<compile_context>
chip_gen: v7x
topology: tpu7x:2x2x1
jax: 0.10.0
libtpu: 0.0.40
codegen_flags: <defaults>
</compile_context>

<pallas_src>
import math

import jax
import jax.numpy as jnp
from jax.experimental import pallas as pl
from jax.experimental.pallas import tpu as pltpu


# ----------------------------------------------------------------------------
# Fused bottleneck kernel (one grid step = one batch element)
# ----------------------------------------------------------------------------
def _make_bottleneck_kernel(H, W, Hp, Wr, Cin, Cb, Cout, d, extra):
    HWr = H * Wr          # rows of the output slab (padded-width, valid H rows)
    HpWr = Hp * Wr        # rows of the fully padded plane

    def kernel(x_ref, r_ref, w1_ref, s1_ref, b1_ref, w2_ref, s2_ref, b2_ref,
               w3_ref, s3_ref, b3_ref, o_ref, h1_ref):
        # ---- conv1 (1x1) + bn1 + relu on the reflect-padded flat plane ------
        # (1x1 conv commutes with spatial padding; input already bf16.)
        h1 = jnp.dot(x_ref[0], w1_ref[...],
                     preferred_element_type=jnp.float32)      # (HpWr, Cb) f32
        h1 = jnp.maximum(h1 * s1_ref[...] + b1_ref[...], 0.0)
        h1_ref[0:HpWr, :] = h1.astype(jnp.bfloat16)           # single f32->bf16 cast
        # Zero the slack rows; they are only read by taps that feed the
        # discarded (j >= W) output columns, but keep them deterministic.
        h1_ref[HpWr:HpWr + extra, :] = jnp.zeros((extra, Cb), jnp.bfloat16)

        # ---- conv2 (3x3, dilation d): 9 accumulating GEMMs over contiguous,
        #      statically shifted row slabs of the flat plane ------------------
        acc = None
        for dy in range(3):
            for dx in range(3):
                off = (dy * Wr + dx) * d                      # static offset
                lhs = h1_ref[off:off + HWr, :]                # (HWr, Cb) bf16
                p = jnp.dot(lhs, w2_ref[dy * 3 + dx],
                            preferred_element_type=jnp.float32)
                acc = p if acc is None else acc + p           # fp32 accumulate
        h2 = jnp.maximum(acc * s2_ref[...] + b2_ref[...], 0.0)

        # ---- conv3 (1x1) + bn3 + residual + relu -----------------------------
        h3 = jnp.dot(h2.astype(jnp.bfloat16), w3_ref[...],
                     preferred_element_type=jnp.float32)      # (HWr, Cout)
        h3 = h3 * s3_ref[...] + b3_ref[...]
        o_ref[0] = jnp.maximum(h3 + r_ref[0], 0.0).astype(o_ref.dtype)

    return kernel


# ----------------------------------------------------------------------------
# Parameter init (Conv2d bias=False; BN folded to per-channel affine, eval mode)
# ----------------------------------------------------------------------------
def _init_bn(key, c, eps=1e-5):
    k1, k2, k3, k4 = jax.random.split(key, 4)
    gamma = 1.0 + 0.1 * jax.random.normal(k1, (c,), jnp.float32)
    beta = 0.1 * jax.random.normal(k2, (c,), jnp.float32)
    rmean = 0.1 * jax.random.normal(k3, (c,), jnp.float32)
    rvar = jnp.abs(1.0 + 0.1 * jax.random.normal(k4, (c,), jnp.float32))
    scale = gamma / jnp.sqrt(rvar + eps)
    shift = beta - rmean * scale
    return scale.reshape(1, c), shift.reshape(1, c)


def init_bottleneck(key, inplanes, planes, dilation=1):
    expansion = 2
    cb = planes // expansion
    ks = jax.random.split(key, 6)
    w1 = jax.random.normal(ks[0], (inplanes, cb), jnp.float32) / math.sqrt(inplanes)
    w2 = jax.random.normal(ks[1], (3, 3, cb, cb), jnp.float32) / math.sqrt(9 * cb)
    w3 = jax.random.normal(ks[2], (cb, planes), jnp.float32) / math.sqrt(cb)
    s1, b1 = _init_bn(ks[3], cb)
    s2, b2 = _init_bn(ks[4], cb)
    s3, b3 = _init_bn(ks[5], planes)
    return {
        "dilation": int(dilation), "inplanes": inplanes, "planes": planes, "bottle": cb,
        # fp32 masters (for the pure-JAX reference)
        "w1_f32": w1, "w2_f32": w2, "w3_f32": w3,
        # bf16 weights for the MXU; conv2 packed tap-major: (9, Cin, Cout)
        "w1": w1.astype(jnp.bfloat16),
        "w2p": w2.reshape(9, cb, cb).astype(jnp.bfloat16),
        "w3": w3.astype(jnp.bfloat16),
        "s1": s1, "b1": b1, "s2": s2, "b2": b2, "s3": s3, "b3": b3,
    }


# ----------------------------------------------------------------------------
# Forward pass (NCHW in / NCHW out, like the PyTorch module)
# ----------------------------------------------------------------------------
def bottleneck_forward(params, x_nchw):
    N, Cin, H, W = x_nchw.shape
    d = params["dilation"]
    cb, planes = params["bottle"], params["planes"]
    assert Cin == params["inplanes"]
    assert Cin == planes, "default residual=x path requires inplanes == planes"
    assert W % 8 == 0, "this implementation assumes W is a multiple of 8"

    Hp, Wp = H + 2 * d, W + 2 * d
    Wr = ((Wp + 7) // 8) * 8          # padded width rounded to a sublane multiple
    HpWr = Hp * Wr
    HWr = H * Wr
    extra = ((2 * d + 7) // 8) * 8    # scratch slack rows (>= 2d) for last taps

    x_nhwc = jnp.transpose(x_nchw, (0, 2, 3, 1))

    # conv path input: reflect pad (hoisted past the pointwise conv1), zero pad
    # W up to Wr, flatten rows, cast to bf16.
    xp = jnp.pad(x_nhwc, ((0, 0), (d, d), (d, d), (0, 0)), mode="reflect")
    xp = jnp.pad(xp, ((0, 0), (0, 0), (0, Wr - Wp), (0, 0)))
    xp = xp.reshape(N, HpWr, Cin).astype(jnp.bfloat16)

    # residual input: unpadded x, zero padded on W to Wr, flattened — exactly
    # the output slab layout, so the in-kernel add is layout-matched (fp32).
    res = jnp.pad(x_nhwc, ((0, 0), (0, 0), (0, Wr - W), (0, 0)))
    res = res.reshape(N, HWr, Cin)

    kernel = _make_bottleneck_kernel(H, W, Hp, Wr, Cin, cb, planes, d, extra)

    out = pl.pallas_call(
        kernel,
        out_shape=jax.ShapeDtypeStruct((N, HWr, planes), jnp.float32),
        grid=(N,),
        in_specs=[
            pl.BlockSpec((1, HpWr, Cin), lambda n: (n, 0, 0)),   # padded x (bf16)
            pl.BlockSpec((1, HWr, Cin), lambda n: (n, 0, 0)),    # residual (f32)
            pl.BlockSpec((Cin, cb), lambda n: (0, 0)),           # w1
            pl.BlockSpec((1, cb), lambda n: (0, 0)),             # s1
            pl.BlockSpec((1, cb), lambda n: (0, 0)),             # b1
            pl.BlockSpec((9, cb, cb), lambda n: (0, 0, 0)),      # w2 (tap-major)
            pl.BlockSpec((1, cb), lambda n: (0, 0)),             # s2
            pl.BlockSpec((1, cb), lambda n: (0, 0)),             # b2
            pl.BlockSpec((cb, planes), lambda n: (0, 0)),        # w3
            pl.BlockSpec((1, planes), lambda n: (0, 0)),         # s3
            pl.BlockSpec((1, planes), lambda n: (0, 0)),         # b3
        ],
        out_specs=pl.BlockSpec((1, HWr, planes), lambda n: (n, 0, 0)),
        scratch_shapes=[
            pltpu.VMEM((HpWr + extra, cb), jnp.bfloat16),        # conv1 output (bf16)
        ],
        compiler_params=pltpu.CompilerParams(
            dimension_semantics=("parallel",),
            vmem_limit_bytes=64 * 1024 * 1024),
    )(xp, res, params["w1"], params["s1"], params["b1"],
      params["w2p"], params["s2"], params["b2"],
      params["w3"], params["s3"], params["b3"])

    # drop the alignment-only columns [W, Wr) and go back to NCHW
    out = out.reshape(N, H, Wr, planes)[:, :, :W, :]
    return jnp.transpose(out, (0, 3, 1, 2))


# ----------------------------------------------------------------------------
# Pure-JAX fp32 reference (same eval-mode folded BN)
# ----------------------------------------------------------------------------
def bottleneck_reference(params, x_nchw):
    d = params["dilation"]
    hi = jax.lax.Precision.HIGHEST
    x = jnp.transpose(x_nchw, (0, 2, 3, 1)).astype(jnp.float32)
    h = jnp.einsum("nhwc,cb->nhwb", x, params["w1_f32"], precision=hi)
    h = jnp.maximum(h * params["s1"] + params["b1"], 0.0)
    hp = jnp.pad(h, ((0, 0), (d, d), (d, d), (0, 0)), mode="reflect")
    h2 = jax.lax.conv_general_dilated(
        hp, params["w2_f32"], window_strides=(1, 1), padding="VALID",
        rhs_dilation=(d, d), dimension_numbers=("NHWC", "HWIO", "NHWC"),
        precision=hi)
    h2 = jnp.maximum(h2 * params["s2"] + params["b2"], 0.0)
    h3 = jnp.einsum("nhwc,co->nhwo", h2, params["w3_f32"], precision=hi)
    h3 = h3 * params["s3"] + params["b3"]
    out = jnp.maximum(h3 + x, 0.0)
    return jnp.transpose(out, (0, 3, 1, 2))


# ----------------------------------------------------------------------------
if __name__ == "__main__":
    key = jax.random.PRNGKey(0)
    kp, kx = jax.random.split(key)

    N, C, H, W = 2, 32, 16, 16            # inplanes = planes = 32 -> bottle = 16
    x = jax.random.normal(kx, (N, C, H, W), jnp.float32)

    # case 1: stride=1, dilation=1
    params = init_bottleneck(kp, inplanes=C, planes=C, dilation=1)
    out = jax.block_until_ready(bottleneck_forward(params, x))
    ref = jax.block_until_ready(bottleneck_reference(params, x))
    assert out.shape == (N, C, H, W)
    err = float(jnp.max(jnp.abs(out - ref)))
    assert err < 0.3, f"dilation=1 max abs error too large: {err}"

    # case 2: dilation=2 exercises the dilated-tap / wider-pad path
    params2 = init_bottleneck(jax.random.PRNGKey(1), inplanes=C, planes=C, dilation=2)
    out2 = jax.block_until_ready(bottleneck_forward(params2, x))
    ref2 = jax.block_until_ready(bottleneck_reference(params2, x))
    err2 = float(jnp.max(jnp.abs(out2 - ref2)))
    assert err2 < 0.3, f"dilation=2 max abs error too large: {err2}"

    print("KERNEL_OK")
</pallas_src>

<mosaic_0001>
module attributes {stable_mosaic.version = 11 : i64} {
  func.func @kernel(%arg0: i32, %arg1: memref<1x432x32xbf16, #tpu.memory_space<vmem>>, %arg2: memref<1x384x32xf32, #tpu.memory_space<vmem>>, %arg3: memref<32x16xbf16, #tpu.memory_space<vmem>>, %arg4: memref<1x16xf32, #tpu.memory_space<vmem>>, %arg5: memref<1x16xf32, #tpu.memory_space<vmem>>, %arg6: memref<9x16x16xbf16, #tpu.memory_space<vmem>>, %arg7: memref<1x16xf32, #tpu.memory_space<vmem>>, %arg8: memref<1x16xf32, #tpu.memory_space<vmem>>, %arg9: memref<16x32xbf16, #tpu.memory_space<vmem>>, %arg10: memref<1x32xf32, #tpu.memory_space<vmem>>, %arg11: memref<1x32xf32, #tpu.memory_space<vmem>>, %arg12: memref<1x384x32xf32, #tpu.memory_space<vmem>>, %arg13: memref<440x16xbf16, #tpu.memory_space<vmem>>) attributes {dimension_semantics = [#tpu.dimension_semantics<parallel>], iteration_bounds = array<i64: 2>, scalar_prefetch = 0 : i64, scratch_operands = 1 : i64, tpu.core_type = #tpu.core_type<tc>, window_params = [{transform_indices = @transform_0, window_bounds = array<i64: 1, 432, 32>}, {transform_indices = @transform_1, window_bounds = array<i64: 1, 384, 32>}, {pipeline_mode = #tpu.pipeline_mode<synchronous>, transform_indices = @transform_2, window_bounds = array<i64: 32, 16>}, {pipeline_mode = #tpu.pipeline_mode<synchronous>, transform_indices = @transform_3, window_bounds = array<i64: 1, 16>}, {pipeline_mode = #tpu.pipeline_mode<synchronous>, transform_indices = @transform_4, window_bounds = array<i64: 1, 16>}, {pipeline_mode = #tpu.pipeline_mode<synchronous>, transform_indices = @transform_5, window_bounds = array<i64: 9, 16, 16>}, {pipeline_mode = #tpu.pipeline_mode<synchronous>, transform_indices = @transform_6, window_bounds = array<i64: 1, 16>}, {pipeline_mode = #tpu.pipeline_mode<synchronous>, transform_indices = @transform_7, window_bounds = array<i64: 1, 16>}, {pipeline_mode = #tpu.pipeline_mode<synchronous>, transform_indices = @transform_8, window_bounds = array<i64: 16, 32>}, {pipeline_mode = #tpu.pipeline_mode<synchronous>, transform_indices = @transform_9, window_bounds = array<i64: 1, 32>}, {pipeline_mode = #tpu.pipeline_mode<synchronous>, transform_indices = @transform_10, window_bounds = array<i64: 1, 32>}, {transform_indices = @transform_11, window_bounds = array<i64: 1, 384, 32>}]} {
    %c0 = arith.constant 0 : index
    %c0_0 = arith.constant 0 : index
    %c0_1 = arith.constant 0 : index
    %0 = vector.load %arg1[%c0, %c0_0, %c0_1] : memref<1x432x32xbf16, #tpu.memory_space<vmem>>, vector<1x432x32xbf16>
    %1 = vector.shape_cast %0 : vector<1x432x32xbf16> to vector<432x32xbf16>
    %c0_2 = arith.constant 0 : index
    %c0_3 = arith.constant 0 : index
    %2 = vector.load %arg3[%c0_2, %c0_3] : memref<32x16xbf16, #tpu.memory_space<vmem>>, vector<32x16xbf16>
    %cst = arith.constant dense<0.000000e+00> : vector<432x16xf32>
    %3 = tpu.matmul %1, %2, %cst {dimension_numbers = #tpu.dot_dimension_numbers<[1], [0], [0], [1], [0, 0, 1, 1], [], []>} : vector<432x32xbf16>, vector<32x16xbf16>, vector<432x16xf32> -> vector<432x16xf32>
    %c0_4 = arith.constant 0 : index
    %c0_5 = arith.constant 0 : index
    %4 = vector.load %arg4[%c0_4, %c0_5] : memref<1x16xf32, #tpu.memory_space<vmem>>, vector<1x16xf32>
    %5 = vector.broadcast %4 : vector<1x16xf32> to vector<432x16xf32>
    %6 = arith.mulf %3, %5 : vector<432x16xf32>
    %c0_6 = arith.constant 0 : index
    %c0_7 = arith.constant 0 : index
    %7 = vector.load %arg5[%c0_6, %c0_7] : memref<1x16xf32, #tpu.memory_space<vmem>>, vector<1x16xf32>
    %8 = vector.broadcast %7 : vector<1x16xf32> to vector<432x16xf32>
    %9 = arith.addf %6, %8 : vector<432x16xf32>
    %cst_8 = arith.constant 0.000000e+00 : f32
    %10 = vector.broadcast %cst_8 : f32 to vector<432x16xf32>
    %11 = arith.maximumf %9, %10 : vector<432x16xf32>
    %12 = arith.truncf %11 : vector<432x16xf32> to vector<432x16xbf16>
    %c0_9 = arith.constant 0 : index
    %c0_10 = arith.constant 0 : index
    %13 = vector.load %arg13[%c0_9, %c0_10] : memref<440x16xbf16, #tpu.memory_space<vmem>>, vector<432x16xbf16>
    tpu.vector_store %arg13[%c0_9, %c0_10], %12 {strides = array<i32>} : memref<440x16xbf16, #tpu.memory_space<vmem>>, vector<432x16xbf16>,
    %cst_11 = arith.constant 0.000000e+00 : bf16
    %14 = vector.broadcast %cst_11 : bf16 to vector<8x16xbf16>
    %c432 = arith.constant 432 : index
    %c0_12 = arith.constant 0 : index
    %15 = vector.load %arg13[%c432, %c0_12] : memref<440x16xbf16, #tpu.memory_space<vmem>>, vector<8x16xbf16>
    tpu.vector_store %arg13[%c432, %c0_12], %14 {strides = array<i32>} : memref<440x16xbf16, #tpu.memory_space<vmem>>, vector<8x16xbf16>,
    %c0_13 = arith.constant 0 : index
    %c0_14 = arith.constant 0 : index
    %16 = vector.load %arg13[%c0_13, %c0_14] : memref<440x16xbf16, #tpu.memory_space<vmem>>, vector<384x16xbf16>
    %c0_15 = arith.constant 0 : index
    %c0_16 = arith.constant 0 : index
    %c0_17 = arith.constant 0 : index
    %17 = vector.load %arg6[%c0_15, %c0_16, %c0_17] : memref<9x16x16xbf16, #tpu.memory_space<vmem>>, vector<1x16x16xbf16>
    %18 = vector.shape_cast %17 : vector<1x16x16xbf16> to vector<16x16xbf16>
    %cst_18 = arith.constant dense<0.000000e+00> : vector<384x16xf32>
    %19 = tpu.matmul %16, %18, %cst_18 {dimension_numbers = #tpu.dot_dimension_numbers<[1], [0], [0], [1], [0, 0, 1, 1], [], []>} : vector<384x16xbf16>, vector<16x16xbf16>, vector<384x16xf32> -> vector<384x16xf32>
    %c1 = arith.constant 1 : index
    %c0_19 = arith.constant 0 : index
    %20 = vector.load %arg13[%c1, %c0_19] : memref<440x16xbf16, #tpu.memory_space<vmem>>, vector<384x16xbf16>
    %c1_20 = arith.constant 1 : index
    %c0_21 = arith.constant 0 : index
    %c0_22 = arith.constant 0 : index
    %21 = vector.load %arg6[%c1_20, %c0_21, %c0_22] : memref<9x16x16xbf16, #tpu.memory_space<vmem>>, vector<1x16x16xbf16>
    %22 = vector.shape_cast %21 : vector<1x16x16xbf16> to vector<16x16xbf16>
    %cst_23 = arith.constant dense<0.000000e+00> : vector<384x16xf32>
    %23 = tpu.matmul %20, %22, %cst_23 {dimension_numbers = #tpu.dot_dimension_numbers<[1], [0], [0], [1], [0, 0, 1, 1], [], []>} : vector<384x16xbf16>, vector<16x16xbf16>, vector<384x16xf32> -> vector<384x16xf32>
    %24 = arith.addf %19, %23 : vector<384x16xf32>
    %c2 = arith.constant 2 : index
    %c0_24 = arith.constant 0 : index
    %25 = vector.load %arg13[%c2, %c0_24] : memref<440x16xbf16, #tpu.memory_space<vmem>>, vector<384x16xbf16>
    %c2_25 = arith.constant 2 : index
    %c0_26 = arith.constant 0 : index
    %c0_27 = arith.constant 0 : index
    %26 = vector.load %arg6[%c2_25, %c0_26, %c0_27] : memref<9x16x16xbf16, #tpu.memory_space<vmem>>, vector<1x16x16xbf16>
    %27 = vector.shape_cast %26 : vector<1x16x16xbf16> to vector<16x16xbf16>
    %cst_28 = arith.constant dense<0.000000e+00> : vector<384x16xf32>
    %28 = tpu.matmul %25, %27, %cst_28 {dimension_numbers = #tpu.dot_dimension_numbers<[1], [0], [0], [1], [0, 0, 1, 1], [], []>} : vector<384x16xbf16>, vector<16x16xbf16>, vector<384x16xf32> -> vector<384x16xf32>
    %29 = arith.addf %24, %28 : vector<384x16xf32>
    %c24 = arith.constant 24 : index
    %c0_29 = arith.constant 0 : index
    %30 = vector.load %arg13[%c24, %c0_29] : memref<440x16xbf16, #tpu.memory_space<vmem>>, vector<384x16xbf16>
    %c3 = arith.constant 3 : index
    %c0_30 = arith.constant 0 : index
    %c0_31 = arith.constant 0 : index
    %31 = vector.load %arg6[%c3, %c0_30, %c0_31] : memref<9x16x16xbf16, #tpu.memory_space<vmem>>, vector<1x16x16xbf16>
    %32 = vector.shape_cast %31 : vector<1x16x16xbf16> to vector<16x16xbf16>
    %cst_32 = arith.constant dense<0.000000e+00> : vector<384x16xf32>
    %33 = tpu.matmul %30, %32, %cst_32 {dimension_numbers = #tpu.dot_dimension_numbers<[1], [0], [0], [1], [0, 0, 1, 1], [], []>} : vector<384x16xbf16>, vector<16x16xbf16>, vector<384x16xf32> -> vector<384x16xf32>
    %34 = arith.addf %29, %33 : vector<384x16xf32>
    %c25 = arith.constant 25 : index
    %c0_33 = arith.constant 0 : index
    %35 = vector.load %arg13[%c25, %c0_33] : memref<440x16xbf16, #tpu.memory_space<vmem>>, vector<384x16xbf16>
    %c4 = arith.constant 4 : index
    %c0_34 = arith.constant 0 : index
    %c0_35 = arith.constant 0 : index
    %36 = vector.load %arg6[%c4, %c0_34, %c0_35] : memref<9x16x16xbf16, #tpu.memory_space<vmem>>, vector<1x16x16xbf16>
    %37 = vector.shape_cast %36 : vector<1x16x16xbf16> to vector<16x16xbf16>
    %cst_36 = arith.constant dense<0.000000e+00> : vector<384x16xf32>
    %38 = tpu.matmul %35, %37, %cst_36 {dimension_numbers = #tpu.dot_dimension_numbers<[1], [0], [0], [1], [0, 0, 1, 1], [], []>} : vector<384x16xbf16>, vector<16x16xbf16>, vector<384x16xf32> -> vector<384x16xf32>
    %39 = arith.addf %34, %38 : vector<384x16xf32>
    %c26 = arith.constant 26 : index
    %c0_37 = arith.constant 0 : index
    %40 = vector.load %arg13[%c26, %c0_37] : memref<440x16xbf16, #tpu.memory_space<vmem>>, vector<384x16xbf16>
    %c5 = arith.constant 5 : index
    %c0_38 = arith.constant 0 : index
    %c0_39 = arith.constant 0 : index
    %41 = vector.load %arg6[%c5, %c0_38, %c0_39] : memref<9x16x16xbf16, #tpu.memory_space<vmem>>, vector<1x16x16xbf16>
    %42 = vector.shape_cast %41 : vector<1x16x16xbf16> to vector<16x16xbf16>
    %cst_40 = arith.constant dense<0.000000e+00> : vector<384x16xf32>
    %43 = tpu.matmul %40, %42, %cst_40 {dimension_numbers = #tpu.dot_dimension_numbers<[1], [0], [0], [1], [0, 0, 1, 1], [], []>} : vector<384x16xbf16>, vector<16x16xbf16>, vector<384x16xf32> -> vector<384x16xf32>
    %44 = arith.addf %39, %43 : vector<384x16xf32>
    %c48 = arith.constant 48 : index
    %c0_41 = arith.constant 0 : index
    %45 = vector.load %arg13[%c48, %c0_41] : memref<440x16xbf16, #tpu.memory_space<vmem>>, vector<384x16xbf16>
    %c6 = arith.constant 6 : index
    %c0_42 = arith.constant 0 : index
    %c0_43 = arith.constant 0 : index
    %46 = vector.load %arg6[%c6, %c0_42, %c0_43] : memref<9x16x16xbf16, #tpu.memory_space<vmem>>, vector<1x16x16xbf16>
    %47 = vector.shape_cast %46 : vector<1x16x16xbf16> to vector<16x16xbf16>
    %cst_44 = arith.constant dense<0.000000e+00> : vector<384x16xf32>
    %48 = tpu.matmul %45, %47, %cst_44 {dimension_numbers = #tpu.dot_dimension_numbers<[1], [0], [0], [1], [0, 0, 1, 1], [], []>} : vector<384x16xbf16>, vector<16x16xbf16>, vector<384x16xf32> -> vector<384x16xf32>
    %49 = arith.addf %44, %48 : vector<384x16xf32>
    %c49 = arith.constant 49 : index
    %c0_45 = arith.constant 0 : index
    %50 = vector.load %arg13[%c49, %c0_45] : memref<440x16xbf16, #tpu.memory_space<vmem>>, vector<384x16xbf16>
    %c7 = arith.constant 7 : index
    %c0_46 = arith.constant 0 : index
    %c0_47 = arith.constant 0 : index
    %51 = vector.load %arg6[%c7, %c0_46, %c0_47] : memref<9x16x16xbf16, #tpu.memory_space<vmem>>, vector<1x16x16xbf16>
    %52 = vector.shape_cast %51 : vector<1x16x16xbf16> to vector<16x16xbf16>
    %cst_48 = arith.constant dense<0.000000e+00> : vector<384x16xf32>
    %53 = tpu.matmul %50, %52, %cst_48 {dimension_numbers = #tpu.dot_dimension_numbers<[1], [0], [0], [1], [0, 0, 1, 1], [], []>} : vector<384x16xbf16>, vector<16x16xbf16>, vector<384x16xf32> -> vector<384x16xf32>
    %54 = arith.addf %49, %53 : vector<384x16xf32>
    %c50 = arith.constant 50 : index
    %c0_49 = arith.constant 0 : index
    %55 = vector.load %arg13[%c50, %c0_49] : memref<440x16xbf16, #tpu.memory_space<vmem>>, vector<384x16xbf16>
    %c8 = arith.constant 8 : index
    %c0_50 = arith.constant 0 : index
    %c0_51 = arith.constant 0 : index
    %56 = vector.load %arg6[%c8, %c0_50, %c0_51] : memref<9x16x16xbf16, #tpu.memory_space<vmem>>, vector<1x16x16xbf16>
    %57 = vector.shape_cast %56 : vector<1x16x16xbf16> to vector<16x16xbf16>
    %cst_52 = arith.constant dense<0.000000e+00> : vector<384x16xf32>
    %58 = tpu.matmul %55, %57, %cst_52 {dimension_numbers = #tpu.dot_dimension_numbers<[1], [0], [0], [1], [0, 0, 1, 1], [], []>} : vector<384x16xbf16>, vector<16x16xbf16>, vector<384x16xf32> -> vector<384x16xf32>
    %59 = arith.addf %54, %58 : vector<384x16xf32>
    %c0_53 = arith.constant 0 : index
    %c0_54 = arith.constant 0 : index
    %60 = vector.load %arg7[%c0_53, %c0_54] : memref<1x16xf32, #tpu.memory_space<vmem>>, vector<1x16xf32>
    %61 = vector.broadcast %60 : vector<1x16xf32> to vector<384x16xf32>
    %62 = arith.mulf %59, %61 : vector<384x16xf32>
    %c0_55 = arith.constant 0 : index
    %c0_56 = arith.constant 0 : index
    %63 = vector.load %arg8[%c0_55, %c0_56] : memref<1x16xf32, #tpu.memory_space<vmem>>, vector<1x16xf32>
    %64 = vector.broadcast %63 : vector<1x16xf32> to vector<384x16xf32>
    %65 = arith.addf %62, %64 : vector<384x16xf32>
    %cst_57 = arith.constant 0.000000e+00 : f32
    %66 = vector.broadcast %cst_57 : f32 to vector<384x16xf32>
    %67 = arith.maximumf %65, %66 : vector<384x16xf32>
    %68 = arith.truncf %67 : vector<384x16xf32> to vector<384x16xbf16>
    %c0_58 = arith.constant 0 : index
    %c0_59 = arith.constant 0 : index
    %69 = vector.load %arg9[%c0_58, %c0_59] : memref<16x32xbf16, #tpu.memory_space<vmem>>, vector<16x32xbf16>
    %cst_60 = arith.constant dense<0.000000e+00> : vector<384x32xf32>
    %70 = tpu.matmul %68, %69, %cst_60 {dimension_numbers = #tpu.dot_dimension_numbers<[1], [0], [0], [1], [0, 0, 1, 1], [], []>} : vector<384x16xbf16>, vector<16x32xbf16>, vector<384x32xf32> -> vector<384x32xf32>
    %c0_61 = arith.constant 0 : index
    %c0_62 = arith.constant 0 : index
    %71 = vector.load %arg10[%c0_61, %c0_62] : memref<1x32xf32, #tpu.memory_space<vmem>>, vector<1x32xf32>
    %72 = vector.broadcast %71 : vector<1x32xf32> to vector<384x32xf32>
    %73 = arith.mulf %70, %72 : vector<384x32xf32>
    %c0_63 = arith.constant 0 : index
    %c0_64 = arith.constant 0 : index
    %74 = vector.load %arg11[%c0_63, %c0_64] : memref<1x32xf32, #tpu.memory_space<vmem>>, vector<1x32xf32>
    %75 = vector.broadcast %74 : vector<1x32xf32> to vector<384x32xf32>
    %76 = arith.addf %73, %75 : vector<384x32xf32>
    %c0_65 = arith.constant 0 : index
    %c0_66 = arith.constant 0 : index
    %c0_67 = arith.constant 0 : index
    %77 = vector.load %arg2[%c0_65, %c0_66, %c0_67] : memref<1x384x32xf32, #tpu.memory_space<vmem>>, vector<1x384x32xf32>
    %78 = vector.shape_cast %77 : vector<1x384x32xf32> to vector<384x32xf32>
    %79 = arith.addf %76, %78 : vector<384x32xf32>
    %cst_68 = arith.constant 0.000000e+00 : f32
    %80 = vector.broadcast %cst_68 : f32 to vector<384x32xf32>
    %81 = arith.maximumf %79, %80 : vector<384x32xf32>
    %c0_69 = arith.constant 0 : index
    %c0_70 = arith.constant 0 : index
    %c0_71 = arith.constant 0 : index
    %82 = vector.load %arg12[%c0_69, %c0_70, %c0_71] : memref<1x384x32xf32, #tpu.memory_space<vmem>>, vector<1x384x32xf32>
    %83 = vector.shape_cast %82 : vector<1x384x32xf32> to vector<384x32xf32>
    %84 = vector.shape_cast %81 : vector<384x32xf32> to vector<1x384x32xf32>
    tpu.vector_store %arg12[%c0_69, %c0_70, %c0_71], %84 {strides = array<i32>} : memref<1x384x32xf32, #tpu.memory_space<vmem>>, vector<1x384x32xf32>,
    return
  }
  func.func @transform_0(%arg0: i32) -> (i32, i32, i32) {
    %c0_i32 = arith.constant 0 : i32
    %c0_i32_0 = arith.constant 0 : i32
    %c0_i32_1 = arith.constant 0 : i32
    return %arg0, %c0_i32, %c0_i32_0 : i32, i32, i32
  }
  func.func @transform_1(%arg0: i32) -> (i32, i32, i32) {
    %c0_i32 = arith.constant 0 : i32
    %c0_i32_0 = arith.constant 0 : i32
    %c0_i32_1 = arith.constant 0 : i32
    return %arg0, %c0_i32, %c0_i32_0 : i32, i32, i32
  }
  func.func @transform_2(%arg0: i32) -> (i32, i32) {
    %c0_i32 = arith.constant 0 : i32
    %c0_i32_0 = arith.constant 0 : i32
    %c0_i32_1 = arith.constant 0 : i32
    return %c0_i32, %c0_i32_0 : i32, i32
  }
  func.func @transform_3(%arg0: i32) -> (i32, i32) {
    %c0_i32 = arith.constant 0 : i32
    %c0_i32_0 = arith.constant 0 : i32
    %c0_i32_1 = arith.constant 0 : i32
    return %c0_i32, %c0_i32_0 : i32, i32
  }
  func.func @transform_4(%arg0: i32) -> (i32, i32) {
    %c0_i32 = arith.constant 0 : i32
    %c0_i32_0 = arith.constant 0 : i32
    %c0_i32_1 = arith.constant 0 : i32
    return %c0_i32, %c0_i32_0 : i32, i32
  }
  func.func @transform_5(%arg0: i32) -> (i32, i32, i32) {
    %c0_i32 = arith.constant 0 : i32
    %c0_i32_0 = arith.constant 0 : i32
    %c0_i32_1 = arith.constant 0 : i32
    %c0_i32_2 = arith.constant 0 : i32
    return %c0_i32, %c0_i32_0, %c0_i32_1 : i32, i32, i32
  }
  func.func @transform_6(%arg0: i32) -> (i32, i32) {
    %c0_i32 = arith.constant 0 : i32
    %c0_i32_0 = arith.constant 0 : i32
    %c0_i32_1 = arith.constant 0 : i32
    return %c0_i32, %c0_i32_0 : i32, i32
  }
  func.func @transform_7(%arg0: i32) -> (i32, i32) {
    %c0_i32 = arith.constant 0 : i32
    %c0_i32_0 = arith.constant 0 : i32
    %c0_i32_1 = arith.constant 0 : i32
    return %c0_i32, %c0_i32_0 : i32, i32
  }
  func.func @transform_8(%arg0: i32) -> (i32, i32) {
    %c0_i32 = arith.constant 0 : i32
    %c0_i32_0 = arith.constant 0 : i32
    %c0_i32_1 = arith.constant 0 : i32
    return %c0_i32, %c0_i32_0 : i32, i32
  }
  func.func @transform_9(%arg0: i32) -> (i32, i32) {
    %c0_i32 = arith.constant 0 : i32
    %c0_i32_0 = arith.constant 0 : i32
    %c0_i32_1 = arith.constant 0 : i32
    return %c0_i32, %c0_i32_0 : i32, i32
  }
  func.func @transform_10(%arg0: i32) -> (i32, i32) {
    %c0_i32 = arith.constant 0 : i32
    %c0_i32_0 = arith.constant 0 : i32
    %c0_i32_1 = arith.constant 0 : i32
    return %c0_i32, %c0_i32_0 : i32, i32
  }
  func.func @transform_11(%arg0: i32) -> (i32, i32, i32) {
    %c0_i32 = arith.constant 0 : i32
    %c0_i32_0 = arith.constant 0 : i32
    %c0_i32_1 = arith.constant 0 : i32
    return %arg0, %c0_i32, %c0_i32_0 : i32, i32, i32
  }
}

</mosaic_0001>

<llo_original>
// kernel: tpu_custom_call.1
$region0: #{tpu_custom_call.1}
  #allocation0 [shape = 'u32[]', space=smem, size = 0x4, offset = 0x4, fixed_abs, tag = 'smem constant byte address 0x4 - core index']
  #allocation1 [shape = 'u32[144,128]{1,0:T(1,128)}', space=vmem, size = 0x12000, scoped, tag = 'internal scratch']
  #allocation2 [shape = 'bf16[440,16]{1,0:T(8,128)(2,1)}', space=vmem, size = 0x1b800, scoped, tag = 'scratch operand']
  %s0 = inlined_call_operand.hbm [shape: bf16[2,432,32], index: 0, kind: input, shape index: {}]
  %s1 = inlined_call_operand.hbm [shape: f32[2,384,32], index: 1, kind: input, shape index: {}]
  %s2 = inlined_call_operand.hbm [shape: bf16[32,16], index: 2, kind: input, shape index: {}]
  %s3 = inlined_call_operand.hbm [shape: f32[1,16], index: 3, kind: input, shape index: {}]
  %s4 = inlined_call_operand.hbm [shape: f32[1,16], index: 4, kind: input, shape index: {}]
  %s5 = inlined_call_operand.hbm [shape: bf16[9,16,16], index: 5, kind: input, shape index: {}]
  %s6 = inlined_call_operand.hbm [shape: f32[1,16], index: 6, kind: input, shape index: {}]
  %s7 = inlined_call_operand.hbm [shape: f32[1,16], index: 7, kind: input, shape index: {}]
  %s8 = inlined_call_operand.hbm [shape: bf16[16,32], index: 8, kind: input, shape index: {}]
  %s9 = inlined_call_operand.hbm [shape: f32[1,32], index: 9, kind: input, shape index: {}]
  %s10 = inlined_call_operand.hbm [shape: f32[1,32], index: 10, kind: input, shape index: {}]
  %s11 = inlined_call_operand.hbm [shape: f32[2,384,32], index: 11, kind: output, shape index: {}]
  %s12 = sld [smem:[#allocation0]]
  $region121: #{tpu_custom_call.1} parent=0
    _
  %s14 = ssub.s32 1, %s12
  %s15 = scalar_select 0, %s14, %s12
  $region1: #{tpu_custom_call.1} parent=0
    #allocation3 [shape = 'u8[221184]{0}', space=vmem, size = 0x36000, scoped, tag = 'input window, operand 0']
    #allocation4 [shape = 's32[2]{0}', space=sflag, size = 0x8, scoped, tag = 'scoped memory for tpu_custom_call.1']
    #allocation5 [shape = 's32[2]{0}', space=sflag, size = 0x8, scoped, tag = 'scoped memory for tpu_custom_call.1']
    #allocation6 [shape = 'u8[393216]{0}', space=vmem, size = 0x60000, scoped, tag = 'input window, operand 1']
    #allocation7 [shape = 's32[2]{0}', space=sflag, size = 0x8, scoped, tag = 'scoped memory for tpu_custom_call.1']
    #allocation8 [shape = 'u8[8192]{0}', space=vmem, size = 0x2000, scoped, tag = 'input window, operand 2, single buffered']
    #allocation9 [shape = 'u8[512]{0}', space=vmem, size = 0x400, scoped, tag = 'input window, operand 3, single buffered']
    #allocation10 [shape = 's32[1]{0}', space=sflag, size = 0x4, scoped, tag = 'scoped memory for tpu_custom_call.1']
    #allocation11 [shape = 'u8[512]{0}', space=vmem, size = 0x400, scoped, tag = 'input window, operand 4, single buffered']
    #allocation12 [shape = 'u8[36864]{0}', space=vmem, size = 0x9000, scoped, tag = 'input window, operand 5, single buffered']
    #allocation13 [shape = 's32[1]{0}', space=sflag, size = 0x4, scoped, tag = 'scoped memory for tpu_custom_call.1']
    #allocation14 [shape = 'u8[512]{0}', space=vmem, size = 0x400, scoped, tag = 'input window, operand 6, single buffered']
    #allocation15 [shape = 'u8[512]{0}', space=vmem, size = 0x400, scoped, tag = 'input window, operand 7, single buffered']
    #allocation16 [shape = 's32[1]{0}', space=sflag, size = 0x4, scoped, tag = 'scoped memory for tpu_custom_call.1']
    #allocation17 [shape = 'u8[4096]{0}', space=vmem, size = 0x1000, scoped, tag = 'input window, operand 8, single buffered']
    #allocation18 [shape = 'u8[512]{0}', space=vmem, size = 0x400, scoped, tag = 'input window, operand 9, single buffered']
    #allocation19 [shape = 's32[1]{0}', space=sflag, size = 0x4, scoped, tag = 'scoped memory for tpu_custom_call.1']
    #allocation20 [shape = 'u8[512]{0}', space=vmem, size = 0x400, scoped, tag = 'input window, operand 10, single buffered']
    #allocation21 [shape = 'u8[393216]{0}', space=vmem, size = 0x60000, scoped, tag = 'output window, operand 0']
    %16 = vsyncpa [#allocation4], 0
    %s17 = scalar_lea.sflag [#allocation4], 1
    %18 = vsyncpa %s17, 0
    %19 = vsyncpa [#allocation7], 0
    %s20 = scalar_lea.sflag [#allocation7], 1
    %21 = vsyncpa %s20, 0
    %22 = vsyncpa [#allocation10], 0
    %23 = vsyncpa [#allocation13], 0
    %24 = vsyncpa [#allocation16], 0
    %25 = vsyncpa [#allocation19], 0
    %26 = vsyncpa [#allocation5], 0
    %s27 = scalar_lea.sflag [#allocation5], 1
    %28 = vsyncpa %s27, 0
    loop: start=0, step=1, limit=4
    $region2: #{tpu_custom_call.1} parent=1 // loop_pre_header
      _
    $region3: #{tpu_custom_call.1} parent=1 // loop_header
      %s30 = sphi 0, %s34
      %p31 = scmp.ge.s32.totalorder %s30, 4
      %s40 = sphi 0, %s42
      %s43 = sphi 0, %s40
      %s44 = sphi 0, %s43
      %s60 = sphi 0, %s44
      %s66 = sphi 0, %s68
      %s69 = sphi 0, %s66
      %s70 = sphi 0, %s69
      %s86 = sphi 0, %s70
      %s90 = sphi 0, %s90
      %s92 = sphi 0, %s90
      %s93 = sphi 0, %s92
      %s107 = sphi 0, %s93
      %s111 = sphi 0, %s111
      %s113 = sphi 0, %s111
      %s114 = sphi 0, %s113
      %s128 = sphi 0, %s114
      %s132 = sphi 0, %s132
      %s134 = sphi 0, %s132
      %s135 = sphi 0, %s134
      %s149 = sphi 0, %s135
      %s153 = sphi 0, %s153
      %s155 = sphi 0, %s153
      %s156 = sphi 0, %s155
      %s170 = sphi 0, %s156
      %s174 = sphi 0, %s174
      %s176 = sphi 0, %s174
      %s177 = sphi 0, %s176
      %s191 = sphi 0, %s177
      %s195 = sphi 0, %s195
      %s197 = sphi 0, %s195
      %s198 = sphi 0, %s197
      %s212 = sphi 0, %s198
      %s216 = sphi 0, %s216
      %s218 = sphi 0, %s216
      %s219 = sphi 0, %s218
      %s233 = sphi 0, %s219
      %s237 = sphi 0, %s237
      %s239 = sphi 0, %s237
      %s240 = sphi 0, %s239
      %s254 = sphi 0, %s240
      %s258 = sphi 0, %s258
      %s260 = sphi 0, %s258
      %s261 = sphi 0, %s260
      %s275 = sphi 0, %s261
      %s281 = sphi 0, %s283
      %s284 = sphi 0, %s281
      %s285 = sphi 0, %s284
      %s301 = sphi 0, %s285
    $region4: #{tpu_custom_call.1} parent=1 // loop_header_branch
      %33 = sbr.rel (%p31) target = $region8
    $region5: #{tpu_custom_call.1} parent=1 // loop_body
      %s35 = ssub.s32 %s30, 1
      %s36 = ssub.s32 %s30, 2
      %s37 = sadd.s32 %s30, 1
      %s38 = ssub.s32 %s30, %s37
      %p39 = scmp.eq.s32.totalorder %s38, 0
      %s41 = sadd.s32 %s40, 1
      %s42 = scalar_select %p39, %s40, %s41
      %p45 = pneg %p39
      %p46 = scmp.eq.s32.totalorder %s30, 1
      %p47 = por %p45, %p46
      %p48 = scmp.ne.s32.totalorder %s40, %s43
      %p49 = scmp.eq.s32.totalorder %s30, 0
      %p50 = por %p48, %p49
      %p51 = scmp.ne.s32.totalorder %s40, %s43
      %p52 = scmp.eq.s32.totalorder %s35, 1
      %p53 = por %p51, %p52
      %p54 = scmp.ne.s32.totalorder %s43, %s44
      %p55 = scmp.eq.s32.totalorder %s35, 0
      %p56 = por %p54, %p55
      %p57 = scmp.ne.s32.totalorder %s43, %s44
      %p58 = scmp.eq.s32.totalorder %s36, 1
      %p59 = por %p57, %p58
      %p61 = scmp.ne.s32.totalorder %s44, %s60
      %p62 = scmp.eq.s32.totalorder %s36, 0
      %p63 = por %p61, %p62
      %s64 = ssub.s32 %s30, %s37
      %p65 = scmp.eq.s32.totalorder %s64, 0
      %s67 = sadd.s32 %s66, 1
      %s68 = scalar_select %p65, %s66, %s67
      %p71 = pneg %p65
      %p72 = scmp.eq.s32.totalorder %s30, 1
      %p73 = por %p71, %p72
      %p74 = scmp.ne.s32.totalorder %s66, %s69
      %p75 = scmp.eq.s32.totalorder %s30, 0
      %p76 = por %p74, %p75
      %p77 = scmp.ne.s32.totalorder %s66, %s69
      %p78 = scmp.eq.s32.totalorder %s35, 1
      %p79 = por %p77, %p78
      %p80 = scmp.ne.s32.totalorder %s69, %s70
      %p81 = scmp.eq.s32.totalorder %s35, 0
      %p82 = por %p80, %p81
      %p83 = scmp.ne.s32.totalorder %s69, %s70
      %p84 = scmp.eq.s32.totalorder %s36, 1
      %p85 = por %p83, %p84
      %p87 = scmp.ne.s32.totalorder %s70, %s86
      %p88 = scmp.eq.s32.totalorder %s36, 0
      %p89 = por %p87, %p88
      %s91 = sadd.s32 %s90, 1
      %p94 = scmp.eq.s32.totalorder %s30, 1
      %p95 = scmp.ne.s32.totalorder %s90, %s92
      %p96 = scmp.eq.s32.totalorder %s30, 0
      %p97 = por %p95, %p96
      %p98 = scmp.ne.s32.totalorder %s90, %s92
      %p99 = scmp.eq.s32.totalorder %s35, 1
      %p100 = por %p98, %p99
      %p101 = scmp.ne.s32.totalorder %s92, %s93
      %p102 = scmp.eq.s32.totalorder %s35, 0
      %p103 = por %p101, %p102
      %p104 = scmp.ne.s32.totalorder %s92, %s93
      %p105 = scmp.eq.s32.totalorder %s36, 1
      %p106 = por %p104, %p105
      %p108 = scmp.ne.s32.totalorder %s93, %s107
      %p109 = scmp.eq.s32.totalorder %s36, 0
      %p110 = por %p108, %p109
      %s112 = sadd.s32 %s111, 1
      %p115 = scmp.eq.s32.totalorder %s30, 1
      %p116 = scmp.ne.s32.totalorder %s111, %s113
      %p117 = scmp.eq.s32.totalorder %s30, 0
      %p118 = por %p116, %p117
      %p119 = scmp.ne.s32.totalorder %s111, %s113
      %p120 = scmp.eq.s32.totalorder %s35, 1
      %p121 = por %p119, %p120
      %p122 = scmp.ne.s32.totalorder %s113, %s114
      %p123 = scmp.eq.s32.totalorder %s35, 0
      %p124 = por %p122, %p123
      %p125 = scmp.ne.s32.totalorder %s113, %s114
      %p126 = scmp.eq.s32.totalorder %s36, 1
      %p127 = por %p125, %p126
      %p129 = scmp.ne.s32.totalorder %s114, %s128
      %p130 = scmp.eq.s32.totalorder %s36, 0
      %p131 = por %p129, %p130
      %s133 = sadd.s32 %s132, 1
      %p136 = scmp.eq.s32.totalorder %s30, 1
      %p137 = scmp.ne.s32.totalorder %s132, %s134
      %p138 = scmp.eq.s32.totalorder %s30, 0
      %p139 = por %p137, %p138
      %p140 = scmp.ne.s32.totalorder %s132, %s134
      %p141 = scmp.eq.s32.totalorder %s35, 1
      %p142 = por %p140, %p141
      %p143 = scmp.ne.s32.totalorder %s134, %s135
      %p144 = scmp.eq.s32.totalorder %s35, 0
      %p145 = por %p143, %p144
      %p146 = scmp.ne.s32.totalorder %s134, %s135
      %p147 = scmp.eq.s32.totalorder %s36, 1
      %p148 = por %p146, %p147
      %p150 = scmp.ne.s32.totalorder %s135, %s149
      %p151 = scmp.eq.s32.totalorder %s36, 0
      %p152 = por %p150, %p151
      %s154 = sadd.s32 %s153, 1
      %p157 = scmp.eq.s32.totalorder %s30, 1
      %p158 = scmp.ne.s32.totalorder %s153, %s155
      %p159 = scmp.eq.s32.totalorder %s30, 0
      %p160 = por %p158, %p159
      %p161 = scmp.ne.s32.totalorder %s153, %s155
      %p162 = scmp.eq.s32.totalorder %s35, 1
      %p163 = por %p161, %p162
      %p164 = scmp.ne.s32.totalorder %s155, %s156
      %p165 = scmp.eq.s32.totalorder %s35, 0
      %p166 = por %p164, %p165
      %p167 = scmp.ne.s32.totalorder %s155, %s156
      %p168 = scmp.eq.s32.totalorder %s36, 1
      %p169 = por %p167, %p168
      %p171 = scmp.ne.s32.totalorder %s156, %s170
      %p172 = scmp.eq.s32.totalorder %s36, 0
      %p173 = por %p171, %p172
      %s175 = sadd.s32 %s174, 1
      %p178 = scmp.eq.s32.totalorder %s30, 1
      %p179 = scmp.ne.s32.totalorder %s174, %s176
      %p180 = scmp.eq.s32.totalorder %s30, 0
      %p181 = por %p179, %p180
      %p182 = scmp.ne.s32.totalorder %s174, %s176
      %p183 = scmp.eq.s32.totalorder %s35, 1
      %p184 = por %p182, %p183
      %p185 = scmp.ne.s32.totalorder %s176, %s177
      %p186 = scmp.eq.s32.totalorder %s35, 0
      %p187 = por %p185, %p186
      %p188 = scmp.ne.s32.totalorder %s176, %s177
      %p189 = scmp.eq.s32.totalorder %s36, 1
      %p190 = por %p188, %p189
      %p192 = scmp.ne.s32.totalorder %s177, %s191
      %p193 = scmp.eq.s32.totalorder %s36, 0
      %p194 = por %p192, %p193
      %s196 = sadd.s32 %s195, 1
      %p199 = scmp.eq.s32.totalorder %s30, 1
      %p200 = scmp.ne.s32.totalorder %s195, %s197
      %p201 = scmp.eq.s32.totalorder %s30, 0
      %p202 = por %p200, %p201
      %p203 = scmp.ne.s32.totalorder %s195, %s197
      %p204 = scmp.eq.s32.totalorder %s35, 1
      %p205 = por %p203, %p204
      %p206 = scmp.ne.s32.totalorder %s197, %s198
      %p207 = scmp.eq.s32.totalorder %s35, 0
      %p208 = por %p206, %p207
      %p209 = scmp.ne.s32.totalorder %s197, %s198
      %p210 = scmp.eq.s32.totalorder %s36, 1
      %p211 = por %p209, %p210
      %p213 = scmp.ne.s32.totalorder %s198, %s212
      %p214 = scmp.eq.s32.totalorder %s36, 0
      %p215 = por %p213, %p214
      %s217 = sadd.s32 %s216, 1
      %p220 = scmp.eq.s32.totalorder %s30, 1
      %p221 = scmp.ne.s32.totalorder %s216, %s218
      %p222 = scmp.eq.s32.totalorder %s30, 0
      %p223 = por %p221, %p222
      %p224 = scmp.ne.s32.totalorder %s216, %s218
      %p225 = scmp.eq.s32.totalorder %s35, 1
      %p226 = por %p224, %p225
      %p227 = scmp.ne.s32.totalorder %s218, %s219
      %p228 = scmp.eq.s32.totalorder %s35, 0
      %p229 = por %p227, %p228
      %p230 = scmp.ne.s32.totalorder %s218, %s219
      %p231 = scmp.eq.s32.totalorder %s36, 1
      %p232 = por %p230, %p231
      %p234 = scmp.ne.s32.totalorder %s219, %s233
      %p235 = scmp.eq.s32.totalorder %s36, 0
      %p236 = por %p234, %p235
      %s238 = sadd.s32 %s237, 1
      %p241 = scmp.eq.s32.totalorder %s30, 1
      %p242 = scmp.ne.s32.totalorder %s237, %s239
      %p243 = scmp.eq.s32.totalorder %s30, 0
      %p244 = por %p242, %p243
      %p245 = scmp.ne.s32.totalorder %s237, %s239
      %p246 = scmp.eq.s32.totalorder %s35, 1
      %p247 = por %p245, %p246
      %p248 = scmp.ne.s32.totalorder %s239, %s240
      %p249 = scmp.eq.s32.totalorder %s35, 0
      %p250 = por %p248, %p249
      %p251 = scmp.ne.s32.totalorder %s239, %s240
      %p252 = scmp.eq.s32.totalorder %s36, 1
      %p253 = por %p251, %p252
      %p255 = scmp.ne.s32.totalorder %s240, %s254
      %p256 = scmp.eq.s32.totalorder %s36, 0
      %p257 = por %p255, %p256
      %s259 = sadd.s32 %s258, 1
      %p262 = scmp.eq.s32.totalorder %s30, 1
      %p263 = scmp.ne.s32.totalorder %s258, %s260
      %p264 = scmp.eq.s32.totalorder %s30, 0
      %p265 = por %p263, %p264
      %p266 = scmp.ne.s32.totalorder %s258, %s260
      %p267 = scmp.eq.s32.totalorder %s35, 1
      %p268 = por %p266, %p267
      %p269 = scmp.ne.s32.totalorder %s260, %s261
      %p270 = scmp.eq.s32.totalorder %s35, 0
      %p271 = por %p269, %p270
      %p272 = scmp.ne.s32.totalorder %s260, %s261
      %p273 = scmp.eq.s32.totalorder %s36, 1
      %p274 = por %p272, %p273
      %p276 = scmp.ne.s32.totalorder %s261, %s275
      %p277 = scmp.eq.s32.totalorder %s36, 0
      %p278 = por %p276, %p277
      %s279 = ssub.s32 %s30, %s37
      %p280 = scmp.eq.s32.totalorder %s279, 0
      %s282 = sadd.s32 %s281, 1
      %s283 = scalar_select %p280, %s281, %s282
      %p286 = pneg %p280
      %p287 = scmp.eq.s32.totalorder %s30, 1
      %p288 = por %p286, %p287
      %p289 = scmp.ne.s32.totalorder %s281, %s284
      %p290 = scmp.eq.s32.totalorder %s30, 0
      %p291 = por %p289, %p290
      %p292 = scmp.ne.s32.totalorder %s281, %s284
      %p293 = scmp.eq.s32.totalorder %s35, 1
      %p294 = por %p292, %p293
      %p295 = scmp.ne.s32.totalorder %s284, %s285
      %p296 = scmp.eq.s32.totalorder %s35, 0
      %p297 = por %p295, %p296
      %p298 = scmp.ne.s32.totalorder %s284, %s285
      %p299 = scmp.eq.s32.totalorder %s36, 1
      %p300 = por %p298, %p299
      %p302 = scmp.ne.s32.totalorder %s285, %s301
      %p303 = scmp.eq.s32.totalorder %s36, 0
      %p304 = por %p302, %p303
      %p305 = scmp.le.s32.totalorder 1, %s30
      %p306 = scmp.lt.s32.totalorder %s30, 3
      %p307 = pnand %p305, %p306
      %p308 = pneg %p307
      // Predicated region
      $region9: #{tpu_custom_call.1} parent=5 // pred_check
        _
      $region10: #{tpu_custom_call.1} parent=5 // pred_check_branch
        %310 = sbr.rel (%p307) target = $region12
      $region11: #{tpu_custom_call.1} parent=5 // pred_region
        %s311 = ssub.s32 %s30, 1
        // Predicated region
        $region13: #{tpu_custom_call.1} parent=11 // pred_check
          %p312 = pneg %p103
        $region14: #{tpu_custom_call.1} parent=11 // pred_check_branch
          %314 = sbr.rel (%p312) target = $region16
        $region15: #{tpu_custom_call.1} parent=11 // pred_region
          %s316 = ssub.s32 256, 256
          %317 = vsyncadd [#allocation7], %s316
          %s318 = sshll.u32 [#allocation8], 4
          %s319 = int_to_ptr.vmem [resolvable:$true] %s318
          %324 = dma.hbm_to_vmem [thread:$0]  %s2, 256, %s319, [#allocation7], 64, 64, 4
        $region16: #{tpu_custom_call.1} parent=11 // pred_fallthru
          _
        // Predicated region
        $region17: #{tpu_custom_call.1} parent=11 // pred_check
          %p325 = pneg %p124
        $region18: #{tpu_custom_call.1} parent=11 // pred_check_branch
          %327 = sbr.rel (%p325) target = $region20
        $region19: #{tpu_custom_call.1} parent=11 // pred_region
          %s329 = ssub.s32 16, 16
          %330 = vsyncadd [#allocation10], %s329
          %s332 = sshll.u32 [#allocation9], 4
          %s333 = int_to_ptr.vmem [resolvable:$true] %s332
          %335 = dma.hbm_to_vmem [thread:$0]  %s3, 16, %s333, [#allocation10]
        $region20: #{tpu_custom_call.1} parent=11 // pred_fallthru
          _
        // Predicated region
        $region21: #{tpu_custom_call.1} parent=11 // pred_check
          %p336 = pneg %p145
        $region22: #{tpu_custom_call.1} parent=11 // pred_check_branch
          %338 = sbr.rel (%p336) target = $region24
        $region23: #{tpu_custom_call.1} parent=11 // pred_region
          %s340 = ssub.s32 16, 16
          %341 = vsyncadd [#allocation10], %s340
          %s343 = sshll.u32 [#allocation11], 4
          %s344 = int_to_ptr.vmem [resolvable:$true] %s343
          %346 = dma.hbm_to_vmem [thread:$0]  %s4, 16, %s344, [#allocation10]
        $region24: #{tpu_custom_call.1} parent=11 // pred_fallthru
          _
        // Predicated region
        $region25: #{tpu_custom_call.1} parent=11 // pred_check
          %p347 = pneg %p166
        $region26: #{tpu_custom_call.1} parent=11 // pred_check_branch
          %349 = sbr.rel (%p347) target = $region28
        $region27: #{tpu_custom_call.1} parent=11 // pred_region
          %s351 = ssub.s32 1152, 1152
          %352 = vsyncadd [#allocation13], %s351
          %s353 = sshll.u32 [#allocation12], 4
          %s354 = int_to_ptr.vmem [resolvable:$true] %s353
          %359 = dma.hbm_to_vmem [thread:$0]  %s5, 1152, %s354, [#allocation13], 64, 64, 4
        $region28: #{tpu_custom_call.1} parent=11 // pred_fallthru
          _
        // Predicated region
        $region29: #{tpu_custom_call.1} parent=11 // pred_check
          %p360 = pneg %p187
        $region30: #{tpu_custom_call.1} parent=11 // pred_check_branch
          %362 = sbr.rel (%p360) target = $region32
        $region31: #{tpu_custom_call.1} parent=11 // pred_region
          %s364 = ssub.s32 16, 16
          %365 = vsyncadd [#allocation13], %s364
          %s367 = sshll.u32 [#allocation14], 4
          %s368 = int_to_ptr.vmem [resolvable:$true] %s367
          %370 = dma.hbm_to_vmem [thread:$0]  %s6, 16, %s368, [#allocation13]
        $region32: #{tpu_custom_call.1} parent=11 // pred_fallthru
          _
        // Predicated region
        $region33: #{tpu_custom_call.1} parent=11 // pred_check
          %p371 = pneg %p208
        $region34: #{tpu_custom_call.1} parent=11 // pred_check_branch
          %373 = sbr.rel (%p371) target = $region36
        $region35: #{tpu_custom_call.1} parent=11 // pred_region
          %s375 = ssub.s32 16, 16
          %376 = vsyncadd [#allocation16], %s375
          %s378 = sshll.u32 [#allocation15], 4
          %s379 = int_to_ptr.vmem [resolvable:$true] %s378
          %381 = dma.hbm_to_vmem [thread:$0]  %s7, 16, %s379, [#allocation16]
        $region36: #{tpu_custom_call.1} parent=11 // pred_fallthru
          _
        // Predicated region
        $region37: #{tpu_custom_call.1} parent=11 // pred_check
          %p382 = pneg %p229
        $region38: #{tpu_custom_call.1} parent=11 // pred_check_branch
          %384 = sbr.rel (%p382) target = $region40
        $region39: #{tpu_custom_call.1} parent=11 // pred_region
          %s386 = ssub.s32 128, 128
          %387 = vsyncadd [#allocation16], %s386
          %s388 = sshll.u32 [#allocation17], 4
          %s389 = int_to_ptr.vmem [resolvable:$true] %s388
          %394 = dma.hbm_to_vmem [thread:$0]  %s8, 128, %s389, [#allocation16], 64, 64, 4
        $region40: #{tpu_custom_call.1} parent=11 // pred_fallthru
          _
        // Predicated region
        $region41: #{tpu_custom_call.1} parent=11 // pred_check
          %p395 = pneg %p250
        $region42: #{tpu_custom_call.1} parent=11 // pred_check_branch
          %397 = sbr.rel (%p395) target = $region44
        $region43: #{tpu_custom_call.1} parent=11 // pred_region
          %s399 = ssub.s32 16, 16
          %400 = vsyncadd [#allocation19], %s399
          %s402 = sshll.u32 [#allocation18], 4
          %s403 = int_to_ptr.vmem [resolvable:$true] %s402
          %405 = dma.hbm_to_vmem [thread:$0]  %s9, 16, %s403, [#allocation19]
        $region44: #{tpu_custom_call.1} parent=11 // pred_fallthru
          _
        // Predicated region
        $region45: #{tpu_custom_call.1} parent=11 // pred_check
          %p406 = pneg %p271
        $region46: #{tpu_custom_call.1} parent=11 // pred_check_branch
          %408 = sbr.rel (%p406) target = $region48
        $region47: #{tpu_custom_call.1} parent=11 // pred_region
          %s410 = ssub.s32 16, 16
          %411 = vsyncadd [#allocation19], %s410
          %s413 = sshll.u32 [#allocation20], 4
          %s414 = int_to_ptr.vmem [resolvable:$true] %s413
          %416 = dma.hbm_to_vmem [thread:$0]  %s10, 16, %s414, [#allocation19]
        $region48: #{tpu_custom_call.1} parent=11 // pred_fallthru
          _
      $region12: #{tpu_custom_call.1} parent=5 // pred_fallthru
        _
      %p417 = scmp.lt.s32.totalorder %s30, 2
      // Predicated region
      $region49: #{tpu_custom_call.1} parent=5 // pred_check
        %p418 = pneg %p417
      $region50: #{tpu_custom_call.1} parent=5 // pred_check_branch
        %420 = sbr.rel (%p418) target = $region52
      $region51: #{tpu_custom_call.1} parent=5 // pred_region
        // Predicated region
        $region53: #{tpu_custom_call.1} parent=51 // pred_check
          %p421 = pneg %p50
        $region54: #{tpu_custom_call.1} parent=51 // pred_check_branch
          %423 = sbr.rel (%p421) target = $region56
        $region55: #{tpu_custom_call.1} parent=51 // pred_region
          %s424 = sand.u32 %s40, 1
          %s425 = scalar_lea.sflag [#allocation4], %s424
          %s426 = sand.u32 %s40, 1
          %s427 = smul.addr %s426, 216
          %s428 = scalar_lea.vmem [#allocation3], %s427
          %s430 = ssub.s32 3456, 3456
          %431 = vsyncadd %s425, %s430
          %s432 = smul.addr %s30, 54
          %s433 = smul.addr %s432, 64
          %s434 = scalar_lea.hbm %s0, %s433
          %s435 = sshll.u32 %s428, 4
          %s436 = int_to_ptr.vmem [resolvable:$true] %s435
          %441 = dma.hbm_to_vmem [thread:$0]  %s434, 3456, %s436, %s425, 64, 64, 4
        $region56: #{tpu_custom_call.1} parent=51 // pred_fallthru
          _
        // Predicated region
        $region57: #{tpu_custom_call.1} parent=51 // pred_check
          %p442 = pneg %p76
        $region58: #{tpu_custom_call.1} parent=51 // pred_check_branch
          %444 = sbr.rel (%p442) target = $region60
        $region59: #{tpu_custom_call.1} parent=51 // pred_region
          %s445 = sand.u32 %s30, 1
          %s446 = scalar_lea.sflag [#allocation7], %s445
          %s447 = sand.u32 %s66, 1
          %s448 = smul.addr %s447, 384
          %s449 = scalar_lea.vmem [#allocation6], %s448
          %s451 = ssub.s32 6144, 6144
          %452 = vsyncadd %s446, %s451
          %s453 = smul.addr %s30, 48
          %s454 = smul.addr %s453, 128
          %s455 = scalar_lea.hbm %s1, %s454
          %s456 = sshll.u32 %s449, 4
          %s457 = int_to_ptr.vmem [resolvable:$true] %s456
          %462 = dma.hbm_to_vmem [thread:$0]  %s455, 6144, %s457, %s446, 128, 128, 8
        $region60: #{tpu_custom_call.1} parent=51 // pred_fallthru
          _
      $region52: #{tpu_custom_call.1} parent=5 // pred_fallthru
        _
      %p463 = scmp.le.s32.totalorder 1, %s30
      %p464 = scmp.lt.s32.totalorder %s30, 3
      %p465 = pnand %p463, %p464
      %p466 = pneg %p465
      // Predicated region
      $region61: #{tpu_custom_call.1} parent=5 // pred_check
        _
      $region62: #{tpu_custom_call.1} parent=5 // pred_check_branch
        %468 = sbr.rel (%p465) target = $region64
      $region63: #{tpu_custom_call.1} parent=5 // pred_region
        %s469 = ssub.s32 %s30, 1
        %s470 = sand.u32 %s43, 1
        %s471 = scalar_lea.sflag [#allocation4], %s470
        %s472 = sand.u32 %s43, 1
        %s473 = smul.addr %s472, 216
        %s474 = scalar_lea.vmem [#allocation3], %s473
        // Predicated region
        $region65: #{tpu_custom_call.1} parent=63 // pred_check
          %p475 = pneg %p56
        $region66: #{tpu_custom_call.1} parent=63 // pred_check_branch
          %477 = sbr.rel (%p475) target = $region68
        $region67: #{tpu_custom_call.1} parent=63 // pred_region
          %478 = dma.done %s471, 3456
        $region68: #{tpu_custom_call.1} parent=63 // pred_fallthru
          _
        %s479 = sand.u32 %s35, 1
        %s480 = scalar_lea.sflag [#allocation7], %s479
        %s481 = sand.u32 %s69, 1
        %s482 = smul.addr %s481, 384
        %s483 = scalar_lea.vmem [#allocation6], %s482
        // Predicated region
        $region69: #{tpu_custom_call.1} parent=63 // pred_check
          %p484 = pneg %p82
        $region70: #{tpu_custom_call.1} parent=63 // pred_check_branch
          %486 = sbr.rel (%p484) target = $region72
        $region71: #{tpu_custom_call.1} parent=63 // pred_region
          %487 = dma.done %s480, 6144
        $region72: #{tpu_custom_call.1} parent=63 // pred_fallthru
          _
        // Predicated region
        $region73: #{tpu_custom_call.1} parent=63 // pred_check
          %p488 = pneg %p103
        $region74: #{tpu_custom_call.1} parent=63 // pred_check_branch
          %490 = sbr.rel (%p488) target = $region76
        $region75: #{tpu_custom_call.1} parent=63 // pred_region
          %491 = dma.done [#allocation7], 256
        $region76: #{tpu_custom_call.1} parent=63 // pred_fallthru
          _
        // Predicated region
        $region77: #{tpu_custom_call.1} parent=63 // pred_check
          %p492 = pneg %p124
        $region78: #{tpu_custom_call.1} parent=63 // pred_check_branch
          %494 = sbr.rel (%p492) target = $region80
        $region79: #{tpu_custom_call.1} parent=63 // pred_region
          %495 = dma.done [#allocation10], 16
        $region80: #{tpu_custom_call.1} parent=63 // pred_fallthru
          _
        // Predicated region
        $region81: #{tpu_custom_call.1} parent=63 // pred_check
          %p496 = pneg %p145
        $region82: #{tpu_custom_call.1} parent=63 // pred_check_branch
          %498 = sbr.rel (%p496) target = $region84
        $region83: #{tpu_custom_call.1} parent=63 // pred_region
          %499 = dma.done [#allocation10], 16
        $region84: #{tpu_custom_call.1} parent=63 // pred_fallthru
          _
        // Predicated region
        $region85: #{tpu_custom_call.1} parent=63 // pred_check
          %p500 = pneg %p166
        $region86: #{tpu_custom_call.1} parent=63 // pred_check_branch
          %502 = sbr.rel (%p500) target = $region88
        $region87: #{tpu_custom_call.1} parent=63 // pred_region
          %503 = dma.done [#allocation13], 1152
        $region88: #{tpu_custom_call.1} parent=63 // pred_fallthru
          _
        // Predicated region
        $region89: #{tpu_custom_call.1} parent=63 // pred_check
          %p504 = pneg %p187
        $region90: #{tpu_custom_call.1} parent=63 // pred_check_branch
          %506 = sbr.rel (%p504) target = $region92
        $region91: #{tpu_custom_call.1} parent=63 // pred_region
          %507 = dma.done [#allocation13], 16
        $region92: #{tpu_custom_call.1} parent=63 // pred_fallthru
          _
        // Predicated region
        $region93: #{tpu_custom_call.1} parent=63 // pred_check
          %p508 = pneg %p208
        $region94: #{tpu_custom_call.1} parent=63 // pred_check_branch
          %510 = sbr.rel (%p508) target = $region96
        $region95: #{tpu_custom_call.1} parent=63 // pred_region
          %511 = dma.done [#allocation16], 16
        $region96: #{tpu_custom_call.1} parent=63 // pred_fallthru
          _
        // Predicated region
        $region97: #{tpu_custom_call.1} parent=63 // pred_check
          %p512 = pneg %p229
        $region98: #{tpu_custom_call.1} parent=63 // pred_check_branch
          %514 = sbr.rel (%p512) target = $region100
        $region99: #{tpu_custom_call.1} parent=63 // pred_region
          %515 = dma.done [#allocation16], 128
        $region100: #{tpu_custom_call.1} parent=63 // pred_fallthru
          _
        // Predicated region
        $region101: #{tpu_custom_call.1} parent=63 // pred_check
          %p516 = pneg %p250
        $region102: #{tpu_custom_call.1} parent=63 // pred_check_branch
          %518 = sbr.rel (%p516) target = $region104
        $region103: #{tpu_custom_call.1} parent=63 // pred_region
          %519 = dma.done [#allocation19], 16
        $region104: #{tpu_custom_call.1} parent=63 // pred_fallthru
          _
        // Predicated region
        $region105: #{tpu_custom_call.1} parent=63 // pred_check
          %p520 = pneg %p271
        $region106: #{tpu_custom_call.1} parent=63 // pred_check_branch
          %522 = sbr.rel (%p520) target = $region108
        $region107: #{tpu_custom_call.1} parent=63 // pred_region
          %523 = dma.done [#allocation19], 16
        $region108: #{tpu_custom_call.1} parent=63 // pred_fallthru
          _
        %s524 = sand.u32 %s43, 1
        %s525 = scalar_lea.sflag [#allocation4], %s524
        %s526 = sand.u32 %s43, 1
        %s527 = smul.addr %s526, 216
        %s528 = scalar_lea.vmem [#allocation3], %s527
        %p529 = pneg %p56
        %p530 = pneg %p53
        %s531 = sand.u32 %s35, 1
        %s532 = scalar_lea.sflag [#allocation7], %s531
        %s533 = sand.u32 %s69, 1
        %s534 = smul.addr %s533, 384
        %s535 = scalar_lea.vmem [#allocation6], %s534
        %p536 = pneg %p82
        %p537 = pneg %p79
        %p538 = pneg %p103
        %p539 = pneg %p100
        %p540 = pneg %p124
        %p541 = pneg %p121
        %p542 = pneg %p145
        %p543 = pneg %p142
        %p544 = pneg %p166
        %p545 = pneg %p163
        %p546 = pneg %p187
        %p547 = pneg %p184
        %p548 = pneg %p208
        %p549 = pneg %p205
        %p550 = pneg %p229
        %p551 = pneg %p226
        %p552 = pneg %p250
        %p553 = pneg %p247
        %p554 = pneg %p271
        %p555 = pneg %p268
        %p556 = pneg %p297
        %p557 = pneg %p294
        %s558 = sand.u32 %s284, 1
        %s559 = scalar_lea.sflag [#allocation5], %s558
        %s560 = sand.u32 %s284, 1
        %s561 = smul.addr %s560, 384
        %s562 = scalar_lea.vmem [#allocation21], %s561
        %v564 = vld [vmem:[%s474] sm:$0xf]
        %v565 = vld [vmem:[%s474 + $0x4] sm:$0xf]
        %v566 = vld [vmem:[%s474 + $0x8] sm:$0xf]
        %v567 = vld [vmem:[%s474 + $0xc] sm:$0xf]
        %v568 = vld [vmem:[%s474 + $0x10] sm:$0xf]
        %v569 = vld [vmem:[%s474 + $0x14] sm:$0xf]
        %v570 = vld [vmem:[%s474 + $0x18] sm:$0xf]
        %v571 = vld [vmem:[%s474 + $0x1c] sm:$0xf]
        %v572 = vld [vmem:[%s474 + $0x20] sm:$0xf]
        %v573 = vld [vmem:[%s474 + $0x24] sm:$0xf]
        %v574 = vld [vmem:[%s474 + $0x28] sm:$0xf]
        %v575 = vld [vmem:[%s474 + $0x2c] sm:$0xf]
        %v576 = vld [vmem:[%s474 + $0x30] sm:$0xf]
        %v577 = vld [vmem:[%s474 + $0x34] sm:$0xf]
        %v578 = vld [vmem:[%s474 + $0x38] sm:$0xf]
        %v579 = vld [vmem:[%s474 + $0x3c] sm:$0xf]
        %v580 = vld [vmem:[%s474 + $0x40] sm:$0xf]
        %v581 = vld [vmem:[%s474 + $0x44] sm:$0xf]
        %v582 = vld [vmem:[%s474 + $0x48] sm:$0xf]
        %v583 = vld [vmem:[%s474 + $0x4c] sm:$0xf]
        %v584 = vld [vmem:[%s474 + $0x50] sm:$0xf]
        %v585 = vld [vmem:[%s474 + $0x54] sm:$0xf]
        %v586 = vld [vmem:[%s474 + $0x58] sm:$0xf]
        %v587 = vld [vmem:[%s474 + $0x5c] sm:$0xf]
        %v588 = vld [vmem:[%s474 + $0x60] sm:$0xf]
        %v589 = vld [vmem:[%s474 + $0x64] sm:$0xf]
        %v590 = vld [vmem:[%s474 + $0x68] sm:$0xf]
        %v591 = vld [vmem:[%s474 + $0x6c] sm:$0xf]
        %v592 = vld [vmem:[%s474 + $0x70] sm:$0xf]
        %v593 = vld [vmem:[%s474 + $0x74] sm:$0xf]
        %v594 = vld [vmem:[%s474 + $0x78] sm:$0xf]
        %v595 = vld [vmem:[%s474 + $0x7c] sm:$0xf]
        %v596 = vld [vmem:[%s474 + $0x80] sm:$0xf]
        %v597 = vld [vmem:[%s474 + $0x84] sm:$0xf]
        %v598 = vld [vmem:[%s474 + $0x88] sm:$0xf]
        %v599 = vld [vmem:[%s474 + $0x8c] sm:$0xf]
        %v600 = vld [vmem:[%s474 + $0x90] sm:$0xf]
        %v601 = vld [vmem:[%s474 + $0x94] sm:$0xf]
        %v602 = vld [vmem:[%s474 + $0x98] sm:$0xf]
        %v603 = vld [vmem:[%s474 + $0x9c] sm:$0xf]
        %v604 = vld [vmem:[%s474 + $0xa0] sm:$0xf]
        %v605 = vld [vmem:[%s474 + $0xa4] sm:$0xf]
        %v606 = vld [vmem:[%s474 + $0xa8] sm:$0xf]
        %v607 = vld [vmem:[%s474 + $0xac] sm:$0xf]
        %v608 = vld [vmem:[%s474 + $0xb0] sm:$0xf]
        %v609 = vld [vmem:[%s474 + $0xb4] sm:$0xf]
        %v610 = vld [vmem:[%s474 + $0xb8] sm:$0xf]
        %v611 = vld [vmem:[%s474 + $0xbc] sm:$0xf]
        %v612 = vld [vmem:[%s474 + $0xc0] sm:$0xf]
        %v613 = vld [vmem:[%s474 + $0xc4] sm:$0xf]
        %v614 = vld [vmem:[%s474 + $0xc8] sm:$0xf]
        %v615 = vld [vmem:[%s474 + $0xcc] sm:$0xf]
        %v616 = vld [vmem:[%s474 + $0xd0] sm:$0xf]
        %v617 = vld [vmem:[%s474 + $0xd4] sm:$0xf]
        %v618 = vld [vmem:[#allocation8] sm:$0xf]
        %v619 = vld [vmem:[#allocation8 + $0x4] sm:$0xf]
        %v620 = vld [vmem:[#allocation8 + $0x8] sm:$0xf]
        %v621 = vld [vmem:[#allocation8 + $0xc] sm:$0xf]
        %v676 = vunpack.c.l.b16 %v564
        %v677 = vunpack.c.l.b16 %v565
        %v678 = vunpack.c.l.b16 %v566
        %v679 = vunpack.c.l.b16 %v567
        %v680 = vunpack.c.l.b16 %v568
        %v681 = vunpack.c.l.b16 %v569
        %v682 = vunpack.c.l.b16 %v570
        %v683 = vunpack.c.l.b16 %v571
        %v684 = vunpack.c.l.b16 %v572
        %v685 = vunpack.c.l.b16 %v573
        %v686 = vunpack.c.l.b16 %v574
        %v687 = vunpack.c.l.b16 %v575
        %v688 = vunpack.c.l.b16 %v576
        %v689 = vunpack.c.l.b16 %v577
        %v690 = vunpack.c.l.b16 %v578
        %v691 = vunpack.c.l.b16 %v579
        %v692 = vunpack.c.l.b16 %v580
        %v693 = vunpack.c.l.b16 %v581
        %v694 = vunpack.c.l.b16 %v582
        %v695 = vunpack.c.l.b16 %v583
        %v696 = vunpack.c.l.b16 %v584
        %v697 = vunpack.c.l.b16 %v585
        %v698 = vunpack.c.l.b16 %v586
        %v699 = vunpack.c.l.b16 %v587
        %v700 = vunpack.c.l.b16 %v588
        %v701 = vunpack.c.l.b16 %v589
        %v702 = vunpack.c.l.b16 %v590
        %v703 = vunpack.c.l.b16 %v591
        %v704 = vunpack.c.l.b16 %v592
        %v705 = vunpack.c.l.b16 %v593
        %v706 = vunpack.c.l.b16 %v594
        %v707 = vunpack.c.l.b16 %v595
        %v708 = vunpack.c.l.b16 %v596
        %v709 = vunpack.c.l.b16 %v597
        %v710 = vunpack.c.l.b16 %v598
        %v711 = vunpack.c.l.b16 %v599
        %v712 = vunpack.c.l.b16 %v600
        %v713 = vunpack.c.l.b16 %v601
        %v714 = vunpack.c.l.b16 %v602
        %v715 = vunpack.c.l.b16 %v603
        %v716 = vunpack.c.l.b16 %v604
        %v717 = vunpack.c.l.b16 %v605
        %v718 = vunpack.c.l.b16 %v606
        %v719 = vunpack.c.l.b16 %v607
        %v720 = vunpack.c.l.b16 %v608
        %v721 = vunpack.c.l.b16 %v609
        %v722 = vunpack.c.l.b16 %v610
        %v723 = vunpack.c.l.b16 %v611
        %v724 = vunpack.c.l.b16 %v612
        %v725 = vunpack.c.l.b16 %v613
        %v726 = vunpack.c.l.b16 %v614
        %v727 = vunpack.c.l.b16 %v615
        %v728 = vunpack.c.l.b16 %v616
        %v729 = vunpack.c.l.b16 %v617
        %v730 = vpack.c.b16 %v677, %v676
        %v731 = vpack.c.b16 %v679, %v678
        %v732 = vpack.c.b16 %v681, %v680
        %v733 = vpack.c.b16 %v683, %v682
        %v734 = vpack.c.b16 %v685, %v684
        %v735 = vpack.c.b16 %v687, %v686
        %v736 = vpack.c.b16 %v689, %v688
        %v737 = vpack.c.b16 %v691, %v690
        %v738 = vpack.c.b16 %v693, %v692
        %v739 = vpack.c.b16 %v695, %v694
        %v740 = vpack.c.b16 %v697, %v696
        %v741 = vpack.c.b16 %v699, %v698
        %v742 = vpack.c.b16 %v701, %v700
        %v743 = vpack.c.b16 %v703, %v702
        %v744 = vpack.c.b16 %v705, %v704
        %v745 = vpack.c.b16 %v707, %v706
        %v746 = vpack.c.b16 %v709, %v708
        %v747 = vpack.c.b16 %v711, %v710
        %v748 = vpack.c.b16 %v713, %v712
        %v749 = vpack.c.b16 %v715, %v714
        %v750 = vpack.c.b16 %v717, %v716
        %v751 = vpack.c.b16 %v719, %v718
        %v752 = vpack.c.b16 %v721, %v720
        %v753 = vpack.c.b16 %v723, %v722
        %v754 = vpack.c.b16 %v725, %v724
        %v755 = vpack.c.b16 %v727, %v726
        %v756 = vpack.c.b16 %v729, %v728
        %v761 = vunpack.c.l.b16 %v618
        %v762 = vunpack.c.l.b16 %v619
        %v763 = vunpack.c.l.b16 %v620
        %v764 = vunpack.c.l.b16 %v621
        %v765 = vpack.c.b16 %v762, %v761
        %v766 = vpack.c.b16 %v764, %v763
        %vm769 = vcmask 261120
        %v771 = vsel %vm769, %v730, 0
        %v774 = vsel %vm769, %v731, 0
        %v777 = vsel %vm769, %v732, 0
        %v780 = vsel %vm769, %v733, 0
        %v783 = vsel %vm769, %v734, 0
        %v786 = vsel %vm769, %v735, 0
        %v789 = vsel %vm769, %v736, 0
        %v792 = vsel %vm769, %v737, 0
        %v795 = vsel %vm769, %v738, 0
        %v798 = vsel %vm769, %v739, 0
        %v801 = vsel %vm769, %v740, 0
        %v804 = vsel %vm769, %v741, 0
        %v807 = vsel %vm769, %v742, 0
        %v810 = vsel %vm769, %v743, 0
        %v813 = vsel %vm769, %v744, 0
        %v816 = vsel %vm769, %v745, 0
        %v819 = vsel %vm769, %v746, 0
        %v822 = vsel %vm769, %v747, 0
        %v825 = vsel %vm769, %v748, 0
        %v828 = vsel %vm769, %v749, 0
        %v831 = vsel %vm769, %v750, 0
        %v834 = vsel %vm769, %v751, 0
        %v837 = vsel %vm769, %v752, 0
        %v840 = vsel %vm769, %v753, 0
        %v843 = vsel %vm769, %v754, 0
        %v846 = vsel %vm769, %v755, 0
        %v849 = vsel %vm769, %v756, 0
        %851 = vmatprep.subr.bf16.mxu0 0
        %852 = vmatpush1.bf16.msra.mxu0 %v765
        %853 = vmatprep.subr.bf16.mxu0 0
        %854 = vmatpush1.bf16.msra.mxu0 %v766
        %855 = vmatprep.subr.bf16.mxu0 0
        %856 = vmatpush1.bf16.msra.mxu0 0
        %857 = vmatprep.subr.bf16.mxu0 0
        %858 = vmatpush1.bf16.msra.mxu0 0
        %859 = vmatprep.subr.bf16.mxu0 0
        %860 = vmatpush1.bf16.msra.mxu0 0
        %861 = vmatprep.subr.bf16.mxu0 0
        %862 = vmatpush1.bf16.msra.mxu0 0
        %863 = vmatprep.subr.bf16.mxu0 0
        %864 = vmatpush1.bf16.msra.mxu0 0
        %865 = vmatprep.subr.bf16.mxu0 0
        %866 = vmatpush1.bf16.msra.mxu0 0
        %867 = vmatprep.subr.bf16.mxu0 0
        %868 = vmatpush1.bf16.msra.mxu0 0
        %869 = vmatprep.subr.bf16.mxu0 0
        %870 = vmatpush1.bf16.msra.mxu0 0
        %871 = vmatprep.subr.bf16.mxu0 0
        %872 = vmatpush1.bf16.msra.mxu0 0
        %873 = vmatprep.subr.bf16.mxu0 0
        %874 = vmatpush1.bf16.msra.mxu0 0
        %875 = vmatprep.subr.bf16.mxu0 0
        %876 = vmatpush1.bf16.msra.mxu0 0
        %877 = vmatprep.subr.bf16.mxu0 0
        %878 = vmatpush1.bf16.msra.mxu0 0
        %879 = vmatprep.subr.bf16.mxu0 0
        %880 = vmatpush1.bf16.msra.mxu0 0
        %881 = vmatprep.subr.bf16.mxu0 0
        %882 = vmatpush1.bf16.msra.mxu0 0
        %883 = vmatprep.mubr.bf16.mxu0 0
        %884 = vmatmul.mubr.bf16.gmra.mrb[0].mxu0 %v771
        %v885 = vpop.f32.mrb[0].mxu0
        %v886 = vadd.f32 0.0, %v885
        %v887 = vpop.f32.mrb[0].mxu0
        %v888 = vpop.f32.mrb[0].mxu0
        %v889 = vadd.f32 0.0, %v888
        %v890 = vpop.f32.mrb[0].mxu0
        %891 = vmatprep.mubr.bf16.mxu0 0
        %892 = vmatmul.mubr.bf16.gmra.mrb[0].mxu0 %v774
        %v893 = vpop.f32.mrb[0].mxu0
        %v894 = vadd.f32 0.0, %v893
        %v895 = vpop.f32.mrb[0].mxu0
        %v896 = vpop.f32.mrb[0].mxu0
        %v897 = vadd.f32 0.0, %v896
        %v898 = vpop.f32.mrb[0].mxu0
        %899 = vmatprep.mubr.bf16.mxu0 0
        %900 = vmatmul.mubr.bf16.gmra.mrb[0].mxu0 %v777
        %v901 = vpop.f32.mrb[0].mxu0
        %v902 = vadd.f32 0.0, %v901
        %v903 = vpop.f32.mrb[0].mxu0
        %v904 = vpop.f32.mrb[0].mxu0
        %v905 = vadd.f32 0.0, %v904
        %v906 = vpop.f32.mrb[0].mxu0
        %907 = vmatprep.mubr.bf16.mxu0 0
        %908 = vmatmul.mubr.bf16.gmra.mrb[0].mxu0 %v780
        %v909 = vpop.f32.mrb[0].mxu0
        %v910 = vadd.f32 0.0, %v909
        %v911 = vpop.f32.mrb[0].mxu0
        %v912 = vpop.f32.mrb[0].mxu0
        %v913 = vadd.f32 0.0, %v912
        %v914 = vpop.f32.mrb[0].mxu0
        %915 = vmatprep.mubr.bf16.mxu0 0
        %916 = vmatmul.mubr.bf16.gmra.mrb[0].mxu0 %v783
        %v917 = vpop.f32.mrb[0].mxu0
        %v918 = vadd.f32 0.0, %v917
        %v919 = vpop.f32.mrb[0].mxu0
        %v920 = vpop.f32.mrb[0].mxu0
        %v921 = vadd.f32 0.0, %v920
        %v922 = vpop.f32.mrb[0].mxu0
        %923 = vmatprep.mubr.bf16.mxu0 0
        %924 = vmatmul.mubr.bf16.gmra.mrb[0].mxu0 %v786
        %v925 = vpop.f32.mrb[0].mxu0
        %v926 = vadd.f32 0.0, %v925
        %v927 = vpop.f32.mrb[0].mxu0
        %v928 = vpop.f32.mrb[0].mxu0
        %v929 = vadd.f32 0.0, %v928
        %v930 = vpop.f32.mrb[0].mxu0
        %931 = vmatprep.mubr.bf16.mxu0 0
        %932 = vmatmul.mubr.bf16.gmra.mrb[0].mxu0 %v789
        %v933 = vpop.f32.mrb[0].mxu0
        %v934 = vadd.f32 0.0, %v933
        %v935 = vpop.f32.mrb[0].mxu0
        %v936 = vpop.f32.mrb[0].mxu0
        %v937 = vadd.f32 0.0, %v936
        %v938 = vpop.f32.mrb[0].mxu0
        %939 = vmatprep.mubr.bf16.mxu0 0
        %940 = vmatmul.mubr.bf16.gmra.mrb[0].mxu0 %v792
        %v941 = vpop.f32.mrb[0].mxu0
        %v942 = vadd.f32 0.0, %v941
        %v943 = vpop.f32.mrb[0].mxu0
        %v944 = vpop.f32.mrb[0].mxu0
        %v945 = vadd.f32 0.0, %v944
        %v946 = vpop.f32.mrb[0].mxu0
        %947 = vmatprep.mubr.bf16.mxu0 0
        %948 = vmatmul.mubr.bf16.gmra.mrb[0].mxu0 %v795
        %v949 = vpop.f32.mrb[0].mxu0
        %v950 = vadd.f32 0.0, %v949
        %v951 = vpop.f32.mrb[0].mxu0
        %v952 = vpop.f32.mrb[0].mxu0
        %v953 = vadd.f32 0.0, %v952
        %v954 = vpop.f32.mrb[0].mxu0
        %955 = vmatprep.mubr.bf16.mxu0 0
        %956 = vmatmul.mubr.bf16.gmra.mrb[0].mxu0 %v798
        %v957 = vpop.f32.mrb[0].mxu0
        %v958 = vadd.f32 0.0, %v957
        %v959 = vpop.f32.mrb[0].mxu0
        %v960 = vpop.f32.mrb[0].mxu0
        %v961 = vadd.f32 0.0, %v960
        %v962 = vpop.f32.mrb[0].mxu0
        %963 = vmatprep.mubr.bf16.mxu0 0
        %964 = vmatmul.mubr.bf16.gmra.mrb[0].mxu0 %v801
        %v965 = vpop.f32.mrb[0].mxu0
        %v966 = vadd.f32 0.0, %v965
        %v967 = vpop.f32.mrb[0].mxu0
        %v968 = vpop.f32.mrb[0].mxu0
        %v969 = vadd.f32 0.0, %v968
        %v970 = vpop.f32.mrb[0].mxu0
        %971 = vmatprep.mubr.bf16.mxu0 0
        %972 = vmatmul.mubr.bf16.gmra.mrb[0].mxu0 %v804
        %v973 = vpop.f32.mrb[0].mxu0
        %v974 = vadd.f32 0.0, %v973
        %v975 = vpop.f32.mrb[0].mxu0
        %v976 = vpop.f32.mrb[0].mxu0
        %v977 = vadd.f32 0.0, %v976
        %v978 = vpop.f32.mrb[0].mxu0
        %979 = vmatprep.mubr.bf16.mxu0 0
        %980 = vmatmul.mubr.bf16.gmra.mrb[0].mxu0 %v807
        %v981 = vpop.f32.mrb[0].mxu0
        %v982 = vadd.f32 0.0, %v981
        %v983 = vpop.f32.mrb[0].mxu0
        %v984 = vpop.f32.mrb[0].mxu0
        %v985 = vadd.f32 0.0, %v984
        %v986 = vpop.f32.mrb[0].mxu0
        %987 = vmatprep.mubr.bf16.mxu0 0
        %988 = vmatmul.mubr.bf16.gmra.mrb[0].mxu0 %v810
        %v989 = vpop.f32.mrb[0].mxu0
        %v990 = vadd.f32 0.0, %v989
        %v991 = vpop.f32.mrb[0].mxu0
        %v992 = vpop.f32.mrb[0].mxu0
        %v993 = vadd.f32 0.0, %v992
        %v994 = vpop.f32.mrb[0].mxu0
        %995 = vmatprep.mubr.bf16.mxu0 0
        %996 = vmatmul.mubr.bf16.gmra.mrb[0].mxu0 %v813
        %v997 = vpop.f32.mrb[0].mxu0
        %v998 = vadd.f32 0.0, %v997
        %v999 = vpop.f32.mrb[0].mxu0
        %v1000 = vpop.f32.mrb[0].mxu0
        %v1001 = vadd.f32 0.0, %v1000
        %v1002 = vpop.f32.mrb[0].mxu0
        %1003 = vmatprep.mubr.bf16.mxu0 0
        %1004 = vmatmul.mubr.bf16.gmra.mrb[0].mxu0 %v816
        %v1005 = vpop.f32.mrb[0].mxu0
        %v1006 = vadd.f32 0.0, %v1005
        %v1007 = vpop.f32.mrb[0].mxu0
        %v1008 = vpop.f32.mrb[0].mxu0
        %v1009 = vadd.f32 0.0, %v1008
        %v1010 = vpop.f32.mrb[0].mxu0
        %1011 = vmatprep.mubr.bf16.mxu0 0
        %1012 = vmatmul.mubr.bf16.gmra.mrb[0].mxu0 %v819
        %v1013 = vpop.f32.mrb[0].mxu0
        %v1014 = vadd.f32 0.0, %v1013
        %v1015 = vpop.f32.mrb[0].mxu0
        %v1016 = vpop.f32.mrb[0].mxu0
        %v1017 = vadd.f32 0.0, %v1016
        %v1018 = vpop.f32.mrb[0].mxu0
        %1019 = vmatprep.mubr.bf16.mxu0 0
        %1020 = vmatmul.mubr.bf16.gmra.mrb[0].mxu0 %v822
        %v1021 = vpop.f32.mrb[0].mxu0
        %v1022 = vadd.f32 0.0, %v1021
        %v1023 = vpop.f32.mrb[0].mxu0
        %v1024 = vpop.f32.mrb[0].mxu0
        %v1025 = vadd.f32 0.0, %v1024
        %v1026 = vpop.f32.mrb[0].mxu0
        %1027 = vmatprep.mubr.bf16.mxu0 0
        %1028 = vmatmul.mubr.bf16.gmra.mrb[0].mxu0 %v825
        %v1029 = vpop.f32.mrb[0].mxu0
        %v1030 = vadd.f32 0.0, %v1029
        %v1031 = vpop.f32.mrb[0].mxu0
        %v1032 = vpop.f32.mrb[0].mxu0
        %v1033 = vadd.f32 0.0, %v1032
        %v1034 = vpop.f32.mrb[0].mxu0
        %1035 = vmatprep.mubr.bf16.mxu0 0
        %1036 = vmatmul.mubr.bf16.gmra.mrb[0].mxu0 %v828
        %v1037 = vpop.f32.mrb[0].mxu0
        %v1038 = vadd.f32 0.0, %v1037
        %v1039 = vpop.f32.mrb[0].mxu0
        %v1040 = vpop.f32.mrb[0].mxu0
        %v1041 = vadd.f32 0.0, %v1040
        %v1042 = vpop.f32.mrb[0].mxu0
        %1043 = vmatprep.mubr.bf16.mxu0 0
        %1044 = vmatmul.mubr.bf16.gmra.mrb[0].mxu0 %v831
        %v1045 = vpop.f32.mrb[0].mxu0
        %v1046 = vadd.f32 0.0, %v1045
        %v1047 = vpop.f32.mrb[0].mxu0
        %v1048 = vpop.f32.mrb[0].mxu0
        %v1049 = vadd.f32 0.0, %v1048
        %v1050 = vpop.f32.mrb[0].mxu0
        %1051 = vmatprep.mubr.bf16.mxu0 0
        %1052 = vmatmul.mubr.bf16.gmra.mrb[0].mxu0 %v834
        %v1053 = vpop.f32.mrb[0].mxu0
        %v1054 = vadd.f32 0.0, %v1053
        %v1055 = vpop.f32.mrb[0].mxu0
        %v1056 = vpop.f32.mrb[0].mxu0
        %v1057 = vadd.f32 0.0, %v1056
        %v1058 = vpop.f32.mrb[0].mxu0
        %1059 = vmatprep.mubr.bf16.mxu0 0
        %1060 = vmatmul.mubr.bf16.gmra.mrb[0].mxu0 %v837
        %v1061 = vpop.f32.mrb[0].mxu0
        %v1062 = vadd.f32 0.0, %v1061
        %v1063 = vpop.f32.mrb[0].mxu0
        %v1064 = vpop.f32.mrb[0].mxu0
        %v1065 = vadd.f32 0.0, %v1064
        %v1066 = vpop.f32.mrb[0].mxu0
        %1067 = vmatprep.mubr.bf16.mxu0 0
        %1068 = vmatmul.mubr.bf16.gmra.mrb[0].mxu0 %v840
        %v1069 = vpop.f32.mrb[0].mxu0
        %v1070 = vadd.f32 0.0, %v1069
        %v1071 = vpop.f32.mrb[0].mxu0
        %v1072 = vpop.f32.mrb[0].mxu0
        %v1073 = vadd.f32 0.0, %v1072
        %v1074 = vpop.f32.mrb[0].mxu0
        %1075 = vmatprep.mubr.bf16.mxu0 0
        %1076 = vmatmul.mubr.bf16.gmra.mrb[0].mxu0 %v843
        %v1077 = vpop.f32.mrb[0].mxu0
        %v1078 = vadd.f32 0.0, %v1077
        %v1079 = vpop.f32.mrb[0].mxu0
        %v1080 = vpop.f32.mrb[0].mxu0
        %v1081 = vadd.f32 0.0, %v1080
        %v1082 = vpop.f32.mrb[0].mxu0
        %1083 = vmatprep.mubr.bf16.mxu0 0
        %1084 = vmatmul.mubr.bf16.gmra.mrb[0].mxu0 %v846
        %v1085 = vpop.f32.mrb[0].mxu0
        %v1086 = vadd.f32 0.0, %v1085
        %v1087 = vpop.f32.mrb[0].mxu0
        %v1088 = vpop.f32.mrb[0].mxu0
        %v1089 = vadd.f32 0.0, %v1088
        %v1090 = vpop.f32.mrb[0].mxu0
        %1091 = vmatprep.mubr.bf16.mxu0 0
        %1092 = vmatmul.mubr.bf16.gmra.mrb[0].mxu0 %v849
        %v1093 = vpop.f32.mrb[0].mxu0
        %v1094 = vadd.f32 0.0, %v1093
        %v1095 = vpop.f32.mrb[0].mxu0
        %v1096 = vpop.f32.mrb[0].mxu0
        %v1097 = vadd.f32 0.0, %v1096
        %v1098 = vpop.f32.mrb[0].mxu0
        %1099 = vdwg.mxu0
        %v1100 = vld [vmem:[#allocation9] sm:$0x1]
        %v1102 = vlaneseq
        %v1103 = vshrl.u32 %v1102, 7
        %v1104 = vsub.s32 0, %v1103
        %v1105 = vrot.slane %v1100, %v1104
        %v1107 = vmul.f32 %v886, %v1105
        %v1108 = vmul.f32 %v889, %v1105
        %v1109 = vmul.f32 %v894, %v1105
        %v1110 = vmul.f32 %v897, %v1105
        %v1111 = vmul.f32 %v902, %v1105
        %v1112 = vmul.f32 %v905, %v1105
        %v1113 = vmul.f32 %v910, %v1105
        %v1114 = vmul.f32 %v913, %v1105
        %v1115 = vmul.f32 %v918, %v1105
        %v1116 = vmul.f32 %v921, %v1105
        %v1117 = vmul.f32 %v926, %v1105
        %v1118 = vmul.f32 %v929, %v1105
        %v1119 = vmul.f32 %v934, %v1105
        %v1120 = vmul.f32 %v937, %v1105
        %v1121 = vmul.f32 %v942, %v1105
        %v1122 = vmul.f32 %v945, %v1105
        %v1123 = vmul.f32 %v950, %v1105
        %v1124 = vmul.f32 %v953, %v1105
        %v1125 = vmul.f32 %v958, %v1105
        %v1126 = vmul.f32 %v961, %v1105
        %v1127 = vmul.f32 %v966, %v1105
        %v1128 = vmul.f32 %v969, %v1105
        %v1129 = vmul.f32 %v974, %v1105
        %v1130 = vmul.f32 %v977, %v1105
        %v1131 = vmul.f32 %v982, %v1105
        %v1132 = vmul.f32 %v985, %v1105
        %v1133 = vmul.f32 %v990, %v1105
        %v1134 = vmul.f32 %v993, %v1105
        %v1135 = vmul.f32 %v998, %v1105
        %v1136 = vmul.f32 %v1001, %v1105
        %v1137 = vmul.f32 %v1006, %v1105
        %v1138 = vmul.f32 %v1009, %v1105
        %v1139 = vmul.f32 %v1014, %v1105
        %v1140 = vmul.f32 %v1017, %v1105
        %v1141 = vmul.f32 %v1022, %v1105
        %v1142 = vmul.f32 %v1025, %v1105
        %v1143 = vmul.f32 %v1030, %v1105
        %v1144 = vmul.f32 %v1033, %v1105
        %v1145 = vmul.f32 %v1038, %v1105
        %v1146 = vmul.f32 %v1041, %v1105
        %v1147 = vmul.f32 %v1046, %v1105
        %v1148 = vmul.f32 %v1049, %v1105
        %v1149 = vmul.f32 %v1054, %v1105
        %v1150 = vmul.f32 %v1057, %v1105
        %v1151 = vmul.f32 %v1062, %v1105
        %v1152 = vmul.f32 %v1065, %v1105
        %v1153 = vmul.f32 %v1070, %v1105
        %v1154 = vmul.f32 %v1073, %v1105
        %v1155 = vmul.f32 %v1078, %v1105
        %v1156 = vmul.f32 %v1081, %v1105
        %v1157 = vmul.f32 %v1086, %v1105
        %v1158 = vmul.f32 %v1089, %v1105
        %v1159 = vmul.f32 %v1094, %v1105
        %v1160 = vmul.f32 %v1097, %v1105
        %v1161 = vld [vmem:[#allocation11] sm:$0x1]
        %v1163 = vlaneseq
        %v1164 = vshrl.u32 %v1163, 7
        %v1165 = vsub.s32 0, %v1164
        %v1166 = vrot.slane %v1161, %v1165
        %v1168 = vadd.f32 %v1107, %v1166
        %v1169 = vadd.f32 %v1108, %v1166
        %v1170 = vadd.f32 %v1109, %v1166
        %v1171 = vadd.f32 %v1110, %v1166
        %v1172 = vadd.f32 %v1111, %v1166
        %v1173 = vadd.f32 %v1112, %v1166
        %v1174 = vadd.f32 %v1113, %v1166
        %v1175 = vadd.f32 %v1114, %v1166
        %v1176 = vadd.f32 %v1115, %v1166
        %v1177 = vadd.f32 %v1116, %v1166
        %v1178 = vadd.f32 %v1117, %v1166
        %v1179 = vadd.f32 %v1118, %v1166
        %v1180 = vadd.f32 %v1119, %v1166
        %v1181 = vadd.f32 %v1120, %v1166
        %v1182 = vadd.f32 %v1121, %v1166
        %v1183 = vadd.f32 %v1122, %v1166
        %v1184 = vadd.f32 %v1123, %v1166
        %v1185 = vadd.f32 %v1124, %v1166
        %v1186 = vadd.f32 %v1125, %v1166
        %v1187 = vadd.f32 %v1126, %v1166
        %v1188 = vadd.f32 %v1127, %v1166
        %v1189 = vadd.f32 %v1128, %v1166
        %v1190 = vadd.f32 %v1129, %v1166
        %v1191 = vadd.f32 %v1130, %v1166
        %v1192 = vadd.f32 %v1131, %v1166
        %v1193 = vadd.f32 %v1132, %v1166
        %v1194 = vadd.f32 %v1133, %v1166
        %v1195 = vadd.f32 %v1134, %v1166
        %v1196 = vadd.f32 %v1135, %v1166
        %v1197 = vadd.f32 %v1136, %v1166
        %v1198 = vadd.f32 %v1137, %v1166
        %v1199 = vadd.f32 %v1138, %v1166
        %v1200 = vadd.f32 %v1139, %v1166
        %v1201 = vadd.f32 %v1140, %v1166
        %v1202 = vadd.f32 %v1141, %v1166
        %v1203 = vadd.f32 %v1142, %v1166
        %v1204 = vadd.f32 %v1143, %v1166
        %v1205 = vadd.f32 %v1144, %v1166
        %v1206 = vadd.f32 %v1145, %v1166
        %v1207 = vadd.f32 %v1146, %v1166
        %v1208 = vadd.f32 %v1147, %v1166
        %v1209 = vadd.f32 %v1148, %v1166
        %v1210 = vadd.f32 %v1149, %v1166
        %v1211 = vadd.f32 %v1150, %v1166
        %v1212 = vadd.f32 %v1151, %v1166
        %v1213 = vadd.f32 %v1152, %v1166
        %v1214 = vadd.f32 %v1153, %v1166
        %v1215 = vadd.f32 %v1154, %v1166
        %v1216 = vadd.f32 %v1155, %v1166
        %v1217 = vadd.f32 %v1156, %v1166
        %v1218 = vadd.f32 %v1157, %v1166
        %v1219 = vadd.f32 %v1158, %v1166
        %v1220 = vadd.f32 %v1159, %v1166
        %v1221 = vadd.f32 %v1160, %v1166
        %v1222 = vmax.f32 %v1168, 0.0
        %v1223 = vmax.f32 %v1169, 0.0
        %v1224 = vmax.f32 %v1170, 0.0
        %v1225 = vmax.f32 %v1171, 0.0
        %v1226 = vmax.f32 %v1172, 0.0
        %v1227 = vmax.f32 %v1173, 0.0
        %v1228 = vmax.f32 %v1174, 0.0
        %v1229 = vmax.f32 %v1175, 0.0
        %v1230 = vmax.f32 %v1176, 0.0
        %v1231 = vmax.f32 %v1177, 0.0
        %v1232 = vmax.f32 %v1178, 0.0
        %v1233 = vmax.f32 %v1179, 0.0
        %v1234 = vmax.f32 %v1180, 0.0
        %v1235 = vmax.f32 %v1181, 0.0
        %v1236 = vmax.f32 %v1182, 0.0
        %v1237 = vmax.f32 %v1183, 0.0
        %v1238 = vmax.f32 %v1184, 0.0
        %v1239 = vmax.f32 %v1185, 0.0
        %v1240 = vmax.f32 %v1186, 0.0
        %v1241 = vmax.f32 %v1187, 0.0
        %v1242 = vmax.f32 %v1188, 0.0
        %v1243 = vmax.f32 %v1189, 0.0
        %v1244 = vmax.f32 %v1190, 0.0
        %v1245 = vmax.f32 %v1191, 0.0
        %v1246 = vmax.f32 %v1192, 0.0
        %v1247 = vmax.f32 %v1193, 0.0
        %v1248 = vmax.f32 %v1194, 0.0
        %v1249 = vmax.f32 %v1195, 0.0
        %v1250 = vmax.f32 %v1196, 0.0
        %v1251 = vmax.f32 %v1197, 0.0
        %v1252 = vmax.f32 %v1198, 0.0
        %v1253 = vmax.f32 %v1199, 0.0
        %v1254 = vmax.f32 %v1200, 0.0
        %v1255 = vmax.f32 %v1201, 0.0
        %v1256 = vmax.f32 %v1202, 0.0
        %v1257 = vmax.f32 %v1203, 0.0
        %v1258 = vmax.f32 %v1204, 0.0
        %v1259 = vmax.f32 %v1205, 0.0
        %v1260 = vmax.f32 %v1206, 0.0
        %v1261 = vmax.f32 %v1207, 0.0
        %v1262 = vmax.f32 %v1208, 0.0
        %v1263 = vmax.f32 %v1209, 0.0
        %v1264 = vmax.f32 %v1210, 0.0
        %v1265 = vmax.f32 %v1211, 0.0
        %v1266 = vmax.f32 %v1212, 0.0
        %v1267 = vmax.f32 %v1213, 0.0
        %v1268 = vmax.f32 %v1214, 0.0
        %v1269 = vmax.f32 %v1215, 0.0
        %v1270 = vmax.f32 %v1216, 0.0
        %v1271 = vmax.f32 %v1217, 0.0
        %v1272 = vmax.f32 %v1218, 0.0
        %v1273 = vmax.f32 %v1219, 0.0
        %v1274 = vmax.f32 %v1220, 0.0
        %v1275 = vmax.f32 %v1221, 0.0
        %v1276 = vpack.c.bf16 %v1223, %v1222
        %v1277 = vpack.c.bf16 %v1225, %v1224
        %v1278 = vpack.c.bf16 %v1227, %v1226
        %v1279 = vpack.c.bf16 %v1229, %v1228
        %v1280 = vpack.c.bf16 %v1231, %v1230
        %v1281 = vpack.c.bf16 %v1233, %v1232
        %v1282 = vpack.c.bf16 %v1235, %v1234
        %v1283 = vpack.c.bf16 %v1237, %v1236
        %v1284 = vpack.c.bf16 %v1239, %v1238
        %v1285 = vpack.c.bf16 %v1241, %v1240
        %v1286 = vpack.c.bf16 %v1243, %v1242
        %v1287 = vpack.c.bf16 %v1245, %v1244
        %v1288 = vpack.c.bf16 %v1247, %v1246
        %v1289 = vpack.c.bf16 %v1249, %v1248
        %v1290 = vpack.c.bf16 %v1251, %v1250
        %v1291 = vpack.c.bf16 %v1253, %v1252
        %v1292 = vpack.c.bf16 %v1255, %v1254
        %v1293 = vpack.c.bf16 %v1257, %v1256
        %v1294 = vpack.c.bf16 %v1259, %v1258
        %v1295 = vpack.c.bf16 %v1261, %v1260
        %v1296 = vpack.c.bf16 %v1263, %v1262
        %v1297 = vpack.c.bf16 %v1265, %v1264
        %v1298 = vpack.c.bf16 %v1267, %v1266
        %v1299 = vpack.c.bf16 %v1269, %v1268
        %v1300 = vpack.c.bf16 %v1271, %v1270
        %v1301 = vpack.c.bf16 %v1273, %v1272
        %v1302 = vpack.c.bf16 %v1275, %v1274
        %v1330 = vunpack.c.l.b16 %v1276
        %v1331 = vunpack.c.h.b16 %v1276
        %v1332 = vunpack.c.l.b16 %v1277
        %v1333 = vunpack.c.h.b16 %v1277
        %v1334 = vunpack.c.l.b16 %v1278
        %v1335 = vunpack.c.h.b16 %v1278
        %v1336 = vunpack.c.l.b16 %v1279
        %v1337 = vunpack.c.h.b16 %v1279
        %v1338 = vunpack.c.l.b16 %v1280
        %v1339 = vunpack.c.h.b16 %v1280
        %v1340 = vunpack.c.l.b16 %v1281
        %v1341 = vunpack.c.h.b16 %v1281
        %v1342 = vunpack.c.l.b16 %v1282
        %v1343 = vunpack.c.h.b16 %v1282
        %v1344 = vunpack.c.l.b16 %v1283
        %v1345 = vunpack.c.h.b16 %v1283
        %v1346 = vunpack.c.l.b16 %v1284
        %v1347 = vunpack.c.h.b16 %v1284
        %v1348 = vunpack.c.l.b16 %v1285
        %v1349 = vunpack.c.h.b16 %v1285
        %v1350 = vunpack.c.l.b16 %v1286
        %v1351 = vunpack.c.h.b16 %v1286
        %v1352 = vunpack.c.l.b16 %v1287
        %v1353 = vunpack.c.h.b16 %v1287
        %v1354 = vunpack.c.l.b16 %v1288
        %v1355 = vunpack.c.h.b16 %v1288
        %v1356 = vunpack.c.l.b16 %v1289
        %v1357 = vunpack.c.h.b16 %v1289
        %v1358 = vunpack.c.l.b16 %v1290
        %v1359 = vunpack.c.h.b16 %v1290
        %v1360 = vunpack.c.l.b16 %v1291
        %v1361 = vunpack.c.h.b16 %v1291
        %v1362 = vunpack.c.l.b16 %v1292
        %v1363 = vunpack.c.h.b16 %v1292
        %v1364 = vunpack.c.l.b16 %v1293
        %v1365 = vunpack.c.h.b16 %v1293
        %v1366 = vunpack.c.l.b16 %v1294
        %v1367 = vunpack.c.h.b16 %v1294
        %v1368 = vunpack.c.l.b16 %v1295
        %v1369 = vunpack.c.h.b16 %v1295
        %v1370 = vunpack.c.l.b16 %v1296
        %v1371 = vunpack.c.h.b16 %v1296
        %v1372 = vunpack.c.l.b16 %v1297
        %v1373 = vunpack.c.h.b16 %v1297
        %v1374 = vunpack.c.l.b16 %v1298
        %v1375 = vunpack.c.h.b16 %v1298
        %v1376 = vunpack.c.l.b16 %v1299
        %v1377 = vunpack.c.h.b16 %v1299
        %v1378 = vunpack.c.l.b16 %v1300
        %v1379 = vunpack.c.h.b16 %v1300
        %v1380 = vunpack.c.l.b16 %v1301
        %v1381 = vunpack.c.h.b16 %v1301
        %v1382 = vunpack.c.l.b16 %v1302
        %v1383 = vunpack.c.h.b16 %v1302
        %v1384 = vpack.c.b16 %v1330, %v1330
        %v1385 = vpack.c.b16 %v1331, %v1331
        %v1386 = vpack.c.b16 %v1332, %v1332
        %v1387 = vpack.c.b16 %v1333, %v1333
        %v1388 = vpack.c.b16 %v1334, %v1334
        %v1389 = vpack.c.b16 %v1335, %v1335
        %v1390 = vpack.c.b16 %v1336, %v1336
        %v1391 = vpack.c.b16 %v1337, %v1337
        %v1392 = vpack.c.b16 %v1338, %v1338
        %v1393 = vpack.c.b16 %v1339, %v1339
        %v1394 = vpack.c.b16 %v1340, %v1340
        %v1395 = vpack.c.b16 %v1341, %v1341
        %v1396 = vpack.c.b16 %v1342, %v1342
        %v1397 = vpack.c.b16 %v1343, %v1343
        %v1398 = vpack.c.b16 %v1344, %v1344
        %v1399 = vpack.c.b16 %v1345, %v1345
        %v1400 = vpack.c.b16 %v1346, %v1346
        %v1401 = vpack.c.b16 %v1347, %v1347
        %v1402 = vpack.c.b16 %v1348, %v1348
        %v1403 = vpack.c.b16 %v1349, %v1349
        %v1404 = vpack.c.b16 %v1350, %v1350
        %v1405 = vpack.c.b16 %v1351, %v1351
        %v1406 = vpack.c.b16 %v1352, %v1352
        %v1407 = vpack.c.b16 %v1353, %v1353
        %v1408 = vpack.c.b16 %v1354, %v1354
        %v1409 = vpack.c.b16 %v1355, %v1355
        %v1410 = vpack.c.b16 %v1356, %v1356
        %v1411 = vpack.c.b16 %v1357, %v1357
        %v1412 = vpack.c.b16 %v1358, %v1358
        %v1413 = vpack.c.b16 %v1359, %v1359
        %v1414 = vpack.c.b16 %v1360, %v1360
        %v1415 = vpack.c.b16 %v1361, %v1361
        %v1416 = vpack.c.b16 %v1362, %v1362
        %v1417 = vpack.c.b16 %v1363, %v1363
        %v1418 = vpack.c.b16 %v1364, %v1364
        %v1419 = vpack.c.b16 %v1365, %v1365
        %v1420 = vpack.c.b16 %v1366, %v1366
        %v1421 = vpack.c.b16 %v1367, %v1367
        %v1422 = vpack.c.b16 %v1368, %v1368
        %v1423 = vpack.c.b16 %v1369, %v1369
        %v1424 = vpack.c.b16 %v1370, %v1370
        %v1425 = vpack.c.b16 %v1371, %v1371
        %v1426 = vpack.c.b16 %v1372, %v1372
        %v1427 = vpack.c.b16 %v1373, %v1373
        %v1428 = vpack.c.b16 %v1374, %v1374
        %v1429 = vpack.c.b16 %v1375, %v1375
        %v1430 = vpack.c.b16 %v1376, %v1376
        %v1431 = vpack.c.b16 %v1377, %v1377
        %v1432 = vpack.c.b16 %v1378, %v1378
        %v1433 = vpack.c.b16 %v1379, %v1379
        %v1434 = vpack.c.b16 %v1380, %v1380
        %v1435 = vpack.c.b16 %v1381, %v1381
        %v1436 = vpack.c.b16 %v1382, %v1382
        %v1437 = vpack.c.b16 %v1383, %v1383
        %vm1492 = vcmask 125952
        %1493 = vst.msk [vmem:[#allocation2] sm:$0xf] %vm1492, %v1384
        %1494 = vst.msk [vmem:[#allocation2 + $0x4] sm:$0xf] %vm1492, %v1385
        %1495 = vst.msk [vmem:[#allocation2 + $0x8] sm:$0xf] %vm1492, %v1386
        %1496 = vst.msk [vmem:[#allocation2 + $0xc] sm:$0xf] %vm1492, %v1387
        %1497 = vst.msk [vmem:[#allocation2 + $0x10] sm:$0xf] %vm1492, %v1388
        %1498 = vst.msk [vmem:[#allocation2 + $0x14] sm:$0xf] %vm1492, %v1389
        %1499 = vst.msk [vmem:[#allocation2 + $0x18] sm:$0xf] %vm1492, %v1390
        %1500 = vst.msk [vmem:[#allocation2 + $0x1c] sm:$0xf] %vm1492, %v1391
        %1501 = vst.msk [vmem:[#allocation2 + $0x20] sm:$0xf] %vm1492, %v1392
        %1502 = vst.msk [vmem:[#allocation2 + $0x24] sm:$0xf] %vm1492, %v1393
        %1503 = vst.msk [vmem:[#allocation2 + $0x28] sm:$0xf] %vm1492, %v1394
        %1504 = vst.msk [vmem:[#allocation2 + $0x2c] sm:$0xf] %vm1492, %v1395
        %1505 = vst.msk [vmem:[#allocation2 + $0x30] sm:$0xf] %vm1492, %v1396
        %1506 = vst.msk [vmem:[#allocation2 + $0x34] sm:$0xf] %vm1492, %v1397
        %1507 = vst.msk [vmem:[#allocation2 + $0x38] sm:$0xf] %vm1492, %v1398
        %1508 = vst.msk [vmem:[#allocation2 + $0x3c] sm:$0xf] %vm1492, %v1399
        %1509 = vst.msk [vmem:[#allocation2 + $0x40] sm:$0xf] %vm1492, %v1400
        %1510 = vst.msk [vmem:[#allocation2 + $0x44] sm:$0xf] %vm1492, %v1401
        %1511 = vst.msk [vmem:[#allocation2 + $0x48] sm:$0xf] %vm1492, %v1402
        %1512 = vst.msk [vmem:[#allocation2 + $0x4c] sm:$0xf] %vm1492, %v1403
        %1513 = vst.msk [vmem:[#allocation2 + $0x50] sm:$0xf] %vm1492, %v1404
        %1514 = vst.msk [vmem:[#allocation2 + $0x54] sm:$0xf] %vm1492, %v1405
        %1515 = vst.msk [vmem:[#allocation2 + $0x58] sm:$0xf] %vm1492, %v1406
        %1516 = vst.msk [vmem:[#allocation2 + $0x5c] sm:$0xf] %vm1492, %v1407
        %1517 = vst.msk [vmem:[#allocation2 + $0x60] sm:$0xf] %vm1492, %v1408
        %1518 = vst.msk [vmem:[#allocation2 + $0x64] sm:$0xf] %vm1492, %v1409
        %1519 = vst.msk [vmem:[#allocation2 + $0x68] sm:$0xf] %vm1492, %v1410
        %1520 = vst.msk [vmem:[#allocation2 + $0x6c] sm:$0xf] %vm1492, %v1411
        %1521 = vst.msk [vmem:[#allocation2 + $0x70] sm:$0xf] %vm1492, %v1412
        %1522 = vst.msk [vmem:[#allocation2 + $0x74] sm:$0xf] %vm1492, %v1413
        %1523 = vst.msk [vmem:[#allocation2 + $0x78] sm:$0xf] %vm1492, %v1414
        %1524 = vst.msk [vmem:[#allocation2 + $0x7c] sm:$0xf] %vm1492, %v1415
        %1525 = vst.msk [vmem:[#allocation2 + $0x80] sm:$0xf] %vm1492, %v1416
        %1526 = vst.msk [vmem:[#allocation2 + $0x84] sm:$0xf] %vm1492, %v1417
        %1527 = vst.msk [vmem:[#allocation2 + $0x88] sm:$0xf] %vm1492, %v1418
        %1528 = vst.msk [vmem:[#allocation2 + $0x8c] sm:$0xf] %vm1492, %v1419
        %1529 = vst.msk [vmem:[#allocation2 + $0x90] sm:$0xf] %vm1492, %v1420
        %1530 = vst.msk [vmem:[#allocation2 + $0x94] sm:$0xf] %vm1492, %v1421
        %1531 = vst.msk [vmem:[#allocation2 + $0x98] sm:$0xf] %vm1492, %v1422
        %1532 = vst.msk [vmem:[#allocation2 + $0x9c] sm:$0xf] %vm1492, %v1423
        %1533 = vst.msk [vmem:[#allocation2 + $0xa0] sm:$0xf] %vm1492, %v1424
        %1534 = vst.msk [vmem:[#allocation2 + $0xa4] sm:$0xf] %vm1492, %v1425
        %1535 = vst.msk [vmem:[#allocation2 + $0xa8] sm:$0xf] %vm1492, %v1426
        %1536 = vst.msk [vmem:[#allocation2 + $0xac] sm:$0xf] %vm1492, %v1427
        %1537 = vst.msk [vmem:[#allocation2 + $0xb0] sm:$0xf] %vm1492, %v1428
        %1538 = vst.msk [vmem:[#allocation2 + $0xb4] sm:$0xf] %vm1492, %v1429
        %1539 = vst.msk [vmem:[#allocation2 + $0xb8] sm:$0xf] %vm1492, %v1430
        %1540 = vst.msk [vmem:[#allocation2 + $0xbc] sm:$0xf] %vm1492, %v1431
        %1541 = vst.msk [vmem:[#allocation2 + $0xc0] sm:$0xf] %vm1492, %v1432
        %1542 = vst.msk [vmem:[#allocation2 + $0xc4] sm:$0xf] %vm1492, %v1433
        %1543 = vst.msk [vmem:[#allocation2 + $0xc8] sm:$0xf] %vm1492, %v1434
        %1544 = vst.msk [vmem:[#allocation2 + $0xcc] sm:$0xf] %vm1492, %v1435
        %1545 = vst.msk [vmem:[#allocation2 + $0xd0] sm:$0xf] %vm1492, %v1436
        %1546 = vst.msk [vmem:[#allocation2 + $0xd4] sm:$0xf] %vm1492, %v1437
        %1547 = vst.msk [vmem:[#allocation2 + $0xd8] sm:$0xf] %vm1492, 0
        %v1548 = vld [vmem:[#allocation2] sm:$0xf]
        %v1549 = vld [vmem:[#allocation2 + $0x4] sm:$0xf]
        %v1550 = vld [vmem:[#allocation2 + $0x8] sm:$0xf]
        %v1551 = vld [vmem:[#allocation2 + $0xc] sm:$0xf]
        %v1552 = vld [vmem:[#allocation2 + $0x10] sm:$0xf]
        %v1553 = vld [vmem:[#allocation2 + $0x14] sm:$0xf]
        %v1554 = vld [vmem:[#allocation2 + $0x18] sm:$0xf]
        %v1555 = vld [vmem:[#allocation2 + $0x1c] sm:$0xf]
        %v1556 = vld [vmem:[#allocation2 + $0x20] sm:$0xf]
        %v1557 = vld [vmem:[#allocation2 + $0x24] sm:$0xf]
        %v1558 = vld [vmem:[#allocation2 + $0x28] sm:$0xf]
        %v1559 = vld [vmem:[#allocation2 + $0x2c] sm:$0xf]
        %v1560 = vld [vmem:[#allocation2 + $0x30] sm:$0xf]
        %v1561 = vld [vmem:[#allocation2 + $0x34] sm:$0xf]
        %v1562 = vld [vmem:[#allocation2 + $0x38] sm:$0xf]
        %v1563 = vld [vmem:[#allocation2 + $0x3c] sm:$0xf]
        %v1564 = vld [vmem:[#allocation2 + $0x40] sm:$0xf]
        %v1565 = vld [vmem:[#allocation2 + $0x44] sm:$0xf]
        %v1566 = vld [vmem:[#allocation2 + $0x48] sm:$0xf]
        %v1567 = vld [vmem:[#allocation2 + $0x4c] sm:$0xf]
        %v1568 = vld [vmem:[#allocation2 + $0x50] sm:$0xf]
        %v1569 = vld [vmem:[#allocation2 + $0x54] sm:$0xf]
        %v1570 = vld [vmem:[#allocation2 + $0x58] sm:$0xf]
        %v1571 = vld [vmem:[#allocation2 + $0x5c] sm:$0xf]
        %v1572 = vld [vmem:[#allocation2 + $0x60] sm:$0xf]
        %v1573 = vld [vmem:[#allocation2 + $0x64] sm:$0xf]
        %v1574 = vld [vmem:[#allocation2 + $0x68] sm:$0xf]
        %v1575 = vld [vmem:[#allocation2 + $0x6c] sm:$0xf]
        %v1576 = vld [vmem:[#allocation2 + $0x70] sm:$0xf]
        %v1577 = vld [vmem:[#allocation2 + $0x74] sm:$0xf]
        %v1578 = vld [vmem:[#allocation2 + $0x78] sm:$0xf]
        %v1579 = vld [vmem:[#allocation2 + $0x7c] sm:$0xf]
        %v1580 = vld [vmem:[#allocation2 + $0x80] sm:$0xf]
        %v1581 = vld [vmem:[#allocation2 + $0x84] sm:$0xf]
        %v1582 = vld [vmem:[#allocation2 + $0x88] sm:$0xf]
        %v1583 = vld [vmem:[#allocation2 + $0x8c] sm:$0xf]
        %v1584 = vld [vmem:[#allocation2 + $0x90] sm:$0xf]
        %v1585 = vld [vmem:[#allocation2 + $0x94] sm:$0xf]
        %v1586 = vld [vmem:[#allocation2 + $0x98] sm:$0xf]
        %v1587 = vld [vmem:[#allocation2 + $0x9c] sm:$0xf]
        %v1588 = vld [vmem:[#allocation2 + $0xa0] sm:$0xf]
        %v1589 = vld [vmem:[#allocation2 + $0xa4] sm:$0xf]
        %v1590 = vld [vmem:[#allocation2 + $0xa8] sm:$0xf]
        %v1591 = vld [vmem:[#allocation2 + $0xac] sm:$0xf]
        %v1592 = vld [vmem:[#allocation2 + $0xb0] sm:$0xf]
        %v1593 = vld [vmem:[#allocation2 + $0xb4] sm:$0xf]
        %v1594 = vld [vmem:[#allocation2 + $0xb8] sm:$0xf]
        %v1595 = vld [vmem:[#allocation2 + $0xbc] sm:$0xf]
        %v1596 = vld [vmem:[#allocation12] sm:$0xf]
        %v1597 = vld [vmem:[#allocation12 + $0x4] sm:$0xf]
        %v1598 = vld [vmem:[#allocation2 + $0xc0] sm:$0x1]
        %s1599 = scalar_lea.vmem [#allocation12], 8
        %v1600 = vld [vmem:[%s1599] sm:$0xf]
        %v1601 = vld [vmem:[%s1599 + $0x4] sm:$0xf]
        %v1651 = vunpack.c.l.b16 %v1548
        %v1652 = vunpack.c.l.b16 %v1549
        %v1653 = vunpack.c.l.b16 %v1550
        %v1654 = vunpack.c.l.b16 %v1551
        %v1655 = vunpack.c.l.b16 %v1552
        %v1656 = vunpack.c.l.b16 %v1553
        %v1657 = vunpack.c.l.b16 %v1554
        %v1658 = vunpack.c.l.b16 %v1555
        %v1659 = vunpack.c.l.b16 %v1556
        %v1660 = vunpack.c.l.b16 %v1557
        %v1661 = vunpack.c.l.b16 %v1558
        %v1662 = vunpack.c.l.b16 %v1559
        %v1663 = vunpack.c.l.b16 %v1560
        %v1664 = vunpack.c.l.b16 %v1561
        %v1665 = vunpack.c.l.b16 %v1562
        %v1666 = vunpack.c.l.b16 %v1563
        %v1667 = vunpack.c.l.b16 %v1564
        %v1668 = vunpack.c.l.b16 %v1565
        %v1669 = vunpack.c.l.b16 %v1566
        %v1670 = vunpack.c.l.b16 %v1567
        %v1671 = vunpack.c.l.b16 %v1568
        %v1672 = vunpack.c.l.b16 %v1569
        %v1673 = vunpack.c.l.b16 %v1570
        %v1674 = vunpack.c.l.b16 %v1571
        %v1675 = vunpack.c.l.b16 %v1572
        %v1676 = vunpack.c.l.b16 %v1573
        %v1677 = vunpack.c.l.b16 %v1574
        %v1678 = vunpack.c.l.b16 %v1575
        %v1679 = vunpack.c.l.b16 %v1576
        %v1680 = vunpack.c.l.b16 %v1577
        %v1681 = vunpack.c.l.b16 %v1578
        %v1682 = vunpack.c.l.b16 %v1579
        %v1683 = vunpack.c.l.b16 %v1580
        %v1684 = vunpack.c.l.b16 %v1581
        %v1685 = vunpack.c.l.b16 %v1582
        %v1686 = vunpack.c.l.b16 %v1583
        %v1687 = vunpack.c.l.b16 %v1584
        %v1688 = vunpack.c.l.b16 %v1585
        %v1689 = vunpack.c.l.b16 %v1586
        %v1690 = vunpack.c.l.b16 %v1587
        %v1691 = vunpack.c.l.b16 %v1588
        %v1692 = vunpack.c.l.b16 %v1589
        %v1693 = vunpack.c.l.b16 %v1590
        %v1694 = vunpack.c.l.b16 %v1591
        %v1695 = vunpack.c.l.b16 %v1592
        %v1696 = vunpack.c.l.b16 %v1593
        %v1697 = vunpack.c.l.b16 %v1594
        %v1698 = vunpack.c.l.b16 %v1595
        %v1699 = vunpack.c.l.b16 %v1598
        %v1700 = vpack.c.b16 %v1652, %v1651
        %v1701 = vpack.c.b16 %v1654, %v1653
        %v1702 = vpack.c.b16 %v1656, %v1655
        %v1703 = vpack.c.b16 %v1658, %v1657
        %v1704 = vpack.c.b16 %v1660, %v1659
        %v1705 = vpack.c.b16 %v1662, %v1661
        %v1706 = vpack.c.b16 %v1664, %v1663
        %v1707 = vpack.c.b16 %v1666, %v1665
        %v1708 = vpack.c.b16 %v1668, %v1667
        %v1709 = vpack.c.b16 %v1670, %v1669
        %v1710 = vpack.c.b16 %v1672, %v1671
        %v1711 = vpack.c.b16 %v1674, %v1673
        %v1712 = vpack.c.b16 %v1676, %v1675
        %v1713 = vpack.c.b16 %v1678, %v1677
        %v1714 = vpack.c.b16 %v1680, %v1679
        %v1715 = vpack.c.b16 %v1682, %v1681
        %v1716 = vpack.c.b16 %v1684, %v1683
        %v1717 = vpack.c.b16 %v1686, %v1685
        %v1718 = vpack.c.b16 %v1688, %v1687
        %v1719 = vpack.c.b16 %v1690, %v1689
        %v1720 = vpack.c.b16 %v1692, %v1691
        %v1721 = vpack.c.b16 %v1694, %v1693
        %v1722 = vpack.c.b16 %v1696, %v1695
        %v1723 = vpack.c.b16 %v1698, %v1697
        %v1724 = vpack.c.b16 %v1699, %v1699
        %vm1725 = vsmask.f32 7424
        %v1727 = vshrl.u32 %v1700, 16
        %v1729 = vshll.u32 %v1700, 16
        %v1731 = vrot.slane %v1729, 1
        %v1732 = vor.u32 %v1727, %v1731
        %v1734 = vshll.u32 %v1701, 16
        %v1736 = vrot.slane %v1734, 1
        %v1737 = vsel %vm1725, %v1732, %v1736
        %v1738 = vshrl.u32 %v1701, 16
        %v1740 = vor.u32 %v1738, %v1736
        %v1742 = vshll.u32 %v1702, 16
        %v1744 = vrot.slane %v1742, 1
        %v1745 = vsel %vm1725, %v1740, %v1744
        %v1746 = vshrl.u32 %v1702, 16
        %v1748 = vor.u32 %v1746, %v1744
        %v1750 = vshll.u32 %v1703, 16
        %v1752 = vrot.slane %v1750, 1
        %v1753 = vsel %vm1725, %v1748, %v1752
        %v1754 = vshrl.u32 %v1703, 16
        %v1756 = vor.u32 %v1754, %v1752
        %v1758 = vshll.u32 %v1704, 16
        %v1760 = vrot.slane %v1758, 1
        %v1761 = vsel %vm1725, %v1756, %v1760
        %v1762 = vshrl.u32 %v1704, 16
        %v1764 = vor.u32 %v1762, %v1760
        %v1766 = vshll.u32 %v1705, 16
        %v1768 = vrot.slane %v1766, 1
        %v1769 = vsel %vm1725, %v1764, %v1768
        %v1770 = vshrl.u32 %v1705, 16
        %v1772 = vor.u32 %v1770, %v1768
        %v1774 = vshll.u32 %v1706, 16
        %v1776 = vrot.slane %v1774, 1
        %v1777 = vsel %vm1725, %v1772, %v1776
        %v1778 = vshrl.u32 %v1706, 16
        %v1780 = vor.u32 %v1778, %v1776
        %v1782 = vshll.u32 %v1707, 16
        %v1784 = vrot.slane %v1782, 1
        %v1785 = vsel %vm1725, %v1780, %v1784
        %v1786 = vshrl.u32 %v1707, 16
        %v1788 = vor.u32 %v1786, %v1784
        %v1790 = vshll.u32 %v1708, 16
        %v1792 = vrot.slane %v1790, 1
        %v1793 = vsel %vm1725, %v1788, %v1792
        %v1794 = vshrl.u32 %v1708, 16
        %v1796 = vor.u32 %v1794, %v1792
        %v1798 = vshll.u32 %v1709, 16
        %v1800 = vrot.slane %v1798, 1
        %v1801 = vsel %vm1725, %v1796, %v1800
        %v1802 = vshrl.u32 %v1709, 16
        %v1804 = vor.u32 %v1802, %v1800
        %v1806 = vshll.u32 %v1710, 16
        %v1808 = vrot.slane %v1806, 1
        %v1809 = vsel %vm1725, %v1804, %v1808
        %v1810 = vshrl.u32 %v1710, 16
        %v1812 = vor.u32 %v1810, %v1808
        %v1814 = vshll.u32 %v1711, 16
        %v1816 = vrot.slane %v1814, 1
        %v1817 = vsel %vm1725, %v1812, %v1816
        %v1818 = vshrl.u32 %v1711, 16
        %v1820 = vor.u32 %v1818, %v1816
        %v1822 = vshll.u32 %v1712, 16
        %v1824 = vrot.slane %v1822, 1
        %v1825 = vsel %vm1725, %v1820, %v1824
        %v1826 = vshrl.u32 %v1712, 16
        %v1828 = vor.u32 %v1826, %v1824
        %v1830 = vshll.u32 %v1713, 16
        %v1832 = vrot.slane %v1830, 1
        %v1833 = vsel %vm1725, %v1828, %v1832
        %v1834 = vshrl.u32 %v1713, 16
        %v1836 = vor.u32 %v1834, %v1832
        %v1838 = vshll.u32 %v1714, 16
        %v1840 = vrot.slane %v1838, 1
        %v1841 = vsel %vm1725, %v1836, %v1840
        %v1842 = vshrl.u32 %v1714, 16
        %v1844 = vor.u32 %v1842, %v1840
        %v1846 = vshll.u32 %v1715, 16
        %v1848 = vrot.slane %v1846, 1
        %v1849 = vsel %vm1725, %v1844, %v1848
        %v1850 = vshrl.u32 %v1715, 16
        %v1852 = vor.u32 %v1850, %v1848
        %v1854 = vshll.u32 %v1716, 16
        %v1856 = vrot.slane %v1854, 1
        %v1857 = vsel %vm1725, %v1852, %v1856
        %v1858 = vshrl.u32 %v1716, 16
        %v1860 = vor.u32 %v1858, %v1856
        %v1862 = vshll.u32 %v1717, 16
        %v1864 = vrot.slane %v1862, 1
        %v1865 = vsel %vm1725, %v1860, %v1864
        %v1866 = vshrl.u32 %v1717, 16
        %v1868 = vor.u32 %v1866, %v1864
        %v1870 = vshll.u32 %v1718, 16
        %v1872 = vrot.slane %v1870, 1
        %v1873 = vsel %vm1725, %v1868, %v1872
        %v1874 = vshrl.u32 %v1718, 16
        %v1876 = vor.u32 %v1874, %v1872
        %v1878 = vshll.u32 %v1719, 16
        %v1880 = vrot.slane %v1878, 1
        %v1881 = vsel %vm1725, %v1876, %v1880
        %v1882 = vshrl.u32 %v1719, 16
        %v1884 = vor.u32 %v1882, %v1880
        %v1886 = vshll.u32 %v1720, 16
        %v1888 = vrot.slane %v1886, 1
        %v1889 = vsel %vm1725, %v1884, %v1888
        %v1890 = vshrl.u32 %v1720, 16
        %v1892 = vor.u32 %v1890, %v1888
        %v1894 = vshll.u32 %v1721, 16
        %v1896 = vrot.slane %v1894, 1
        %v1897 = vsel %vm1725, %v1892, %v1896
        %v1898 = vshrl.u32 %v1721, 16
        %v1900 = vor.u32 %v1898, %v1896
        %v1902 = vshll.u32 %v1722, 16
        %v1904 = vrot.slane %v1902, 1
        %v1905 = vsel %vm1725, %v1900, %v1904
        %v1906 = vshrl.u32 %v1722, 16
        %v1908 = vor.u32 %v1906, %v1904
        %v1910 = vshll.u32 %v1723, 16
        %v1912 = vrot.slane %v1910, 1
        %v1913 = vsel %vm1725, %v1908, %v1912
        %v1914 = vshrl.u32 %v1723, 16
        %v1916 = vor.u32 %v1914, %v1912
        %v1918 = vshll.u32 %v1724, 16
        %v1920 = vrot.slane %v1918, 1
        %v1921 = vsel %vm1725, %v1916, %v1920
        %v1924 = vunpack.c.l.b16 %v1600
        %v1925 = vunpack.c.l.b16 %v1601
        %v1926 = vpack.c.b16 %v1925, %v1924
        %vm1928 = vcmask 130048
        %v1930 = vsel %vm1928, %v1737, 0
        %v1933 = vsel %vm1928, %v1745, 0
        %v1936 = vsel %vm1928, %v1753, 0
        %v1939 = vsel %vm1928, %v1761, 0
        %v1942 = vsel %vm1928, %v1769, 0
        %v1945 = vsel %vm1928, %v1777, 0
        %v1948 = vsel %vm1928, %v1785, 0
        %v1951 = vsel %vm1928, %v1793, 0
        %v1954 = vsel %vm1928, %v1801, 0
        %v1957 = vsel %vm1928, %v1809, 0
        %v1960 = vsel %vm1928, %v1817, 0
        %v1963 = vsel %vm1928, %v1825, 0
        %v1966 = vsel %vm1928, %v1833, 0
        %v1969 = vsel %vm1928, %v1841, 0
        %v1972 = vsel %vm1928, %v1849, 0
        %v1975 = vsel %vm1928, %v1857, 0
        %v1978 = vsel %vm1928, %v1865, 0
        %v1981 = vsel %vm1928, %v1873, 0
        %v1984 = vsel %vm1928, %v1881, 0
        %v1987 = vsel %vm1928, %v1889, 0
        %v1990 = vsel %vm1928, %v1897, 0
        %v1993 = vsel %vm1928, %v1905, 0
        %v1996 = vsel %vm1928, %v1913, 0
        %v1999 = vsel %vm1928, %v1921, 0
        %2001 = vmatprep.subr.bf16.mxu0 0
        %2002 = vmatpush1.bf16.msra.mxu0 %v1926
        %2003 = vmatprep.subr.bf16.mxu0 0
        %2004 = vmatpush1.bf16.msra.mxu0 0
        %2005 = vmatprep.subr.bf16.mxu0 0
        %2006 = vmatpush1.bf16.msra.mxu0 0
        %2007 = vmatprep.subr.bf16.mxu0 0
        %2008 = vmatpush1.bf16.msra.mxu0 0
        %2009 = vmatprep.subr.bf16.mxu0 0
        %2010 = vmatpush1.bf16.msra.mxu0 0
        %2011 = vmatprep.subr.bf16.mxu0 0
        %2012 = vmatpush1.bf16.msra.mxu0 0
        %2013 = vmatprep.subr.bf16.mxu0 0
        %2014 = vmatpush1.bf16.msra.mxu0 0
        %2015 = vmatprep.subr.bf16.mxu0 0
        %2016 = vmatpush1.bf16.msra.mxu0 0
        %2017 = vmatprep.subr.bf16.mxu0 0
        %2018 = vmatpush1.bf16.msra.mxu0 0
        %2019 = vmatprep.subr.bf16.mxu0 0
        %2020 = vmatpush1.bf16.msra.mxu0 0
        %2021 = vmatprep.subr.bf16.mxu0 0
        %2022 = vmatpush1.bf16.msra.mxu0 0
        %2023 = vmatprep.subr.bf16.mxu0 0
        %2024 = vmatpush1.bf16.msra.mxu0 0
        %2025 = vmatprep.subr.bf16.mxu0 0
        %2026 = vmatpush1.bf16.msra.mxu0 0
        %2027 = vmatprep.subr.bf16.mxu0 0
        %2028 = vmatpush1.bf16.msra.mxu0 0
        %2029 = vmatprep.subr.bf16.mxu0 0
        %2030 = vmatpush1.bf16.msra.mxu0 0
        %2031 = vmatprep.subr.bf16.mxu0 0
        %2032 = vmatpush1.bf16.msra.mxu0 0
        %2033 = vmatprep.mubr.bf16.mxu0 0
        %2034 = vmatmul.mubr.bf16.gmra.mrb[0].mxu0 %v1930
        %v2035 = vpop.f32.mrb[0].mxu0
        %v2036 = vadd.f32 0.0, %v2035
        %v2037 = vpop.f32.mrb[0].mxu0
        %v2038 = vpop.f32.mrb[0].mxu0
        %v2039 = vadd.f32 0.0, %v2038
        %v2040 = vpop.f32.mrb[0].mxu0
        %2041 = vmatprep.mubr.bf16.mxu0 0
        %2042 = vmatmul.mubr.bf16.gmra.mrb[0].mxu0 %v1933
        %v2043 = vpop.f32.mrb[0].mxu0
        %v2044 = vadd.f32 0.0, %v2043
        %v2045 = vpop.f32.mrb[0].mxu0
        %v2046 = vpop.f32.mrb[0].mxu0
        %v2047 = vadd.f32 0.0, %v2046
        %v2048 = vpop.f32.mrb[0].mxu0
        %2049 = vmatprep.mubr.bf16.mxu0 0
        %2050 = vmatmul.mubr.bf16.gmra.mrb[0].mxu0 %v1936
        %v2051 = vpop.f32.mrb[0].mxu0
        %v2052 = vadd.f32 0.0, %v2051
        %v2053 = vpop.f32.mrb[0].mxu0
        %v2054 = vpop.f32.mrb[0].mxu0
        %v2055 = vadd.f32 0.0, %v2054
        %v2056 = vpop.f32.mrb[0].mxu0
        %2057 = vmatprep.mubr.bf16.mxu0 0
        %2058 = vmatmul.mubr.bf16.gmra.mrb[0].mxu0 %v1939
        %v2059 = vpop.f32.mrb[0].mxu0
        %v2060 = vadd.f32 0.0, %v2059
        %v2061 = vpop.f32.mrb[0].mxu0
        %v2062 = vpop.f32.mrb[0].mxu0
        %v2063 = vadd.f32 0.0, %v2062
        %v2064 = vpop.f32.mrb[0].mxu0
        %2065 = vmatprep.mubr.bf16.mxu0 0
        %2066 = vmatmul.mubr.bf16.gmra.mrb[0].mxu0 %v1942
        %v2067 = vpop.f32.mrb[0].mxu0
        %v2068 = vadd.f32 0.0, %v2067
        %v2069 = vpop.f32.mrb[0].mxu0
        %v2070 = vpop.f32.mrb[0].mxu0
        %v2071 = vadd.f32 0.0, %v2070
        %v2072 = vpop.f32.mrb[0].mxu0
        %2073 = vmatprep.mubr.bf16.mxu0 0
        %2074 = vmatmul.mubr.bf16.gmra.mrb[0].mxu0 %v1945
        %v2075 = vpop.f32.mrb[0].mxu0
        %v2076 = vadd.f32 0.0, %v2075
        %v2077 = vpop.f32.mrb[0].mxu0
        %v2078 = vpop.f32.mrb[0].mxu0
        %v2079 = vadd.f32 0.0, %v2078
        %v2080 = vpop.f32.mrb[0].mxu0
        %2081 = vmatprep.mubr.bf16.mxu0 0
        %2082 = vmatmul.mubr.bf16.gmra.mrb[0].mxu0 %v1948
        %v2083 = vpop.f32.mrb[0].mxu0
        %v2084 = vadd.f32 0.0, %v2083
        %v2085 = vpop.f32.mrb[0].mxu0
        %v2086 = vpop.f32.mrb[0].mxu0
        %v2087 = vadd.f32 0.0, %v2086
        %v2088 = vpop.f32.mrb[0].mxu0
        %2089 = vmatprep.mubr.bf16.mxu0 0
        %2090 = vmatmul.mubr.bf16.gmra.mrb[0].mxu0 %v1951
        %v2091 = vpop.f32.mrb[0].mxu0
        %v2092 = vadd.f32 0.0, %v2091
        %v2093 = vpop.f32.mrb[0].mxu0
        %v2094 = vpop.f32.mrb[0].mxu0
        %v2095 = vadd.f32 0.0, %v2094
        %v2096 = vpop.f32.mrb[0].mxu0
        %2097 = vmatprep.mubr.bf16.mxu0 0
        %2098 = vmatmul.mubr.bf16.gmra.mrb[0].mxu0 %v1954
        %v2099 = vpop.f32.mrb[0].mxu0
        %v2100 = vadd.f32 0.0, %v2099
        %v2101 = vpop.f32.mrb[0].mxu0
        %v2102 = vpop.f32.mrb[0].mxu0
        %v2103 = vadd.f32 0.0, %v2102
        %v2104 = vpop.f32.mrb[0].mxu0
        %2105 = vmatprep.mubr.bf16.mxu0 0
        %2106 = vmatmul.mubr.bf16.gmra.mrb[0].mxu0 %v1957
        %v2107 = vpop.f32.mrb[0].mxu0
        %v2108 = vadd.f32 0.0, %v2107
        %v2109 = vpop.f32.mrb[0].mxu0
        %v2110 = vpop.f32.mrb[0].mxu0
        %v2111 = vadd.f32 0.0, %v2110
        %v2112 = vpop.f32.mrb[0].mxu0
        %2113 = vmatprep.mubr.bf16.mxu0 0
        %2114 = vmatmul.mubr.bf16.gmra.mrb[0].mxu0 %v1960
        %v2115 = vpop.f32.mrb[0].mxu0
        %v2116 = vadd.f32 0.0, %v2115
        %v2117 = vpop.f32.mrb[0].mxu0
        %v2118 = vpop.f32.mrb[0].mxu0
        %v2119 = vadd.f32 0.0, %v2118
        %v2120 = vpop.f32.mrb[0].mxu0
        %2121 = vmatprep.mubr.bf16.mxu0 0
        %2122 = vmatmul.mubr.bf16.gmra.mrb[0].mxu0 %v1963
        %v2123 = vpop.f32.mrb[0].mxu0
        %v2124 = vadd.f32 0.0, %v2123
        %v2125 = vpop.f32.mrb[0].mxu0
        %v2126 = vpop.f32.mrb[0].mxu0
        %v2127 = vadd.f32 0.0, %v2126
        %v2128 = vpop.f32.mrb[0].mxu0
        %2129 = vmatprep.mubr.bf16.mxu0 0
        %2130 = vmatmul.mubr.bf16.gmra.mrb[0].mxu0 %v1966
        %v2131 = vpop.f32.mrb[0].mxu0
        %v2132 = vadd.f32 0.0, %v2131
        %v2133 = vpop.f32.mrb[0].mxu0
        %v2134 = vpop.f32.mrb[0].mxu0
        %v2135 = vadd.f32 0.0, %v2134
        %v2136 = vpop.f32.mrb[0].mxu0
        %2137 = vmatprep.mubr.bf16.mxu0 0
        %2138 = vmatmul.mubr.bf16.gmra.mrb[0].mxu0 %v1969
        %v2139 = vpop.f32.mrb[0].mxu0
        %v2140 = vadd.f32 0.0, %v2139
        %v2141 = vpop.f32.mrb[0].mxu0
        %v2142 = vpop.f32.mrb[0].mxu0
        %v2143 = vadd.f32 0.0, %v2142
        %v2144 = vpop.f32.mrb[0].mxu0
        %2145 = vmatprep.mubr.bf16.mxu0 0
        %2146 = vmatmul.mubr.bf16.gmra.mrb[0].mxu0 %v1972
        %v2147 = vpop.f32.mrb[0].mxu0
        %v2148 = vadd.f32 0.0, %v2147
        %v2149 = vpop.f32.mrb[0].mxu0
        %v2150 = vpop.f32.mrb[0].mxu0
        %v2151 = vadd.f32 0.0, %v2150
        %v2152 = vpop.f32.mrb[0].mxu0
        %2153 = vmatprep.mubr.bf16.mxu0 0
        %2154 = vmatmul.mubr.bf16.gmra.mrb[0].mxu0 %v1975
        %v2155 = vpop.f32.mrb[0].mxu0
        %v2156 = vadd.f32 0.0, %v2155
        %v2157 = vpop.f32.mrb[0].mxu0
        %v2158 = vpop.f32.mrb[0].mxu0
        %v2159 = vadd.f32 0.0, %v2158
        %v2160 = vpop.f32.mrb[0].mxu0
        %2161 = vmatprep.mubr.bf16.mxu0 0
        %2162 = vmatmul.mubr.bf16.gmra.mrb[0].mxu0 %v1978
        %v2163 = vpop.f32.mrb[0].mxu0
        %v2164 = vadd.f32 0.0, %v2163
        %v2165 = vpop.f32.mrb[0].mxu0
        %v2166 = vpop.f32.mrb[0].mxu0
        %v2167 = vadd.f32 0.0, %v2166
        %v2168 = vpop.f32.mrb[0].mxu0
        %2169 = vmatprep.mubr.bf16.mxu0 0
        %2170 = vmatmul.mubr.bf16.gmra.mrb[0].mxu0 %v1981
        %v2171 = vpop.f32.mrb[0].mxu0
        %v2172 = vadd.f32 0.0, %v2171
        %v2173 = vpop.f32.mrb[0].mxu0
        %v2174 = vpop.f32.mrb[0].mxu0
        %v2175 = vadd.f32 0.0, %v2174
        %v2176 = vpop.f32.mrb[0].mxu0
        %2177 = vmatprep.mubr.bf16.mxu0 0
        %2178 = vmatmul.mubr.bf16.gmra.mrb[0].mxu0 %v1984
        %v2179 = vpop.f32.mrb[0].mxu0
        %v2180 = vadd.f32 0.0, %v2179
        %v2181 = vpop.f32.mrb[0].mxu0
        %v2182 = vpop.f32.mrb[0].mxu0
        %v2183 = vadd.f32 0.0, %v2182
        %v2184 = vpop.f32.mrb[0].mxu0
        %2185 = vmatprep.mubr.bf16.mxu0 0
        %2186 = vmatmul.mubr.bf16.gmra.mrb[0].mxu0 %v1987
        %v2187 = vpop.f32.mrb[0].mxu0
        %v2188 = vadd.f32 0.0, %v2187
        %v2189 = vpop.f32.mrb[0].mxu0
        %v2190 = vpop.f32.mrb[0].mxu0
        %v2191 = vadd.f32 0.0, %v2190
        %v2192 = vpop.f32.mrb[0].mxu0
        %2193 = vmatprep.mubr.bf16.mxu0 0
        %2194 = vmatmul.mubr.bf16.gmra.mrb[0].mxu0 %v1990
        %v2195 = vpop.f32.mrb[0].mxu0
        %v2196 = vadd.f32 0.0, %v2195
        %v2197 = vpop.f32.mrb[0].mxu0
        %v2198 = vpop.f32.mrb[0].mxu0
        %v2199 = vadd.f32 0.0, %v2198
        %v2200 = vpop.f32.mrb[0].mxu0
        %2201 = vmatprep.mubr.bf16.mxu0 0
        %2202 = vmatmul.mubr.bf16.gmra.mrb[0].mxu0 %v1993
        %v2203 = vpop.f32.mrb[0].mxu0
        %v2204 = vadd.f32 0.0, %v2203
        %v2205 = vpop.f32.mrb[0].mxu0
        %v2206 = vpop.f32.mrb[0].mxu0
        %v2207 = vadd.f32 0.0, %v2206
        %v2208 = vpop.f32.mrb[0].mxu0
        %2209 = vmatprep.mubr.bf16.mxu0 0
        %2210 = vmatmul.mubr.bf16.gmra.mrb[0].mxu0 %v1996
        %v2211 = vpop.f32.mrb[0].mxu0
        %v2212 = vadd.f32 0.0, %v2211
        %v2213 = vpop.f32.mrb[0].mxu0
        %v2214 = vpop.f32.mrb[0].mxu0
        %v2215 = vadd.f32 0.0, %v2214
        %v2216 = vpop.f32.mrb[0].mxu0
        %2217 = vmatprep.mubr.bf16.mxu0 0
        %2218 = vmatmul.mubr.bf16.gmra.mrb[0].mxu0 %v1999
        %v2219 = vpop.f32.mrb[0].mxu0
        %v2220 = vadd.f32 0.0, %v2219
        %v2221 = vpop.f32.mrb[0].mxu0
        %v2222 = vpop.f32.mrb[0].mxu0
        %v2223 = vadd.f32 0.0, %v2222
        %v2224 = vpop.f32.mrb[0].mxu0
        %2225 = vdwg.mxu0
        %v2228 = vunpack.c.l.b16 %v1596
        %v2229 = vunpack.c.l.b16 %v1597
        %v2230 = vpack.c.b16 %v2229, %v2228
        %v2232 = vsel %vm1928, %v1700, 0
        %v2234 = vsel %vm1928, %v1701, 0
        %v2236 = vsel %vm1928, %v1702, 0
        %v2238 = vsel %vm1928, %v1703, 0
        %v2240 = vsel %vm1928, %v1704, 0
        %v2242 = vsel %vm1928, %v1705, 0
        %v2244 = vsel %vm1928, %v1706, 0
        %v2246 = vsel %vm1928, %v1707, 0
        %v2248 = vsel %vm1928, %v1708, 0
        %v2250 = vsel %vm1928, %v1709, 0
        %v2252 = vsel %vm1928, %v1710, 0
        %v2254 = vsel %vm1928, %v1711, 0
        %v2256 = vsel %vm1928, %v1712, 0
        %v2258 = vsel %vm1928, %v1713, 0
        %v2260 = vsel %vm1928, %v1714, 0
        %v2262 = vsel %vm1928, %v1715, 0
        %v2264 = vsel %vm1928, %v1716, 0
        %v2266 = vsel %vm1928, %v1717, 0
        %v2268 = vsel %vm1928, %v1718, 0
        %v2270 = vsel %vm1928, %v1719, 0
        %v2272 = vsel %vm1928, %v1720, 0
        %v2274 = vsel %vm1928, %v1721, 0
        %v2276 = vsel %vm1928, %v1722, 0
        %v2278 = vsel %vm1928, %v1723, 0
        %2280 = vmatprep.subr.bf16.mxu0 0
        %2281 = vmatpush1.bf16.msra.mxu0 %v2230
        %2282 = vmatprep.subr.bf16.mxu0 0
        %2283 = vmatpush1.bf16.msra.mxu0 0
        %2284 = vmatprep.subr.bf16.mxu0 0
        %2285 = vmatpush1.bf16.msra.mxu0 0
        %2286 = vmatprep.subr.bf16.mxu0 0
        %2287 = vmatpush1.bf16.msra.mxu0 0
        %2288 = vmatprep.subr.bf16.mxu0 0
        %2289 = vmatpush1.bf16.msra.mxu0 0
        %2290 = vmatprep.subr.bf16.mxu0 0
        %2291 = vmatpush1.bf16.msra.mxu0 0
        %2292 = vmatprep.subr.bf16.mxu0 0
        %2293 = vmatpush1.bf16.msra.mxu0 0
        %2294 = vmatprep.subr.bf16.mxu0 0
        %2295 = vmatpush1.bf16.msra.mxu0 0
        %2296 = vmatprep.subr.bf16.mxu0 0
        %2297 = vmatpush1.bf16.msra.mxu0 0
        %2298 = vmatprep.subr.bf16.mxu0 0
        %2299 = vmatpush1.bf16.msra.mxu0 0
        %2300 = vmatprep.subr.bf16.mxu0 0
        %2301 = vmatpush1.bf16.msra.mxu0 0
        %2302 = vmatprep.subr.bf16.mxu0 0
        %2303 = vmatpush1.bf16.msra.mxu0 0
        %2304 = vmatprep.subr.bf16.mxu0 0
        %2305 = vmatpush1.bf16.msra.mxu0 0
        %2306 = vmatprep.subr.bf16.mxu0 0
        %2307 = vmatpush1.bf16.msra.mxu0 0
        %2308 = vmatprep.subr.bf16.mxu0 0
        %2309 = vmatpush1.bf16.msra.mxu0 0
        %2310 = vmatprep.subr.bf16.mxu0 0
        %2311 = vmatpush1.bf16.msra.mxu0 0
        %2312 = vmatprep.mubr.bf16.mxu0 0
        %2313 = vmatmul.mubr.bf16.gmra.mrb[0].mxu0 %v2232
        %v2314 = vpop.f32.mrb[0].mxu0
        %v2315 = vadd.f32 %v2036, %v2314
        %v2316 = vpop.f32.mrb[0].mxu0
        %v2317 = vpop.f32.mrb[0].mxu0
        %v2318 = vadd.f32 %v2039, %v2317
        %v2319 = vpop.f32.mrb[0].mxu0
        %2320 = vmatprep.mubr.bf16.mxu0 0
        %2321 = vmatmul.mubr.bf16.gmra.mrb[0].mxu0 %v2234
        %v2322 = vpop.f32.mrb[0].mxu0
        %v2323 = vadd.f32 %v2044, %v2322
        %v2324 = vpop.f32.mrb[0].mxu0
        %v2325 = vpop.f32.mrb[0].mxu0
        %v2326 = vadd.f32 %v2047, %v2325
        %v2327 = vpop.f32.mrb[0].mxu0
        %2328 = vmatprep.mubr.bf16.mxu0 0
        %2329 = vmatmul.mubr.bf16.gmra.mrb[0].mxu0 %v2236
        %v2330 = vpop.f32.mrb[0].mxu0
        %v2331 = vadd.f32 %v2052, %v2330
        %v2332 = vpop.f32.mrb[0].mxu0
        %v2333 = vpop.f32.mrb[0].mxu0
        %v2334 = vadd.f32 %v2055, %v2333
        %v2335 = vpop.f32.mrb[0].mxu0
        %2336 = vmatprep.mubr.bf16.mxu0 0
        %2337 = vmatmul.mubr.bf16.gmra.mrb[0].mxu0 %v2238
        %v2338 = vpop.f32.mrb[0].mxu0
        %v2339 = vadd.f32 %v2060, %v2338
        %v2340 = vpop.f32.mrb[0].mxu0
        %v2341 = vpop.f32.mrb[0].mxu0
        %v2342 = vadd.f32 %v2063, %v2341
        %v2343 = vpop.f32.mrb[0].mxu0
        %2344 = vmatprep.mubr.bf16.mxu0 0
        %2345 = vmatmul.mubr.bf16.gmra.mrb[0].mxu0 %v2240
        %v2346 = vpop.f32.mrb[0].mxu0
        %v2347 = vadd.f32 %v2068, %v2346
        %v2348 = vpop.f32.mrb[0].mxu0
        %v2349 = vpop.f32.mrb[0].mxu0
        %v2350 = vadd.f32 %v2071, %v2349
        %v2351 = vpop.f32.mrb[0].mxu0
        %2352 = vmatprep.mubr.bf16.mxu0 0
        %2353 = vmatmul.mubr.bf16.gmra.mrb[0].mxu0 %v2242
        %v2354 = vpop.f32.mrb[0].mxu0
        %v2355 = vadd.f32 %v2076, %v2354
        %v2356 = vpop.f32.mrb[0].mxu0
        %v2357 = vpop.f32.mrb[0].mxu0
        %v2358 = vadd.f32 %v2079, %v2357
        %v2359 = vpop.f32.mrb[0].mxu0
        %2360 = vmatprep.mubr.bf16.mxu0 0
        %2361 = vmatmul.mubr.bf16.gmra.mrb[0].mxu0 %v2244
        %v2362 = vpop.f32.mrb[0].mxu0
        %v2363 = vadd.f32 %v2084, %v2362
        %v2364 = vpop.f32.mrb[0].mxu0
        %v2365 = vpop.f32.mrb[0].mxu0
        %v2366 = vadd.f32 %v2087, %v2365
        %v2367 = vpop.f32.mrb[0].mxu0
        %2368 = vmatprep.mubr.bf16.mxu0 0
        %2369 = vmatmul.mubr.bf16.gmra.mrb[0].mxu0 %v2246
        %v2370 = vpop.f32.mrb[0].mxu0
        %v2371 = vadd.f32 %v2092, %v2370
        %v2372 = vpop.f32.mrb[0].mxu0
        %v2373 = vpop.f32.mrb[0].mxu0
        %v2374 = vadd.f32 %v2095, %v2373
        %v2375 = vpop.f32.mrb[0].mxu0
        %2376 = vmatprep.mubr.bf16.mxu0 0
        %2377 = vmatmul.mubr.bf16.gmra.mrb[0].mxu0 %v2248
        %v2378 = vpop.f32.mrb[0].mxu0
        %v2379 = vadd.f32 %v2100, %v2378
        %v2380 = vpop.f32.mrb[0].mxu0
        %v2381 = vpop.f32.mrb[0].mxu0
        %v2382 = vadd.f32 %v2103, %v2381
        %v2383 = vpop.f32.mrb[0].mxu0
        %2384 = vmatprep.mubr.bf16.mxu0 0
        %2385 = vmatmul.mubr.bf16.gmra.mrb[0].mxu0 %v2250
        %v2386 = vpop.f32.mrb[0].mxu0
        %v2387 = vadd.f32 %v2108, %v2386
        %v2388 = vpop.f32.mrb[0].mxu0
        %v2389 = vpop.f32.mrb[0].mxu0
        %v2390 = vadd.f32 %v2111, %v2389
        %v2391 = vpop.f32.mrb[0].mxu0
        %2392 = vmatprep.mubr.bf16.mxu0 0
        %2393 = vmatmul.mubr.bf16.gmra.mrb[0].mxu0 %v2252
        %v2394 = vpop.f32.mrb[0].mxu0
        %v2395 = vadd.f32 %v2116, %v2394
        %v2396 = vpop.f32.mrb[0].mxu0
        %v2397 = vpop.f32.mrb[0].mxu0
        %v2398 = vadd.f32 %v2119, %v2397
        %v2399 = vpop.f32.mrb[0].mxu0
        %2400 = vmatprep.mubr.bf16.mxu0 0
        %2401 = vmatmul.mubr.bf16.gmra.mrb[0].mxu0 %v2254
        %v2402 = vpop.f32.mrb[0].mxu0
        %v2403 = vadd.f32 %v2124, %v2402
        %v2404 = vpop.f32.mrb[0].mxu0
        %v2405 = vpop.f32.mrb[0].mxu0
        %v2406 = vadd.f32 %v2127, %v2405
        %v2407 = vpop.f32.mrb[0].mxu0
        %2408 = vmatprep.mubr.bf16.mxu0 0
        %2409 = vmatmul.mubr.bf16.gmra.mrb[0].mxu0 %v2256
        %v2410 = vpop.f32.mrb[0].mxu0
        %v2411 = vadd.f32 %v2132, %v2410
        %v2412 = vpop.f32.mrb[0].mxu0
        %v2413 = vpop.f32.mrb[0].mxu0
        %v2414 = vadd.f32 %v2135, %v2413
        %v2415 = vpop.f32.mrb[0].mxu0
        %2416 = vmatprep.mubr.bf16.mxu0 0
        %2417 = vmatmul.mubr.bf16.gmra.mrb[0].mxu0 %v2258
        %v2418 = vpop.f32.mrb[0].mxu0
        %v2419 = vadd.f32 %v2140, %v2418
        %v2420 = vpop.f32.mrb[0].mxu0
        %v2421 = vpop.f32.mrb[0].mxu0
        %v2422 = vadd.f32 %v2143, %v2421
        %v2423 = vpop.f32.mrb[0].mxu0
        %2424 = vmatprep.mubr.bf16.mxu0 0
        %2425 = vmatmul.mubr.bf16.gmra.mrb[0].mxu0 %v2260
        %v2426 = vpop.f32.mrb[0].mxu0
        %v2427 = vadd.f32 %v2148, %v2426
        %v2428 = vpop.f32.mrb[0].mxu0
        %v2429 = vpop.f32.mrb[0].mxu0
        %v2430 = vadd.f32 %v2151, %v2429
        %v2431 = vpop.f32.mrb[0].mxu0
        %2432 = vmatprep.mubr.bf16.mxu0 0
        %2433 = vmatmul.mubr.bf16.gmra.mrb[0].mxu0 %v2262
        %v2434 = vpop.f32.mrb[0].mxu0
        %v2435 = vadd.f32 %v2156, %v2434
        %v2436 = vpop.f32.mrb[0].mxu0
        %v2437 = vpop.f32.mrb[0].mxu0
        %v2438 = vadd.f32 %v2159, %v2437
        %v2439 = vpop.f32.mrb[0].mxu0
        %2440 = vmatprep.mubr.bf16.mxu0 0
        %2441 = vmatmul.mubr.bf16.gmra.mrb[0].mxu0 %v2264
        %v2442 = vpop.f32.mrb[0].mxu0
        %v2443 = vadd.f32 %v2164, %v2442
        %v2444 = vpop.f32.mrb[0].mxu0
        %v2445 = vpop.f32.mrb[0].mxu0
        %v2446 = vadd.f32 %v2167, %v2445
        %v2447 = vpop.f32.mrb[0].mxu0
        %2448 = vmatprep.mubr.bf16.mxu0 0
        %2449 = vmatmul.mubr.bf16.gmra.mrb[0].mxu0 %v2266
        %v2450 = vpop.f32.mrb[0].mxu0
        %v2451 = vadd.f32 %v2172, %v2450
        %v2452 = vpop.f32.mrb[0].mxu0
        %v2453 = vpop.f32.mrb[0].mxu0
        %v2454 = vadd.f32 %v2175, %v2453
        %v2455 = vpop.f32.mrb[0].mxu0
        %2456 = vmatprep.mubr.bf16.mxu0 0
        %2457 = vmatmul.mubr.bf16.gmra.mrb[0].mxu0 %v2268
        %v2458 = vpop.f32.mrb[0].mxu0
        %v2459 = vadd.f32 %v2180, %v2458
        %v2460 = vpop.f32.mrb[0].mxu0
        %v2461 = vpop.f32.mrb[0].mxu0
        %v2462 = vadd.f32 %v2183, %v2461
        %v2463 = vpop.f32.mrb[0].mxu0
        %2464 = vmatprep.mubr.bf16.mxu0 0
        %2465 = vmatmul.mubr.bf16.gmra.mrb[0].mxu0 %v2270
        %v2466 = vpop.f32.mrb[0].mxu0
        %v2467 = vadd.f32 %v2188, %v2466
        %v2468 = vpop.f32.mrb[0].mxu0
        %v2469 = vpop.f32.mrb[0].mxu0
        %v2470 = vadd.f32 %v2191, %v2469
        %v2471 = vpop.f32.mrb[0].mxu0
        %2472 = vmatprep.mubr.bf16.mxu0 0
        %2473 = vmatmul.mubr.bf16.gmra.mrb[0].mxu0 %v2272
        %v2474 = vpop.f32.mrb[0].mxu0
        %v2475 = vadd.f32 %v2196, %v2474
        %v2476 = vpop.f32.mrb[0].mxu0
        %v2477 = vpop.f32.mrb[0].mxu0
        %v2478 = vadd.f32 %v2199, %v2477
        %v2479 = vpop.f32.mrb[0].mxu0
        %2480 = vmatprep.mubr.bf16.mxu0 0
        %2481 = vmatmul.mubr.bf16.gmra.mrb[0].mxu0 %v2274
        %v2482 = vpop.f32.mrb[0].mxu0
        %v2483 = vadd.f32 %v2204, %v2482
        %v2484 = vpop.f32.mrb[0].mxu0
        %v2485 = vpop.f32.mrb[0].mxu0
        %v2486 = vadd.f32 %v2207, %v2485
        %v2487 = vpop.f32.mrb[0].mxu0
        %2488 = vmatprep.mubr.bf16.mxu0 0
        %2489 = vmatmul.mubr.bf16.gmra.mrb[0].mxu0 %v2276
        %v2490 = vpop.f32.mrb[0].mxu0
        %v2491 = vadd.f32 %v2212, %v2490
        %v2492 = vpop.f32.mrb[0].mxu0
        %v2493 = vpop.f32.mrb[0].mxu0
        %v2494 = vadd.f32 %v2215, %v2493
        %v2495 = vpop.f32.mrb[0].mxu0
        %2496 = vmatprep.mubr.bf16.mxu0 0
        %2497 = vmatmul.mubr.bf16.gmra.mrb[0].mxu0 %v2278
        %v2498 = vpop.f32.mrb[0].mxu0
        %v2499 = vadd.f32 %v2220, %v2498
        %v2500 = vpop.f32.mrb[0].mxu0
        %v2501 = vpop.f32.mrb[0].mxu0
        %v2502 = vadd.f32 %v2223, %v2501
        %v2503 = vpop.f32.mrb[0].mxu0
        %2504 = vdwg.mxu0
        %v2505 = vld [vmem:[#allocation2] sm:$0xe]
        %s2506 = scalar_lea.vmem [#allocation12], 16
        %v2507 = vld [vmem:[%s2506] sm:$0xf]
        %v2508 = vld [vmem:[%s2506 + $0x4] sm:$0xf]
        %v2510 = vunpack.c.l.b16 %v2505
        %v2511 = vpack.c.b16 %v1652, %v2510
        %vm2512 = vcmask 1046528
        %v2513 = vrot.slane %v2511, 1
        %v2514 = vrot.slane %v1701, 1
        %v2515 = vsel %vm2512, %v2513, %v2514
        %v2516 = vrot.slane %v1702, 1
        %v2517 = vsel %vm2512, %v2514, %v2516
        %v2518 = vrot.slane %v1703, 1
        %v2519 = vsel %vm2512, %v2516, %v2518
        %v2520 = vrot.slane %v1704, 1
        %v2521 = vsel %vm2512, %v2518, %v2520
        %v2522 = vrot.slane %v1705, 1
        %v2523 = vsel %vm2512, %v2520, %v2522
        %v2524 = vrot.slane %v1706, 1
        %v2525 = vsel %vm2512, %v2522, %v2524
        %v2526 = vrot.slane %v1707, 1
        %v2527 = vsel %vm2512, %v2524, %v2526
        %v2528 = vrot.slane %v1708, 1
        %v2529 = vsel %vm2512, %v2526, %v2528
        %v2530 = vrot.slane %v1709, 1
        %v2531 = vsel %vm2512, %v2528, %v2530
        %v2532 = vrot.slane %v1710, 1
        %v2533 = vsel %vm2512, %v2530, %v2532
        %v2534 = vrot.slane %v1711, 1
        %v2535 = vsel %vm2512, %v2532, %v2534
        %v2536 = vrot.slane %v1712, 1
        %v2537 = vsel %vm2512, %v2534, %v2536
        %v2538 = vrot.slane %v1713, 1
        %v2539 = vsel %vm2512, %v2536, %v2538
        %v2540 = vrot.slane %v1714, 1
        %v2541 = vsel %vm2512, %v2538, %v2540
        %v2542 = vrot.slane %v1715, 1
        %v2543 = vsel %vm2512, %v2540, %v2542
        %v2544 = vrot.slane %v1716, 1
        %v2545 = vsel %vm2512, %v2542, %v2544
        %v2546 = vrot.slane %v1717, 1
        %v2547 = vsel %vm2512, %v2544, %v2546
        %v2548 = vrot.slane %v1718, 1
        %v2549 = vsel %vm2512, %v2546, %v2548
        %v2550 = vrot.slane %v1719, 1
        %v2551 = vsel %vm2512, %v2548, %v2550
        %v2552 = vrot.slane %v1720, 1
        %v2553 = vsel %vm2512, %v2550, %v2552
        %v2554 = vrot.slane %v1721, 1
        %v2555 = vsel %vm2512, %v2552, %v2554
        %v2556 = vrot.slane %v1722, 1
        %v2557 = vsel %vm2512, %v2554, %v2556
        %v2558 = vrot.slane %v1723, 1
        %v2559 = vsel %vm2512, %v2556, %v2558
        %v2560 = vrot.slane %v1724, 1
        %v2561 = vsel %vm2512, %v2558, %v2560
        %v2564 = vunpack.c.l.b16 %v2507
        %v2565 = vunpack.c.l.b16 %v2508
        %v2566 = vpack.c.b16 %v2565, %v2564
        %v2569 = vsel %vm1928, %v2515, 0
        %v2572 = vsel %vm1928, %v2517, 0
        %v2575 = vsel %vm1928, %v2519, 0
        %v2578 = vsel %vm1928, %v2521, 0
        %v2581 = vsel %vm1928, %v2523, 0
        %v2584 = vsel %vm1928, %v2525, 0
        %v2587 = vsel %vm1928, %v2527, 0
        %v2590 = vsel %vm1928, %v2529, 0
        %v2593 = vsel %vm1928, %v2531, 0
        %v2596 = vsel %vm1928, %v2533, 0
        %v2599 = vsel %vm1928, %v2535, 0
        %v2602 = vsel %vm1928, %v2537, 0
        %v2605 = vsel %vm1928, %v2539, 0
        %v2608 = vsel %vm1928, %v2541, 0
        %v2611 = vsel %vm1928, %v2543, 0
        %v2614 = vsel %vm1928, %v2545, 0
        %v2617 = vsel %vm1928, %v2547, 0
        %v2620 = vsel %vm1928, %v2549, 0
        %v2623 = vsel %vm1928, %v2551, 0
        %v2626 = vsel %vm1928, %v2553, 0
        %v2629 = vsel %vm1928, %v2555, 0
        %v2632 = vsel %vm1928, %v2557, 0
        %v2635 = vsel %vm1928, %v2559, 0
        %v2638 = vsel %vm1928, %v2561, 0
        %2640 = vmatprep.subr.bf16.mxu0 0
        %2641 = vmatpush1.bf16.msra.mxu0 %v2566
        %2642 = vmatprep.subr.bf16.mxu0 0
        %2643 = vmatpush1.bf16.msra.mxu0 0
        %2644 = vmatprep.subr.bf16.mxu0 0
        %2645 = vmatpush1.bf16.msra.mxu0 0
        %2646 = vmatprep.subr.bf16.mxu0 0
        %2647 = vmatpush1.bf16.msra.mxu0 0
        %2648 = vmatprep.subr.bf16.mxu0 0
        %2649 = vmatpush1.bf16.msra.mxu0 0
        %2650 = vmatprep.subr.bf16.mxu0 0
        %2651 = vmatpush1.bf16.msra.mxu0 0
        %2652 = vmatprep.subr.bf16.mxu0 0
        %2653 = vmatpush1.bf16.msra.mxu0 0
        %2654 = vmatprep.subr.bf16.mxu0 0
        %2655 = vmatpush1.bf16.msra.mxu0 0
        %2656 = vmatprep.subr.bf16.mxu0 0
        %2657 = vmatpush1.bf16.msra.mxu0 0
        %2658 = vmatprep.subr.bf16.mxu0 0
        %2659 = vmatpush1.bf16.msra.mxu0 0
        %2660 = vmatprep.subr.bf16.mxu0 0
        %2661 = vmatpush1.bf16.msra.mxu0 0
        %2662 = vmatprep.subr.bf16.mxu0 0
        %2663 = vmatpush1.bf16.msra.mxu0 0
        %2664 = vmatprep.subr.bf16.mxu0 0
        %2665 = vmatpush1.bf16.msra.mxu0 0
        %2666 = vmatprep.subr.bf16.mxu0 0
        %2667 = vmatpush1.bf16.msra.mxu0 0
        %2668 = vmatprep.subr.bf16.mxu0 0
        %2669 = vmatpush1.bf16.msra.mxu0 0
        %2670 = vmatprep.subr.bf16.mxu0 0
        %2671 = vmatpush1.bf16.msra.mxu0 0
        %2672 = vmatprep.mubr.bf16.mxu0 0
        %2673 = vmatmul.mubr.bf16.gmra.mrb[0].mxu0 %v2569
        %v2674 = vpop.f32.mrb[0].mxu0
        %v2675 = vadd.f32 0.0, %v2674
        %v2676 = vpop.f32.mrb[0].mxu0
        %v2677 = vpop.f32.mrb[0].mxu0
        %v2678 = vadd.f32 0.0, %v2677
        %v2679 = vpop.f32.mrb[0].mxu0
        %2680 = vmatprep.mubr.bf16.mxu0 0
        %2681 = vmatmul.mubr.bf16.gmra.mrb[0].mxu0 %v2572
        %v2682 = vpop.f32.mrb[0].mxu0
        %v2683 = vadd.f32 0.0, %v2682
        %v2684 = vpop.f32.mrb[0].mxu0
        %v2685 = vpop.f32.mrb[0].mxu0
        %v2686 = vadd.f32 0.0, %v2685
        %v2687 = vpop.f32.mrb[0].mxu0
        %2688 = vmatprep.mubr.bf16.mxu0 0
        %2689 = vmatmul.mubr.bf16.gmra.mrb[0].mxu0 %v2575
        %v2690 = vpop.f32.mrb[0].mxu0
        %v2691 = vadd.f32 0.0, %v2690
        %v2692 = vpop.f32.mrb[0].mxu0
        %v2693 = vpop.f32.mrb[0].mxu0
        %v2694 = vadd.f32 0.0, %v2693
        %v2695 = vpop.f32.mrb[0].mxu0
        %2696 = vmatprep.mubr.bf16.mxu0 0
        %2697 = vmatmul.mubr.bf16.gmra.mrb[0].mxu0 %v2578
        %v2698 = vpop.f32.mrb[0].mxu0
        %v2699 = vadd.f32 0.0, %v2698
        %v2700 = vpop.f32.mrb[0].mxu0
        %v2701 = vpop.f32.mrb[0].mxu0
        %v2702 = vadd.f32 0.0, %v2701
        %v2703 = vpop.f32.mrb[0].mxu0
        %2704 = vmatprep.mubr.bf16.mxu0 0
        %2705 = vmatmul.mubr.bf16.gmra.mrb[0].mxu0 %v2581
        %v2706 = vpop.f32.mrb[0].mxu0
        %v2707 = vadd.f32 0.0, %v2706
        %v2708 = vpop.f32.mrb[0].mxu0
        %v2709 = vpop.f32.mrb[0].mxu0
        %v2710 = vadd.f32 0.0, %v2709
        %v2711 = vpop.f32.mrb[0].mxu0
        %2712 = vmatprep.mubr.bf16.mxu0 0
        %2713 = vmatmul.mubr.bf16.gmra.mrb[0].mxu0 %v2584
        %v2714 = vpop.f32.mrb[0].mxu0
        %v2715 = vadd.f32 0.0, %v2714
        %v2716 = vpop.f32.mrb[0].mxu0
        %v2717 = vpop.f32.mrb[0].mxu0
        %v2718 = vadd.f32 0.0, %v2717
        %v2719 = vpop.f32.mrb[0].mxu0
        %2720 = vmatprep.mubr.bf16.mxu0 0
        %2721 = vmatmul.mubr.bf16.gmra.mrb[0].mxu0 %v2587
        %v2722 = vpop.f32.mrb[0].mxu0
        %v2723 = vadd.f32 0.0, %v2722
        %v2724 = vpop.f32.mrb[0].mxu0
        %v2725 = vpop.f32.mrb[0].mxu0
        %v2726 = vadd.f32 0.0, %v2725
        %v2727 = vpop.f32.mrb[0].mxu0
        %2728 = vmatprep.mubr.bf16.mxu0 0
        %2729 = vmatmul.mubr.bf16.gmra.mrb[0].mxu0 %v2590
        %v2730 = vpop.f32.mrb[0].mxu0
        %v2731 = vadd.f32 0.0, %v2730
        %v2732 = vpop.f32.mrb[0].mxu0
        %v2733 = vpop.f32.mrb[0].mxu0
        %v2734 = vadd.f32 0.0, %v2733
        %v2735 = vpop.f32.mrb[0].mxu0
        %2736 = vmatprep.mubr.bf16.mxu0 0
        %2737 = vmatmul.mubr.bf16.gmra.mrb[0].mxu0 %v2593
        %v2738 = vpop.f32.mrb[0].mxu0
        %v2739 = vadd.f32 0.0, %v2738
        %v2740 = vpop.f32.mrb[0].mxu0
        %v2741 = vpop.f32.mrb[0].mxu0
        %v2742 = vadd.f32 0.0, %v2741
        %v2743 = vpop.f32.mrb[0].mxu0
        %2744 = vmatprep.mubr.bf16.mxu0 0
        %2745 = vmatmul.mubr.bf16.gmra.mrb[0].mxu0 %v2596
        %v2746 = vpop.f32.mrb[0].mxu0
        %v2747 = vadd.f32 0.0, %v2746
        %v2748 = vpop.f32.mrb[0].mxu0
        %v2749 = vpop.f32.mrb[0].mxu0
        %v2750 = vadd.f32 0.0, %v2749
        %v2751 = vpop.f32.mrb[0].mxu0
        %2752 = vmatprep.mubr.bf16.mxu0 0
        %2753 = vmatmul.mubr.bf16.gmra.mrb[0].mxu0 %v2599
        %v2754 = vpop.f32.mrb[0].mxu0
        %v2755 = vadd.f32 0.0, %v2754
        %v2756 = vpop.f32.mrb[0].mxu0
        %v2757 = vpop.f32.mrb[0].mxu0
        %v2758 = vadd.f32 0.0, %v2757
        %v2759 = vpop.f32.mrb[0].mxu0
        %2760 = vmatprep.mubr.bf16.mxu0 0
        %2761 = vmatmul.mubr.bf16.gmra.mrb[0].mxu0 %v2602
        %v2762 = vpop.f32.mrb[0].mxu0
        %v2763 = vadd.f32 0.0, %v2762
        %v2764 = vpop.f32.mrb[0].mxu0
        %v2765 = vpop.f32.mrb[0].mxu0
        %v2766 = vadd.f32 0.0, %v2765
        %v2767 = vpop.f32.mrb[0].mxu0
        %2768 = vmatprep.mubr.bf16.mxu0 0
        %2769 = vmatmul.mubr.bf16.gmra.mrb[0].mxu0 %v2605
        %v2770 = vpop.f32.mrb[0].mxu0
        %v2771 = vadd.f32 0.0, %v2770
        %v2772 = vpop.f32.mrb[0].mxu0
        %v2773 = vpop.f32.mrb[0].mxu0
        %v2774 = vadd.f32 0.0, %v2773
        %v2775 = vpop.f32.mrb[0].mxu0
        %2776 = vmatprep.mubr.bf16.mxu0 0
        %2777 = vmatmul.mubr.bf16.gmra.mrb[0].mxu0 %v2608
        %v2778 = vpop.f32.mrb[0].mxu0
        %v2779 = vadd.f32 0.0, %v2778
        %v2780 = vpop.f32.mrb[0].mxu0
        %v2781 = vpop.f32.mrb[0].mxu0
        %v2782 = vadd.f32 0.0, %v2781
        %v2783 = vpop.f32.mrb[0].mxu0
        %2784 = vmatprep.mubr.bf16.mxu0 0
        %2785 = vmatmul.mubr.bf16.gmra.mrb[0].mxu0 %v2611
        %v2786 = vpop.f32.mrb[0].mxu0
        %v2787 = vadd.f32 0.0, %v2786
        %v2788 = vpop.f32.mrb[0].mxu0
        %v2789 = vpop.f32.mrb[0].mxu0
        %v2790 = vadd.f32 0.0, %v2789
        %v2791 = vpop.f32.mrb[0].mxu0
        %2792 = vmatprep.mubr.bf16.mxu0 0
        %2793 = vmatmul.mubr.bf16.gmra.mrb[0].mxu0 %v2614
        %v2794 = vpop.f32.mrb[0].mxu0
        %v2795 = vadd.f32 0.0, %v2794
        %v2796 = vpop.f32.mrb[0].mxu0
        %v2797 = vpop.f32.mrb[0].mxu0
        %v2798 = vadd.f32 0.0, %v2797
        %v2799 = vpop.f32.mrb[0].mxu0
        %2800 = vmatprep.mubr.bf16.mxu0 0
        %2801 = vmatmul.mubr.bf16.gmra.mrb[0].mxu0 %v2617
        %v2802 = vpop.f32.mrb[0].mxu0
        %v2803 = vadd.f32 0.0, %v2802
        %v2804 = vpop.f32.mrb[0].mxu0
        %v2805 = vpop.f32.mrb[0].mxu0
        %v2806 = vadd.f32 0.0, %v2805
        %v2807 = vpop.f32.mrb[0].mxu0
        %2808 = vmatprep.mubr.bf16.mxu0 0
        %2809 = vmatmul.mubr.bf16.gmra.mrb[0].mxu0 %v2620
        %v2810 = vpop.f32.mrb[0].mxu0
        %v2811 = vadd.f32 0.0, %v2810
        %v2812 = vpop.f32.mrb[0].mxu0
        %v2813 = vpop.f32.mrb[0].mxu0
        %v2814 = vadd.f32 0.0, %v2813
        %v2815 = vpop.f32.mrb[0].mxu0
        %2816 = vmatprep.mubr.bf16.mxu0 0
        %2817 = vmatmul.mubr.bf16.gmra.mrb[0].mxu0 %v2623
        %v2818 = vpop.f32.mrb[0].mxu0
        %v2819 = vadd.f32 0.0, %v2818
        %v2820 = vpop.f32.mrb[0].mxu0
        %v2821 = vpop.f32.mrb[0].mxu0
        %v2822 = vadd.f32 0.0, %v2821
        %v2823 = vpop.f32.mrb[0].mxu0
        %2824 = vmatprep.mubr.bf16.mxu0 0
        %2825 = vmatmul.mubr.bf16.gmra.mrb[0].mxu0 %v2626
        %v2826 = vpop.f32.mrb[0].mxu0
        %v2827 = vadd.f32 0.0, %v2826
        %v2828 = vpop.f32.mrb[0].mxu0
        %v2829 = vpop.f32.mrb[0].mxu0
        %v2830 = vadd.f32 0.0, %v2829
        %v2831 = vpop.f32.mrb[0].mxu0
        %2832 = vmatprep.mubr.bf16.mxu0 0
        %2833 = vmatmul.mubr.bf16.gmra.mrb[0].mxu0 %v2629
        %v2834 = vpop.f32.mrb[0].mxu0
        %v2835 = vadd.f32 0.0, %v2834
        %v2836 = vpop.f32.mrb[0].mxu0
        %v2837 = vpop.f32.mrb[0].mxu0
        %v2838 = vadd.f32 0.0, %v2837
        %v2839 = vpop.f32.mrb[0].mxu0
        %2840 = vmatprep.mubr.bf16.mxu0 0
        %2841 = vmatmul.mubr.bf16.gmra.mrb[0].mxu0 %v2632
        %v2842 = vpop.f32.mrb[0].mxu0
        %v2843 = vadd.f32 0.0, %v2842
        %v2844 = vpop.f32.mrb[0].mxu0
        %v2845 = vpop.f32.mrb[0].mxu0
        %v2846 = vadd.f32 0.0, %v2845
        %v2847 = vpop.f32.mrb[0].mxu0
        %2848 = vmatprep.mubr.bf16.mxu0 0
        %2849 = vmatmul.mubr.bf16.gmra.mrb[0].mxu0 %v2635
        %v2850 = vpop.f32.mrb[0].mxu0
        %v2851 = vadd.f32 0.0, %v2850
        %v2852 = vpop.f32.mrb[0].mxu0
        %v2853 = vpop.f32.mrb[0].mxu0
        %v2854 = vadd.f32 0.0, %v2853
        %v2855 = vpop.f32.mrb[0].mxu0
        %2856 = vmatprep.mubr.bf16.mxu0 0
        %2857 = vmatmul.mubr.bf16.gmra.mrb[0].mxu0 %v2638
        %v2858 = vpop.f32.mrb[0].mxu0
        %v2859 = vadd.f32 0.0, %v2858
        %v2860 = vpop.f32.mrb[0].mxu0
        %v2861 = vpop.f32.mrb[0].mxu0
        %v2862 = vadd.f32 0.0, %v2861
        %v2863 = vpop.f32.mrb[0].mxu0
        %2864 = vdwg.mxu0
        %v2865 = vadd.f32 %v2315, %v2675
        %v2866 = vadd.f32 %v2318, %v2678
        %v2867 = vadd.f32 %v2323, %v2683
        %v2868 = vadd.f32 %v2326, %v2686
        %v2869 = vadd.f32 %v2331, %v2691
        %v2870 = vadd.f32 %v2334, %v2694
        %v2871 = vadd.f32 %v2339, %v2699
        %v2872 = vadd.f32 %v2342, %v2702
        %v2873 = vadd.f32 %v2347, %v2707
        %v2874 = vadd.f32 %v2350, %v2710
        %v2875 = vadd.f32 %v2355, %v2715
        %v2876 = vadd.f32 %v2358, %v2718
        %v2877 = vadd.f32 %v2363, %v2723
        %v2878 = vadd.f32 %v2366, %v2726
        %v2879 = vadd.f32 %v2371, %v2731
        %v2880 = vadd.f32 %v2374, %v2734
        %v2881 = vadd.f32 %v2379, %v2739
        %v2882 = vadd.f32 %v2382, %v2742
        %v2883 = vadd.f32 %v2387, %v2747
        %v2884 = vadd.f32 %v2390, %v2750
        %v2885 = vadd.f32 %v2395, %v2755
        %v2886 = vadd.f32 %v2398, %v2758
        %v2887 = vadd.f32 %v2403, %v2763
        %v2888 = vadd.f32 %v2406, %v2766
        %v2889 = vadd.f32 %v2411, %v2771
        %v2890 = vadd.f32 %v2414, %v2774
        %v2891 = vadd.f32 %v2419, %v2779
        %v2892 = vadd.f32 %v2422, %v2782
        %v2893 = vadd.f32 %v2427, %v2787
        %v2894 = vadd.f32 %v2430, %v2790
        %v2895 = vadd.f32 %v2435, %v2795
        %v2896 = vadd.f32 %v2438, %v2798
        %v2897 = vadd.f32 %v2443, %v2803
        %v2898 = vadd.f32 %v2446, %v2806
        %v2899 = vadd.f32 %v2451, %v2811
        %v2900 = vadd.f32 %v2454, %v2814
        %v2901 = vadd.f32 %v2459, %v2819
        %v2902 = vadd.f32 %v2462, %v2822
        %v2903 = vadd.f32 %v2467, %v2827
        %v2904 = vadd.f32 %v2470, %v2830
        %v2905 = vadd.f32 %v2475, %v2835
        %v2906 = vadd.f32 %v2478, %v2838
        %v2907 = vadd.f32 %v2483, %v2843
        %v2908 = vadd.f32 %v2486, %v2846
        %v2909 = vadd.f32 %v2491, %v2851
        %v2910 = vadd.f32 %v2494, %v2854
        %v2911 = vadd.f32 %v2499, %v2859
        %v2912 = vadd.f32 %v2502, %v2862
        %v2913 = vld [vmem:[#allocation2 + $0xc] sm:$0xf]
        %v2914 = vld [vmem:[#allocation2 + $0x10] sm:$0xf]
        %v2915 = vld [vmem:[#allocation2 + $0x14] sm:$0xf]
        %v2916 = vld [vmem:[#allocation2 + $0x18] sm:$0xf]
        %v2917 = vld [vmem:[#allocation2 + $0x1c] sm:$0xf]
        %v2918 = vld [vmem:[#allocation2 + $0x20] sm:$0xf]
        %v2919 = vld [vmem:[#allocation2 + $0x24] sm:$0xf]
        %v2920 = vld [vmem:[#allocation2 + $0x28] sm:$0xf]
        %v2921 = vld [vmem:[#allocation2 + $0x2c] sm:$0xf]
        %v2922 = vld [vmem:[#allocation2 + $0x30] sm:$0xf]
        %v2923 = vld [vmem:[#allocation2 + $0x34] sm:$0xf]
        %v2924 = vld [vmem:[#allocation2 + $0x38] sm:$0xf]
        %v2925 = vld [vmem:[#allocation2 + $0x3c] sm:$0xf]
        %v2926 = vld [vmem:[#allocation2 + $0x40] sm:$0xf]
        %v2927 = vld [vmem:[#allocation2 + $0x44] sm:$0xf]
        %v2928 = vld [vmem:[#allocation2 + $0x48] sm:$0xf]
        %v2929 = vld [vmem:[#allocation2 + $0x4c] sm:$0xf]
        %v2930 = vld [vmem:[#allocation2 + $0x50] sm:$0xf]
        %v2931 = vld [vmem:[#allocation2 + $0x54] sm:$0xf]
        %v2932 = vld [vmem:[#allocation2 + $0x58] sm:$0xf]
        %v2933 = vld [vmem:[#allocation2 + $0x5c] sm:$0xf]
        %v2934 = vld [vmem:[#allocation2 + $0x60] sm:$0xf]
        %v2935 = vld [vmem:[#allocation2 + $0x64] sm:$0xf]
        %v2936 = vld [vmem:[#allocation2 + $0x68] sm:$0xf]
        %v2937 = vld [vmem:[#allocation2 + $0x6c] sm:$0xf]
        %v2938 = vld [vmem:[#allocation2 + $0x70] sm:$0xf]
        %v2939 = vld [vmem:[#allocation2 + $0x74] sm:$0xf]
        %v2940 = vld [vmem:[#allocation2 + $0x78] sm:$0xf]
        %v2941 = vld [vmem:[#allocation2 + $0x7c] sm:$0xf]
        %v2942 = vld [vmem:[#allocation2 + $0x80] sm:$0xf]
        %v2943 = vld [vmem:[#allocation2 + $0x84] sm:$0xf]
        %v2944 = vld [vmem:[#allocation2 + $0x88] sm:$0xf]
        %v2945 = vld [vmem:[#allocation2 + $0x8c] sm:$0xf]
        %v2946 = vld [vmem:[#allocation2 + $0x90] sm:$0xf]
        %v2947 = vld [vmem:[#allocation2 + $0x94] sm:$0xf]
        %v2948 = vld [vmem:[#allocation2 + $0x98] sm:$0xf]
        %v2949 = vld [vmem:[#allocation2 + $0x9c] sm:$0xf]
        %v2950 = vld [vmem:[#allocation2 + $0xa0] sm:$0xf]
        %v2951 = vld [vmem:[#allocation2 + $0xa4] sm:$0xf]
        %v2952 = vld [vmem:[#allocation2 + $0xa8] sm:$0xf]
        %v2953 = vld [vmem:[#allocation2 + $0xac] sm:$0xf]
        %v2954 = vld [vmem:[#allocation2 + $0xb0] sm:$0xf]
        %v2955 = vld [vmem:[#allocation2 + $0xb4] sm:$0xf]
        %v2956 = vld [vmem:[#allocation2 + $0xb8] sm:$0xf]
        %v2957 = vld [vmem:[#allocation2 + $0xbc] sm:$0xf]
        %v2958 = vld [vmem:[#allocation2 + $0xc0] sm:$0xf]
        %v2959 = vld [vmem:[#allocation2 + $0xc4] sm:$0xf]
        %v2960 = vld [vmem:[#allocation2 + $0xc8] sm:$0xf]
        %s2961 = scalar_lea.vmem [#allocation12], 24
        %v2962 = vld [vmem:[%s2961] sm:$0xf]
        %v2963 = vld [vmem:[%s2961 + $0x4] sm:$0xf]
        %v3012 = vunpack.c.l.b16 %v2913
        %v3013 = vunpack.c.l.b16 %v2914
        %v3014 = vunpack.c.l.b16 %v2915
        %v3015 = vunpack.c.l.b16 %v2916
        %v3016 = vunpack.c.l.b16 %v2917
        %v3017 = vunpack.c.l.b16 %v2918
        %v3018 = vunpack.c.l.b16 %v2919
        %v3019 = vunpack.c.l.b16 %v2920
        %v3020 = vunpack.c.l.b16 %v2921
        %v3021 = vunpack.c.l.b16 %v2922
        %v3022 = vunpack.c.l.b16 %v2923
        %v3023 = vunpack.c.l.b16 %v2924
        %v3024 = vunpack.c.l.b16 %v2925
        %v3025 = vunpack.c.l.b16 %v2926
        %v3026 = vunpack.c.l.b16 %v2927
        %v3027 = vunpack.c.l.b16 %v2928
        %v3028 = vunpack.c.l.b16 %v2929
        %v3029 = vunpack.c.l.b16 %v2930
        %v3030 = vunpack.c.l.b16 %v2931
        %v3031 = vunpack.c.l.b16 %v2932
        %v3032 = vunpack.c.l.b16 %v2933
        %v3033 = vunpack.c.l.b16 %v2934
        %v3034 = vunpack.c.l.b16 %v2935
        %v3035 = vunpack.c.l.b16 %v2936
        %v3036 = vunpack.c.l.b16 %v2937
        %v3037 = vunpack.c.l.b16 %v2938
        %v3038 = vunpack.c.l.b16 %v2939
        %v3039 = vunpack.c.l.b16 %v2940
        %v3040 = vunpack.c.l.b16 %v2941
        %v3041 = vunpack.c.l.b16 %v2942
        %v3042 = vunpack.c.l.b16 %v2943
        %v3043 = vunpack.c.l.b16 %v2944
        %v3044 = vunpack.c.l.b16 %v2945
        %v3045 = vunpack.c.l.b16 %v2946
        %v3046 = vunpack.c.l.b16 %v2947
        %v3047 = vunpack.c.l.b16 %v2948
        %v3048 = vunpack.c.l.b16 %v2949
        %v3049 = vunpack.c.l.b16 %v2950
        %v3050 = vunpack.c.l.b16 %v2951
        %v3051 = vunpack.c.l.b16 %v2952
        %v3052 = vunpack.c.l.b16 %v2953
        %v3053 = vunpack.c.l.b16 %v2954
        %v3054 = vunpack.c.l.b16 %v2955
        %v3055 = vunpack.c.l.b16 %v2956
        %v3056 = vunpack.c.l.b16 %v2957
        %v3057 = vunpack.c.l.b16 %v2958
        %v3058 = vunpack.c.l.b16 %v2959
        %v3059 = vunpack.c.l.b16 %v2960
        %v3060 = vpack.c.b16 %v3013, %v3012
        %v3061 = vpack.c.b16 %v3015, %v3014
        %v3062 = vpack.c.b16 %v3017, %v3016
        %v3063 = vpack.c.b16 %v3019, %v3018
        %v3064 = vpack.c.b16 %v3021, %v3020
        %v3065 = vpack.c.b16 %v3023, %v3022
        %v3066 = vpack.c.b16 %v3025, %v3024
        %v3067 = vpack.c.b16 %v3027, %v3026
        %v3068 = vpack.c.b16 %v3029, %v3028
        %v3069 = vpack.c.b16 %v3031, %v3030
        %v3070 = vpack.c.b16 %v3033, %v3032
        %v3071 = vpack.c.b16 %v3035, %v3034
        %v3072 = vpack.c.b16 %v3037, %v3036
        %v3073 = vpack.c.b16 %v3039, %v3038
        %v3074 = vpack.c.b16 %v3041, %v3040
        %v3075 = vpack.c.b16 %v3043, %v3042
        %v3076 = vpack.c.b16 %v3045, %v3044
        %v3077 = vpack.c.b16 %v3047, %v3046
        %v3078 = vpack.c.b16 %v3049, %v3048
        %v3079 = vpack.c.b16 %v3051, %v3050
        %v3080 = vpack.c.b16 %v3053, %v3052
        %v3081 = vpack.c.b16 %v3055, %v3054
        %v3082 = vpack.c.b16 %v3057, %v3056
        %v3083 = vpack.c.b16 %v3059, %v3058
        %v3086 = vunpack.c.l.b16 %v2962
        %v3087 = vunpack.c.l.b16 %v2963
        %v3088 = vpack.c.b16 %v3087, %v3086
        %v3091 = vsel %vm1928, %v3060, 0
        %v3094 = vsel %vm1928, %v3061, 0
        %v3097 = vsel %vm1928, %v3062, 0
        %v3100 = vsel %vm1928, %v3063, 0
        %v3103 = vsel %vm1928, %v3064, 0
        %v3106 = vsel %vm1928, %v3065, 0
        %v3109 = vsel %vm1928, %v3066, 0
        %v3112 = vsel %vm1928, %v3067, 0
        %v3115 = vsel %vm1928, %v3068, 0
        %v3118 = vsel %vm1928, %v3069, 0
        %v3121 = vsel %vm1928, %v3070, 0
        %v3124 = vsel %vm1928, %v3071, 0
        %v3127 = vsel %vm1928, %v3072, 0
        %v3130 = vsel %vm1928, %v3073, 0
        %v3133 = vsel %vm1928, %v3074, 0
        %v3136 = vsel %vm1928, %v3075, 0
        %v3139 = vsel %vm1928, %v3076, 0
        %v3142 = vsel %vm1928, %v3077, 0
        %v3145 = vsel %vm1928, %v3078, 0
        %v3148 = vsel %vm1928, %v3079, 0
        %v3151 = vsel %vm1928, %v3080, 0
        %v3154 = vsel %vm1928, %v3081, 0
        %v3157 = vsel %vm1928, %v3082, 0
        %v3160 = vsel %vm1928, %v3083, 0
        %3162 = vmatprep.subr.bf16.mxu0 0
        %3163 = vmatpush1.bf16.msra.mxu0 %v3088
        %3164 = vmatprep.subr.bf16.mxu0 0
        %3165 = vmatpush1.bf16.msra.mxu0 0
        %3166 = vmatprep.subr.bf16.mxu0 0
        %3167 = vmatpush1.bf16.msra.mxu0 0
        %3168 = vmatprep.subr.bf16.mxu0 0
        %3169 = vmatpush1.bf16.msra.mxu0 0
        %3170 = vmatprep.subr.bf16.mxu0 0
        %3171 = vmatpush1.bf16.msra.mxu0 0
        %3172 = vmatprep.subr.bf16.mxu0 0
        %3173 = vmatpush1.bf16.msra.mxu0 0
        %3174 = vmatprep.subr.bf16.mxu0 0
        %3175 = vmatpush1.bf16.msra.mxu0 0
        %3176 = vmatprep.subr.bf16.mxu0 0
        %3177 = vmatpush1.bf16.msra.mxu0 0
        %3178 = vmatprep.subr.bf16.mxu0 0
        %3179 = vmatpush1.bf16.msra.mxu0 0
        %3180 = vmatprep.subr.bf16.mxu0 0
        %3181 = vmatpush1.bf16.msra.mxu0 0
        %3182 = vmatprep.subr.bf16.mxu0 0
        %3183 = vmatpush1.bf16.msra.mxu0 0
        %3184 = vmatprep.subr.bf16.mxu0 0
        %3185 = vmatpush1.bf16.msra.mxu0 0
        %3186 = vmatprep.subr.bf16.mxu0 0
        %3187 = vmatpush1.bf16.msra.mxu0 0
        %3188 = vmatprep.subr.bf16.mxu0 0
        %3189 = vmatpush1.bf16.msra.mxu0 0
        %3190 = vmatprep.subr.bf16.mxu0 0
        %3191 = vmatpush1.bf16.msra.mxu0 0
        %3192 = vmatprep.subr.bf16.mxu0 0
        %3193 = vmatpush1.bf16.msra.mxu0 0
        %3194 = vmatprep.mubr.bf16.mxu0 0
        %3195 = vmatmul.mubr.bf16.gmra.mrb[0].mxu0 %v3091
        %v3196 = vpop.f32.mrb[0].mxu0
        %v3197 = vadd.f32 0.0, %v3196
        %v3198 = vpop.f32.mrb[0].mxu0
        %v3199 = vpop.f32.mrb[0].mxu0
        %v3200 = vadd.f32 0.0, %v3199
        %v3201 = vpop.f32.mrb[0].mxu0
        %3202 = vmatprep.mubr.bf16.mxu0 0
        %3203 = vmatmul.mubr.bf16.gmra.mrb[0].mxu0 %v3094
        %v3204 = vpop.f32.mrb[0].mxu0
        %v3205 = vadd.f32 0.0, %v3204
        %v3206 = vpop.f32.mrb[0].mxu0
        %v3207 = vpop.f32.mrb[0].mxu0
        %v3208 = vadd.f32 0.0, %v3207
        %v3209 = vpop.f32.mrb[0].mxu0
        %3210 = vmatprep.mubr.bf16.mxu0 0
        %3211 = vmatmul.mubr.bf16.gmra.mrb[0].mxu0 %v3097
        %v3212 = vpop.f32.mrb[0].mxu0
        %v3213 = vadd.f32 0.0, %v3212
        %v3214 = vpop.f32.mrb[0].mxu0
        %v3215 = vpop.f32.mrb[0].mxu0
        %v3216 = vadd.f32 0.0, %v3215
        %v3217 = vpop.f32.mrb[0].mxu0
        %3218 = vmatprep.mubr.bf16.mxu0 0
        %3219 = vmatmul.mubr.bf16.gmra.mrb[0].mxu0 %v3100
        %v3220 = vpop.f32.mrb[0].mxu0
        %v3221 = vadd.f32 0.0, %v3220
        %v3222 = vpop.f32.mrb[0].mxu0
        %v3223 = vpop.f32.mrb[0].mxu0
        %v3224 = vadd.f32 0.0, %v3223
        %v3225 = vpop.f32.mrb[0].mxu0
        %3226 = vmatprep.mubr.bf16.mxu0 0
        %3227 = vmatmul.mubr.bf16.gmra.mrb[0].mxu0 %v3103
        %v3228 = vpop.f32.mrb[0].mxu0
        %v3229 = vadd.f32 0.0, %v3228
        %v3230 = vpop.f32.mrb[0].mxu0
        %v3231 = vpop.f32.mrb[0].mxu0
        %v3232 = vadd.f32 0.0, %v3231
        %v3233 = vpop.f32.mrb[0].mxu0
        %3234 = vmatprep.mubr.bf16.mxu0 0
        %3235 = vmatmul.mubr.bf16.gmra.mrb[0].mxu0 %v3106
        %v3236 = vpop.f32.mrb[0].mxu0
        %v3237 = vadd.f32 0.0, %v3236
        %v3238 = vpop.f32.mrb[0].mxu0
        %v3239 = vpop.f32.mrb[0].mxu0
        %v3240 = vadd.f32 0.0, %v3239
        %v3241 = vpop.f32.mrb[0].mxu0
        %3242 = vmatprep.mubr.bf16.mxu0 0
        %3243 = vmatmul.mubr.bf16.gmra.mrb[0].mxu0 %v3109
        %v3244 = vpop.f32.mrb[0].mxu0
        %v3245 = vadd.f32 0.0, %v3244
        %v3246 = vpop.f32.mrb[0].mxu0
        %v3247 = vpop.f32.mrb[0].mxu0
        %v3248 = vadd.f32 0.0, %v3247
        %v3249 = vpop.f32.mrb[0].mxu0
        %3250 = vmatprep.mubr.bf16.mxu0 0
        %3251 = vmatmul.mubr.bf16.gmra.mrb[0].mxu0 %v3112
        %v3252 = vpop.f32.mrb[0].mxu0
        %v3253 = vadd.f32 0.0, %v3252
        %v3254 = vpop.f32.mrb[0].mxu0
        %v3255 = vpop.f32.mrb[0].mxu0
        %v3256 = vadd.f32 0.0, %v3255
        %v3257 = vpop.f32.mrb[0].mxu0
        %3258 = vmatprep.mubr.bf16.mxu0 0
        %3259 = vmatmul.mubr.bf16.gmra.mrb[0].mxu0 %v3115
        %v3260 = vpop.f32.mrb[0].mxu0
        %v3261 = vadd.f32 0.0, %v3260
        %v3262 = vpop.f32.mrb[0].mxu0
        %v3263 = vpop.f32.mrb[0].mxu0
        %v3264 = vadd.f32 0.0, %v3263
        %v3265 = vpop.f32.mrb[0].mxu0
        %3266 = vmatprep.mubr.bf16.mxu0 0
        %3267 = vmatmul.mubr.bf16.gmra.mrb[0].mxu0 %v3118
        %v3268 = vpop.f32.mrb[0].mxu0
        %v3269 = vadd.f32 0.0, %v3268
        %v3270 = vpop.f32.mrb[0].mxu0
        %v3271 = vpop.f32.mrb[0].mxu0
        %v3272 = vadd.f32 0.0, %v3271
        %v3273 = vpop.f32.mrb[0].mxu0
        %3274 = vmatprep.mubr.bf16.mxu0 0
        %3275 = vmatmul.mubr.bf16.gmra.mrb[0].mxu0 %v3121
        %v3276 = vpop.f32.mrb[0].mxu0
        %v3277 = vadd.f32 0.0, %v3276
        %v3278 = vpop.f32.mrb[0].mxu0
        %v3279 = vpop.f32.mrb[0].mxu0
        %v3280 = vadd.f32 0.0, %v3279
        %v3281 = vpop.f32.mrb[0].mxu0
        %3282 = vmatprep.mubr.bf16.mxu0 0
        %3283 = vmatmul.mubr.bf16.gmra.mrb[0].mxu0 %v3124
        %v3284 = vpop.f32.mrb[0].mxu0
        %v3285 = vadd.f32 0.0, %v3284
        %v3286 = vpop.f32.mrb[0].mxu0
        %v3287 = vpop.f32.mrb[0].mxu0
        %v3288 = vadd.f32 0.0, %v3287
        %v3289 = vpop.f32.mrb[0].mxu0
        %3290 = vmatprep.mubr.bf16.mxu0 0
        %3291 = vmatmul.mubr.bf16.gmra.mrb[0].mxu0 %v3127
        %v3292 = vpop.f32.mrb[0].mxu0
        %v3293 = vadd.f32 0.0, %v3292
        %v3294 = vpop.f32.mrb[0].mxu0
        %v3295 = vpop.f32.mrb[0].mxu0
        %v3296 = vadd.f32 0.0, %v3295
        %v3297 = vpop.f32.mrb[0].mxu0
        %3298 = vmatprep.mubr.bf16.mxu0 0
        %3299 = vmatmul.mubr.bf16.gmra.mrb[0].mxu0 %v3130
        %v3300 = vpop.f32.mrb[0].mxu0
        %v3301 = vadd.f32 0.0, %v3300
        %v3302 = vpop.f32.mrb[0].mxu0
        %v3303 = vpop.f32.mrb[0].mxu0
        %v3304 = vadd.f32 0.0, %v3303
        %v3305 = vpop.f32.mrb[0].mxu0
        %3306 = vmatprep.mubr.bf16.mxu0 0
        %3307 = vmatmul.mubr.bf16.gmra.mrb[0].mxu0 %v3133
        %v3308 = vpop.f32.mrb[0].mxu0
        %v3309 = vadd.f32 0.0, %v3308
        %v3310 = vpop.f32.mrb[0].mxu0
        %v3311 = vpop.f32.mrb[0].mxu0
        %v3312 = vadd.f32 0.0, %v3311
        %v3313 = vpop.f32.mrb[0].mxu0
        %3314 = vmatprep.mubr.bf16.mxu0 0
        %3315 = vmatmul.mubr.bf16.gmra.mrb[0].mxu0 %v3136
        %v3316 = vpop.f32.mrb[0].mxu0
        %v3317 = vadd.f32 0.0, %v3316
        %v3318 = vpop.f32.mrb[0].mxu0
        %v3319 = vpop.f32.mrb[0].mxu0
        %v3320 = vadd.f32 0.0, %v3319
        %v3321 = vpop.f32.mrb[0].mxu0
        %3322 = vmatprep.mubr.bf16.mxu0 0
        %3323 = vmatmul.mubr.bf16.gmra.mrb[0].mxu0 %v3139
        %v3324 = vpop.f32.mrb[0].mxu0
        %v3325 = vadd.f32 0.0, %v3324
        %v3326 = vpop.f32.mrb[0].mxu0
        %v3327 = vpop.f32.mrb[0].mxu0
        %v3328 = vadd.f32 0.0, %v3327
        %v3329 = vpop.f32.mrb[0].mxu0
        %3330 = vmatprep.mubr.bf16.mxu0 0
        %3331 = vmatmul.mubr.bf16.gmra.mrb[0].mxu0 %v3142
        %v3332 = vpop.f32.mrb[0].mxu0
        %v3333 = vadd.f32 0.0, %v3332
        %v3334 = vpop.f32.mrb[0].mxu0
        %v3335 = vpop.f32.mrb[0].mxu0
        %v3336 = vadd.f32 0.0, %v3335
        %v3337 = vpop.f32.mrb[0].mxu0
        %3338 = vmatprep.mubr.bf16.mxu0 0
        %3339 = vmatmul.mubr.bf16.gmra.mrb[0].mxu0 %v3145
        %v3340 = vpop.f32.mrb[0].mxu0
        %v3341 = vadd.f32 0.0, %v3340
        %v3342 = vpop.f32.mrb[0].mxu0
        %v3343 = vpop.f32.mrb[0].mxu0
        %v3344 = vadd.f32 0.0, %v3343
        %v3345 = vpop.f32.mrb[0].mxu0
        %3346 = vmatprep.mubr.bf16.mxu0 0
        %3347 = vmatmul.mubr.bf16.gmra.mrb[0].mxu0 %v3148
        %v3348 = vpop.f32.mrb[0].mxu0
        %v3349 = vadd.f32 0.0, %v3348
        %v3350 = vpop.f32.mrb[0].mxu0
        %v3351 = vpop.f32.mrb[0].mxu0
        %v3352 = vadd.f32 0.0, %v3351
        %v3353 = vpop.f32.mrb[0].mxu0
        %3354 = vmatprep.mubr.bf16.mxu0 0
        %3355 = vmatmul.mubr.bf16.gmra.mrb[0].mxu0 %v3151
        %v3356 = vpop.f32.mrb[0].mxu0
        %v3357 = vadd.f32 0.0, %v3356
        %v3358 = vpop.f32.mrb[0].mxu0
        %v3359 = vpop.f32.mrb[0].mxu0
        %v3360 = vadd.f32 0.0, %v3359
        %v3361 = vpop.f32.mrb[0].mxu0
        %3362 = vmatprep.mubr.bf16.mxu0 0
        %3363 = vmatmul.mubr.bf16.gmra.mrb[0].mxu0 %v3154
        %v3364 = vpop.f32.mrb[0].mxu0
        %v3365 = vadd.f32 0.0, %v3364
        %v3366 = vpop.f32.mrb[0].mxu0
        %v3367 = vpop.f32.mrb[0].mxu0
        %v3368 = vadd.f32 0.0, %v3367
        %v3369 = vpop.f32.mrb[0].mxu0
        %3370 = vmatprep.mubr.bf16.mxu0 0
        %3371 = vmatmul.mubr.bf16.gmra.mrb[0].mxu0 %v3157
        %v3372 = vpop.f32.mrb[0].mxu0
        %v3373 = vadd.f32 0.0, %v3372
        %v3374 = vpop.f32.mrb[0].mxu0
        %v3375 = vpop.f32.mrb[0].mxu0
        %v3376 = vadd.f32 0.0, %v3375
        %v3377 = vpop.f32.mrb[0].mxu0
        %3378 = vmatprep.mubr.bf16.mxu0 0
        %3379 = vmatmul.mubr.bf16.gmra.mrb[0].mxu0 %v3160
        %v3380 = vpop.f32.mrb[0].mxu0
        %v3381 = vadd.f32 0.0, %v3380
        %v3382 = vpop.f32.mrb[0].mxu0
        %v3383 = vpop.f32.mrb[0].mxu0
        %v3384 = vadd.f32 0.0, %v3383
        %v3385 = vpop.f32.mrb[0].mxu0
        %3386 = vdwg.mxu0
        %v3387 = vadd.f32 %v2865, %v3197
        %v3388 = vadd.f32 %v2866, %v3200
        %v3389 = vadd.f32 %v2867, %v3205
        %v3390 = vadd.f32 %v2868, %v3208
        %v3391 = vadd.f32 %v2869, %v3213
        %v3392 = vadd.f32 %v2870, %v3216
        %v3393 = vadd.f32 %v2871, %v3221
        %v3394 = vadd.f32 %v2872, %v3224
        %v3395 = vadd.f32 %v2873, %v3229
        %v3396 = vadd.f32 %v2874, %v3232
        %v3397 = vadd.f32 %v2875, %v3237
        %v3398 = vadd.f32 %v2876, %v3240
        %v3399 = vadd.f32 %v2877, %v3245
        %v3400 = vadd.f32 %v2878, %v3248
        %v3401 = vadd.f32 %v2879, %v3253
        %v3402 = vadd.f32 %v2880, %v3256
        %v3403 = vadd.f32 %v2881, %v3261
        %v3404 = vadd.f32 %v2882, %v3264
        %v3405 = vadd.f32 %v2883, %v3269
        %v3406 = vadd.f32 %v2884, %v3272
        %v3407 = vadd.f32 %v2885, %v3277
        %v3408 = vadd.f32 %v2886, %v3280
        %v3409 = vadd.f32 %v2887, %v3285
        %v3410 = vadd.f32 %v2888, %v3288
        %v3411 = vadd.f32 %v2889, %v3293
        %v3412 = vadd.f32 %v2890, %v3296
        %v3413 = vadd.f32 %v2891, %v3301
        %v3414 = vadd.f32 %v2892, %v3304
        %v3415 = vadd.f32 %v2893, %v3309
        %v3416 = vadd.f32 %v2894, %v3312
        %v3417 = vadd.f32 %v2895, %v3317
        %v3418 = vadd.f32 %v2896, %v3320
        %v3419 = vadd.f32 %v2897, %v3325
        %v3420 = vadd.f32 %v2898, %v3328
        %v3421 = vadd.f32 %v2899, %v3333
        %v3422 = vadd.f32 %v2900, %v3336
        %v3423 = vadd.f32 %v2901, %v3341
        %v3424 = vadd.f32 %v2902, %v3344
        %v3425 = vadd.f32 %v2903, %v3349
        %v3426 = vadd.f32 %v2904, %v3352
        %v3427 = vadd.f32 %v2905, %v3357
        %v3428 = vadd.f32 %v2906, %v3360
        %v3429 = vadd.f32 %v2907, %v3365
        %v3430 = vadd.f32 %v2908, %v3368
        %v3431 = vadd.f32 %v2909, %v3373
        %v3432 = vadd.f32 %v2910, %v3376
        %v3433 = vadd.f32 %v2911, %v3381
        %v3434 = vadd.f32 %v2912, %v3384
        %v3435 = vld [vmem:[#allocation2 + $0xc] sm:$0xf]
        %v3436 = vld [vmem:[#allocation2 + $0x10] sm:$0xf]
        %v3437 = vld [vmem:[#allocation2 + $0x14] sm:$0xf]
        %v3438 = vld [vmem:[#allocation2 + $0x18] sm:$0xf]
        %v3439 = vld [vmem:[#allocation2 + $0x1c] sm:$0xf]
        %v3440 = vld [vmem:[#allocation2 + $0x20] sm:$0xf]
        %v3441 = vld [vmem:[#allocation2 + $0x24] sm:$0xf]
        %v3442 = vld [vmem:[#allocation2 + $0x28] sm:$0xf]
        %v3443 = vld [vmem:[#allocation2 + $0x2c] sm:$0xf]
        %v3444 = vld [vmem:[#allocation2 + $0x30] sm:$0xf]
        %v3445 = vld [vmem:[#allocation2 + $0x34] sm:$0xf]
        %v3446 = vld [vmem:[#allocation2 + $0x38] sm:$0xf]
        %v3447 = vld [vmem:[#allocation2 + $0x3c] sm:$0xf]
        %v3448 = vld [vmem:[#allocation2 + $0x40] sm:$0xf]
        %v3449 = vld [vmem:[#allocation2 + $0x44] sm:$0xf]
        %v3450 = vld [vmem:[#allocation2 + $0x48] sm:$0xf]
        %v3451 = vld [vmem:[#allocation2 + $0x4c] sm:$0xf]
        %v3452 = vld [vmem:[#allocation2 + $0x50] sm:$0xf]
        %v3453 = vld [vmem:[#allocation2 + $0x54] sm:$0xf]
        %v3454 = vld [vmem:[#allocation2 + $0x58] sm:$0xf]
        %v3455 = vld [vmem:[#allocation2 + $0x5c] sm:$0xf]
        %v3456 = vld [vmem:[#allocation2 + $0x60] sm:$0xf]
        %v3457 = vld [vmem:[#allocation2 + $0x64] sm:$0xf]
        %v3458 = vld [vmem:[#allocation2 + $0x68] sm:$0xf]
        %v3459 = vld [vmem:[#allocation2 + $0x6c] sm:$0xf]
        %v3460 = vld [vmem:[#allocation2 + $0x70] sm:$0xf]
        %v3461 = vld [vmem:[#allocation2 + $0x74] sm:$0xf]
        %v3462 = vld [vmem:[#allocation2 + $0x78] sm:$0xf]
        %v3463 = vld [vmem:[#allocation2 + $0x7c] sm:$0xf]
        %v3464 = vld [vmem:[#allocation2 + $0x80] sm:$0xf]
        %v3465 = vld [vmem:[#allocation2 + $0x84] sm:$0xf]
        %v3466 = vld [vmem:[#allocation2 + $0x88] sm:$0xf]
        %v3467 = vld [vmem:[#allocation2 + $0x8c] sm:$0xf]
        %v3468 = vld [vmem:[#allocation2 + $0x90] sm:$0xf]
        %v3469 = vld [vmem:[#allocation2 + $0x94] sm:$0xf]
        %v3470 = vld [vmem:[#allocation2 + $0x98] sm:$0xf]
        %v3471 = vld [vmem:[#allocation2 + $0x9c] sm:$0xf]
        %v3472 = vld [vmem:[#allocation2 + $0xa0] sm:$0xf]
        %v3473 = vld [vmem:[#allocation2 + $0xa4] sm:$0xf]
        %v3474 = vld [vmem:[#allocation2 + $0xa8] sm:$0xf]
        %v3475 = vld [vmem:[#allocation2 + $0xac] sm:$0xf]
        %v3476 = vld [vmem:[#allocation2 + $0xb0] sm:$0xf]
        %v3477 = vld [vmem:[#allocation2 + $0xb4] sm:$0xf]
        %v3478 = vld [vmem:[#allocation2 + $0xb8] sm:$0xf]
        %v3479 = vld [vmem:[#allocation2 + $0xbc] sm:$0xf]
        %v3480 = vld [vmem:[#allocation2 + $0xc0] sm:$0xf]
        %v3481 = vld [vmem:[#allocation2 + $0xc4] sm:$0xf]
        %v3482 = vld [vmem:[#allocation2 + $0xc8] sm:$0xf]
        %v3483 = vld [vmem:[#allocation2 + $0xcc] sm:$0x1]
        %s3484 = scalar_lea.vmem [#allocation12], 32
        %v3485 = vld [vmem:[%s3484] sm:$0xf]
        %v3486 = vld [vmem:[%s3484 + $0x4] sm:$0xf]
        %v3536 = vunpack.c.l.b16 %v3435
        %v3537 = vunpack.c.l.b16 %v3436
        %v3538 = vunpack.c.l.b16 %v3437
        %v3539 = vunpack.c.l.b16 %v3438
        %v3540 = vunpack.c.l.b16 %v3439
        %v3541 = vunpack.c.l.b16 %v3440
        %v3542 = vunpack.c.l.b16 %v3441
        %v3543 = vunpack.c.l.b16 %v3442
        %v3544 = vunpack.c.l.b16 %v3443
        %v3545 = vunpack.c.l.b16 %v3444
        %v3546 = vunpack.c.l.b16 %v3445
        %v3547 = vunpack.c.l.b16 %v3446
        %v3548 = vunpack.c.l.b16 %v3447
        %v3549 = vunpack.c.l.b16 %v3448
        %v3550 = vunpack.c.l.b16 %v3449
        %v3551 = vunpack.c.l.b16 %v3450
        %v3552 = vunpack.c.l.b16 %v3451
        %v3553 = vunpack.c.l.b16 %v3452
        %v3554 = vunpack.c.l.b16 %v3453
        %v3555 = vunpack.c.l.b16 %v3454
        %v3556 = vunpack.c.l.b16 %v3455
        %v3557 = vunpack.c.l.b16 %v3456
        %v3558 = vunpack.c.l.b16 %v3457
        %v3559 = vunpack.c.l.b16 %v3458
        %v3560 = vunpack.c.l.b16 %v3459
        %v3561 = vunpack.c.l.b16 %v3460
        %v3562 = vunpack.c.l.b16 %v3461
        %v3563 = vunpack.c.l.b16 %v3462
        %v3564 = vunpack.c.l.b16 %v3463
        %v3565 = vunpack.c.l.b16 %v3464
        %v3566 = vunpack.c.l.b16 %v3465
        %v3567 = vunpack.c.l.b16 %v3466
        %v3568 = vunpack.c.l.b16 %v3467
        %v3569 = vunpack.c.l.b16 %v3468
        %v3570 = vunpack.c.l.b16 %v3469
        %v3571 = vunpack.c.l.b16 %v3470
        %v3572 = vunpack.c.l.b16 %v3471
        %v3573 = vunpack.c.l.b16 %v3472
        %v3574 = vunpack.c.l.b16 %v3473
        %v3575 = vunpack.c.l.b16 %v3474
        %v3576 = vunpack.c.l.b16 %v3475
        %v3577 = vunpack.c.l.b16 %v3476
        %v3578 = vunpack.c.l.b16 %v3477
        %v3579 = vunpack.c.l.b16 %v3478
        %v3580 = vunpack.c.l.b16 %v3479
        %v3581 = vunpack.c.l.b16 %v3480
        %v3582 = vunpack.c.l.b16 %v3481
        %v3583 = vunpack.c.l.b16 %v3482
        %v3584 = vunpack.c.l.b16 %v3483
        %v3585 = vpack.c.b16 %v3537, %v3536
        %v3586 = vpack.c.b16 %v3539, %v3538
        %v3587 = vpack.c.b16 %v3541, %v3540
        %v3588 = vpack.c.b16 %v3543, %v3542
        %v3589 = vpack.c.b16 %v3545, %v3544
        %v3590 = vpack.c.b16 %v3547, %v3546
        %v3591 = vpack.c.b16 %v3549, %v3548
        %v3592 = vpack.c.b16 %v3551, %v3550
        %v3593 = vpack.c.b16 %v3553, %v3552
        %v3594 = vpack.c.b16 %v3555, %v3554
        %v3595 = vpack.c.b16 %v3557, %v3556
        %v3596 = vpack.c.b16 %v3559, %v3558
        %v3597 = vpack.c.b16 %v3561, %v3560
        %v3598 = vpack.c.b16 %v3563, %v3562
        %v3599 = vpack.c.b16 %v3565, %v3564
        %v3600 = vpack.c.b16 %v3567, %v3566
        %v3601 = vpack.c.b16 %v3569, %v3568
        %v3602 = vpack.c.b16 %v3571, %v3570
        %v3603 = vpack.c.b16 %v3573, %v3572
        %v3604 = vpack.c.b16 %v3575, %v3574
        %v3605 = vpack.c.b16 %v3577, %v3576
        %v3606 = vpack.c.b16 %v3579, %v3578
        %v3607 = vpack.c.b16 %v3581, %v3580
        %v3608 = vpack.c.b16 %v3583, %v3582
        %v3609 = vpack.c.b16 %v3584, %v3584
        %v3611 = vshrl.u32 %v3585, 16
        %v3613 = vshll.u32 %v3585, 16
        %v3615 = vrot.slane %v3613, 1
        %v3616 = vor.u32 %v3611, %v3615
        %v3618 = vshll.u32 %v3586, 16
        %v3620 = vrot.slane %v3618, 1
        %v3621 = vsel %vm1725, %v3616, %v3620
        %v3622 = vshrl.u32 %v3586, 16
        %v3624 = vor.u32 %v3622, %v3620
        %v3626 = vshll.u32 %v3587, 16
        %v3628 = vrot.slane %v3626, 1
        %v3629 = vsel %vm1725, %v3624, %v3628
        %v3630 = vshrl.u32 %v3587, 16
        %v3632 = vor.u32 %v3630, %v3628
        %v3634 = vshll.u32 %v3588, 16
        %v3636 = vrot.slane %v3634, 1
        %v3637 = vsel %vm1725, %v3632, %v3636
        %v3638 = vshrl.u32 %v3588, 16
        %v3640 = vor.u32 %v3638, %v3636
        %v3642 = vshll.u32 %v3589, 16
        %v3644 = vrot.slane %v3642, 1
        %v3645 = vsel %vm1725, %v3640, %v3644
        %v3646 = vshrl.u32 %v3589, 16
        %v3648 = vor.u32 %v3646, %v3644
        %v3650 = vshll.u32 %v3590, 16
        %v3652 = vrot.slane %v3650, 1
        %v3653 = vsel %vm1725, %v3648, %v3652
        %v3654 = vshrl.u32 %v3590, 16
        %v3656 = vor.u32 %v3654, %v3652
        %v3658 = vshll.u32 %v3591, 16
        %v3660 = vrot.slane %v3658, 1
        %v3661 = vsel %vm1725, %v3656, %v3660
        %v3662 = vshrl.u32 %v3591, 16
        %v3664 = vor.u32 %v3662, %v3660
        %v3666 = vshll.u32 %v3592, 16
        %v3668 = vrot.slane %v3666, 1
        %v3669 = vsel %vm1725, %v3664, %v3668
        %v3670 = vshrl.u32 %v3592, 16
        %v3672 = vor.u32 %v3670, %v3668
        %v3674 = vshll.u32 %v3593, 16
        %v3676 = vrot.slane %v3674, 1
        %v3677 = vsel %vm1725, %v3672, %v3676
        %v3678 = vshrl.u32 %v3593, 16
        %v3680 = vor.u32 %v3678, %v3676
        %v3682 = vshll.u32 %v3594, 16
        %v3684 = vrot.slane %v3682, 1
        %v3685 = vsel %vm1725, %v3680, %v3684
        %v3686 = vshrl.u32 %v3594, 16
        %v3688 = vor.u32 %v3686, %v3684
        %v3690 = vshll.u32 %v3595, 16
        %v3692 = vrot.slane %v3690, 1
        %v3693 = vsel %vm1725, %v3688, %v3692
        %v3694 = vshrl.u32 %v3595, 16
        %v3696 = vor.u32 %v3694, %v3692
        %v3698 = vshll.u32 %v3596, 16
        %v3700 = vrot.slane %v3698, 1
        %v3701 = vsel %vm1725, %v3696, %v3700
        %v3702 = vshrl.u32 %v3596, 16
        %v3704 = vor.u32 %v3702, %v3700
        %v3706 = vshll.u32 %v3597, 16
        %v3708 = vrot.slane %v3706, 1
        %v3709 = vsel %vm1725, %v3704, %v3708
        %v3710 = vshrl.u32 %v3597, 16
        %v3712 = vor.u32 %v3710, %v3708
        %v3714 = vshll.u32 %v3598, 16
        %v3716 = vrot.slane %v3714, 1
        %v3717 = vsel %vm1725, %v3712, %v3716
        %v3718 = vshrl.u32 %v3598, 16
        %v3720 = vor.u32 %v3718, %v3716
        %v3722 = vshll.u32 %v3599, 16
        %v3724 = vrot.slane %v3722, 1
        %v3725 = vsel %vm1725, %v3720, %v3724
        %v3726 = vshrl.u32 %v3599, 16
        %v3728 = vor.u32 %v3726, %v3724
        %v3730 = vshll.u32 %v3600, 16
        %v3732 = vrot.slane %v3730, 1
        %v3733 = vsel %vm1725, %v3728, %v3732
        %v3734 = vshrl.u32 %v3600, 16
        %v3736 = vor.u32 %v3734, %v3732
        %v3738 = vshll.u32 %v3601, 16
        %v3740 = vrot.slane %v3738, 1
        %v3741 = vsel %vm1725, %v3736, %v3740
        %v3742 = vshrl.u32 %v3601, 16
        %v3744 = vor.u32 %v3742, %v3740
        %v3746 = vshll.u32 %v3602, 16
        %v3748 = vrot.slane %v3746, 1
        %v3749 = vsel %vm1725, %v3744, %v3748
        %v3750 = vshrl.u32 %v3602, 16
        %v3752 = vor.u32 %v3750, %v3748
        %v3754 = vshll.u32 %v3603, 16
        %v3756 = vrot.slane %v3754, 1
        %v3757 = vsel %vm1725, %v3752, %v3756
        %v3758 = vshrl.u32 %v3603, 16
        %v3760 = vor.u32 %v3758, %v3756
        %v3762 = vshll.u32 %v3604, 16
        %v3764 = vrot.slane %v3762, 1
        %v3765 = vsel %vm1725, %v3760, %v3764
        %v3766 = vshrl.u32 %v3604, 16
        %v3768 = vor.u32 %v3766, %v3764
        %v3770 = vshll.u32 %v3605, 16
        %v3772 = vrot.slane %v3770, 1
        %v3773 = vsel %vm1725, %v3768, %v3772
        %v3774 = vshrl.u32 %v3605, 16
        %v3776 = vor.u32 %v3774, %v3772
        %v3778 = vshll.u32 %v3606, 16
        %v3780 = vrot.slane %v3778, 1
        %v3781 = vsel %vm1725, %v3776, %v3780
        %v3782 = vshrl.u32 %v3606, 16
        %v3784 = vor.u32 %v3782, %v3780
        %v3786 = vshll.u32 %v3607, 16
        %v3788 = vrot.slane %v3786, 1
        %v3789 = vsel %vm1725, %v3784, %v3788
        %v3790 = vshrl.u32 %v3607, 16
        %v3792 = vor.u32 %v3790, %v3788
        %v3794 = vshll.u32 %v3608, 16
        %v3796 = vrot.slane %v3794, 1
        %v3797 = vsel %vm1725, %v3792, %v3796
        %v3798 = vshrl.u32 %v3608, 16
        %v3800 = vor.u32 %v3798, %v3796
        %v3802 = vshll.u32 %v3609, 16
        %v3804 = vrot.slane %v3802, 1
        %v3805 = vsel %vm1725, %v3800, %v3804
        %v3808 = vunpack.c.l.b16 %v3485
        %v3809 = vunpack.c.l.b16 %v3486
        %v3810 = vpack.c.b16 %v3809, %v3808
        %v3813 = vsel %vm1928, %v3621, 0
        %v3816 = vsel %vm1928, %v3629, 0
        %v3819 = vsel %vm1928, %v3637, 0
        %v3822 = vsel %vm1928, %v3645, 0
        %v3825 = vsel %vm1928, %v3653, 0
        %v3828 = vsel %vm1928, %v3661, 0
        %v3831 = vsel %vm1928, %v3669, 0
        %v3834 = vsel %vm1928, %v3677, 0
        %v3837 = vsel %vm1928, %v3685, 0
        %v3840 = vsel %vm1928, %v3693, 0
        %v3843 = vsel %vm1928, %v3701, 0
        %v3846 = vsel %vm1928, %v3709, 0
        %v3849 = vsel %vm1928, %v3717, 0
        %v3852 = vsel %vm1928, %v3725, 0
        %v3855 = vsel %vm1928, %v3733, 0
        %v3858 = vsel %vm1928, %v3741, 0
        %v3861 = vsel %vm1928, %v3749, 0
        %v3864 = vsel %vm1928, %v3757, 0
        %v3867 = vsel %vm1928, %v3765, 0
        %v3870 = vsel %vm1928, %v3773, 0
        %v3873 = vsel %vm1928, %v3781, 0
        %v3876 = vsel %vm1928, %v3789, 0
        %v3879 = vsel %vm1928, %v3797, 0
        %v3882 = vsel %vm1928, %v3805, 0
        %3884 = vmatprep.subr.bf16.mxu0 0
        %3885 = vmatpush1.bf16.msra.mxu0 %v3810
        %3886 = vmatprep.subr.bf16.mxu0 0
        %3887 = vmatpush1.bf16.msra.mxu0 0
        %3888 = vmatprep.subr.bf16.mxu0 0
        %3889 = vmatpush1.bf16.msra.mxu0 0
        %3890 = vmatprep.subr.bf16.mxu0 0
        %3891 = vmatpush1.bf16.msra.mxu0 0
        %3892 = vmatprep.subr.bf16.mxu0 0
        %3893 = vmatpush1.bf16.msra.mxu0 0
        %3894 = vmatprep.subr.bf16.mxu0 0
        %3895 = vmatpush1.bf16.msra.mxu0 0
        %3896 = vmatprep.subr.bf16.mxu0 0
        %3897 = vmatpush1.bf16.msra.mxu0 0
        %3898 = vmatprep.subr.bf16.mxu0 0
        %3899 = vmatpush1.bf16.msra.mxu0 0
        %3900 = vmatprep.subr.bf16.mxu0 0
        %3901 = vmatpush1.bf16.msra.mxu0 0
        %3902 = vmatprep.subr.bf16.mxu0 0
        %3903 = vmatpush1.bf16.msra.mxu0 0
        %3904 = vmatprep.subr.bf16.mxu0 0
        %3905 = vmatpush1.bf16.msra.mxu0 0
        %3906 = vmatprep.subr.bf16.mxu0 0
        %3907 = vmatpush1.bf16.msra.mxu0 0
        %3908 = vmatprep.subr.bf16.mxu0 0
        %3909 = vmatpush1.bf16.msra.mxu0 0
        %3910 = vmatprep.subr.bf16.mxu0 0
        %3911 = vmatpush1.bf16.msra.mxu0 0
        %3912 = vmatprep.subr.bf16.mxu0 0
        %3913 = vmatpush1.bf16.msra.mxu0 0
        %3914 = vmatprep.subr.bf16.mxu0 0
        %3915 = vmatpush1.bf16.msra.mxu0 0
        %3916 = vmatprep.mubr.bf16.mxu0 0
        %3917 = vmatmul.mubr.bf16.gmra.mrb[0].mxu0 %v3813
        %v3918 = vpop.f32.mrb[0].mxu0
        %v3919 = vadd.f32 0.0, %v3918
        %v3920 = vpop.f32.mrb[0].mxu0
        %v3921 = vpop.f32.mrb[0].mxu0
        %v3922 = vadd.f32 0.0, %v3921
        %v3923 = vpop.f32.mrb[0].mxu0
        %3924 = vmatprep.mubr.bf16.mxu0 0
        %3925 = vmatmul.mubr.bf16.gmra.mrb[0].mxu0 %v3816
        %v3926 = vpop.f32.mrb[0].mxu0
        %v3927 = vadd.f32 0.0, %v3926
        %v3928 = vpop.f32.mrb[0].mxu0
        %v3929 = vpop.f32.mrb[0].mxu0
        %v3930 = vadd.f32 0.0, %v3929
        %v3931 = vpop.f32.mrb[0].mxu0
        %3932 = vmatprep.mubr.bf16.mxu0 0
        %3933 = vmatmul.mubr.bf16.gmra.mrb[0].mxu0 %v3819
        %v3934 = vpop.f32.mrb[0].mxu0
        %v3935 = vadd.f32 0.0, %v3934
        %v3936 = vpop.f32.mrb[0].mxu0
        %v3937 = vpop.f32.mrb[0].mxu0
        %v3938 = vadd.f32 0.0, %v3937
        %v3939 = vpop.f32.mrb[0].mxu0
        %3940 = vmatprep.mubr.bf16.mxu0 0
        %3941 = vmatmul.mubr.bf16.gmra.mrb[0].mxu0 %v3822
        %v3942 = vpop.f32.mrb[0].mxu0
        %v3943 = vadd.f32 0.0, %v3942
        %v3944 = vpop.f32.mrb[0].mxu0
        %v3945 = vpop.f32.mrb[0].mxu0
        %v3946 = vadd.f32 0.0, %v3945
        %v3947 = vpop.f32.mrb[0].mxu0
        %3948 = vmatprep.mubr.bf16.mxu0 0
        %3949 = vmatmul.mubr.bf16.gmra.mrb[0].mxu0 %v3825
        %v3950 = vpop.f32.mrb[0].mxu0
        %v3951 = vadd.f32 0.0, %v3950
        %v3952 = vpop.f32.mrb[0].mxu0
        %v3953 = vpop.f32.mrb[0].mxu0
        %v3954 = vadd.f32 0.0, %v3953
        %v3955 = vpop.f32.mrb[0].mxu0
        %3956 = vmatprep.mubr.bf16.mxu0 0
        %3957 = vmatmul.mubr.bf16.gmra.mrb[0].mxu0 %v3828
        %v3958 = vpop.f32.mrb[0].mxu0
        %v3959 = vadd.f32 0.0, %v3958
        %v3960 = vpop.f32.mrb[0].mxu0
        %v3961 = vpop.f32.mrb[0].mxu0
        %v3962 = vadd.f32 0.0, %v3961
        %v3963 = vpop.f32.mrb[0].mxu0
        %3964 = vmatprep.mubr.bf16.mxu0 0
        %3965 = vmatmul.mubr.bf16.gmra.mrb[0].mxu0 %v3831
        %v3966 = vpop.f32.mrb[0].mxu0
        %v3967 = vadd.f32 0.0, %v3966
        %v3968 = vpop.f32.mrb[0].mxu0
        %v3969 = vpop.f32.mrb[0].mxu0
        %v3970 = vadd.f32 0.0, %v3969
        %v3971 = vpop.f32.mrb[0].mxu0
        %3972 = vmatprep.mubr.bf16.mxu0 0
        %3973 = vmatmul.mubr.bf16.gmra.mrb[0].mxu0 %v3834
        %v3974 = vpop.f32.mrb[0].mxu0
        %v3975 = vadd.f32 0.0, %v3974
        %v3976 = vpop.f32.mrb[0].mxu0
        %v3977 = vpop.f32.mrb[0].mxu0
        %v3978 = vadd.f32 0.0, %v3977
        %v3979 = vpop.f32.mrb[0].mxu0
        %3980 = vmatprep.mubr.bf16.mxu0 0
        %3981 = vmatmul.mubr.bf16.gmra.mrb[0].mxu0 %v3837
        %v3982 = vpop.f32.mrb[0].mxu0
        %v3983 = vadd.f32 0.0, %v3982
        %v3984 = vpop.f32.mrb[0].mxu0
        %v3985 = vpop.f32.mrb[0].mxu0
        %v3986 = vadd.f32 0.0, %v3985
        %v3987 = vpop.f32.mrb[0].mxu0
        %3988 = vmatprep.mubr.bf16.mxu0 0
        %3989 = vmatmul.mubr.bf16.gmra.mrb[0].mxu0 %v3840
        %v3990 = vpop.f32.mrb[0].mxu0
        %v3991 = vadd.f32 0.0, %v3990
        %v3992 = vpop.f32.mrb[0].mxu0
        %v3993 = vpop.f32.mrb[0].mxu0
        %v3994 = vadd.f32 0.0, %v3993
        %v3995 = vpop.f32.mrb[0].mxu0
        %3996 = vmatprep.mubr.bf16.mxu0 0
        %3997 = vmatmul.mubr.bf16.gmra.mrb[0].mxu0 %v3843
        %v3998 = vpop.f32.mrb[0].mxu0
        %v3999 = vadd.f32 0.0, %v3998
        %v4000 = vpop.f32.mrb[0].mxu0
        %v4001 = vpop.f32.mrb[0].mxu0
        %v4002 = vadd.f32 0.0, %v4001
        %v4003 = vpop.f32.mrb[0].mxu0
        %4004 = vmatprep.mubr.bf16.mxu0 0
        %4005 = vmatmul.mubr.bf16.gmra.mrb[0].mxu0 %v3846
        %v4006 = vpop.f32.mrb[0].mxu0
        %v4007 = vadd.f32 0.0, %v4006
        %v4008 = vpop.f32.mrb[0].mxu0
        %v4009 = vpop.f32.mrb[0].mxu0
        %v4010 = vadd.f32 0.0, %v4009
        %v4011 = vpop.f32.mrb[0].mxu0
        %4012 = vmatprep.mubr.bf16.mxu0 0
        %4013 = vmatmul.mubr.bf16.gmra.mrb[0].mxu0 %v3849
        %v4014 = vpop.f32.mrb[0].mxu0
        %v4015 = vadd.f32 0.0, %v4014
        %v4016 = vpop.f32.mrb[0].mxu0
        %v4017 = vpop.f32.mrb[0].mxu0
        %v4018 = vadd.f32 0.0, %v4017
        %v4019 = vpop.f32.mrb[0].mxu0
        %4020 = vmatprep.mubr.bf16.mxu0 0
        %4021 = vmatmul.mubr.bf16.gmra.mrb[0].mxu0 %v3852
        %v4022 = vpop.f32.mrb[0].mxu0
        %v4023 = vadd.f32 0.0, %v4022
        %v4024 = vpop.f32.mrb[0].mxu0
        %v4025 = vpop.f32.mrb[0].mxu0
        %v4026 = vadd.f32 0.0, %v4025
        %v4027 = vpop.f32.mrb[0].mxu0
        %4028 = vmatprep.mubr.bf16.mxu0 0
        %4029 = vmatmul.mubr.bf16.gmra.mrb[0].mxu0 %v3855
        %v4030 = vpop.f32.mrb[0].mxu0
        %v4031 = vadd.f32 0.0, %v4030
        %v4032 = vpop.f32.mrb[0].mxu0
        %v4033 = vpop.f32.mrb[0].mxu0
        %v4034 = vadd.f32 0.0, %v4033
        %v4035 = vpop.f32.mrb[0].mxu0
        %4036 = vmatprep.mubr.bf16.mxu0 0
        %4037 = vmatmul.mubr.bf16.gmra.mrb[0].mxu0 %v3858
        %v4038 = vpop.f32.mrb[0].mxu0
        %v4039 = vadd.f32 0.0, %v4038
        %v4040 = vpop.f32.mrb[0].mxu0
        %v4041 = vpop.f32.mrb[0].mxu0
        %v4042 = vadd.f32 0.0, %v4041
        %v4043 = vpop.f32.mrb[0].mxu0
        %4044 = vmatprep.mubr.bf16.mxu0 0
        %4045 = vmatmul.mubr.bf16.gmra.mrb[0].mxu0 %v3861
        %v4046 = vpop.f32.mrb[0].mxu0
        %v4047 = vadd.f32 0.0, %v4046
        %v4048 = vpop.f32.mrb[0].mxu0
        %v4049 = vpop.f32.mrb[0].mxu0
        %v4050 = vadd.f32 0.0, %v4049
        %v4051 = vpop.f32.mrb[0].mxu0
        %4052 = vmatprep.mubr.bf16.mxu0 0
        %4053 = vmatmul.mubr.bf16.gmra.mrb[0].mxu0 %v3864
        %v4054 = vpop.f32.mrb[0].mxu0
        %v4055 = vadd.f32 0.0, %v4054
        %v4056 = vpop.f32.mrb[0].mxu0
        %v4057 = vpop.f32.mrb[0].mxu0
        %v4058 = vadd.f32 0.0, %v4057
        %v4059 = vpop.f32.mrb[0].mxu0
        %4060 = vmatprep.mubr.bf16.mxu0 0
        %4061 = vmatmul.mubr.bf16.gmra.mrb[0].mxu0 %v3867
        %v4062 = vpop.f32.mrb[0].mxu0
        %v4063 = vadd.f32 0.0, %v4062
        %v4064 = vpop.f32.mrb[0].mxu0
        %v4065 = vpop.f32.mrb[0].mxu0
        %v4066 = vadd.f32 0.0, %v4065
        %v4067 = vpop.f32.mrb[0].mxu0
        %4068 = vmatprep.mubr.bf16.mxu0 0
        %4069 = vmatmul.mubr.bf16.gmra.mrb[0].mxu0 %v3870
        %v4070 = vpop.f32.mrb[0].mxu0
        %v4071 = vadd.f32 0.0, %v4070
        %v4072 = vpop.f32.mrb[0].mxu0
        %v4073 = vpop.f32.mrb[0].mxu0
        %v4074 = vadd.f32 0.0, %v4073
        %v4075 = vpop.f32.mrb[0].mxu0
        %4076 = vmatprep.mubr.bf16.mxu0 0
        %4077 = vmatmul.mubr.bf16.gmra.mrb[0].mxu0 %v3873
        %v4078 = vpop.f32.mrb[0].mxu0
        %v4079 = vadd.f32 0.0, %v4078
        %v4080 = vpop.f32.mrb[0].mxu0
        %v4081 = vpop.f32.mrb[0].mxu0
        %v4082 = vadd.f32 0.0, %v4081
        %v4083 = vpop.f32.mrb[0].mxu0
        %4084 = vmatprep.mubr.bf16.mxu0 0
        %4085 = vmatmul.mubr.bf16.gmra.mrb[0].mxu0 %v3876
        %v4086 = vpop.f32.mrb[0].mxu0
        %v4087 = vadd.f32 0.0, %v4086
        %v4088 = vpop.f32.mrb[0].mxu0
        %v4089 = vpop.f32.mrb[0].mxu0
        %v4090 = vadd.f32 0.0, %v4089
        %v4091 = vpop.f32.mrb[0].mxu0
        %4092 = vmatprep.mubr.bf16.mxu0 0
        %4093 = vmatmul.mubr.bf16.gmra.mrb[0].mxu0 %v3879
        %v4094 = vpop.f32.mrb[0].mxu0
        %v4095 = vadd.f32 0.0, %v4094
        %v4096 = vpop.f32.mrb[0].mxu0
        %v4097 = vpop.f32.mrb[0].mxu0
        %v4098 = vadd.f32 0.0, %v4097
        %v4099 = vpop.f32.mrb[0].mxu0
        %4100 = vmatprep.mubr.bf16.mxu0 0
        %4101 = vmatmul.mubr.bf16.gmra.mrb[0].mxu0 %v3882
        %v4102 = vpop.f32.mrb[0].mxu0
        %v4103 = vadd.f32 0.0, %v4102
        %v4104 = vpop.f32.mrb[0].mxu0
        %v4105 = vpop.f32.mrb[0].mxu0
        %v4106 = vadd.f32 0.0, %v4105
        %v4107 = vpop.f32.mrb[0].mxu0
        %4108 = vdwg.mxu0
        %v4109 = vadd.f32 %v3387, %v3919
        %v4110 = vadd.f32 %v3388, %v3922
        %v4111 = vadd.f32 %v3389, %v3927
        %v4112 = vadd.f32 %v3390, %v3930
        %v4113 = vadd.f32 %v3391, %v3935
        %v4114 = vadd.f32 %v3392, %v3938
        %v4115 = vadd.f32 %v3393, %v3943
        %v4116 = vadd.f32 %v3394, %v3946
        %v4117 = vadd.f32 %v3395, %v3951
        %v4118 = vadd.f32 %v3396, %v3954
        %v4119 = vadd.f32 %v3397, %v3959
        %v4120 = vadd.f32 %v3398, %v3962
        %v4121 = vadd.f32 %v3399, %v3967
        %v4122 = vadd.f32 %v3400, %v3970
        %v4123 = vadd.f32 %v3401, %v3975
        %v4124 = vadd.f32 %v3402, %v3978
        %v4125 = vadd.f32 %v3403, %v3983
        %v4126 = vadd.f32 %v3404, %v3986
        %v4127 = vadd.f32 %v3405, %v3991
        %v4128 = vadd.f32 %v3406, %v3994
        %v4129 = vadd.f32 %v3407, %v3999
        %v4130 = vadd.f32 %v3408, %v4002
        %v4131 = vadd.f32 %v3409, %v4007
        %v4132 = vadd.f32 %v3410, %v4010
        %v4133 = vadd.f32 %v3411, %v4015
        %v4134 = vadd.f32 %v3412, %v4018
        %v4135 = vadd.f32 %v3413, %v4023
        %v4136 = vadd.f32 %v3414, %v4026
        %v4137 = vadd.f32 %v3415, %v4031
        %v4138 = vadd.f32 %v3416, %v4034
        %v4139 = vadd.f32 %v3417, %v4039
        %v4140 = vadd.f32 %v3418, %v4042
        %v4141 = vadd.f32 %v3419, %v4047
        %v4142 = vadd.f32 %v3420, %v4050
        %v4143 = vadd.f32 %v3421, %v4055
        %v4144 = vadd.f32 %v3422, %v4058
        %v4145 = vadd.f32 %v3423, %v4063
        %v4146 = vadd.f32 %v3424, %v4066
        %v4147 = vadd.f32 %v3425, %v4071
        %v4148 = vadd.f32 %v3426, %v4074
        %v4149 = vadd.f32 %v3427, %v4079
        %v4150 = vadd.f32 %v3428, %v4082
        %v4151 = vadd.f32 %v3429, %v4087
        %v4152 = vadd.f32 %v3430, %v4090
        %v4153 = vadd.f32 %v3431, %v4095
        %v4154 = vadd.f32 %v3432, %v4098
        %v4155 = vadd.f32 %v3433, %v4103
        %v4156 = vadd.f32 %v3434, %v4106
        %v4157 = vld [vmem:[#allocation2 + $0xc] sm:$0xe]
        %s4158 = scalar_lea.vmem [#allocation12], 40
        %v4159 = vld [vmem:[%s4158] sm:$0xf]
        %v4160 = vld [vmem:[%s4158 + $0x4] sm:$0xf]
        %v4162 = vunpack.c.l.b16 %v4157
        %v4163 = vpack.c.b16 %v3537, %v4162
        %v4164 = vrot.slane %v4163, 1
        %v4165 = vrot.slane %v3586, 1
        %v4166 = vsel %vm2512, %v4164, %v4165
        %v4167 = vrot.slane %v3587, 1
        %v4168 = vsel %vm2512, %v4165, %v4167
        %v4169 = vrot.slane %v3588, 1
        %v4170 = vsel %vm2512, %v4167, %v4169
        %v4171 = vrot.slane %v3589, 1
        %v4172 = vsel %vm2512, %v4169, %v4171
        %v4173 = vrot.slane %v3590, 1
        %v4174 = vsel %vm2512, %v4171, %v4173
        %v4175 = vrot.slane %v3591, 1
        %v4176 = vsel %vm2512, %v4173, %v4175
        %v4177 = vrot.slane %v3592, 1
        %v4178 = vsel %vm2512, %v4175, %v4177
        %v4179 = vrot.slane %v3593, 1
        %v4180 = vsel %vm2512, %v4177, %v4179
        %v4181 = vrot.slane %v3594, 1
        %v4182 = vsel %vm2512, %v4179, %v4181
        %v4183 = vrot.slane %v3595, 1
        %v4184 = vsel %vm2512, %v4181, %v4183
        %v4185 = vrot.slane %v3596, 1
        %v4186 = vsel %vm2512, %v4183, %v4185
        %v4187 = vrot.slane %v3597, 1
        %v4188 = vsel %vm2512, %v4185, %v4187
        %v4189 = vrot.slane %v3598, 1
        %v4190 = vsel %vm2512, %v4187, %v4189
        %v4191 = vrot.slane %v3599, 1
        %v4192 = vsel %vm2512, %v4189, %v4191
        %v4193 = vrot.slane %v3600, 1
        %v4194 = vsel %vm2512, %v4191, %v4193
        %v4195 = vrot.slane %v3601, 1
        %v4196 = vsel %vm2512, %v4193, %v4195
        %v4197 = vrot.slane %v3602, 1
        %v4198 = vsel %vm2512, %v4195, %v4197
        %v4199 = vrot.slane %v3603, 1
        %v4200 = vsel %vm2512, %v4197, %v4199
        %v4201 = vrot.slane %v3604, 1
        %v4202 = vsel %vm2512, %v4199, %v4201
        %v4203 = vrot.slane %v3605, 1
        %v4204 = vsel %vm2512, %v4201, %v4203
        %v4205 = vrot.slane %v3606, 1
        %v4206 = vsel %vm2512, %v4203, %v4205
        %v4207 = vrot.slane %v3607, 1
        %v4208 = vsel %vm2512, %v4205, %v4207
        %v4209 = vrot.slane %v3608, 1
        %v4210 = vsel %vm2512, %v4207, %v4209
        %v4211 = vrot.slane %v3609, 1
        %v4212 = vsel %vm2512, %v4209, %v4211
        %v4215 = vunpack.c.l.b16 %v4159
        %v4216 = vunpack.c.l.b16 %v4160
        %v4217 = vpack.c.b16 %v4216, %v4215
        %v4220 = vsel %vm1928, %v4166, 0
        %v4223 = vsel %vm1928, %v4168, 0
        %v4226 = vsel %vm1928, %v4170, 0
        %v4229 = vsel %vm1928, %v4172, 0
        %v4232 = vsel %vm1928, %v4174, 0
        %v4235 = vsel %vm1928, %v4176, 0
        %v4238 = vsel %vm1928, %v4178, 0
        %v4241 = vsel %vm1928, %v4180, 0
        %v4244 = vsel %vm1928, %v4182, 0
        %v4247 = vsel %vm1928, %v4184, 0
        %v4250 = vsel %vm1928, %v4186, 0
        %v4253 = vsel %vm1928, %v4188, 0
        %v4256 = vsel %vm1928, %v4190, 0
        %v4259 = vsel %vm1928, %v4192, 0
        %v4262 = vsel %vm1928, %v4194, 0
        %v4265 = vsel %vm1928, %v4196, 0
        %v4268 = vsel %vm1928, %v4198, 0
        %v4271 = vsel %vm1928, %v4200, 0
        %v4274 = vsel %vm1928, %v4202, 0
        %v4277 = vsel %vm1928, %v4204, 0
        %v4280 = vsel %vm1928, %v4206, 0
        %v4283 = vsel %vm1928, %v4208, 0
        %v4286 = vsel %vm1928, %v4210, 0
        %v4289 = vsel %vm1928, %v4212, 0
        %4291 = vmatprep.subr.bf16.mxu0 0
        %4292 = vmatpush1.bf16.msra.mxu0 %v4217
        %4293 = vmatprep.subr.bf16.mxu0 0
        %4294 = vmatpush1.bf16.msra.mxu0 0
        %4295 = vmatprep.subr.bf16.mxu0 0
        %4296 = vmatpush1.bf16.msra.mxu0 0
        %4297 = vmatprep.subr.bf16.mxu0 0
        %4298 = vmatpush1.bf16.msra.mxu0 0
        %4299 = vmatprep.subr.bf16.mxu0 0
        %4300 = vmatpush1.bf16.msra.mxu0 0
        %4301 = vmatprep.subr.bf16.mxu0 0
        %4302 = vmatpush1.bf16.msra.mxu0 0
        %4303 = vmatprep.subr.bf16.mxu0 0
        %4304 = vmatpush1.bf16.msra.mxu0 0
        %4305 = vmatprep.subr.bf16.mxu0 0
        %4306 = vmatpush1.bf16.msra.mxu0 0
        %4307 = vmatprep.subr.bf16.mxu0 0
        %4308 = vmatpush1.bf16.msra.mxu0 0
        %4309 = vmatprep.subr.bf16.mxu0 0
        %4310 = vmatpush1.bf16.msra.mxu0 0
        %4311 = vmatprep.subr.bf16.mxu0 0
        %4312 = vmatpush1.bf16.msra.mxu0 0
        %4313 = vmatprep.subr.bf16.mxu0 0
        %4314 = vmatpush1.bf16.msra.mxu0 0
        %4315 = vmatprep.subr.bf16.mxu0 0
        %4316 = vmatpush1.bf16.msra.mxu0 0
        %4317 = vmatprep.subr.bf16.mxu0 0
        %4318 = vmatpush1.bf16.msra.mxu0 0
        %4319 = vmatprep.subr.bf16.mxu0 0
        %4320 = vmatpush1.bf16.msra.mxu0 0
        %4321 = vmatprep.subr.bf16.mxu0 0
        %4322 = vmatpush1.bf16.msra.mxu0 0
        %4323 = vmatprep.mubr.bf16.mxu0 0
        %4324 = vmatmul.mubr.bf16.gmra.mrb[0].mxu0 %v4220
        %v4325 = vpop.f32.mrb[0].mxu0
        %v4326 = vadd.f32 0.0, %v4325
        %v4327 = vpop.f32.mrb[0].mxu0
        %v4328 = vpop.f32.mrb[0].mxu0
        %v4329 = vadd.f32 0.0, %v4328
        %v4330 = vpop.f32.mrb[0].mxu0
        %4331 = vmatprep.mubr.bf16.mxu0 0
        %4332 = vmatmul.mubr.bf16.gmra.mrb[0].mxu0 %v4223
        %v4333 = vpop.f32.mrb[0].mxu0
        %v4334 = vadd.f32 0.0, %v4333
        %v4335 = vpop.f32.mrb[0].mxu0
        %v4336 = vpop.f32.mrb[0].mxu0
        %v4337 = vadd.f32 0.0, %v4336
        %v4338 = vpop.f32.mrb[0].mxu0
        %4339 = vmatprep.mubr.bf16.mxu0 0
        %4340 = vmatmul.mubr.bf16.gmra.mrb[0].mxu0 %v4226
        %v4341 = vpop.f32.mrb[0].mxu0
        %v4342 = vadd.f32 0.0, %v4341
        %v4343 = vpop.f32.mrb[0].mxu0
        %v4344 = vpop.f32.mrb[0].mxu0
        %v4345 = vadd.f32 0.0, %v4344
        %v4346 = vpop.f32.mrb[0].mxu0
        %4347 = vmatprep.mubr.bf16.mxu0 0
        %4348 = vmatmul.mubr.bf16.gmra.mrb[0].mxu0 %v4229
        %v4349 = vpop.f32.mrb[0].mxu0
        %v4350 = vadd.f32 0.0, %v4349
        %v4351 = vpop.f32.mrb[0].mxu0
        %v4352 = vpop.f32.mrb[0].mxu0
        %v4353 = vadd.f32 0.0, %v4352
        %v4354 = vpop.f32.mrb[0].mxu0
        %4355 = vmatprep.mubr.bf16.mxu0 0
        %4356 = vmatmul.mubr.bf16.gmra.mrb[0].mxu0 %v4232
        %v4357 = vpop.f32.mrb[0].mxu0
        %v4358 = vadd.f32 0.0, %v4357
        %v4359 = vpop.f32.mrb[0].mxu0
        %v4360 = vpop.f32.mrb[0].mxu0
        %v4361 = vadd.f32 0.0, %v4360
        %v4362 = vpop.f32.mrb[0].mxu0
        %4363 = vmatprep.mubr.bf16.mxu0 0
        %4364 = vmatmul.mubr.bf16.gmra.mrb[0].mxu0 %v4235
        %v4365 = vpop.f32.mrb[0].mxu0
        %v4366 = vadd.f32 0.0, %v4365
        %v4367 = vpop.f32.mrb[0].mxu0
        %v4368 = vpop.f32.mrb[0].mxu0
        %v4369 = vadd.f32 0.0, %v4368
        %v4370 = vpop.f32.mrb[0].mxu0
        %4371 = vmatprep.mubr.bf16.mxu0 0
        %4372 = vmatmul.mubr.bf16.gmra.mrb[0].mxu0 %v4238
        %v4373 = vpop.f32.mrb[0].mxu0
        %v4374 = vadd.f32 0.0, %v4373
        %v4375 = vpop.f32.mrb[0].mxu0
        %v4376 = vpop.f32.mrb[0].mxu0
        %v4377 = vadd.f32 0.0, %v4376
        %v4378 = vpop.f32.mrb[0].mxu0
        %4379 = vmatprep.mubr.bf16.mxu0 0
        %4380 = vmatmul.mubr.bf16.gmra.mrb[0].mxu0 %v4241
        %v4381 = vpop.f32.mrb[0].mxu0
        %v4382 = vadd.f32 0.0, %v4381
        %v4383 = vpop.f32.mrb[0].mxu0
        %v4384 = vpop.f32.mrb[0].mxu0
        %v4385 = vadd.f32 0.0, %v4384
        %v4386 = vpop.f32.mrb[0].mxu0
        %4387 = vmatprep.mubr.bf16.mxu0 0
        %4388 = vmatmul.mubr.bf16.gmra.mrb[0].mxu0 %v4244
        %v4389 = vpop.f32.mrb[0].mxu0
        %v4390 = vadd.f32 0.0, %v4389
        %v4391 = vpop.f32.mrb[0].mxu0
        %v4392 = vpop.f32.mrb[0].mxu0
        %v4393 = vadd.f32 0.0, %v4392
        %v4394 = vpop.f32.mrb[0].mxu0
        %4395 = vmatprep.mubr.bf16.mxu0 0
        %4396 = vmatmul.mubr.bf16.gmra.mrb[0].mxu0 %v4247
        %v4397 = vpop.f32.mrb[0].mxu0
        %v4398 = vadd.f32 0.0, %v4397
        %v4399 = vpop.f32.mrb[0].mxu0
        %v4400 = vpop.f32.mrb[0].mxu0
        %v4401 = vadd.f32 0.0, %v4400
        %v4402 = vpop.f32.mrb[0].mxu0
        %4403 = vmatprep.mubr.bf16.mxu0 0
        %4404 = vmatmul.mubr.bf16.gmra.mrb[0].mxu0 %v4250
        %v4405 = vpop.f32.mrb[0].mxu0
        %v4406 = vadd.f32 0.0, %v4405
        %v4407 = vpop.f32.mrb[0].mxu0
        %v4408 = vpop.f32.mrb[0].mxu0
        %v4409 = vadd.f32 0.0, %v4408
        %v4410 = vpop.f32.mrb[0].mxu0
        %4411 = vmatprep.mubr.bf16.mxu0 0
        %4412 = vmatmul.mubr.bf16.gmra.mrb[0].mxu0 %v4253
        %v4413 = vpop.f32.mrb[0].mxu0
        %v4414 = vadd.f32 0.0, %v4413
        %v4415 = vpop.f32.mrb[0].mxu0
        %v4416 = vpop.f32.mrb[0].mxu0
        %v4417 = vadd.f32 0.0, %v4416
        %v4418 = vpop.f32.mrb[0].mxu0
        %4419 = vmatprep.mubr.bf16.mxu0 0
        %4420 = vmatmul.mubr.bf16.gmra.mrb[0].mxu0 %v4256
        %v4421 = vpop.f32.mrb[0].mxu0
        %v4422 = vadd.f32 0.0, %v4421
        %v4423 = vpop.f32.mrb[0].mxu0
        %v4424 = vpop.f32.mrb[0].mxu0
        %v4425 = vadd.f32 0.0, %v4424
        %v4426 = vpop.f32.mrb[0].mxu0
        %4427 = vmatprep.mubr.bf16.mxu0 0
        %4428 = vmatmul.mubr.bf16.gmra.mrb[0].mxu0 %v4259
        %v4429 = vpop.f32.mrb[0].mxu0
        %v4430 = vadd.f32 0.0, %v4429
        %v4431 = vpop.f32.mrb[0].mxu0
        %v4432 = vpop.f32.mrb[0].mxu0
        %v4433 = vadd.f32 0.0, %v4432
        %v4434 = vpop.f32.mrb[0].mxu0
        %4435 = vmatprep.mubr.bf16.mxu0 0
        %4436 = vmatmul.mubr.bf16.gmra.mrb[0].mxu0 %v4262
        %v4437 = vpop.f32.mrb[0].mxu0
        %v4438 = vadd.f32 0.0, %v4437
        %v4439 = vpop.f32.mrb[0].mxu0
        %v4440 = vpop.f32.mrb[0].mxu0
        %v4441 = vadd.f32 0.0, %v4440
        %v4442 = vpop.f32.mrb[0].mxu0
        %4443 = vmatprep.mubr.bf16.mxu0 0
        %4444 = vmatmul.mubr.bf16.gmra.mrb[0].mxu0 %v4265
        %v4445 = vpop.f32.mrb[0].mxu0
        %v4446 = vadd.f32 0.0, %v4445
        %v4447 = vpop.f32.mrb[0].mxu0
        %v4448 = vpop.f32.mrb[0].mxu0
        %v4449 = vadd.f32 0.0, %v4448
        %v4450 = vpop.f32.mrb[0].mxu0
        %4451 = vmatprep.mubr.bf16.mxu0 0
        %4452 = vmatmul.mubr.bf16.gmra.mrb[0].mxu0 %v4268
        %v4453 = vpop.f32.mrb[0].mxu0
        %v4454 = vadd.f32 0.0, %v4453
        %v4455 = vpop.f32.mrb[0].mxu0
        %v4456 = vpop.f32.mrb[0].mxu0
        %v4457 = vadd.f32 0.0, %v4456
        %v4458 = vpop.f32.mrb[0].mxu0
        %4459 = vmatprep.mubr.bf16.mxu0 0
        %4460 = vmatmul.mubr.bf16.gmra.mrb[0].mxu0 %v4271
        %v4461 = vpop.f32.mrb[0].mxu0
        %v4462 = vadd.f32 0.0, %v4461
        %v4463 = vpop.f32.mrb[0].mxu0
        %v4464 = vpop.f32.mrb[0].mxu0
        %v4465 = vadd.f32 0.0, %v4464
        %v4466 = vpop.f32.mrb[0].mxu0
        %4467 = vmatprep.mubr.bf16.mxu0 0
        %4468 = vmatmul.mubr.bf16.gmra.mrb[0].mxu0 %v4274
        %v4469 = vpop.f32.mrb[0].mxu0
        %v4470 = vadd.f32 0.0, %v4469
        %v4471 = vpop.f32.mrb[0].mxu0
        %v4472 = vpop.f32.mrb[0].mxu0
        %v4473 = vadd.f32 0.0, %v4472
        %v4474 = vpop.f32.mrb[0].mxu0
        %4475 = vmatprep.mubr.bf16.mxu0 0
        %4476 = vmatmul.mubr.bf16.gmra.mrb[0].mxu0 %v4277
        %v4477 = vpop.f32.mrb[0].mxu0
        %v4478 = vadd.f32 0.0, %v4477
        %v4479 = vpop.f32.mrb[0].mxu0
        %v4480 = vpop.f32.mrb[0].mxu0
        %v4481 = vadd.f32 0.0, %v4480
        %v4482 = vpop.f32.mrb[0].mxu0
        %4483 = vmatprep.mubr.bf16.mxu0 0
        %4484 = vmatmul.mubr.bf16.gmra.mrb[0].mxu0 %v4280
        %v4485 = vpop.f32.mrb[0].mxu0
        %v4486 = vadd.f32 0.0, %v4485
        %v4487 = vpop.f32.mrb[0].mxu0
        %v4488 = vpop.f32.mrb[0].mxu0
        %v4489 = vadd.f32 0.0, %v4488
        %v4490 = vpop.f32.mrb[0].mxu0
        %4491 = vmatprep.mubr.bf16.mxu0 0
        %4492 = vmatmul.mubr.bf16.gmra.mrb[0].mxu0 %v4283
        %v4493 = vpop.f32.mrb[0].mxu0
        %v4494 = vadd.f32 0.0, %v4493
        %v4495 = vpop.f32.mrb[0].mxu0
        %v4496 = vpop.f32.mrb[0].mxu0
        %v4497 = vadd.f32 0.0, %v4496
        %v4498 = vpop.f32.mrb[0].mxu0
        %4499 = vmatprep.mubr.bf16.mxu0 0
        %4500 = vmatmul.mubr.bf16.gmra.mrb[0].mxu0 %v4286
        %v4501 = vpop.f32.mrb[0].mxu0
        %v4502 = vadd.f32 0.0, %v4501
        %v4503 = vpop.f32.mrb[0].mxu0
        %v4504 = vpop.f32.mrb[0].mxu0
        %v4505 = vadd.f32 0.0, %v4504
        %v4506 = vpop.f32.mrb[0].mxu0
        %4507 = vmatprep.mubr.bf16.mxu0 0
        %4508 = vmatmul.mubr.bf16.gmra.mrb[0].mxu0 %v4289
        %v4509 = vpop.f32.mrb[0].mxu0
        %v4510 = vadd.f32 0.0, %v4509
        %v4511 = vpop.f32.mrb[0].mxu0
        %v4512 = vpop.f32.mrb[0].mxu0
        %v4513 = vadd.f32 0.0, %v4512
        %v4514 = vpop.f32.mrb[0].mxu0
        %4515 = vdwg.mxu0
        %v4516 = vadd.f32 %v4109, %v4326
        %v4517 = vadd.f32 %v4110, %v4329
        %v4518 = vadd.f32 %v4111, %v4334
        %v4519 = vadd.f32 %v4112, %v4337
        %v4520 = vadd.f32 %v4113, %v4342
        %v4521 = vadd.f32 %v4114, %v4345
        %v4522 = vadd.f32 %v4115, %v4350
        %v4523 = vadd.f32 %v4116, %v4353
        %v4524 = vadd.f32 %v4117, %v4358
        %v4525 = vadd.f32 %v4118, %v4361
        %v4526 = vadd.f32 %v4119, %v4366
        %v4527 = vadd.f32 %v4120, %v4369
        %v4528 = vadd.f32 %v4121, %v4374
        %v4529 = vadd.f32 %v4122, %v4377
        %v4530 = vadd.f32 %v4123, %v4382
        %v4531 = vadd.f32 %v4124, %v4385
        %v4532 = vadd.f32 %v4125, %v4390
        %v4533 = vadd.f32 %v4126, %v4393
        %v4534 = vadd.f32 %v4127, %v4398
        %v4535 = vadd.f32 %v4128, %v4401
        %v4536 = vadd.f32 %v4129, %v4406
        %v4537 = vadd.f32 %v4130, %v4409
        %v4538 = vadd.f32 %v4131, %v4414
        %v4539 = vadd.f32 %v4132, %v4417
        %v4540 = vadd.f32 %v4133, %v4422
        %v4541 = vadd.f32 %v4134, %v4425
        %v4542 = vadd.f32 %v4135, %v4430
        %v4543 = vadd.f32 %v4136, %v4433
        %v4544 = vadd.f32 %v4137, %v4438
        %v4545 = vadd.f32 %v4138, %v4441
        %v4546 = vadd.f32 %v4139, %v4446
        %v4547 = vadd.f32 %v4140, %v4449
        %v4548 = vadd.f32 %v4141, %v4454
        %v4549 = vadd.f32 %v4142, %v4457
        %v4550 = vadd.f32 %v4143, %v4462
        %v4551 = vadd.f32 %v4144, %v4465
        %v4552 = vadd.f32 %v4145, %v4470
        %v4553 = vadd.f32 %v4146, %v4473
        %v4554 = vadd.f32 %v4147, %v4478
        %v4555 = vadd.f32 %v4148, %v4481
        %v4556 = vadd.f32 %v4149, %v4486
        %v4557 = vadd.f32 %v4150, %v4489
        %v4558 = vadd.f32 %v4151, %v4494
        %v4559 = vadd.f32 %v4152, %v4497
        %v4560 = vadd.f32 %v4153, %v4502
        %v4561 = vadd.f32 %v4154, %v4505
        %v4562 = vadd.f32 %v4155, %v4510
        %v4563 = vadd.f32 %v4156, %v4513
        %v4564 = vld [vmem:[#allocation2 + $0x18] sm:$0xf]
        %v4565 = vld [vmem:[#allocation2 + $0x1c] sm:$0xf]
        %v4566 = vld [vmem:[#allocation2 + $0x20] sm:$0xf]
        %v4567 = vld [vmem:[#allocation2 + $0x24] sm:$0xf]
        %v4568 = vld [vmem:[#allocation2 + $0x28] sm:$0xf]
        %v4569 = vld [vmem:[#allocation2 + $0x2c] sm:$0xf]
        %v4570 = vld [vmem:[#allocation2 + $0x30] sm:$0xf]
        %v4571 = vld [vmem:[#allocation2 + $0x34] sm:$0xf]
        %v4572 = vld [vmem:[#allocation2 + $0x38] sm:$0xf]
        %v4573 = vld [vmem:[#allocation2 + $0x3c] sm:$0xf]
        %v4574 = vld [vmem:[#allocation2 + $0x40] sm:$0xf]
        %v4575 = vld [vmem:[#allocation2 + $0x44] sm:$0xf]
        %v4576 = vld [vmem:[#allocation2 + $0x48] sm:$0xf]
        %v4577 = vld [vmem:[#allocation2 + $0x4c] sm:$0xf]
        %v4578 = vld [vmem:[#allocation2 + $0x50] sm:$0xf]
        %v4579 = vld [vmem:[#allocation2 + $0x54] sm:$0xf]
        %v4580 = vld [vmem:[#allocation2 + $0x58] sm:$0xf]
        %v4581 = vld [vmem:[#allocation2 + $0x5c] sm:$0xf]
        %v4582 = vld [vmem:[#allocation2 + $0x60] sm:$0xf]
        %v4583 = vld [vmem:[#allocation2 + $0x64] sm:$0xf]
        %v4584 = vld [vmem:[#allocation2 + $0x68] sm:$0xf]
        %v4585 = vld [vmem:[#allocation2 + $0x6c] sm:$0xf]
        %v4586 = vld [vmem:[#allocation2 + $0x70] sm:$0xf]
        %v4587 = vld [vmem:[#allocation2 + $0x74] sm:$0xf]
        %v4588 = vld [vmem:[#allocation2 + $0x78] sm:$0xf]
        %v4589 = vld [vmem:[#allocation2 + $0x7c] sm:$0xf]
        %v4590 = vld [vmem:[#allocation2 + $0x80] sm:$0xf]
        %v4591 = vld [vmem:[#allocation2 + $0x84] sm:$0xf]
        %v4592 = vld [vmem:[#allocation2 + $0x88] sm:$0xf]
        %v4593 = vld [vmem:[#allocation2 + $0x8c] sm:$0xf]
        %v4594 = vld [vmem:[#allocation2 + $0x90] sm:$0xf]
        %v4595 = vld [vmem:[#allocation2 + $0x94] sm:$0xf]
        %v4596 = vld [vmem:[#allocation2 + $0x98] sm:$0xf]
        %v4597 = vld [vmem:[#allocation2 + $0x9c] sm:$0xf]
        %v4598 = vld [vmem:[#allocation2 + $0xa0] sm:$0xf]
        %v4599 = vld [vmem:[#allocation2 + $0xa4] sm:$0xf]
        %v4600 = vld [vmem:[#allocation2 + $0xa8] sm:$0xf]
        %v4601 = vld [vmem:[#allocation2 + $0xac] sm:$0xf]
        %v4602 = vld [vmem:[#allocation2 + $0xb0] sm:$0xf]
        %v4603 = vld [vmem:[#allocation2 + $0xb4] sm:$0xf]
        %v4604 = vld [vmem:[#allocation2 + $0xb8] sm:$0xf]
        %v4605 = vld [vmem:[#allocation2 + $0xbc] sm:$0xf]
        %v4606 = vld [vmem:[#allocation2 + $0xc0] sm:$0xf]
        %v4607 = vld [vmem:[#allocation2 + $0xc4] sm:$0xf]
        %v4608 = vld [vmem:[#allocation2 + $0xc8] sm:$0xf]
        %v4609 = vld [vmem:[#allocation2 + $0xcc] sm:$0xf]
        %v4610 = vld [vmem:[#allocation2 + $0xd0] sm:$0xf]
        %v4611 = vld [vmem:[#allocation2 + $0xd4] sm:$0xf]
        %s4612 = scalar_lea.vmem [#allocation12], 48
        %v4613 = vld [vmem:[%s4612] sm:$0xf]
        %v4614 = vld [vmem:[%s4612 + $0x4] sm:$0xf]
        %v4663 = vunpack.c.l.b16 %v4564
        %v4664 = vunpack.c.l.b16 %v4565
        %v4665 = vunpack.c.l.b16 %v4566
        %v4666 = vunpack.c.l.b16 %v4567
        %v4667 = vunpack.c.l.b16 %v4568
        %v4668 = vunpack.c.l.b16 %v4569
        %v4669 = vunpack.c.l.b16 %v4570
        %v4670 = vunpack.c.l.b16 %v4571
        %v4671 = vunpack.c.l.b16 %v4572
        %v4672 = vunpack.c.l.b16 %v4573
        %v4673 = vunpack.c.l.b16 %v4574
        %v4674 = vunpack.c.l.b16 %v4575
        %v4675 = vunpack.c.l.b16 %v4576
        %v4676 = vunpack.c.l.b16 %v4577
        %v4677 = vunpack.c.l.b16 %v4578
        %v4678 = vunpack.c.l.b16 %v4579
        %v4679 = vunpack.c.l.b16 %v4580
        %v4680 = vunpack.c.l.b16 %v4581
        %v4681 = vunpack.c.l.b16 %v4582
        %v4682 = vunpack.c.l.b16 %v4583
        %v4683 = vunpack.c.l.b16 %v4584
        %v4684 = vunpack.c.l.b16 %v4585
        %v4685 = vunpack.c.l.b16 %v4586
        %v4686 = vunpack.c.l.b16 %v4587
        %v4687 = vunpack.c.l.b16 %v4588
        %v4688 = vunpack.c.l.b16 %v4589
        %v4689 = vunpack.c.l.b16 %v4590
        %v4690 = vunpack.c.l.b16 %v4591
        %v4691 = vunpack.c.l.b16 %v4592
        %v4692 = vunpack.c.l.b16 %v4593
        %v4693 = vunpack.c.l.b16 %v4594
        %v4694 = vunpack.c.l.b16 %v4595
        %v4695 = vunpack.c.l.b16 %v4596
        %v4696 = vunpack.c.l.b16 %v4597
        %v4697 = vunpack.c.l.b16 %v4598
        %v4698 = vunpack.c.l.b16 %v4599
        %v4699 = vunpack.c.l.b16 %v4600
        %v4700 = vunpack.c.l.b16 %v4601
        %v4701 = vunpack.c.l.b16 %v4602
        %v4702 = vunpack.c.l.b16 %v4603
        %v4703 = vunpack.c.l.b16 %v4604
        %v4704 = vunpack.c.l.b16 %v4605
        %v4705 = vunpack.c.l.b16 %v4606
        %v4706 = vunpack.c.l.b16 %v4607
        %v4707 = vunpack.c.l.b16 %v4608
        %v4708 = vunpack.c.l.b16 %v4609
        %v4709 = vunpack.c.l.b16 %v4610
        %v4710 = vunpack.c.l.b16 %v4611
        %v4711 = vpack.c.b16 %v4664, %v4663
        %v4712 = vpack.c.b16 %v4666, %v4665
        %v4713 = vpack.c.b16 %v4668, %v4667
        %v4714 = vpack.c.b16 %v4670, %v4669
        %v4715 = vpack.c.b16 %v4672, %v4671
        %v4716 = vpack.c.b16 %v4674, %v4673
        %v4717 = vpack.c.b16 %v4676, %v4675
        %v4718 = vpack.c.b16 %v4678, %v4677
        %v4719 = vpack.c.b16 %v4680, %v4679
        %v4720 = vpack.c.b16 %v4682, %v4681
        %v4721 = vpack.c.b16 %v4684, %v4683
        %v4722 = vpack.c.b16 %v4686, %v4685
        %v4723 = vpack.c.b16 %v4688, %v4687
        %v4724 = vpack.c.b16 %v4690, %v4689
        %v4725 = vpack.c.b16 %v4692, %v4691
        %v4726 = vpack.c.b16 %v4694, %v4693
        %v4727 = vpack.c.b16 %v4696, %v4695
        %v4728 = vpack.c.b16 %v4698, %v4697
        %v4729 = vpack.c.b16 %v4700, %v4699
        %v4730 = vpack.c.b16 %v4702, %v4701
        %v4731 = vpack.c.b16 %v4704, %v4703
        %v4732 = vpack.c.b16 %v4706, %v4705
        %v4733 = vpack.c.b16 %v4708, %v4707
        %v4734 = vpack.c.b16 %v4710, %v4709
        %v4737 = vunpack.c.l.b16 %v4613
        %v4738 = vunpack.c.l.b16 %v4614
        %v4739 = vpack.c.b16 %v4738, %v4737
        %v4742 = vsel %vm1928, %v4711, 0
        %v4745 = vsel %vm1928, %v4712, 0
        %v4748 = vsel %vm1928, %v4713, 0
        %v4751 = vsel %vm1928, %v4714, 0
        %v4754 = vsel %vm1928, %v4715, 0
        %v4757 = vsel %vm1928, %v4716, 0
        %v4760 = vsel %vm1928, %v4717, 0
        %v4763 = vsel %vm1928, %v4718, 0
        %v4766 = vsel %vm1928, %v4719, 0
        %v4769 = vsel %vm1928, %v4720, 0
        %v4772 = vsel %vm1928, %v4721, 0
        %v4775 = vsel %vm1928, %v4722, 0
        %v4778 = vsel %vm1928, %v4723, 0
        %v4781 = vsel %vm1928, %v4724, 0
        %v4784 = vsel %vm1928, %v4725, 0
        %v4787 = vsel %vm1928, %v4726, 0
        %v4790 = vsel %vm1928, %v4727, 0
        %v4793 = vsel %vm1928, %v4728, 0
        %v4796 = vsel %vm1928, %v4729, 0
        %v4799 = vsel %vm1928, %v4730, 0
        %v4802 = vsel %vm1928, %v4731, 0
        %v4805 = vsel %vm1928, %v4732, 0
        %v4808 = vsel %vm1928, %v4733, 0
        %v4811 = vsel %vm1928, %v4734, 0
        %4813 = vmatprep.subr.bf16.mxu0 0
        %4814 = vmatpush1.bf16.msra.mxu0 %v4739
        %4815 = vmatprep.subr.bf16.mxu0 0
        %4816 = vmatpush1.bf16.msra.mxu0 0
        %4817 = vmatprep.subr.bf16.mxu0 0
        %4818 = vmatpush1.bf16.msra.mxu0 0
        %4819 = vmatprep.subr.bf16.mxu0 0
        %4820 = vmatpush1.bf16.msra.mxu0 0
        %4821 = vmatprep.subr.bf16.mxu0 0
        %4822 = vmatpush1.bf16.msra.mxu0 0
        %4823 = vmatprep.subr.bf16.mxu0 0
        %4824 = vmatpush1.bf16.msra.mxu0 0
        %4825 = vmatprep.subr.bf16.mxu0 0
        %4826 = vmatpush1.bf16.msra.mxu0 0
        %4827 = vmatprep.subr.bf16.mxu0 0
        %4828 = vmatpush1.bf16.msra.mxu0 0
        %4829 = vmatprep.subr.bf16.mxu0 0
        %4830 = vmatpush1.bf16.msra.mxu0 0
        %4831 = vmatprep.subr.bf16.mxu0 0
        %4832 = vmatpush1.bf16.msra.mxu0 0
        %4833 = vmatprep.subr.bf16.mxu0 0
        %4834 = vmatpush1.bf16.msra.mxu0 0
        %4835 = vmatprep.subr.bf16.mxu0 0
        %4836 = vmatpush1.bf16.msra.mxu0 0
        %4837 = vmatprep.subr.bf16.mxu0 0
        %4838 = vmatpush1.bf16.msra.mxu0 0
        %4839 = vmatprep.subr.bf16.mxu0 0
        %4840 = vmatpush1.bf16.msra.mxu0 0
        %4841 = vmatprep.subr.bf16.mxu0 0
        %4842 = vmatpush1.bf16.msra.mxu0 0
        %4843 = vmatprep.subr.bf16.mxu0 0
        %4844 = vmatpush1.bf16.msra.mxu0 0
        %4845 = vmatprep.mubr.bf16.mxu0 0
        %4846 = vmatmul.mubr.bf16.gmra.mrb[0].mxu0 %v4742
        %v4847 = vpop.f32.mrb[0].mxu0
        %v4848 = vadd.f32 0.0, %v4847
        %v4849 = vpop.f32.mrb[0].mxu0
        %v4850 = vpop.f32.mrb[0].mxu0
        %v4851 = vadd.f32 0.0, %v4850
        %v4852 = vpop.f32.mrb[0].mxu0
        %4853 = vmatprep.mubr.bf16.mxu0 0
        %4854 = vmatmul.mubr.bf16.gmra.mrb[0].mxu0 %v4745
        %v4855 = vpop.f32.mrb[0].mxu0
        %v4856 = vadd.f32 0.0, %v4855
        %v4857 = vpop.f32.mrb[0].mxu0
        %v4858 = vpop.f32.mrb[0].mxu0
        %v4859 = vadd.f32 0.0, %v4858
        %v4860 = vpop.f32.mrb[0].mxu0
        %4861 = vmatprep.mubr.bf16.mxu0 0
        %4862 = vmatmul.mubr.bf16.gmra.mrb[0].mxu0 %v4748
        %v4863 = vpop.f32.mrb[0].mxu0
        %v4864 = vadd.f32 0.0, %v4863
        %v4865 = vpop.f32.mrb[0].mxu0
        %v4866 = vpop.f32.mrb[0].mxu0
        %v4867 = vadd.f32 0.0, %v4866
        %v4868 = vpop.f32.mrb[0].mxu0
        %4869 = vmatprep.mubr.bf16.mxu0 0
        %4870 = vmatmul.mubr.bf16.gmra.mrb[0].mxu0 %v4751
        %v4871 = vpop.f32.mrb[0].mxu0
        %v4872 = vadd.f32 0.0, %v4871
        %v4873 = vpop.f32.mrb[0].mxu0
        %v4874 = vpop.f32.mrb[0].mxu0
        %v4875 = vadd.f32 0.0, %v4874
        %v4876 = vpop.f32.mrb[0].mxu0
        %4877 = vmatprep.mubr.bf16.mxu0 0
        %4878 = vmatmul.mubr.bf16.gmra.mrb[0].mxu0 %v4754
        %v4879 = vpop.f32.mrb[0].mxu0
        %v4880 = vadd.f32 0.0, %v4879
        %v4881 = vpop.f32.mrb[0].mxu0
        %v4882 = vpop.f32.mrb[0].mxu0
        %v4883 = vadd.f32 0.0, %v4882
        %v4884 = vpop.f32.mrb[0].mxu0
        %4885 = vmatprep.mubr.bf16.mxu0 0
        %4886 = vmatmul.mubr.bf16.gmra.mrb[0].mxu0 %v4757
        %v4887 = vpop.f32.mrb[0].mxu0
        %v4888 = vadd.f32 0.0, %v4887
        %v4889 = vpop.f32.mrb[0].mxu0
        %v4890 = vpop.f32.mrb[0].mxu0
        %v4891 = vadd.f32 0.0, %v4890
        %v4892 = vpop.f32.mrb[0].mxu0
        %4893 = vmatprep.mubr.bf16.mxu0 0
        %4894 = vmatmul.mubr.bf16.gmra.mrb[0].mxu0 %v4760
        %v4895 = vpop.f32.mrb[0].mxu0
        %v4896 = vadd.f32 0.0, %v4895
        %v4897 = vpop.f32.mrb[0].mxu0
        %v4898 = vpop.f32.mrb[0].mxu0
        %v4899 = vadd.f32 0.0, %v4898
        %v4900 = vpop.f32.mrb[0].mxu0
        %4901 = vmatprep.mubr.bf16.mxu0 0
        %4902 = vmatmul.mubr.bf16.gmra.mrb[0].mxu0 %v4763
        %v4903 = vpop.f32.mrb[0].mxu0
        %v4904 = vadd.f32 0.0, %v4903
        %v4905 = vpop.f32.mrb[0].mxu0
        %v4906 = vpop.f32.mrb[0].mxu0
        %v4907 = vadd.f32 0.0, %v4906
        %v4908 = vpop.f32.mrb[0].mxu0
        %4909 = vmatprep.mubr.bf16.mxu0 0
        %4910 = vmatmul.mubr.bf16.gmra.mrb[0].mxu0 %v4766
        %v4911 = vpop.f32.mrb[0].mxu0
        %v4912 = vadd.f32 0.0, %v4911
        %v4913 = vpop.f32.mrb[0].mxu0
        %v4914 = vpop.f32.mrb[0].mxu0
        %v4915 = vadd.f32 0.0, %v4914
        %v4916 = vpop.f32.mrb[0].mxu0
        %4917 = vmatprep.mubr.bf16.mxu0 0
        %4918 = vmatmul.mubr.bf16.gmra.mrb[0].mxu0 %v4769
        %v4919 = vpop.f32.mrb[0].mxu0
        %v4920 = vadd.f32 0.0, %v4919
        %v4921 = vpop.f32.mrb[0].mxu0
        %v4922 = vpop.f32.mrb[0].mxu0
        %v4923 = vadd.f32 0.0, %v4922
        %v4924 = vpop.f32.mrb[0].mxu0
        %4925 = vmatprep.mubr.bf16.mxu0 0
        %4926 = vmatmul.mubr.bf16.gmra.mrb[0].mxu0 %v4772
        %v4927 = vpop.f32.mrb[0].mxu0
        %v4928 = vadd.f32 0.0, %v4927
        %v4929 = vpop.f32.mrb[0].mxu0
        %v4930 = vpop.f32.mrb[0].mxu0
        %v4931 = vadd.f32 0.0, %v4930
        %v4932 = vpop.f32.mrb[0].mxu0
        %4933 = vmatprep.mubr.bf16.mxu0 0
        %4934 = vmatmul.mubr.bf16.gmra.mrb[0].mxu0 %v4775
        %v4935 = vpop.f32.mrb[0].mxu0
        %v4936 = vadd.f32 0.0, %v4935
        %v4937 = vpop.f32.mrb[0].mxu0
        %v4938 = vpop.f32.mrb[0].mxu0
        %v4939 = vadd.f32 0.0, %v4938
        %v4940 = vpop.f32.mrb[0].mxu0
        %4941 = vmatprep.mubr.bf16.mxu0 0
        %4942 = vmatmul.mubr.bf16.gmra.mrb[0].mxu0 %v4778
        %v4943 = vpop.f32.mrb[0].mxu0
        %v4944 = vadd.f32 0.0, %v4943
        %v4945 = vpop.f32.mrb[0].mxu0
        %v4946 = vpop.f32.mrb[0].mxu0
        %v4947 = vadd.f32 0.0, %v4946
        %v4948 = vpop.f32.mrb[0].mxu0
        %4949 = vmatprep.mubr.bf16.mxu0 0
        %4950 = vmatmul.mubr.bf16.gmra.mrb[0].mxu0 %v4781
        %v4951 = vpop.f32.mrb[0].mxu0
        %v4952 = vadd.f32 0.0, %v4951
        %v4953 = vpop.f32.mrb[0].mxu0
        %v4954 = vpop.f32.mrb[0].mxu0
        %v4955 = vadd.f32 0.0, %v4954
        %v4956 = vpop.f32.mrb[0].mxu0
        %4957 = vmatprep.mubr.bf16.mxu0 0
        %4958 = vmatmul.mubr.bf16.gmra.mrb[0].mxu0 %v4784
        %v4959 = vpop.f32.mrb[0].mxu0
        %v4960 = vadd.f32 0.0, %v4959
        %v4961 = vpop.f32.mrb[0].mxu0
        %v4962 = vpop.f32.mrb[0].mxu0
        %v4963 = vadd.f32 0.0, %v4962
        %v4964 = vpop.f32.mrb[0].mxu0
        %4965 = vmatprep.mubr.bf16.mxu0 0
        %4966 = vmatmul.mubr.bf16.gmra.mrb[0].mxu0 %v4787
        %v4967 = vpop.f32.mrb[0].mxu0
        %v4968 = vadd.f32 0.0, %v4967
        %v4969 = vpop.f32.mrb[0].mxu0
        %v4970 = vpop.f32.mrb[0].mxu0
        %v4971 = vadd.f32 0.0, %v4970
        %v4972 = vpop.f32.mrb[0].mxu0
        %4973 = vmatprep.mubr.bf16.mxu0 0
        %4974 = vmatmul.mubr.bf16.gmra.mrb[0].mxu0 %v4790
        %v4975 = vpop.f32.mrb[0].mxu0
        %v4976 = vadd.f32 0.0, %v4975
        %v4977 = vpop.f32.mrb[0].mxu0
        %v4978 = vpop.f32.mrb[0].mxu0
        %v4979 = vadd.f32 0.0, %v4978
        %v4980 = vpop.f32.mrb[0].mxu0
        %4981 = vmatprep.mubr.bf16.mxu0 0
        %4982 = vmatmul.mubr.bf16.gmra.mrb[0].mxu0 %v4793
        %v4983 = vpop.f32.mrb[0].mxu0
        %v4984 = vadd.f32 0.0, %v4983
        %v4985 = vpop.f32.mrb[0].mxu0
        %v4986 = vpop.f32.mrb[0].mxu0
        %v4987 = vadd.f32 0.0, %v4986
        %v4988 = vpop.f32.mrb[0].mxu0
        %4989 = vmatprep.mubr.bf16.mxu0 0
        %4990 = vmatmul.mubr.bf16.gmra.mrb[0].mxu0 %v4796
        %v4991 = vpop.f32.mrb[0].mxu0
        %v4992 = vadd.f32 0.0, %v4991
        %v4993 = vpop.f32.mrb[0].mxu0
        %v4994 = vpop.f32.mrb[0].mxu0
        %v4995 = vadd.f32 0.0, %v4994
        %v4996 = vpop.f32.mrb[0].mxu0
        %4997 = vmatprep.mubr.bf16.mxu0 0
        %4998 = vmatmul.mubr.bf16.gmra.mrb[0].mxu0 %v4799
        %v4999 = vpop.f32.mrb[0].mxu0
        %v5000 = vadd.f32 0.0, %v4999
        %v5001 = vpop.f32.mrb[0].mxu0
        %v5002 = vpop.f32.mrb[0].mxu0
        %v5003 = vadd.f32 0.0, %v5002
        %v5004 = vpop.f32.mrb[0].mxu0
        %5005 = vmatprep.mubr.bf16.mxu0 0
        %5006 = vmatmul.mubr.bf16.gmra.mrb[0].mxu0 %v4802
        %v5007 = vpop.f32.mrb[0].mxu0
        %v5008 = vadd.f32 0.0, %v5007
        %v5009 = vpop.f32.mrb[0].mxu0
        %v5010 = vpop.f32.mrb[0].mxu0
        %v5011 = vadd.f32 0.0, %v5010
        %v5012 = vpop.f32.mrb[0].mxu0
        %5013 = vmatprep.mubr.bf16.mxu0 0
        %5014 = vmatmul.mubr.bf16.gmra.mrb[0].mxu0 %v4805
        %v5015 = vpop.f32.mrb[0].mxu0
        %v5016 = vadd.f32 0.0, %v5015
        %v5017 = vpop.f32.mrb[0].mxu0
        %v5018 = vpop.f32.mrb[0].mxu0
        %v5019 = vadd.f32 0.0, %v5018
        %v5020 = vpop.f32.mrb[0].mxu0
        %5021 = vmatprep.mubr.bf16.mxu0 0
        %5022 = vmatmul.mubr.bf16.gmra.mrb[0].mxu0 %v4808
        %v5023 = vpop.f32.mrb[0].mxu0
        %v5024 = vadd.f32 0.0, %v5023
        %v5025 = vpop.f32.mrb[0].mxu0
        %v5026 = vpop.f32.mrb[0].mxu0
        %v5027 = vadd.f32 0.0, %v5026
        %v5028 = vpop.f32.mrb[0].mxu0
        %5029 = vmatprep.mubr.bf16.mxu0 0
        %5030 = vmatmul.mubr.bf16.gmra.mrb[0].mxu0 %v4811
        %v5031 = vpop.f32.mrb[0].mxu0
        %v5032 = vadd.f32 0.0, %v5031
        %v5033 = vpop.f32.mrb[0].mxu0
        %v5034 = vpop.f32.mrb[0].mxu0
        %v5035 = vadd.f32 0.0, %v5034
        %v5036 = vpop.f32.mrb[0].mxu0
        %5037 = vdwg.mxu0
        %v5038 = vadd.f32 %v4516, %v4848
        %v5039 = vadd.f32 %v4517, %v4851
        %v5040 = vadd.f32 %v4518, %v4856
        %v5041 = vadd.f32 %v4519, %v4859
        %v5042 = vadd.f32 %v4520, %v4864
        %v5043 = vadd.f32 %v4521, %v4867
        %v5044 = vadd.f32 %v4522, %v4872
        %v5045 = vadd.f32 %v4523, %v4875
        %v5046 = vadd.f32 %v4524, %v4880
        %v5047 = vadd.f32 %v4525, %v4883
        %v5048 = vadd.f32 %v4526, %v4888
        %v5049 = vadd.f32 %v4527, %v4891
        %v5050 = vadd.f32 %v4528, %v4896
        %v5051 = vadd.f32 %v4529, %v4899
        %v5052 = vadd.f32 %v4530, %v4904
        %v5053 = vadd.f32 %v4531, %v4907
        %v5054 = vadd.f32 %v4532, %v4912
        %v5055 = vadd.f32 %v4533, %v4915
        %v5056 = vadd.f32 %v4534, %v4920
        %v5057 = vadd.f32 %v4535, %v4923
        %v5058 = vadd.f32 %v4536, %v4928
        %v5059 = vadd.f32 %v4537, %v4931
        %v5060 = vadd.f32 %v4538, %v4936
        %v5061 = vadd.f32 %v4539, %v4939
        %v5062 = vadd.f32 %v4540, %v4944
        %v5063 = vadd.f32 %v4541, %v4947
        %v5064 = vadd.f32 %v4542, %v4952
        %v5065 = vadd.f32 %v4543, %v4955
        %v5066 = vadd.f32 %v4544, %v4960
        %v5067 = vadd.f32 %v4545, %v4963
        %v5068 = vadd.f32 %v4546, %v4968
        %v5069 = vadd.f32 %v4547, %v4971
        %v5070 = vadd.f32 %v4548, %v4976
        %v5071 = vadd.f32 %v4549, %v4979
        %v5072 = vadd.f32 %v4550, %v4984
        %v5073 = vadd.f32 %v4551, %v4987
        %v5074 = vadd.f32 %v4552, %v4992
        %v5075 = vadd.f32 %v4553, %v4995
        %v5076 = vadd.f32 %v4554, %v5000
        %v5077 = vadd.f32 %v4555, %v5003
        %v5078 = vadd.f32 %v4556, %v5008
        %v5079 = vadd.f32 %v4557, %v5011
        %v5080 = vadd.f32 %v4558, %v5016
        %v5081 = vadd.f32 %v4559, %v5019
        %v5082 = vadd.f32 %v4560, %v5024
        %v5083 = vadd.f32 %v4561, %v5027
        %v5084 = vadd.f32 %v4562, %v5032
        %v5085 = vadd.f32 %v4563, %v5035
        %v5086 = vld [vmem:[#allocation2 + $0x18] sm:$0xf]
        %v5087 = vld [vmem:[#allocation2 + $0x1c] sm:$0xf]
        %v5088 = vld [vmem:[#allocation2 + $0x20] sm:$0xf]
        %v5089 = vld [vmem:[#allocation2 + $0x24] sm:$0xf]
        %v5090 = vld [vmem:[#allocation2 + $0x28] sm:$0xf]
        %v5091 = vld [vmem:[#allocation2 + $0x2c] sm:$0xf]
        %v5092 = vld [vmem:[#allocation2 + $0x30] sm:$0xf]
        %v5093 = vld [vmem:[#allocation2 + $0x34] sm:$0xf]
        %v5094 = vld [vmem:[#allocation2 + $0x38] sm:$0xf]
        %v5095 = vld [vmem:[#allocation2 + $0x3c] sm:$0xf]
        %v5096 = vld [vmem:[#allocation2 + $0x40] sm:$0xf]
        %v5097 = vld [vmem:[#allocation2 + $0x44] sm:$0xf]
        %v5098 = vld [vmem:[#allocation2 + $0x48] sm:$0xf]
        %v5099 = vld [vmem:[#allocation2 + $0x4c] sm:$0xf]
        %v5100 = vld [vmem:[#allocation2 + $0x50] sm:$0xf]
        %v5101 = vld [vmem:[#allocation2 + $0x54] sm:$0xf]
        %v5102 = vld [vmem:[#allocation2 + $0x58] sm:$0xf]
        %v5103 = vld [vmem:[#allocation2 + $0x5c] sm:$0xf]
        %v5104 = vld [vmem:[#allocation2 + $0x60] sm:$0xf]
        %v5105 = vld [vmem:[#allocation2 + $0x64] sm:$0xf]
        %v5106 = vld [vmem:[#allocation2 + $0x68] sm:$0xf]
        %v5107 = vld [vmem:[#allocation2 + $0x6c] sm:$0xf]
        %v5108 = vld [vmem:[#allocation2 + $0x70] sm:$0xf]
        %v5109 = vld [vmem:[#allocation2 + $0x74] sm:$0xf]
        %v5110 = vld [vmem:[#allocation2 + $0x78] sm:$0xf]
        %v5111 = vld [vmem:[#allocation2 + $0x7c] sm:$0xf]
        %v5112 = vld [vmem:[#allocation2 + $0x80] sm:$0xf]
        %v5113 = vld [vmem:[#allocation2 + $0x84] sm:$0xf]
        %v5114 = vld [vmem:[#allocation2 + $0x88] sm:$0xf]
        %v5115 = vld [vmem:[#allocation2 + $0x8c] sm:$0xf]
        %v5116 = vld [vmem:[#allocation2 + $0x90] sm:$0xf]
        %v5117 = vld [vmem:[#allocation2 + $0x94] sm:$0xf]
        %v5118 = vld [vmem:[#allocation2 + $0x98] sm:$0xf]
        %v5119 = vld [vmem:[#allocation2 + $0x9c] sm:$0xf]
        %v5120 = vld [vmem:[#allocation2 + $0xa0] sm:$0xf]
        %v5121 = vld [vmem:[#allocation2 + $0xa4] sm:$0xf]
        %v5122 = vld [vmem:[#allocation2 + $0xa8] sm:$0xf]
        %v5123 = vld [vmem:[#allocation2 + $0xac] sm:$0xf]
        %v5124 = vld [vmem:[#allocation2 + $0xb0] sm:$0xf]
        %v5125 = vld [vmem:[#allocation2 + $0xb4] sm:$0xf]
        %v5126 = vld [vmem:[#allocation2 + $0xb8] sm:$0xf]
        %v5127 = vld [vmem:[#allocation2 + $0xbc] sm:$0xf]
        %v5128 = vld [vmem:[#allocation2 + $0xc0] sm:$0xf]
        %v5129 = vld [vmem:[#allocation2 + $0xc4] sm:$0xf]
        %v5130 = vld [vmem:[#allocation2 + $0xc8] sm:$0xf]
        %v5131 = vld [vmem:[#allocation2 + $0xcc] sm:$0xf]
        %v5132 = vld [vmem:[#allocation2 + $0xd0] sm:$0xf]
        %v5133 = vld [vmem:[#allocation2 + $0xd4] sm:$0xf]
        %v5134 = vld [vmem:[#allocation2 + $0xd8] sm:$0x1]
        %s5135 = scalar_lea.vmem [#allocation12], 56
        %v5136 = vld [vmem:[%s5135] sm:$0xf]
        %v5137 = vld [vmem:[%s5135 + $0x4] sm:$0xf]
        %v5187 = vunpack.c.l.b16 %v5086
        %v5188 = vunpack.c.l.b16 %v5087
        %v5189 = vunpack.c.l.b16 %v5088
        %v5190 = vunpack.c.l.b16 %v5089
        %v5191 = vunpack.c.l.b16 %v5090
        %v5192 = vunpack.c.l.b16 %v5091
        %v5193 = vunpack.c.l.b16 %v5092
        %v5194 = vunpack.c.l.b16 %v5093
        %v5195 = vunpack.c.l.b16 %v5094
        %v5196 = vunpack.c.l.b16 %v5095
        %v5197 = vunpack.c.l.b16 %v5096
        %v5198 = vunpack.c.l.b16 %v5097
        %v5199 = vunpack.c.l.b16 %v5098
        %v5200 = vunpack.c.l.b16 %v5099
        %v5201 = vunpack.c.l.b16 %v5100
        %v5202 = vunpack.c.l.b16 %v5101
        %v5203 = vunpack.c.l.b16 %v5102
        %v5204 = vunpack.c.l.b16 %v5103
        %v5205 = vunpack.c.l.b16 %v5104
        %v5206 = vunpack.c.l.b16 %v5105
        %v5207 = vunpack.c.l.b16 %v5106
        %v5208 = vunpack.c.l.b16 %v5107
        %v5209 = vunpack.c.l.b16 %v5108
        %v5210 = vunpack.c.l.b16 %v5109
        %v5211 = vunpack.c.l.b16 %v5110
        %v5212 = vunpack.c.l.b16 %v5111
        %v5213 = vunpack.c.l.b16 %v5112
        %v5214 = vunpack.c.l.b16 %v5113
        %v5215 = vunpack.c.l.b16 %v5114
        %v5216 = vunpack.c.l.b16 %v5115
        %v5217 = vunpack.c.l.b16 %v5116
        %v5218 = vunpack.c.l.b16 %v5117
        %v5219 = vunpack.c.l.b16 %v5118
        %v5220 = vunpack.c.l.b16 %v5119
        %v5221 = vunpack.c.l.b16 %v5120
        %v5222 = vunpack.c.l.b16 %v5121
        %v5223 = vunpack.c.l.b16 %v5122
        %v5224 = vunpack.c.l.b16 %v5123
        %v5225 = vunpack.c.l.b16 %v5124
        %v5226 = vunpack.c.l.b16 %v5125
        %v5227 = vunpack.c.l.b16 %v5126
        %v5228 = vunpack.c.l.b16 %v5127
        %v5229 = vunpack.c.l.b16 %v5128
        %v5230 = vunpack.c.l.b16 %v5129
        %v5231 = vunpack.c.l.b16 %v5130
        %v5232 = vunpack.c.l.b16 %v5131
        %v5233 = vunpack.c.l.b16 %v5132
        %v5234 = vunpack.c.l.b16 %v5133
        %v5235 = vunpack.c.l.b16 %v5134
        %v5236 = vpack.c.b16 %v5188, %v5187
        %v5237 = vpack.c.b16 %v5190, %v5189
        %v5238 = vpack.c.b16 %v5192, %v5191
        %v5239 = vpack.c.b16 %v5194, %v5193
        %v5240 = vpack.c.b16 %v5196, %v5195
        %v5241 = vpack.c.b16 %v5198, %v5197
        %v5242 = vpack.c.b16 %v5200, %v5199
        %v5243 = vpack.c.b16 %v5202, %v5201
        %v5244 = vpack.c.b16 %v5204, %v5203
        %v5245 = vpack.c.b16 %v5206, %v5205
        %v5246 = vpack.c.b16 %v5208, %v5207
        %v5247 = vpack.c.b16 %v5210, %v5209
        %v5248 = vpack.c.b16 %v5212, %v5211
        %v5249 = vpack.c.b16 %v5214, %v5213
        %v5250 = vpack.c.b16 %v5216, %v5215
        %v5251 = vpack.c.b16 %v5218, %v5217
        %v5252 = vpack.c.b16 %v5220, %v5219
        %v5253 = vpack.c.b16 %v5222, %v5221
        %v5254 = vpack.c.b16 %v5224, %v5223
        %v5255 = vpack.c.b16 %v5226, %v5225
        %v5256 = vpack.c.b16 %v5228, %v5227
        %v5257 = vpack.c.b16 %v5230, %v5229
        %v5258 = vpack.c.b16 %v5232, %v5231
        %v5259 = vpack.c.b16 %v5234, %v5233
        %v5260 = vpack.c.b16 %v5235, %v5235
        %v5262 = vshrl.u32 %v5236, 16
        %v5264 = vshll.u32 %v5236, 16
        %v5266 = vrot.slane %v5264, 1
        %v5267 = vor.u32 %v5262, %v5266
        %v5269 = vshll.u32 %v5237, 16
        %v5271 = vrot.slane %v5269, 1
        %v5272 = vsel %vm1725, %v5267, %v5271
        %v5273 = vshrl.u32 %v5237, 16
        %v5275 = vor.u32 %v5273, %v5271
        %v5277 = vshll.u32 %v5238, 16
        %v5279 = vrot.slane %v5277, 1
        %v5280 = vsel %vm1725, %v5275, %v5279
        %v5281 = vshrl.u32 %v5238, 16
        %v5283 = vor.u32 %v5281, %v5279
        %v5285 = vshll.u32 %v5239, 16
        %v5287 = vrot.slane %v5285, 1
        %v5288 = vsel %vm1725, %v5283, %v5287
        %v5289 = vshrl.u32 %v5239, 16
        %v5291 = vor.u32 %v5289, %v5287
        %v5293 = vshll.u32 %v5240, 16
        %v5295 = vrot.slane %v5293, 1
        %v5296 = vsel %vm1725, %v5291, %v5295
        %v5297 = vshrl.u32 %v5240, 16
        %v5299 = vor.u32 %v5297, %v5295
        %v5301 = vshll.u32 %v5241, 16
        %v5303 = vrot.slane %v5301, 1
        %v5304 = vsel %vm1725, %v5299, %v5303
        %v5305 = vshrl.u32 %v5241, 16
        %v5307 = vor.u32 %v5305, %v5303
        %v5309 = vshll.u32 %v5242, 16
        %v5311 = vrot.slane %v5309, 1
        %v5312 = vsel %vm1725, %v5307, %v5311
        %v5313 = vshrl.u32 %v5242, 16
        %v5315 = vor.u32 %v5313, %v5311
        %v5317 = vshll.u32 %v5243, 16
        %v5319 = vrot.slane %v5317, 1
        %v5320 = vsel %vm1725, %v5315, %v5319
        %v5321 = vshrl.u32 %v5243, 16
        %v5323 = vor.u32 %v5321, %v5319
        %v5325 = vshll.u32 %v5244, 16
        %v5327 = vrot.slane %v5325, 1
        %v5328 = vsel %vm1725, %v5323, %v5327
        %v5329 = vshrl.u32 %v5244, 16
        %v5331 = vor.u32 %v5329, %v5327
        %v5333 = vshll.u32 %v5245, 16
        %v5335 = vrot.slane %v5333, 1
        %v5336 = vsel %vm1725, %v5331, %v5335
        %v5337 = vshrl.u32 %v5245, 16
        %v5339 = vor.u32 %v5337, %v5335
        %v5341 = vshll.u32 %v5246, 16
        %v5343 = vrot.slane %v5341, 1
        %v5344 = vsel %vm1725, %v5339, %v5343
        %v5345 = vshrl.u32 %v5246, 16
        %v5347 = vor.u32 %v5345, %v5343
        %v5349 = vshll.u32 %v5247, 16
        %v5351 = vrot.slane %v5349, 1
        %v5352 = vsel %vm1725, %v5347, %v5351
        %v5353 = vshrl.u32 %v5247, 16
        %v5355 = vor.u32 %v5353, %v5351
        %v5357 = vshll.u32 %v5248, 16
        %v5359 = vrot.slane %v5357, 1
        %v5360 = vsel %vm1725, %v5355, %v5359
        %v5361 = vshrl.u32 %v5248, 16
        %v5363 = vor.u32 %v5361, %v5359
        %v5365 = vshll.u32 %v5249, 16
        %v5367 = vrot.slane %v5365, 1
        %v5368 = vsel %vm1725, %v5363, %v5367
        %v5369 = vshrl.u32 %v5249, 16
        %v5371 = vor.u32 %v5369, %v5367
        %v5373 = vshll.u32 %v5250, 16
        %v5375 = vrot.slane %v5373, 1
        %v5376 = vsel %vm1725, %v5371, %v5375
        %v5377 = vshrl.u32 %v5250, 16
        %v5379 = vor.u32 %v5377, %v5375
        %v5381 = vshll.u32 %v5251, 16
        %v5383 = vrot.slane %v5381, 1
        %v5384 = vsel %vm1725, %v5379, %v5383
        %v5385 = vshrl.u32 %v5251, 16
        %v5387 = vor.u32 %v5385, %v5383
        %v5389 = vshll.u32 %v5252, 16
        %v5391 = vrot.slane %v5389, 1
        %v5392 = vsel %vm1725, %v5387, %v5391
        %v5393 = vshrl.u32 %v5252, 16
        %v5395 = vor.u32 %v5393, %v5391
        %v5397 = vshll.u32 %v5253, 16
        %v5399 = vrot.slane %v5397, 1
        %v5400 = vsel %vm1725, %v5395, %v5399
        %v5401 = vshrl.u32 %v5253, 16
        %v5403 = vor.u32 %v5401, %v5399
        %v5405 = vshll.u32 %v5254, 16
        %v5407 = vrot.slane %v5405, 1
        %v5408 = vsel %vm1725, %v5403, %v5407
        %v5409 = vshrl.u32 %v5254, 16
        %v5411 = vor.u32 %v5409, %v5407
        %v5413 = vshll.u32 %v5255, 16
        %v5415 = vrot.slane %v5413, 1
        %v5416 = vsel %vm1725, %v5411, %v5415
        %v5417 = vshrl.u32 %v5255, 16
        %v5419 = vor.u32 %v5417, %v5415
        %v5421 = vshll.u32 %v5256, 16
        %v5423 = vrot.slane %v5421, 1
        %v5424 = vsel %vm1725, %v5419, %v5423
        %v5425 = vshrl.u32 %v5256, 16
        %v5427 = vor.u32 %v5425, %v5423
        %v5429 = vshll.u32 %v5257, 16
        %v5431 = vrot.slane %v5429, 1
        %v5432 = vsel %vm1725, %v5427, %v5431
        %v5433 = vshrl.u32 %v5257, 16
        %v5435 = vor.u32 %v5433, %v5431
        %v5437 = vshll.u32 %v5258, 16
        %v5439 = vrot.slane %v5437, 1
        %v5440 = vsel %vm1725, %v5435, %v5439
        %v5441 = vshrl.u32 %v5258, 16
        %v5443 = vor.u32 %v5441, %v5439
        %v5445 = vshll.u32 %v5259, 16
        %v5447 = vrot.slane %v5445, 1
        %v5448 = vsel %vm1725, %v5443, %v5447
        %v5449 = vshrl.u32 %v5259, 16
        %v5451 = vor.u32 %v5449, %v5447
        %v5453 = vshll.u32 %v5260, 16
        %v5455 = vrot.slane %v5453, 1
        %v5456 = vsel %vm1725, %v5451, %v5455
        %v5459 = vunpack.c.l.b16 %v5136
        %v5460 = vunpack.c.l.b16 %v5137
        %v5461 = vpack.c.b16 %v5460, %v5459
        %v5464 = vsel %vm1928, %v5272, 0
        %v5467 = vsel %vm1928, %v5280, 0
        %v5470 = vsel %vm1928, %v5288, 0
        %v5473 = vsel %vm1928, %v5296, 0
        %v5476 = vsel %vm1928, %v5304, 0
        %v5479 = vsel %vm1928, %v5312, 0
        %v5482 = vsel %vm1928, %v5320, 0
        %v5485 = vsel %vm1928, %v5328, 0
        %v5488 = vsel %vm1928, %v5336, 0
        %v5491 = vsel %vm1928, %v5344, 0
        %v5494 = vsel %vm1928, %v5352, 0
        %v5497 = vsel %vm1928, %v5360, 0
        %v5500 = vsel %vm1928, %v5368, 0
        %v5503 = vsel %vm1928, %v5376, 0
        %v5506 = vsel %vm1928, %v5384, 0
        %v5509 = vsel %vm1928, %v5392, 0
        %v5512 = vsel %vm1928, %v5400, 0
        %v5515 = vsel %vm1928, %v5408, 0
        %v5518 = vsel %vm1928, %v5416, 0
        %v5521 = vsel %vm1928, %v5424, 0
        %v5524 = vsel %vm1928, %v5432, 0
        %v5527 = vsel %vm1928, %v5440, 0
        %v5530 = vsel %vm1928, %v5448, 0
        %v5533 = vsel %vm1928, %v5456, 0
        %5535 = vmatprep.subr.bf16.mxu0 0
        %5536 = vmatpush1.bf16.msra.mxu0 %v5461
        %5537 = vmatprep.subr.bf16.mxu0 0
        %5538 = vmatpush1.bf16.msra.mxu0 0
        %5539 = vmatprep.subr.bf16.mxu0 0
        %5540 = vmatpush1.bf16.msra.mxu0 0
        %5541 = vmatprep.subr.bf16.mxu0 0
        %5542 = vmatpush1.bf16.msra.mxu0 0
        %5543 = vmatprep.subr.bf16.mxu0 0
        %5544 = vmatpush1.bf16.msra.mxu0 0
        %5545 = vmatprep.subr.bf16.mxu0 0
        %5546 = vmatpush1.bf16.msra.mxu0 0
        %5547 = vmatprep.subr.bf16.mxu0 0
        %5548 = vmatpush1.bf16.msra.mxu0 0
        %5549 = vmatprep.subr.bf16.mxu0 0
        %5550 = vmatpush1.bf16.msra.mxu0 0
        %5551 = vmatprep.subr.bf16.mxu0 0
        %5552 = vmatpush1.bf16.msra.mxu0 0
        %5553 = vmatprep.subr.bf16.mxu0 0
        %5554 = vmatpush1.bf16.msra.mxu0 0
        %5555 = vmatprep.subr.bf16.mxu0 0
        %5556 = vmatpush1.bf16.msra.mxu0 0
        %5557 = vmatprep.subr.bf16.mxu0 0
        %5558 = vmatpush1.bf16.msra.mxu0 0
        %5559 = vmatprep.subr.bf16.mxu0 0
        %5560 = vmatpush1.bf16.msra.mxu0 0
        %5561 = vmatprep.subr.bf16.mxu0 0
        %5562 = vmatpush1.bf16.msra.mxu0 0
        %5563 = vmatprep.subr.bf16.mxu0 0
        %5564 = vmatpush1.bf16.msra.mxu0 0
        %5565 = vmatprep.subr.bf16.mxu0 0
        %5566 = vmatpush1.bf16.msra.mxu0 0
        %5567 = vmatprep.mubr.bf16.mxu0 0
        %5568 = vmatmul.mubr.bf16.gmra.mrb[0].mxu0 %v5464
        %v5569 = vpop.f32.mrb[0].mxu0
        %v5570 = vadd.f32 0.0, %v5569
        %v5571 = vpop.f32.mrb[0].mxu0
        %v5572 = vpop.f32.mrb[0].mxu0
        %v5573 = vadd.f32 0.0, %v5572
        %v5574 = vpop.f32.mrb[0].mxu0
        %5575 = vmatprep.mubr.bf16.mxu0 0
        %5576 = vmatmul.mubr.bf16.gmra.mrb[0].mxu0 %v5467
        %v5577 = vpop.f32.mrb[0].mxu0
        %v5578 = vadd.f32 0.0, %v5577
        %v5579 = vpop.f32.mrb[0].mxu0
        %v5580 = vpop.f32.mrb[0].mxu0
        %v5581 = vadd.f32 0.0, %v5580
        %v5582 = vpop.f32.mrb[0].mxu0
        %5583 = vmatprep.mubr.bf16.mxu0 0
        %5584 = vmatmul.mubr.bf16.gmra.mrb[0].mxu0 %v5470
        %v5585 = vpop.f32.mrb[0].mxu0
        %v5586 = vadd.f32 0.0, %v5585
        %v5587 = vpop.f32.mrb[0].mxu0
        %v5588 = vpop.f32.mrb[0].mxu0
        %v5589 = vadd.f32 0.0, %v5588
        %v5590 = vpop.f32.mrb[0].mxu0
        %5591 = vmatprep.mubr.bf16.mxu0 0
        %5592 = vmatmul.mubr.bf16.gmra.mrb[0].mxu0 %v5473
        %v5593 = vpop.f32.mrb[0].mxu0
        %v5594 = vadd.f32 0.0, %v5593
        %v5595 = vpop.f32.mrb[0].mxu0
        %v5596 = vpop.f32.mrb[0].mxu0
        %v5597 = vadd.f32 0.0, %v5596
        %v5598 = vpop.f32.mrb[0].mxu0
        %5599 = vmatprep.mubr.bf16.mxu0 0
        %5600 = vmatmul.mubr.bf16.gmra.mrb[0].mxu0 %v5476
        %v5601 = vpop.f32.mrb[0].mxu0
        %v5602 = vadd.f32 0.0, %v5601
        %v5603 = vpop.f32.mrb[0].mxu0
        %v5604 = vpop.f32.mrb[0].mxu0
        %v5605 = vadd.f32 0.0, %v5604
        %v5606 = vpop.f32.mrb[0].mxu0
        %5607 = vmatprep.mubr.bf16.mxu0 0
        %5608 = vmatmul.mubr.bf16.gmra.mrb[0].mxu0 %v5479
        %v5609 = vpop.f32.mrb[0].mxu0
        %v5610 = vadd.f32 0.0, %v5609
        %v5611 = vpop.f32.mrb[0].mxu0
        %v5612 = vpop.f32.mrb[0].mxu0
        %v5613 = vadd.f32 0.0, %v5612
        %v5614 = vpop.f32.mrb[0].mxu0
        %5615 = vmatprep.mubr.bf16.mxu0 0
        %5616 = vmatmul.mubr.bf16.gmra.mrb[0].mxu0 %v5482
        %v5617 = vpop.f32.mrb[0].mxu0
        %v5618 = vadd.f32 0.0, %v5617
        %v5619 = vpop.f32.mrb[0].mxu0
        %v5620 = vpop.f32.mrb[0].mxu0
        %v5621 = vadd.f32 0.0, %v5620
        %v5622 = vpop.f32.mrb[0].mxu0
        %5623 = vmatprep.mubr.bf16.mxu0 0
        %5624 = vmatmul.mubr.bf16.gmra.mrb[0].mxu0 %v5485
        %v5625 = vpop.f32.mrb[0].mxu0
        %v5626 = vadd.f32 0.0, %v5625
        %v5627 = vpop.f32.mrb[0].mxu0
        %v5628 = vpop.f32.mrb[0].mxu0
        %v5629 = vadd.f32 0.0, %v5628
        %v5630 = vpop.f32.mrb[0].mxu0
        %5631 = vmatprep.mubr.bf16.mxu0 0
        %5632 = vmatmul.mubr.bf16.gmra.mrb[0].mxu0 %v5488
        %v5633 = vpop.f32.mrb[0].mxu0
        %v5634 = vadd.f32 0.0, %v5633
        %v5635 = vpop.f32.mrb[0].mxu0
        %v5636 = vpop.f32.mrb[0].mxu0
        %v5637 = vadd.f32 0.0, %v5636
        %v5638 = vpop.f32.mrb[0].mxu0
        %5639 = vmatprep.mubr.bf16.mxu0 0
        %5640 = vmatmul.mubr.bf16.gmra.mrb[0].mxu0 %v5491
        %v5641 = vpop.f32.mrb[0].mxu0
        %v5642 = vadd.f32 0.0, %v5641
        %v5643 = vpop.f32.mrb[0].mxu0
        %v5644 = vpop.f32.mrb[0].mxu0
        %v5645 = vadd.f32 0.0, %v5644
        %v5646 = vpop.f32.mrb[0].mxu0
        %5647 = vmatprep.mubr.bf16.mxu0 0
        %5648 = vmatmul.mubr.bf16.gmra.mrb[0].mxu0 %v5494
        %v5649 = vpop.f32.mrb[0].mxu0
        %v5650 = vadd.f32 0.0, %v5649
        %v5651 = vpop.f32.mrb[0].mxu0
        %v5652 = vpop.f32.mrb[0].mxu0
        %v5653 = vadd.f32 0.0, %v5652
        %v5654 = vpop.f32.mrb[0].mxu0
        %5655 = vmatprep.mubr.bf16.mxu0 0
        %5656 = vmatmul.mubr.bf16.gmra.mrb[0].mxu0 %v5497
        %v5657 = vpop.f32.mrb[0].mxu0
        %v5658 = vadd.f32 0.0, %v5657
        %v5659 = vpop.f32.mrb[0].mxu0
        %v5660 = vpop.f32.mrb[0].mxu0
        %v5661 = vadd.f32 0.0, %v5660
        %v5662 = vpop.f32.mrb[0].mxu0
        %5663 = vmatprep.mubr.bf16.mxu0 0
        %5664 = vmatmul.mubr.bf16.gmra.mrb[0].mxu0 %v5500
        %v5665 = vpop.f32.mrb[0].mxu0
        %v5666 = vadd.f32 0.0, %v5665
        %v5667 = vpop.f32.mrb[0].mxu0
        %v5668 = vpop.f32.mrb[0].mxu0
        %v5669 = vadd.f32 0.0, %v5668
        %v5670 = vpop.f32.mrb[0].mxu0
        %5671 = vmatprep.mubr.bf16.mxu0 0
        %5672 = vmatmul.mubr.bf16.gmra.mrb[0].mxu0 %v5503
        %v5673 = vpop.f32.mrb[0].mxu0
        %v5674 = vadd.f32 0.0, %v5673
        %v5675 = vpop.f32.mrb[0].mxu0
        %v5676 = vpop.f32.mrb[0].mxu0
        %v5677 = vadd.f32 0.0, %v5676
        %v5678 = vpop.f32.mrb[0].mxu0
        %5679 = vmatprep.mubr.bf16.mxu0 0
        %5680 = vmatmul.mubr.bf16.gmra.mrb[0].mxu0 %v5506
        %v5681 = vpop.f32.mrb[0].mxu0
        %v5682 = vadd.f32 0.0, %v5681
        %v5683 = vpop.f32.mrb[0].mxu0
        %v5684 = vpop.f32.mrb[0].mxu0
        %v5685 = vadd.f32 0.0, %v5684
        %v5686 = vpop.f32.mrb[0].mxu0
        %5687 = vmatprep.mubr.bf16.mxu0 0
        %5688 = vmatmul.mubr.bf16.gmra.mrb[0].mxu0 %v5509
        %v5689 = vpop.f32.mrb[0].mxu0
        %v5690 = vadd.f32 0.0, %v5689
        %v5691 = vpop.f32.mrb[0].mxu0
        %v5692 = vpop.f32.mrb[0].mxu0
        %v5693 = vadd.f32 0.0, %v5692
        %v5694 = vpop.f32.mrb[0].mxu0
        %5695 = vmatprep.mubr.bf16.mxu0 0
        %5696 = vmatmul.mubr.bf16.gmra.mrb[0].mxu0 %v5512
        %v5697 = vpop.f32.mrb[0].mxu0
        %v5698 = vadd.f32 0.0, %v5697
        %v5699 = vpop.f32.mrb[0].mxu0
        %v5700 = vpop.f32.mrb[0].mxu0
        %v5701 = vadd.f32 0.0, %v5700
        %v5702 = vpop.f32.mrb[0].mxu0
        %5703 = vmatprep.mubr.bf16.mxu0 0
        %5704 = vmatmul.mubr.bf16.gmra.mrb[0].mxu0 %v5515
        %v5705 = vpop.f32.mrb[0].mxu0
        %v5706 = vadd.f32 0.0, %v5705
        %v5707 = vpop.f32.mrb[0].mxu0
        %v5708 = vpop.f32.mrb[0].mxu0
        %v5709 = vadd.f32 0.0, %v5708
        %v5710 = vpop.f32.mrb[0].mxu0
        %5711 = vmatprep.mubr.bf16.mxu0 0
        %5712 = vmatmul.mubr.bf16.gmra.mrb[0].mxu0 %v5518
        %v5713 = vpop.f32.mrb[0].mxu0
        %v5714 = vadd.f32 0.0, %v5713
        %v5715 = vpop.f32.mrb[0].mxu0
        %v5716 = vpop.f32.mrb[0].mxu0
        %v5717 = vadd.f32 0.0, %v5716
        %v5718 = vpop.f32.mrb[0].mxu0
        %5719 = vmatprep.mubr.bf16.mxu0 0
        %5720 = vmatmul.mubr.bf16.gmra.mrb[0].mxu0 %v5521
        %v5721 = vpop.f32.mrb[0].mxu0
        %v5722 = vadd.f32 0.0, %v5721
        %v5723 = vpop.f32.mrb[0].mxu0
        %v5724 = vpop.f32.mrb[0].mxu0
        %v5725 = vadd.f32 0.0, %v5724
        %v5726 = vpop.f32.mrb[0].mxu0
        %5727 = vmatprep.mubr.bf16.mxu0 0
        %5728 = vmatmul.mubr.bf16.gmra.mrb[0].mxu0 %v5524
        %v5729 = vpop.f32.mrb[0].mxu0
        %v5730 = vadd.f32 0.0, %v5729
        %v5731 = vpop.f32.mrb[0].mxu0
        %v5732 = vpop.f32.mrb[0].mxu0
        %v5733 = vadd.f32 0.0, %v5732
        %v5734 = vpop.f32.mrb[0].mxu0
        %5735 = vmatprep.mubr.bf16.mxu0 0
        %5736 = vmatmul.mubr.bf16.gmra.mrb[0].mxu0 %v5527
        %v5737 = vpop.f32.mrb[0].mxu0
        %v5738 = vadd.f32 0.0, %v5737
        %v5739 = vpop.f32.mrb[0].mxu0
        %v5740 = vpop.f32.mrb[0].mxu0
        %v5741 = vadd.f32 0.0, %v5740
        %v5742 = vpop.f32.mrb[0].mxu0
        %5743 = vmatprep.mubr.bf16.mxu0 0
        %5744 = vmatmul.mubr.bf16.gmra.mrb[0].mxu0 %v5530
        %v5745 = vpop.f32.mrb[0].mxu0
        %v5746 = vadd.f32 0.0, %v5745
        %v5747 = vpop.f32.mrb[0].mxu0
        %v5748 = vpop.f32.mrb[0].mxu0
        %v5749 = vadd.f32 0.0, %v5748
        %v5750 = vpop.f32.mrb[0].mxu0
        %5751 = vmatprep.mubr.bf16.mxu0 0
        %5752 = vmatmul.mubr.bf16.gmra.mrb[0].mxu0 %v5533
        %v5753 = vpop.f32.mrb[0].mxu0
        %v5754 = vadd.f32 0.0, %v5753
        %v5755 = vpop.f32.mrb[0].mxu0
        %v5756 = vpop.f32.mrb[0].mxu0
        %v5757 = vadd.f32 0.0, %v5756
        %v5758 = vpop.f32.mrb[0].mxu0
        %5759 = vdwg.mxu0
        %v5760 = vadd.f32 %v5038, %v5570
        %v5761 = vadd.f32 %v5039, %v5573
        %v5762 = vadd.f32 %v5040, %v5578
        %v5763 = vadd.f32 %v5041, %v5581
        %v5764 = vadd.f32 %v5042, %v5586
        %v5765 = vadd.f32 %v5043, %v5589
        %v5766 = vadd.f32 %v5044, %v5594
        %v5767 = vadd.f32 %v5045, %v5597
        %v5768 = vadd.f32 %v5046, %v5602
        %v5769 = vadd.f32 %v5047, %v5605
        %v5770 = vadd.f32 %v5048, %v5610
        %v5771 = vadd.f32 %v5049, %v5613
        %v5772 = vadd.f32 %v5050, %v5618
        %v5773 = vadd.f32 %v5051, %v5621
        %v5774 = vadd.f32 %v5052, %v5626
        %v5775 = vadd.f32 %v5053, %v5629
        %v5776 = vadd.f32 %v5054, %v5634
        %v5777 = vadd.f32 %v5055, %v5637
        %v5778 = vadd.f32 %v5056, %v5642
        %v5779 = vadd.f32 %v5057, %v5645
        %v5780 = vadd.f32 %v5058, %v5650
        %v5781 = vadd.f32 %v5059, %v5653
        %v5782 = vadd.f32 %v5060, %v5658
        %v5783 = vadd.f32 %v5061, %v5661
        %v5784 = vadd.f32 %v5062, %v5666
        %v5785 = vadd.f32 %v5063, %v5669
        %v5786 = vadd.f32 %v5064, %v5674
        %v5787 = vadd.f32 %v5065, %v5677
        %v5788 = vadd.f32 %v5066, %v5682
        %v5789 = vadd.f32 %v5067, %v5685
        %v5790 = vadd.f32 %v5068, %v5690
        %v5791 = vadd.f32 %v5069, %v5693
        %v5792 = vadd.f32 %v5070, %v5698
        %v5793 = vadd.f32 %v5071, %v5701
        %v5794 = vadd.f32 %v5072, %v5706
        %v5795 = vadd.f32 %v5073, %v5709
        %v5796 = vadd.f32 %v5074, %v5714
        %v5797 = vadd.f32 %v5075, %v5717
        %v5798 = vadd.f32 %v5076, %v5722
        %v5799 = vadd.f32 %v5077, %v5725
        %v5800 = vadd.f32 %v5078, %v5730
        %v5801 = vadd.f32 %v5079, %v5733
        %v5802 = vadd.f32 %v5080, %v5738
        %v5803 = vadd.f32 %v5081, %v5741
        %v5804 = vadd.f32 %v5082, %v5746
        %v5805 = vadd.f32 %v5083, %v5749
        %v5806 = vadd.f32 %v5084, %v5754
        %v5807 = vadd.f32 %v5085, %v5757
        %v5808 = vld [vmem:[#allocation2 + $0x18] sm:$0xe]
        %s5809 = scalar_lea.vmem [#allocation12], 64
        %v5810 = vld [vmem:[%s5809] sm:$0xf]
        %v5811 = vld [vmem:[%s5809 + $0x4] sm:$0xf]
        %v5813 = vunpack.c.l.b16 %v5808
        %v5814 = vpack.c.b16 %v5188, %v5813
        %v5815 = vrot.slane %v5814, 1
        %v5816 = vrot.slane %v5237, 1
        %v5817 = vsel %vm2512, %v5815, %v5816
        %v5818 = vrot.slane %v5238, 1
        %v5819 = vsel %vm2512, %v5816, %v5818
        %v5820 = vrot.slane %v5239, 1
        %v5821 = vsel %vm2512, %v5818, %v5820
        %v5822 = vrot.slane %v5240, 1
        %v5823 = vsel %vm2512, %v5820, %v5822
        %v5824 = vrot.slane %v5241, 1
        %v5825 = vsel %vm2512, %v5822, %v5824
        %v5826 = vrot.slane %v5242, 1
        %v5827 = vsel %vm2512, %v5824, %v5826
        %v5828 = vrot.slane %v5243, 1
        %v5829 = vsel %vm2512, %v5826, %v5828
        %v5830 = vrot.slane %v5244, 1
        %v5831 = vsel %vm2512, %v5828, %v5830
        %v5832 = vrot.slane %v5245, 1
        %v5833 = vsel %vm2512, %v5830, %v5832
        %v5834 = vrot.slane %v5246, 1
        %v5835 = vsel %vm2512, %v5832, %v5834
        %v5836 = vrot.slane %v5247, 1
        %v5837 = vsel %vm2512, %v5834, %v5836
        %v5838 = vrot.slane %v5248, 1
        %v5839 = vsel %vm2512, %v5836, %v5838
        %v5840 = vrot.slane %v5249, 1
        %v5841 = vsel %vm2512, %v5838, %v5840
        %v5842 = vrot.slane %v5250, 1
        %v5843 = vsel %vm2512, %v5840, %v5842
        %v5844 = vrot.slane %v5251, 1
        %v5845 = vsel %vm2512, %v5842, %v5844
        %v5846 = vrot.slane %v5252, 1
        %v5847 = vsel %vm2512, %v5844, %v5846
        %v5848 = vrot.slane %v5253, 1
        %v5849 = vsel %vm2512, %v5846, %v5848
        %v5850 = vrot.slane %v5254, 1
        %v5851 = vsel %vm2512, %v5848, %v5850
        %v5852 = vrot.slane %v5255, 1
        %v5853 = vsel %vm2512, %v5850, %v5852
        %v5854 = vrot.slane %v5256, 1
        %v5855 = vsel %vm2512, %v5852, %v5854
        %v5856 = vrot.slane %v5257, 1
        %v5857 = vsel %vm2512, %v5854, %v5856
        %v5858 = vrot.slane %v5258, 1
        %v5859 = vsel %vm2512, %v5856, %v5858
        %v5860 = vrot.slane %v5259, 1
        %v5861 = vsel %vm2512, %v5858, %v5860
        %v5862 = vrot.slane %v5260, 1
        %v5863 = vsel %vm2512, %v5860, %v5862
        %v5866 = vunpack.c.l.b16 %v5810
        %v5867 = vunpack.c.l.b16 %v5811
        %v5868 = vpack.c.b16 %v5867, %v5866
        %v5871 = vsel %vm1928, %v5817, 0
        %v5874 = vsel %vm1928, %v5819, 0
        %v5877 = vsel %vm1928, %v5821, 0
        %v5880 = vsel %vm1928, %v5823, 0
        %v5883 = vsel %vm1928, %v5825, 0
        %v5886 = vsel %vm1928, %v5827, 0
        %v5889 = vsel %vm1928, %v5829, 0
        %v5892 = vsel %vm1928, %v5831, 0
        %v5895 = vsel %vm1928, %v5833, 0
        %v5898 = vsel %vm1928, %v5835, 0
        %v5901 = vsel %vm1928, %v5837, 0
        %v5904 = vsel %vm1928, %v5839, 0
        %v5907 = vsel %vm1928, %v5841, 0
        %v5910 = vsel %vm1928, %v5843, 0
        %v5913 = vsel %vm1928, %v5845, 0
        %v5916 = vsel %vm1928, %v5847, 0
        %v5919 = vsel %vm1928, %v5849, 0
        %v5922 = vsel %vm1928, %v5851, 0
        %v5925 = vsel %vm1928, %v5853, 0
        %v5928 = vsel %vm1928, %v5855, 0
        %v5931 = vsel %vm1928, %v5857, 0
        %v5934 = vsel %vm1928, %v5859, 0
        %v5937 = vsel %vm1928, %v5861, 0
        %v5940 = vsel %vm1928, %v5863, 0
        %5942 = vmatprep.subr.bf16.mxu0 0
        %5943 = vmatpush1.bf16.msra.mxu0 %v5868
        %5944 = vmatprep.subr.bf16.mxu0 0
        %5945 = vmatpush1.bf16.msra.mxu0 0
        %5946 = vmatprep.subr.bf16.mxu0 0
        %5947 = vmatpush1.bf16.msra.mxu0 0
        %5948 = vmatprep.subr.bf16.mxu0 0
        %5949 = vmatpush1.bf16.msra.mxu0 0
        %5950 = vmatprep.subr.bf16.mxu0 0
        %5951 = vmatpush1.bf16.msra.mxu0 0
        %5952 = vmatprep.subr.bf16.mxu0 0
        %5953 = vmatpush1.bf16.msra.mxu0 0
        %5954 = vmatprep.subr.bf16.mxu0 0
        %5955 = vmatpush1.bf16.msra.mxu0 0
        %5956 = vmatprep.subr.bf16.mxu0 0
        %5957 = vmatpush1.bf16.msra.mxu0 0
        %5958 = vmatprep.subr.bf16.mxu0 0
        %5959 = vmatpush1.bf16.msra.mxu0 0
        %5960 = vmatprep.subr.bf16.mxu0 0
        %5961 = vmatpush1.bf16.msra.mxu0 0
        %5962 = vmatprep.subr.bf16.mxu0 0
        %5963 = vmatpush1.bf16.msra.mxu0 0
        %5964 = vmatprep.subr.bf16.mxu0 0
        %5965 = vmatpush1.bf16.msra.mxu0 0
        %5966 = vmatprep.subr.bf16.mxu0 0
        %5967 = vmatpush1.bf16.msra.mxu0 0
        %5968 = vmatprep.subr.bf16.mxu0 0
        %5969 = vmatpush1.bf16.msra.mxu0 0
        %5970 = vmatprep.subr.bf16.mxu0 0
        %5971 = vmatpush1.bf16.msra.mxu0 0
        %5972 = vmatprep.subr.bf16.mxu0 0
        %5973 = vmatpush1.bf16.msra.mxu0 0
        %5974 = vmatprep.mubr.bf16.mxu0 0
        %5975 = vmatmul.mubr.bf16.gmra.mrb[0].mxu0 %v5871
        %v5976 = vpop.f32.mrb[0].mxu0
        %v5977 = vadd.f32 0.0, %v5976
        %v5978 = vpop.f32.mrb[0].mxu0
        %v5979 = vpop.f32.mrb[0].mxu0
        %v5980 = vadd.f32 0.0, %v5979
        %v5981 = vpop.f32.mrb[0].mxu0
        %5982 = vmatprep.mubr.bf16.mxu0 0
        %5983 = vmatmul.mubr.bf16.gmra.mrb[0].mxu0 %v5874
        %v5984 = vpop.f32.mrb[0].mxu0
        %v5985 = vadd.f32 0.0, %v5984
        %v5986 = vpop.f32.mrb[0].mxu0
        %v5987 = vpop.f32.mrb[0].mxu0
        %v5988 = vadd.f32 0.0, %v5987
        %v5989 = vpop.f32.mrb[0].mxu0
        %5990 = vmatprep.mubr.bf16.mxu0 0
        %5991 = vmatmul.mubr.bf16.gmra.mrb[0].mxu0 %v5877
        %v5992 = vpop.f32.mrb[0].mxu0
        %v5993 = vadd.f32 0.0, %v5992
        %v5994 = vpop.f32.mrb[0].mxu0
        %v5995 = vpop.f32.mrb[0].mxu0
        %v5996 = vadd.f32 0.0, %v5995
        %v5997 = vpop.f32.mrb[0].mxu0
        %5998 = vmatprep.mubr.bf16.mxu0 0
        %5999 = vmatmul.mubr.bf16.gmra.mrb[0].mxu0 %v5880
        %v6000 = vpop.f32.mrb[0].mxu0
        %v6001 = vadd.f32 0.0, %v6000
        %v6002 = vpop.f32.mrb[0].mxu0
        %v6003 = vpop.f32.mrb[0].mxu0
        %v6004 = vadd.f32 0.0, %v6003
        %v6005 = vpop.f32.mrb[0].mxu0
        %6006 = vmatprep.mubr.bf16.mxu0 0
        %6007 = vmatmul.mubr.bf16.gmra.mrb[0].mxu0 %v5883
        %v6008 = vpop.f32.mrb[0].mxu0
        %v6009 = vadd.f32 0.0, %v6008
        %v6010 = vpop.f32.mrb[0].mxu0
        %v6011 = vpop.f32.mrb[0].mxu0
        %v6012 = vadd.f32 0.0, %v6011
        %v6013 = vpop.f32.mrb[0].mxu0
        %6014 = vmatprep.mubr.bf16.mxu0 0
        %6015 = vmatmul.mubr.bf16.gmra.mrb[0].mxu0 %v5886
        %v6016 = vpop.f32.mrb[0].mxu0
        %v6017 = vadd.f32 0.0, %v6016
        %v6018 = vpop.f32.mrb[0].mxu0
        %v6019 = vpop.f32.mrb[0].mxu0
        %v6020 = vadd.f32 0.0, %v6019
        %v6021 = vpop.f32.mrb[0].mxu0
        %6022 = vmatprep.mubr.bf16.mxu0 0
        %6023 = vmatmul.mubr.bf16.gmra.mrb[0].mxu0 %v5889
        %v6024 = vpop.f32.mrb[0].mxu0
        %v6025 = vadd.f32 0.0, %v6024
        %v6026 = vpop.f32.mrb[0].mxu0
        %v6027 = vpop.f32.mrb[0].mxu0
        %v6028 = vadd.f32 0.0, %v6027
        %v6029 = vpop.f32.mrb[0].mxu0
        %6030 = vmatprep.mubr.bf16.mxu0 0
        %6031 = vmatmul.mubr.bf16.gmra.mrb[0].mxu0 %v5892
        %v6032 = vpop.f32.mrb[0].mxu0
        %v6033 = vadd.f32 0.0, %v6032
        %v6034 = vpop.f32.mrb[0].mxu0
        %v6035 = vpop.f32.mrb[0].mxu0
        %v6036 = vadd.f32 0.0, %v6035
        %v6037 = vpop.f32.mrb[0].mxu0
        %6038 = vmatprep.mubr.bf16.mxu0 0
        %6039 = vmatmul.mubr.bf16.gmra.mrb[0].mxu0 %v5895
        %v6040 = vpop.f32.mrb[0].mxu0
        %v6041 = vadd.f32 0.0, %v6040
        %v6042 = vpop.f32.mrb[0].mxu0
        %v6043 = vpop.f32.mrb[0].mxu0
        %v6044 = vadd.f32 0.0, %v6043
        %v6045 = vpop.f32.mrb[0].mxu0
        %6046 = vmatprep.mubr.bf16.mxu0 0
        %6047 = vmatmul.mubr.bf16.gmra.mrb[0].mxu0 %v5898
        %v6048 = vpop.f32.mrb[0].mxu0
        %v6049 = vadd.f32 0.0, %v6048
        %v6050 = vpop.f32.mrb[0].mxu0
        %v6051 = vpop.f32.mrb[0].mxu0
        %v6052 = vadd.f32 0.0, %v6051
        %v6053 = vpop.f32.mrb[0].mxu0
        %6054 = vmatprep.mubr.bf16.mxu0 0
        %6055 = vmatmul.mubr.bf16.gmra.mrb[0].mxu0 %v5901
        %v6056 = vpop.f32.mrb[0].mxu0
        %v6057 = vadd.f32 0.0, %v6056
        %v6058 = vpop.f32.mrb[0].mxu0
        %v6059 = vpop.f32.mrb[0].mxu0
        %v6060 = vadd.f32 0.0, %v6059
        %v6061 = vpop.f32.mrb[0].mxu0
        %6062 = vmatprep.mubr.bf16.mxu0 0
        %6063 = vmatmul.mubr.bf16.gmra.mrb[0].mxu0 %v5904
        %v6064 = vpop.f32.mrb[0].mxu0
        %v6065 = vadd.f32 0.0, %v6064
        %v6066 = vpop.f32.mrb[0].mxu0
        %v6067 = vpop.f32.mrb[0].mxu0
        %v6068 = vadd.f32 0.0, %v6067
        %v6069 = vpop.f32.mrb[0].mxu0
        %6070 = vmatprep.mubr.bf16.mxu0 0
        %6071 = vmatmul.mubr.bf16.gmra.mrb[0].mxu0 %v5907
        %v6072 = vpop.f32.mrb[0].mxu0
        %v6073 = vadd.f32 0.0, %v6072
        %v6074 = vpop.f32.mrb[0].mxu0
        %v6075 = vpop.f32.mrb[0].mxu0
        %v6076 = vadd.f32 0.0, %v6075
        %v6077 = vpop.f32.mrb[0].mxu0
        %6078 = vmatprep.mubr.bf16.mxu0 0
        %6079 = vmatmul.mubr.bf16.gmra.mrb[0].mxu0 %v5910
        %v6080 = vpop.f32.mrb[0].mxu0
        %v6081 = vadd.f32 0.0, %v6080
        %v6082 = vpop.f32.mrb[0].mxu0
        %v6083 = vpop.f32.mrb[0].mxu0
        %v6084 = vadd.f32 0.0, %v6083
        %v6085 = vpop.f32.mrb[0].mxu0
        %6086 = vmatprep.mubr.bf16.mxu0 0
        %6087 = vmatmul.mubr.bf16.gmra.mrb[0].mxu0 %v5913
        %v6088 = vpop.f32.mrb[0].mxu0
        %v6089 = vadd.f32 0.0, %v6088
        %v6090 = vpop.f32.mrb[0].mxu0
        %v6091 = vpop.f32.mrb[0].mxu0
        %v6092 = vadd.f32 0.0, %v6091
        %v6093 = vpop.f32.mrb[0].mxu0
        %6094 = vmatprep.mubr.bf16.mxu0 0
        %6095 = vmatmul.mubr.bf16.gmra.mrb[0].mxu0 %v5916
        %v6096 = vpop.f32.mrb[0].mxu0
        %v6097 = vadd.f32 0.0, %v6096
        %v6098 = vpop.f32.mrb[0].mxu0
        %v6099 = vpop.f32.mrb[0].mxu0
        %v6100 = vadd.f32 0.0, %v6099
        %v6101 = vpop.f32.mrb[0].mxu0
        %6102 = vmatprep.mubr.bf16.mxu0 0
        %6103 = vmatmul.mubr.bf16.gmra.mrb[0].mxu0 %v5919
        %v6104 = vpop.f32.mrb[0].mxu0
        %v6105 = vadd.f32 0.0, %v6104
        %v6106 = vpop.f32.mrb[0].mxu0
        %v6107 = vpop.f32.mrb[0].mxu0
        %v6108 = vadd.f32 0.0, %v6107
        %v6109 = vpop.f32.mrb[0].mxu0
        %6110 = vmatprep.mubr.bf16.mxu0 0
        %6111 = vmatmul.mubr.bf16.gmra.mrb[0].mxu0 %v5922
        %v6112 = vpop.f32.mrb[0].mxu0
        %v6113 = vadd.f32 0.0, %v6112
        %v6114 = vpop.f32.mrb[0].mxu0
        %v6115 = vpop.f32.mrb[0].mxu0
        %v6116 = vadd.f32 0.0, %v6115
        %v6117 = vpop.f32.mrb[0].mxu0
        %6118 = vmatprep.mubr.bf16.mxu0 0
        %6119 = vmatmul.mubr.bf16.gmra.mrb[0].mxu0 %v5925
        %v6120 = vpop.f32.mrb[0].mxu0
        %v6121 = vadd.f32 0.0, %v6120
        %v6122 = vpop.f32.mrb[0].mxu0
        %v6123 = vpop.f32.mrb[0].mxu0
        %v6124 = vadd.f32 0.0, %v6123
        %v6125 = vpop.f32.mrb[0].mxu0
        %6126 = vmatprep.mubr.bf16.mxu0 0
        %6127 = vmatmul.mubr.bf16.gmra.mrb[0].mxu0 %v5928
        %v6128 = vpop.f32.mrb[0].mxu0
        %v6129 = vadd.f32 0.0, %v6128
        %v6130 = vpop.f32.mrb[0].mxu0
        %v6131 = vpop.f32.mrb[0].mxu0
        %v6132 = vadd.f32 0.0, %v6131
        %v6133 = vpop.f32.mrb[0].mxu0
        %6134 = vmatprep.mubr.bf16.mxu0 0
        %6135 = vmatmul.mubr.bf16.gmra.mrb[0].mxu0 %v5931
        %v6136 = vpop.f32.mrb[0].mxu0
        %v6137 = vadd.f32 0.0, %v6136
        %v6138 = vpop.f32.mrb[0].mxu0
        %v6139 = vpop.f32.mrb[0].mxu0
        %v6140 = vadd.f32 0.0, %v6139
        %v6141 = vpop.f32.mrb[0].mxu0
        %6142 = vmatprep.mubr.bf16.mxu0 0
        %6143 = vmatmul.mubr.bf16.gmra.mrb[0].mxu0 %v5934
        %v6144 = vpop.f32.mrb[0].mxu0
        %v6145 = vadd.f32 0.0, %v6144
        %v6146 = vpop.f32.mrb[0].mxu0
        %v6147 = vpop.f32.mrb[0].mxu0
        %v6148 = vadd.f32 0.0, %v6147
        %v6149 = vpop.f32.mrb[0].mxu0
        %6150 = vmatprep.mubr.bf16.mxu0 0
        %6151 = vmatmul.mubr.bf16.gmra.mrb[0].mxu0 %v5937
        %v6152 = vpop.f32.mrb[0].mxu0
        %v6153 = vadd.f32 0.0, %v6152
        %v6154 = vpop.f32.mrb[0].mxu0
        %v6155 = vpop.f32.mrb[0].mxu0
        %v6156 = vadd.f32 0.0, %v6155
        %v6157 = vpop.f32.mrb[0].mxu0
        %6158 = vmatprep.mubr.bf16.mxu0 0
        %6159 = vmatmul.mubr.bf16.gmra.mrb[0].mxu0 %v5940
        %v6160 = vpop.f32.mrb[0].mxu0
        %v6161 = vadd.f32 0.0, %v6160
        %v6162 = vpop.f32.mrb[0].mxu0
        %v6163 = vpop.f32.mrb[0].mxu0
        %v6164 = vadd.f32 0.0, %v6163
        %v6165 = vpop.f32.mrb[0].mxu0
        %6166 = vdwg.mxu0
        %v6167 = vadd.f32 %v5760, %v5977
        %v6168 = vadd.f32 %v5761, %v5980
        %v6169 = vadd.f32 %v5762, %v5985
        %v6170 = vadd.f32 %v5763, %v5988
        %v6171 = vadd.f32 %v5764, %v5993
        %v6172 = vadd.f32 %v5765, %v5996
        %v6173 = vadd.f32 %v5766, %v6001
        %v6174 = vadd.f32 %v5767, %v6004
        %v6175 = vadd.f32 %v5768, %v6009
        %v6176 = vadd.f32 %v5769, %v6012
        %v6177 = vadd.f32 %v5770, %v6017
        %v6178 = vadd.f32 %v5771, %v6020
        %v6179 = vadd.f32 %v5772, %v6025
        %v6180 = vadd.f32 %v5773, %v6028
        %v6181 = vadd.f32 %v5774, %v6033
        %v6182 = vadd.f32 %v5775, %v6036
        %v6183 = vadd.f32 %v5776, %v6041
        %v6184 = vadd.f32 %v5777, %v6044
        %v6185 = vadd.f32 %v5778, %v6049
        %v6186 = vadd.f32 %v5779, %v6052
        %v6187 = vadd.f32 %v5780, %v6057
        %v6188 = vadd.f32 %v5781, %v6060
        %v6189 = vadd.f32 %v5782, %v6065
        %v6190 = vadd.f32 %v5783, %v6068
        %v6191 = vadd.f32 %v5784, %v6073
        %v6192 = vadd.f32 %v5785, %v6076
        %v6193 = vadd.f32 %v5786, %v6081
        %v6194 = vadd.f32 %v5787, %v6084
        %v6195 = vadd.f32 %v5788, %v6089
        %v6196 = vadd.f32 %v5789, %v6092
        %v6197 = vadd.f32 %v5790, %v6097
        %v6198 = vadd.f32 %v5791, %v6100
        %v6199 = vadd.f32 %v5792, %v6105
        %v6200 = vadd.f32 %v5793, %v6108
        %v6201 = vadd.f32 %v5794, %v6113
        %v6202 = vadd.f32 %v5795, %v6116
        %v6203 = vadd.f32 %v5796, %v6121
        %v6204 = vadd.f32 %v5797, %v6124
        %v6205 = vadd.f32 %v5798, %v6129
        %v6206 = vadd.f32 %v5799, %v6132
        %v6207 = vadd.f32 %v5800, %v6137
        %v6208 = vadd.f32 %v5801, %v6140
        %v6209 = vadd.f32 %v5802, %v6145
        %v6210 = vadd.f32 %v5803, %v6148
        %v6211 = vadd.f32 %v5804, %v6153
        %v6212 = vadd.f32 %v5805, %v6156
        %v6213 = vadd.f32 %v5806, %v6161
        %v6214 = vadd.f32 %v5807, %v6164
        %v6215 = vld [vmem:[#allocation14] sm:$0x1]
        %v6217 = vlaneseq
        %v6218 = vshrl.u32 %v6217, 7
        %v6219 = vsub.s32 0, %v6218
        %v6220 = vrot.slane %v6215, %v6219
        %v6222 = vmul.f32 %v6167, %v6220
        %v6223 = vmul.f32 %v6168, %v6220
        %v6224 = vmul.f32 %v6169, %v6220
        %v6225 = vmul.f32 %v6170, %v6220
        %v6226 = vmul.f32 %v6171, %v6220
        %v6227 = vmul.f32 %v6172, %v6220
        %v6228 = vmul.f32 %v6173, %v6220
        %v6229 = vmul.f32 %v6174, %v6220
        %v6230 = vmul.f32 %v6175, %v6220
        %v6231 = vmul.f32 %v6176, %v6220
        %v6232 = vmul.f32 %v6177, %v6220
        %v6233 = vmul.f32 %v6178, %v6220
        %v6234 = vmul.f32 %v6179, %v6220
        %v6235 = vmul.f32 %v6180, %v6220
        %v6236 = vmul.f32 %v6181, %v6220
        %v6237 = vmul.f32 %v6182, %v6220
        %v6238 = vmul.f32 %v6183, %v6220
        %v6239 = vmul.f32 %v6184, %v6220
        %v6240 = vmul.f32 %v6185, %v6220
        %v6241 = vmul.f32 %v6186, %v6220
        %v6242 = vmul.f32 %v6187, %v6220
        %v6243 = vmul.f32 %v6188, %v6220
        %v6244 = vmul.f32 %v6189, %v6220
        %v6245 = vmul.f32 %v6190, %v6220
        %v6246 = vmul.f32 %v6191, %v6220
        %v6247 = vmul.f32 %v6192, %v6220
        %v6248 = vmul.f32 %v6193, %v6220
        %v6249 = vmul.f32 %v6194, %v6220
        %v6250 = vmul.f32 %v6195, %v6220
        %v6251 = vmul.f32 %v6196, %v6220
        %v6252 = vmul.f32 %v6197, %v6220
        %v6253 = vmul.f32 %v6198, %v6220
        %v6254 = vmul.f32 %v6199, %v6220
        %v6255 = vmul.f32 %v6200, %v6220
        %v6256 = vmul.f32 %v6201, %v6220
        %v6257 = vmul.f32 %v6202, %v6220
        %v6258 = vmul.f32 %v6203, %v6220
        %v6259 = vmul.f32 %v6204, %v6220
        %v6260 = vmul.f32 %v6205, %v6220
        %v6261 = vmul.f32 %v6206, %v6220
        %v6262 = vmul.f32 %v6207, %v6220
        %v6263 = vmul.f32 %v6208, %v6220
        %v6264 = vmul.f32 %v6209, %v6220
        %v6265 = vmul.f32 %v6210, %v6220
        %v6266 = vmul.f32 %v6211, %v6220
        %v6267 = vmul.f32 %v6212, %v6220
        %v6268 = vmul.f32 %v6213, %v6220
        %v6269 = vmul.f32 %v6214, %v6220
        %v6270 = vld [vmem:[#allocation15] sm:$0x1]
        %v6272 = vlaneseq
        %v6273 = vshrl.u32 %v6272, 7
        %v6274 = vsub.s32 0, %v6273
        %v6275 = vrot.slane %v6270, %v6274
        %v6277 = vadd.f32 %v6222, %v6275
        %v6278 = vadd.f32 %v6223, %v6275
        %v6279 = vadd.f32 %v6224, %v6275
        %v6280 = vadd.f32 %v6225, %v6275
        %v6281 = vadd.f32 %v6226, %v6275
        %v6282 = vadd.f32 %v6227, %v6275
        %v6283 = vadd.f32 %v6228, %v6275
        %v6284 = vadd.f32 %v6229, %v6275
        %v6285 = vadd.f32 %v6230, %v6275
        %v6286 = vadd.f32 %v6231, %v6275
        %v6287 = vadd.f32 %v6232, %v6275
        %v6288 = vadd.f32 %v6233, %v6275
        %v6289 = vadd.f32 %v6234, %v6275
        %v6290 = vadd.f32 %v6235, %v6275
        %v6291 = vadd.f32 %v6236, %v6275
        %v6292 = vadd.f32 %v6237, %v6275
        %v6293 = vadd.f32 %v6238, %v6275
        %v6294 = vadd.f32 %v6239, %v6275
        %v6295 = vadd.f32 %v6240, %v6275
        %v6296 = vadd.f32 %v6241, %v6275
        %v6297 = vadd.f32 %v6242, %v6275
        %v6298 = vadd.f32 %v6243, %v6275
        %v6299 = vadd.f32 %v6244, %v6275
        %v6300 = vadd.f32 %v6245, %v6275
        %v6301 = vadd.f32 %v6246, %v6275
        %v6302 = vadd.f32 %v6247, %v6275
        %v6303 = vadd.f32 %v6248, %v6275
        %v6304 = vadd.f32 %v6249, %v6275
        %v6305 = vadd.f32 %v6250, %v6275
        %v6306 = vadd.f32 %v6251, %v6275
        %v6307 = vadd.f32 %v6252, %v6275
        %v6308 = vadd.f32 %v6253, %v6275
        %v6309 = vadd.f32 %v6254, %v6275
        %v6310 = vadd.f32 %v6255, %v6275
        %v6311 = vadd.f32 %v6256, %v6275
        %v6312 = vadd.f32 %v6257, %v6275
        %v6313 = vadd.f32 %v6258, %v6275
        %v6314 = vadd.f32 %v6259, %v6275
        %v6315 = vadd.f32 %v6260, %v6275
        %v6316 = vadd.f32 %v6261, %v6275
        %v6317 = vadd.f32 %v6262, %v6275
        %v6318 = vadd.f32 %v6263, %v6275
        %v6319 = vadd.f32 %v6264, %v6275
        %v6320 = vadd.f32 %v6265, %v6275
        %v6321 = vadd.f32 %v6266, %v6275
        %v6322 = vadd.f32 %v6267, %v6275
        %v6323 = vadd.f32 %v6268, %v6275
        %v6324 = vadd.f32 %v6269, %v6275
        %v6325 = vmax.f32 %v6277, 0.0
        %v6326 = vmax.f32 %v6278, 0.0
        %v6327 = vmax.f32 %v6279, 0.0
        %v6328 = vmax.f32 %v6280, 0.0
        %v6329 = vmax.f32 %v6281, 0.0
        %v6330 = vmax.f32 %v6282, 0.0
        %v6331 = vmax.f32 %v6283, 0.0
        %v6332 = vmax.f32 %v6284, 0.0
        %v6333 = vmax.f32 %v6285, 0.0
        %v6334 = vmax.f32 %v6286, 0.0
        %v6335 = vmax.f32 %v6287, 0.0
        %v6336 = vmax.f32 %v6288, 0.0
        %v6337 = vmax.f32 %v6289, 0.0
        %v6338 = vmax.f32 %v6290, 0.0
        %v6339 = vmax.f32 %v6291, 0.0
        %v6340 = vmax.f32 %v6292, 0.0
        %v6341 = vmax.f32 %v6293, 0.0
        %v6342 = vmax.f32 %v6294, 0.0
        %v6343 = vmax.f32 %v6295, 0.0
        %v6344 = vmax.f32 %v6296, 0.0
        %v6345 = vmax.f32 %v6297, 0.0
        %v6346 = vmax.f32 %v6298, 0.0
        %v6347 = vmax.f32 %v6299, 0.0
        %v6348 = vmax.f32 %v6300, 0.0
        %v6349 = vmax.f32 %v6301, 0.0
        %v6350 = vmax.f32 %v6302, 0.0
        %v6351 = vmax.f32 %v6303, 0.0
        %v6352 = vmax.f32 %v6304, 0.0
        %v6353 = vmax.f32 %v6305, 0.0
        %v6354 = vmax.f32 %v6306, 0.0
        %v6355 = vmax.f32 %v6307, 0.0
        %v6356 = vmax.f32 %v6308, 0.0
        %v6357 = vmax.f32 %v6309, 0.0
        %v6358 = vmax.f32 %v6310, 0.0
        %v6359 = vmax.f32 %v6311, 0.0
        %v6360 = vmax.f32 %v6312, 0.0
        %v6361 = vmax.f32 %v6313, 0.0
        %v6362 = vmax.f32 %v6314, 0.0
        %v6363 = vmax.f32 %v6315, 0.0
        %v6364 = vmax.f32 %v6316, 0.0
        %v6365 = vmax.f32 %v6317, 0.0
        %v6366 = vmax.f32 %v6318, 0.0
        %v6367 = vmax.f32 %v6319, 0.0
        %v6368 = vmax.f32 %v6320, 0.0
        %v6369 = vmax.f32 %v6321, 0.0
        %v6370 = vmax.f32 %v6322, 0.0
        %v6371 = vmax.f32 %v6323, 0.0
        %v6372 = vmax.f32 %v6324, 0.0
        %v6373 = vpack.c.bf16 %v6326, %v6325
        %v6374 = vpack.c.bf16 %v6328, %v6327
        %v6375 = vpack.c.bf16 %v6330, %v6329
        %v6376 = vpack.c.bf16 %v6332, %v6331
        %v6377 = vpack.c.bf16 %v6334, %v6333
        %v6378 = vpack.c.bf16 %v6336, %v6335
        %v6379 = vpack.c.bf16 %v6338, %v6337
        %v6380 = vpack.c.bf16 %v6340, %v6339
        %v6381 = vpack.c.bf16 %v6342, %v6341
        %v6382 = vpack.c.bf16 %v6344, %v6343
        %v6383 = vpack.c.bf16 %v6346, %v6345
        %v6384 = vpack.c.bf16 %v6348, %v6347
        %v6385 = vpack.c.bf16 %v6350, %v6349
        %v6386 = vpack.c.bf16 %v6352, %v6351
        %v6387 = vpack.c.bf16 %v6354, %v6353
        %v6388 = vpack.c.bf16 %v6356, %v6355
        %v6389 = vpack.c.bf16 %v6358, %v6357
        %v6390 = vpack.c.bf16 %v6360, %v6359
        %v6391 = vpack.c.bf16 %v6362, %v6361
        %v6392 = vpack.c.bf16 %v6364, %v6363
        %v6393 = vpack.c.bf16 %v6366, %v6365
        %v6394 = vpack.c.bf16 %v6368, %v6367
        %v6395 = vpack.c.bf16 %v6370, %v6369
        %v6396 = vpack.c.bf16 %v6372, %v6371
        %v6397 = vld [vmem:[#allocation17] sm:$0xf]
        %v6398 = vld [vmem:[#allocation17 + $0x4] sm:$0xf]
        %v6401 = vunpack.c.l.b16 %v6397
        %v6402 = vunpack.c.l.b16 %v6398
        %v6403 = vpack.c.b16 %v6402, %v6401
        %v6406 = vsel %vm1928, %v6373, 0
        %v6409 = vsel %vm1928, %v6374, 0
        %v6412 = vsel %vm1928, %v6375, 0
        %v6415 = vsel %vm1928, %v6376, 0
        %v6418 = vsel %vm1928, %v6377, 0
        %v6421 = vsel %vm1928, %v6378, 0
        %v6424 = vsel %vm1928, %v6379, 0
        %v6427 = vsel %vm1928, %v6380, 0
        %v6430 = vsel %vm1928, %v6381, 0
        %v6433 = vsel %vm1928, %v6382, 0
        %v6436 = vsel %vm1928, %v6383, 0
        %v6439 = vsel %vm1928, %v6384, 0
        %v6442 = vsel %vm1928, %v6385, 0
        %v6445 = vsel %vm1928, %v6386, 0
        %v6448 = vsel %vm1928, %v6387, 0
        %v6451 = vsel %vm1928, %v6388, 0
        %v6454 = vsel %vm1928, %v6389, 0
        %v6457 = vsel %vm1928, %v6390, 0
        %v6460 = vsel %vm1928, %v6391, 0
        %v6463 = vsel %vm1928, %v6392, 0
        %v6466 = vsel %vm1928, %v6393, 0
        %v6469 = vsel %vm1928, %v6394, 0
        %v6472 = vsel %vm1928, %v6395, 0
        %v6475 = vsel %vm1928, %v6396, 0
        %6477 = vmatprep.subr.bf16.mxu0 0
        %6478 = vmatpush1.bf16.msra.mxu0 %v6403
        %6479 = vmatprep.subr.bf16.mxu0 0
        %6480 = vmatpush1.bf16.msra.mxu0 0
        %6481 = vmatprep.subr.bf16.mxu0 0
        %6482 = vmatpush1.bf16.msra.mxu0 0
        %6483 = vmatprep.subr.bf16.mxu0 0
        %6484 = vmatpush1.bf16.msra.mxu0 0
        %6485 = vmatprep.subr.bf16.mxu0 0
        %6486 = vmatpush1.bf16.msra.mxu0 0
        %6487 = vmatprep.subr.bf16.mxu0 0
        %6488 = vmatpush1.bf16.msra.mxu0 0
        %6489 = vmatprep.subr.bf16.mxu0 0
        %6490 = vmatpush1.bf16.msra.mxu0 0
        %6491 = vmatprep.subr.bf16.mxu0 0
        %6492 = vmatpush1.bf16.msra.mxu0 0
        %6493 = vmatprep.subr.bf16.mxu0 0
        %6494 = vmatpush1.bf16.msra.mxu0 0
        %6495 = vmatprep.subr.bf16.mxu0 0
        %6496 = vmatpush1.bf16.msra.mxu0 0
        %6497 = vmatprep.subr.bf16.mxu0 0
        %6498 = vmatpush1.bf16.msra.mxu0 0
        %6499 = vmatprep.subr.bf16.mxu0 0
        %6500 = vmatpush1.bf16.msra.mxu0 0
        %6501 = vmatprep.subr.bf16.mxu0 0
        %6502 = vmatpush1.bf16.msra.mxu0 0
        %6503 = vmatprep.subr.bf16.mxu0 0
        %6504 = vmatpush1.bf16.msra.mxu0 0
        %6505 = vmatprep.subr.bf16.mxu0 0
        %6506 = vmatpush1.bf16.msra.mxu0 0
        %6507 = vmatprep.subr.bf16.mxu0 0
        %6508 = vmatpush1.bf16.msra.mxu0 0
        %6509 = vmatprep.mubr.bf16.mxu0 0
        %6510 = vmatmul.mubr.bf16.gmra.mrb[0].mxu0 %v6406
        %v6511 = vpop.f32.mrb[0].mxu0
        %v6512 = vadd.f32 0.0, %v6511
        %v6513 = vpop.f32.mrb[0].mxu0
        %v6514 = vpop.f32.mrb[0].mxu0
        %v6515 = vadd.f32 0.0, %v6514
        %v6516 = vpop.f32.mrb[0].mxu0
        %6517 = vmatprep.mubr.bf16.mxu0 0
        %6518 = vmatmul.mubr.bf16.gmra.mrb[0].mxu0 %v6409
        %v6519 = vpop.f32.mrb[0].mxu0
        %v6520 = vadd.f32 0.0, %v6519
        %v6521 = vpop.f32.mrb[0].mxu0
        %v6522 = vpop.f32.mrb[0].mxu0
        %v6523 = vadd.f32 0.0, %v6522
        %v6524 = vpop.f32.mrb[0].mxu0
        %6525 = vmatprep.mubr.bf16.mxu0 0
        %6526 = vmatmul.mubr.bf16.gmra.mrb[0].mxu0 %v6412
        %v6527 = vpop.f32.mrb[0].mxu0
        %v6528 = vadd.f32 0.0, %v6527
        %v6529 = vpop.f32.mrb[0].mxu0
        %v6530 = vpop.f32.mrb[0].mxu0
        %v6531 = vadd.f32 0.0, %v6530
        %v6532 = vpop.f32.mrb[0].mxu0
        %6533 = vmatprep.mubr.bf16.mxu0 0
        %6534 = vmatmul.mubr.bf16.gmra.mrb[0].mxu0 %v6415
        %v6535 = vpop.f32.mrb[0].mxu0
        %v6536 = vadd.f32 0.0, %v6535
        %v6537 = vpop.f32.mrb[0].mxu0
        %v6538 = vpop.f32.mrb[0].mxu0
        %v6539 = vadd.f32 0.0, %v6538
        %v6540 = vpop.f32.mrb[0].mxu0
        %6541 = vmatprep.mubr.bf16.mxu0 0
        %6542 = vmatmul.mubr.bf16.gmra.mrb[0].mxu0 %v6418
        %v6543 = vpop.f32.mrb[0].mxu0
        %v6544 = vadd.f32 0.0, %v6543
        %v6545 = vpop.f32.mrb[0].mxu0
        %v6546 = vpop.f32.mrb[0].mxu0
        %v6547 = vadd.f32 0.0, %v6546
        %v6548 = vpop.f32.mrb[0].mxu0
        %6549 = vmatprep.mubr.bf16.mxu0 0
        %6550 = vmatmul.mubr.bf16.gmra.mrb[0].mxu0 %v6421
        %v6551 = vpop.f32.mrb[0].mxu0
        %v6552 = vadd.f32 0.0, %v6551
        %v6553 = vpop.f32.mrb[0].mxu0
        %v6554 = vpop.f32.mrb[0].mxu0
        %v6555 = vadd.f32 0.0, %v6554
        %v6556 = vpop.f32.mrb[0].mxu0
        %6557 = vmatprep.mubr.bf16.mxu0 0
        %6558 = vmatmul.mubr.bf16.gmra.mrb[0].mxu0 %v6424
        %v6559 = vpop.f32.mrb[0].mxu0
        %v6560 = vadd.f32 0.0, %v6559
        %v6561 = vpop.f32.mrb[0].mxu0
        %v6562 = vpop.f32.mrb[0].mxu0
        %v6563 = vadd.f32 0.0, %v6562
        %v6564 = vpop.f32.mrb[0].mxu0
        %6565 = vmatprep.mubr.bf16.mxu0 0
        %6566 = vmatmul.mubr.bf16.gmra.mrb[0].mxu0 %v6427
        %v6567 = vpop.f32.mrb[0].mxu0
        %v6568 = vadd.f32 0.0, %v6567
        %v6569 = vpop.f32.mrb[0].mxu0
        %v6570 = vpop.f32.mrb[0].mxu0
        %v6571 = vadd.f32 0.0, %v6570
        %v6572 = vpop.f32.mrb[0].mxu0
        %6573 = vmatprep.mubr.bf16.mxu0 0
        %6574 = vmatmul.mubr.bf16.gmra.mrb[0].mxu0 %v6430
        %v6575 = vpop.f32.mrb[0].mxu0
        %v6576 = vadd.f32 0.0, %v6575
        %v6577 = vpop.f32.mrb[0].mxu0
        %v6578 = vpop.f32.mrb[0].mxu0
        %v6579 = vadd.f32 0.0, %v6578
        %v6580 = vpop.f32.mrb[0].mxu0
        %6581 = vmatprep.mubr.bf16.mxu0 0
        %6582 = vmatmul.mubr.bf16.gmra.mrb[0].mxu0 %v6433
        %v6583 = vpop.f32.mrb[0].mxu0
        %v6584 = vadd.f32 0.0, %v6583
        %v6585 = vpop.f32.mrb[0].mxu0
        %v6586 = vpop.f32.mrb[0].mxu0
        %v6587 = vadd.f32 0.0, %v6586
        %v6588 = vpop.f32.mrb[0].mxu0
        %6589 = vmatprep.mubr.bf16.mxu0 0
        %6590 = vmatmul.mubr.bf16.gmra.mrb[0].mxu0 %v6436
        %v6591 = vpop.f32.mrb[0].mxu0
        %v6592 = vadd.f32 0.0, %v6591
        %v6593 = vpop.f32.mrb[0].mxu0
        %v6594 = vpop.f32.mrb[0].mxu0
        %v6595 = vadd.f32 0.0, %v6594
        %v6596 = vpop.f32.mrb[0].mxu0
        %6597 = vmatprep.mubr.bf16.mxu0 0
        %6598 = vmatmul.mubr.bf16.gmra.mrb[0].mxu0 %v6439
        %v6599 = vpop.f32.mrb[0].mxu0
        %v6600 = vadd.f32 0.0, %v6599
        %v6601 = vpop.f32.mrb[0].mxu0
        %v6602 = vpop.f32.mrb[0].mxu0
        %v6603 = vadd.f32 0.0, %v6602
        %v6604 = vpop.f32.mrb[0].mxu0
        %6605 = vmatprep.mubr.bf16.mxu0 0
        %6606 = vmatmul.mubr.bf16.gmra.mrb[0].mxu0 %v6442
        %v6607 = vpop.f32.mrb[0].mxu0
        %v6608 = vadd.f32 0.0, %v6607
        %v6609 = vpop.f32.mrb[0].mxu0
        %v6610 = vpop.f32.mrb[0].mxu0
        %v6611 = vadd.f32 0.0, %v6610
        %v6612 = vpop.f32.mrb[0].mxu0
        %6613 = vmatprep.mubr.bf16.mxu0 0
        %6614 = vmatmul.mubr.bf16.gmra.mrb[0].mxu0 %v6445
        %v6615 = vpop.f32.mrb[0].mxu0
        %v6616 = vadd.f32 0.0, %v6615
        %v6617 = vpop.f32.mrb[0].mxu0
        %v6618 = vpop.f32.mrb[0].mxu0
        %v6619 = vadd.f32 0.0, %v6618
        %v6620 = vpop.f32.mrb[0].mxu0
        %6621 = vmatprep.mubr.bf16.mxu0 0
        %6622 = vmatmul.mubr.bf16.gmra.mrb[0].mxu0 %v6448
        %v6623 = vpop.f32.mrb[0].mxu0
        %v6624 = vadd.f32 0.0, %v6623
        %v6625 = vpop.f32.mrb[0].mxu0
        %v6626 = vpop.f32.mrb[0].mxu0
        %v6627 = vadd.f32 0.0, %v6626
        %v6628 = vpop.f32.mrb[0].mxu0
        %6629 = vmatprep.mubr.bf16.mxu0 0
        %6630 = vmatmul.mubr.bf16.gmra.mrb[0].mxu0 %v6451
        %v6631 = vpop.f32.mrb[0].mxu0
        %v6632 = vadd.f32 0.0, %v6631
        %v6633 = vpop.f32.mrb[0].mxu0
        %v6634 = vpop.f32.mrb[0].mxu0
        %v6635 = vadd.f32 0.0, %v6634
        %v6636 = vpop.f32.mrb[0].mxu0
        %6637 = vmatprep.mubr.bf16.mxu0 0
        %6638 = vmatmul.mubr.bf16.gmra.mrb[0].mxu0 %v6454
        %v6639 = vpop.f32.mrb[0].mxu0
        %v6640 = vadd.f32 0.0, %v6639
        %v6641 = vpop.f32.mrb[0].mxu0
        %v6642 = vpop.f32.mrb[0].mxu0
        %v6643 = vadd.f32 0.0, %v6642
        %v6644 = vpop.f32.mrb[0].mxu0
        %6645 = vmatprep.mubr.bf16.mxu0 0
        %6646 = vmatmul.mubr.bf16.gmra.mrb[0].mxu0 %v6457
        %v6647 = vpop.f32.mrb[0].mxu0
        %v6648 = vadd.f32 0.0, %v6647
        %v6649 = vpop.f32.mrb[0].mxu0
        %v6650 = vpop.f32.mrb[0].mxu0
        %v6651 = vadd.f32 0.0, %v6650
        %v6652 = vpop.f32.mrb[0].mxu0
        %6653 = vmatprep.mubr.bf16.mxu0 0
        %6654 = vmatmul.mubr.bf16.gmra.mrb[0].mxu0 %v6460
        %v6655 = vpop.f32.mrb[0].mxu0
        %v6656 = vadd.f32 0.0, %v6655
        %v6657 = vpop.f32.mrb[0].mxu0
        %v6658 = vpop.f32.mrb[0].mxu0
        %v6659 = vadd.f32 0.0, %v6658
        %v6660 = vpop.f32.mrb[0].mxu0
        %6661 = vmatprep.mubr.bf16.mxu0 0
        %6662 = vmatmul.mubr.bf16.gmra.mrb[0].mxu0 %v6463
        %v6663 = vpop.f32.mrb[0].mxu0
        %v6664 = vadd.f32 0.0, %v6663
        %v6665 = vpop.f32.mrb[0].mxu0
        %v6666 = vpop.f32.mrb[0].mxu0
        %v6667 = vadd.f32 0.0, %v6666
        %v6668 = vpop.f32.mrb[0].mxu0
        %6669 = vmatprep.mubr.bf16.mxu0 0
        %6670 = vmatmul.mubr.bf16.gmra.mrb[0].mxu0 %v6466
        %v6671 = vpop.f32.mrb[0].mxu0
        %v6672 = vadd.f32 0.0, %v6671
        %v6673 = vpop.f32.mrb[0].mxu0
        %v6674 = vpop.f32.mrb[0].mxu0
        %v6675 = vadd.f32 0.0, %v6674
        %v6676 = vpop.f32.mrb[0].mxu0
        %6677 = vmatprep.mubr.bf16.mxu0 0
        %6678 = vmatmul.mubr.bf16.gmra.mrb[0].mxu0 %v6469
        %v6679 = vpop.f32.mrb[0].mxu0
        %v6680 = vadd.f32 0.0, %v6679
        %v6681 = vpop.f32.mrb[0].mxu0
        %v6682 = vpop.f32.mrb[0].mxu0
        %v6683 = vadd.f32 0.0, %v6682
        %v6684 = vpop.f32.mrb[0].mxu0
        %6685 = vmatprep.mubr.bf16.mxu0 0
        %6686 = vmatmul.mubr.bf16.gmra.mrb[0].mxu0 %v6472
        %v6687 = vpop.f32.mrb[0].mxu0
        %v6688 = vadd.f32 0.0, %v6687
        %v6689 = vpop.f32.mrb[0].mxu0
        %v6690 = vpop.f32.mrb[0].mxu0
        %v6691 = vadd.f32 0.0, %v6690
        %v6692 = vpop.f32.mrb[0].mxu0
        %6693 = vmatprep.mubr.bf16.mxu0 0
        %6694 = vmatmul.mubr.bf16.gmra.mrb[0].mxu0 %v6475
        %v6695 = vpop.f32.mrb[0].mxu0
        %v6696 = vadd.f32 0.0, %v6695
        %v6697 = vpop.f32.mrb[0].mxu0
        %v6698 = vpop.f32.mrb[0].mxu0
        %v6699 = vadd.f32 0.0, %v6698
        %v6700 = vpop.f32.mrb[0].mxu0
        %6701 = vdwg.mxu0
        %v6702 = vld [vmem:[#allocation18] sm:$0x1]
        %v6704 = vlaneseq
        %v6705 = vshrl.u32 %v6704, 7
        %v6706 = vsub.s32 0, %v6705
        %v6707 = vrot.slane %v6702, %v6706
        %v6709 = vmul.f32 %v6512, %v6707
        %v6710 = vmul.f32 %v6515, %v6707
        %v6711 = vmul.f32 %v6520, %v6707
        %v6712 = vmul.f32 %v6523, %v6707
        %v6713 = vmul.f32 %v6528, %v6707
        %v6714 = vmul.f32 %v6531, %v6707
        %v6715 = vmul.f32 %v6536, %v6707
        %v6716 = vmul.f32 %v6539, %v6707
        %v6717 = vmul.f32 %v6544, %v6707
        %v6718 = vmul.f32 %v6547, %v6707
        %v6719 = vmul.f32 %v6552, %v6707
        %v6720 = vmul.f32 %v6555, %v6707
        %v6721 = vmul.f32 %v6560, %v6707
        %v6722 = vmul.f32 %v6563, %v6707
        %v6723 = vmul.f32 %v6568, %v6707
        %v6724 = vmul.f32 %v6571, %v6707
        %v6725 = vmul.f32 %v6576, %v6707
        %v6726 = vmul.f32 %v6579, %v6707
        %v6727 = vmul.f32 %v6584, %v6707
        %v6728 = vmul.f32 %v6587, %v6707
        %v6729 = vmul.f32 %v6592, %v6707
        %v6730 = vmul.f32 %v6595, %v6707
        %v6731 = vmul.f32 %v6600, %v6707
        %v6732 = vmul.f32 %v6603, %v6707
        %v6733 = vmul.f32 %v6608, %v6707
        %v6734 = vmul.f32 %v6611, %v6707
        %v6735 = vmul.f32 %v6616, %v6707
        %v6736 = vmul.f32 %v6619, %v6707
        %v6737 = vmul.f32 %v6624, %v6707
        %v6738 = vmul.f32 %v6627, %v6707
        %v6739 = vmul.f32 %v6632, %v6707
        %v6740 = vmul.f32 %v6635, %v6707
        %v6741 = vmul.f32 %v6640, %v6707
        %v6742 = vmul.f32 %v6643, %v6707
        %v6743 = vmul.f32 %v6648, %v6707
        %v6744 = vmul.f32 %v6651, %v6707
        %v6745 = vmul.f32 %v6656, %v6707
        %v6746 = vmul.f32 %v6659, %v6707
        %v6747 = vmul.f32 %v6664, %v6707
        %v6748 = vmul.f32 %v6667, %v6707
        %v6749 = vmul.f32 %v6672, %v6707
        %v6750 = vmul.f32 %v6675, %v6707
        %v6751 = vmul.f32 %v6680, %v6707
        %v6752 = vmul.f32 %v6683, %v6707
        %v6753 = vmul.f32 %v6688, %v6707
        %v6754 = vmul.f32 %v6691, %v6707
        %v6755 = vmul.f32 %v6696, %v6707
        %v6756 = vmul.f32 %v6699, %v6707
        %v6757 = vld [vmem:[#allocation20] sm:$0x1]
        %v6759 = vlaneseq
        %v6760 = vshrl.u32 %v6759, 7
        %v6761 = vsub.s32 0, %v6760
        %v6762 = vrot.slane %v6757, %v6761
        %v6764 = vadd.f32 %v6709, %v6762
        %v6765 = vadd.f32 %v6710, %v6762
        %v6766 = vadd.f32 %v6711, %v6762
        %v6767 = vadd.f32 %v6712, %v6762
        %v6768 = vadd.f32 %v6713, %v6762
        %v6769 = vadd.f32 %v6714, %v6762
        %v6770 = vadd.f32 %v6715, %v6762
        %v6771 = vadd.f32 %v6716, %v6762
        %v6772 = vadd.f32 %v6717, %v6762
        %v6773 = vadd.f32 %v6718, %v6762
        %v6774 = vadd.f32 %v6719, %v6762
        %v6775 = vadd.f32 %v6720, %v6762
        %v6776 = vadd.f32 %v6721, %v6762
        %v6777 = vadd.f32 %v6722, %v6762
        %v6778 = vadd.f32 %v6723, %v6762
        %v6779 = vadd.f32 %v6724, %v6762
        %v6780 = vadd.f32 %v6725, %v6762
        %v6781 = vadd.f32 %v6726, %v6762
        %v6782 = vadd.f32 %v6727, %v6762
        %v6783 = vadd.f32 %v6728, %v6762
        %v6784 = vadd.f32 %v6729, %v6762
        %v6785 = vadd.f32 %v6730, %v6762
        %v6786 = vadd.f32 %v6731, %v6762
        %v6787 = vadd.f32 %v6732, %v6762
        %v6788 = vadd.f32 %v6733, %v6762
        %v6789 = vadd.f32 %v6734, %v6762
        %v6790 = vadd.f32 %v6735, %v6762
        %v6791 = vadd.f32 %v6736, %v6762
        %v6792 = vadd.f32 %v6737, %v6762
        %v6793 = vadd.f32 %v6738, %v6762
        %v6794 = vadd.f32 %v6739, %v6762
        %v6795 = vadd.f32 %v6740, %v6762
        %v6796 = vadd.f32 %v6741, %v6762
        %v6797 = vadd.f32 %v6742, %v6762
        %v6798 = vadd.f32 %v6743, %v6762
        %v6799 = vadd.f32 %v6744, %v6762
        %v6800 = vadd.f32 %v6745, %v6762
        %v6801 = vadd.f32 %v6746, %v6762
        %v6802 = vadd.f32 %v6747, %v6762
        %v6803 = vadd.f32 %v6748, %v6762
        %v6804 = vadd.f32 %v6749, %v6762
        %v6805 = vadd.f32 %v6750, %v6762
        %v6806 = vadd.f32 %v6751, %v6762
        %v6807 = vadd.f32 %v6752, %v6762
        %v6808 = vadd.f32 %v6753, %v6762
        %v6809 = vadd.f32 %v6754, %v6762
        %v6810 = vadd.f32 %v6755, %v6762
        %v6811 = vadd.f32 %v6756, %v6762
        %v6812 = vld [vmem:[%s483] sm:$0xff]
        %v6813 = vld [vmem:[%s483 + $0x8] sm:$0xff]
        %v6814 = vld [vmem:[%s483 + $0x10] sm:$0xff]
        %v6815 = vld [vmem:[%s483 + $0x18] sm:$0xff]
        %v6816 = vld [vmem:[%s483 + $0x20] sm:$0xff]
        %v6817 = vld [vmem:[%s483 + $0x28] sm:$0xff]
        %v6818 = vld [vmem:[%s483 + $0x30] sm:$0xff]
        %v6819 = vld [vmem:[%s483 + $0x38] sm:$0xff]
        %v6820 = vld [vmem:[%s483 + $0x40] sm:$0xff]
        %v6821 = vld [vmem:[%s483 + $0x48] sm:$0xff]
        %v6822 = vld [vmem:[%s483 + $0x50] sm:$0xff]
        %v6823 = vld [vmem:[%s483 + $0x58] sm:$0xff]
        %v6824 = vld [vmem:[%s483 + $0x60] sm:$0xff]
        %v6825 = vld [vmem:[%s483 + $0x68] sm:$0xff]
        %v6826 = vld [vmem:[%s483 + $0x70] sm:$0xff]
        %v6827 = vld [vmem:[%s483 + $0x78] sm:$0xff]
        %v6828 = vld [vmem:[%s483 + $0x80] sm:$0xff]
        %v6829 = vld [vmem:[%s483 + $0x88] sm:$0xff]
        %v6830 = vld [vmem:[%s483 + $0x90] sm:$0xff]
        %v6831 = vld [vmem:[%s483 + $0x98] sm:$0xff]
        %v6832 = vld [vmem:[%s483 + $0xa0] sm:$0xff]
        %v6833 = vld [vmem:[%s483 + $0xa8] sm:$0xff]
        %v6834 = vld [vmem:[%s483 + $0xb0] sm:$0xff]
        %v6835 = vld [vmem:[%s483 + $0xb8] sm:$0xff]
        %v6836 = vld [vmem:[%s483 + $0xc0] sm:$0xff]
        %v6837 = vld [vmem:[%s483 + $0xc8] sm:$0xff]
        %v6838 = vld [vmem:[%s483 + $0xd0] sm:$0xff]
        %v6839 = vld [vmem:[%s483 + $0xd8] sm:$0xff]
        %v6840 = vld [vmem:[%s483 + $0xe0] sm:$0xff]
        %v6841 = vld [vmem:[%s483 + $0xe8] sm:$0xff]
        %v6842 = vld [vmem:[%s483 + $0xf0] sm:$0xff]
        %v6843 = vld [vmem:[%s483 + $0xf8] sm:$0xff]
        %v6844 = vld [vmem:[%s483 + $0x100] sm:$0xff]
        %v6845 = vld [vmem:[%s483 + $0x108] sm:$0xff]
        %v6846 = vld [vmem:[%s483 + $0x110] sm:$0xff]
        %v6847 = vld [vmem:[%s483 + $0x118] sm:$0xff]
        %v6848 = vld [vmem:[%s483 + $0x120] sm:$0xff]
        %v6849 = vld [vmem:[%s483 + $0x128] sm:$0xff]
        %v6850 = vld [vmem:[%s483 + $0x130] sm:$0xff]
        %v6851 = vld [vmem:[%s483 + $0x138] sm:$0xff]
        %v6852 = vld [vmem:[%s483 + $0x140] sm:$0xff]
        %v6853 = vld [vmem:[%s483 + $0x148] sm:$0xff]
        %v6854 = vld [vmem:[%s483 + $0x150] sm:$0xff]
        %v6855 = vld [vmem:[%s483 + $0x158] sm:$0xff]
        %v6856 = vld [vmem:[%s483 + $0x160] sm:$0xff]
        %v6857 = vld [vmem:[%s483 + $0x168] sm:$0xff]
        %v6858 = vld [vmem:[%s483 + $0x170] sm:$0xff]
        %v6859 = vld [vmem:[%s483 + $0x178] sm:$0xff]
        %v6860 = vadd.f32 %v6764, %v6812
        %v6861 = vadd.f32 %v6765, %v6813
        %v6862 = vadd.f32 %v6766, %v6814
        %v6863 = vadd.f32 %v6767, %v6815
        %v6864 = vadd.f32 %v6768, %v6816
        %v6865 = vadd.f32 %v6769, %v6817
        %v6866 = vadd.f32 %v6770, %v6818
        %v6867 = vadd.f32 %v6771, %v6819
        %v6868 = vadd.f32 %v6772, %v6820
        %v6869 = vadd.f32 %v6773, %v6821
        %v6870 = vadd.f32 %v6774, %v6822
        %v6871 = vadd.f32 %v6775, %v6823
        %v6872 = vadd.f32 %v6776, %v6824
        %v6873 = vadd.f32 %v6777, %v6825
        %v6874 = vadd.f32 %v6778, %v6826
        %v6875 = vadd.f32 %v6779, %v6827
        %v6876 = vadd.f32 %v6780, %v6828
        %v6877 = vadd.f32 %v6781, %v6829
        %v6878 = vadd.f32 %v6782, %v6830
        %v6879 = vadd.f32 %v6783, %v6831
        %v6880 = vadd.f32 %v6784, %v6832
        %v6881 = vadd.f32 %v6785, %v6833
        %v6882 = vadd.f32 %v6786, %v6834
        %v6883 = vadd.f32 %v6787, %v6835
        %v6884 = vadd.f32 %v6788, %v6836
        %v6885 = vadd.f32 %v6789, %v6837
        %v6886 = vadd.f32 %v6790, %v6838
        %v6887 = vadd.f32 %v6791, %v6839
        %v6888 = vadd.f32 %v6792, %v6840
        %v6889 = vadd.f32 %v6793, %v6841
        %v6890 = vadd.f32 %v6794, %v6842
        %v6891 = vadd.f32 %v6795, %v6843
        %v6892 = vadd.f32 %v6796, %v6844
        %v6893 = vadd.f32 %v6797, %v6845
        %v6894 = vadd.f32 %v6798, %v6846
        %v6895 = vadd.f32 %v6799, %v6847
        %v6896 = vadd.f32 %v6800, %v6848
        %v6897 = vadd.f32 %v6801, %v6849
        %v6898 = vadd.f32 %v6802, %v6850
        %v6899 = vadd.f32 %v6803, %v6851
        %v6900 = vadd.f32 %v6804, %v6852
        %v6901 = vadd.f32 %v6805, %v6853
        %v6902 = vadd.f32 %v6806, %v6854
        %v6903 = vadd.f32 %v6807, %v6855
        %v6904 = vadd.f32 %v6808, %v6856
        %v6905 = vadd.f32 %v6809, %v6857
        %v6906 = vadd.f32 %v6810, %v6858
        %v6907 = vadd.f32 %v6811, %v6859
        %v6908 = vmax.f32 %v6860, 0.0
        %v6909 = vmax.f32 %v6861, 0.0
        %v6910 = vmax.f32 %v6862, 0.0
        %v6911 = vmax.f32 %v6863, 0.0
        %v6912 = vmax.f32 %v6864, 0.0
        %v6913 = vmax.f32 %v6865, 0.0
        %v6914 = vmax.f32 %v6866, 0.0
        %v6915 = vmax.f32 %v6867, 0.0
        %v6916 = vmax.f32 %v6868, 0.0
        %v6917 = vmax.f32 %v6869, 0.0
        %v6918 = vmax.f32 %v6870, 0.0
        %v6919 = vmax.f32 %v6871, 0.0
        %v6920 = vmax.f32 %v6872, 0.0
        %v6921 = vmax.f32 %v6873, 0.0
        %v6922 = vmax.f32 %v6874, 0.0
        %v6923 = vmax.f32 %v6875, 0.0
        %v6924 = vmax.f32 %v6876, 0.0
        %v6925 = vmax.f32 %v6877, 0.0
        %v6926 = vmax.f32 %v6878, 0.0
        %v6927 = vmax.f32 %v6879, 0.0
        %v6928 = vmax.f32 %v6880, 0.0
        %v6929 = vmax.f32 %v6881, 0.0
        %v6930 = vmax.f32 %v6882, 0.0
        %v6931 = vmax.f32 %v6883, 0.0
        %v6932 = vmax.f32 %v6884, 0.0
        %v6933 = vmax.f32 %v6885, 0.0
        %v6934 = vmax.f32 %v6886, 0.0
        %v6935 = vmax.f32 %v6887, 0.0
        %v6936 = vmax.f32 %v6888, 0.0
        %v6937 = vmax.f32 %v6889, 0.0
        %v6938 = vmax.f32 %v6890, 0.0
        %v6939 = vmax.f32 %v6891, 0.0
        %v6940 = vmax.f32 %v6892, 0.0
        %v6941 = vmax.f32 %v6893, 0.0
        %v6942 = vmax.f32 %v6894, 0.0
        %v6943 = vmax.f32 %v6895, 0.0
        %v6944 = vmax.f32 %v6896, 0.0
        %v6945 = vmax.f32 %v6897, 0.0
        %v6946 = vmax.f32 %v6898, 0.0
        %v6947 = vmax.f32 %v6899, 0.0
        %v6948 = vmax.f32 %v6900, 0.0
        %v6949 = vmax.f32 %v6901, 0.0
        %v6950 = vmax.f32 %v6902, 0.0
        %v6951 = vmax.f32 %v6903, 0.0
        %v6952 = vmax.f32 %v6904, 0.0
        %v6953 = vmax.f32 %v6905, 0.0
        %v6954 = vmax.f32 %v6906, 0.0
        %v6955 = vmax.f32 %v6907, 0.0
        %6956 = vst.msk [vmem:[%s562] sm:$0xff] %vm769, %v6908
        %6957 = vst.msk [vmem:[%s562 + $0x8] sm:$0xff] %vm769, %v6909
        %6958 = vst.msk [vmem:[%s562 + $0x10] sm:$0xff] %vm769, %v6910
        %6959 = vst.msk [vmem:[%s562 + $0x18] sm:$0xff] %vm769, %v6911
        %6960 = vst.msk [vmem:[%s562 + $0x20] sm:$0xff] %vm769, %v6912
        %6961 = vst.msk [vmem:[%s562 + $0x28] sm:$0xff] %vm769, %v6913
        %6962 = vst.msk [vmem:[%s562 + $0x30] sm:$0xff] %vm769, %v6914
        %6963 = vst.msk [vmem:[%s562 + $0x38] sm:$0xff] %vm769, %v6915
        %6964 = vst.msk [vmem:[%s562 + $0x40] sm:$0xff] %vm769, %v6916
        %6965 = vst.msk [vmem:[%s562 + $0x48] sm:$0xff] %vm769, %v6917
        %6966 = vst.msk [vmem:[%s562 + $0x50] sm:$0xff] %vm769, %v6918
        %6967 = vst.msk [vmem:[%s562 + $0x58] sm:$0xff] %vm769, %v6919
        %6968 = vst.msk [vmem:[%s562 + $0x60] sm:$0xff] %vm769, %v6920
        %6969 = vst.msk [vmem:[%s562 + $0x68] sm:$0xff] %vm769, %v6921
        %6970 = vst.msk [vmem:[%s562 + $0x70] sm:$0xff] %vm769, %v6922
        %6971 = vst.msk [vmem:[%s562 + $0x78] sm:$0xff] %vm769, %v6923
        %6972 = vst.msk [vmem:[%s562 + $0x80] sm:$0xff] %vm769, %v6924
        %6973 = vst.msk [vmem:[%s562 + $0x88] sm:$0xff] %vm769, %v6925
        %6974 = vst.msk [vmem:[%s562 + $0x90] sm:$0xff] %vm769, %v6926
        %6975 = vst.msk [vmem:[%s562 + $0x98] sm:$0xff] %vm769, %v6927
        %6976 = vst.msk [vmem:[%s562 + $0xa0] sm:$0xff] %vm769, %v6928
        %6977 = vst.msk [vmem:[%s562 + $0xa8] sm:$0xff] %vm769, %v6929
        %6978 = vst.msk [vmem:[%s562 + $0xb0] sm:$0xff] %vm769, %v6930
        %6979 = vst.msk [vmem:[%s562 + $0xb8] sm:$0xff] %vm769, %v6931
        %6980 = vst.msk [vmem:[%s562 + $0xc0] sm:$0xff] %vm769, %v6932
        %6981 = vst.msk [vmem:[%s562 + $0xc8] sm:$0xff] %vm769, %v6933
        %6982 = vst.msk [vmem:[%s562 + $0xd0] sm:$0xff] %vm769, %v6934
        %6983 = vst.msk [vmem:[%s562 + $0xd8] sm:$0xff] %vm769, %v6935
        %6984 = vst.msk [vmem:[%s562 + $0xe0] sm:$0xff] %vm769, %v6936
        %6985 = vst.msk [vmem:[%s562 + $0xe8] sm:$0xff] %vm769, %v6937
        %6986 = vst.msk [vmem:[%s562 + $0xf0] sm:$0xff] %vm769, %v6938
        %6987 = vst.msk [vmem:[%s562 + $0xf8] sm:$0xff] %vm769, %v6939
        %6988 = vst.msk [vmem:[%s562 + $0x100] sm:$0xff] %vm769, %v6940
        %6989 = vst.msk [vmem:[%s562 + $0x108] sm:$0xff] %vm769, %v6941
        %6990 = vst.msk [vmem:[%s562 + $0x110] sm:$0xff] %vm769, %v6942
        %6991 = vst.msk [vmem:[%s562 + $0x118] sm:$0xff] %vm769, %v6943
        %6992 = vst.msk [vmem:[%s562 + $0x120] sm:$0xff] %vm769, %v6944
        %6993 = vst.msk [vmem:[%s562 + $0x128] sm:$0xff] %vm769, %v6945
        %6994 = vst.msk [vmem:[%s562 + $0x130] sm:$0xff] %vm769, %v6946
        %6995 = vst.msk [vmem:[%s562 + $0x138] sm:$0xff] %vm769, %v6947
        %6996 = vst.msk [vmem:[%s562 + $0x140] sm:$0xff] %vm769, %v6948
        %6997 = vst.msk [vmem:[%s562 + $0x148] sm:$0xff] %vm769, %v6949
        %6998 = vst.msk [vmem:[%s562 + $0x150] sm:$0xff] %vm769, %v6950
        %6999 = vst.msk [vmem:[%s562 + $0x158] sm:$0xff] %vm769, %v6951
        %7000 = vst.msk [vmem:[%s562 + $0x160] sm:$0xff] %vm769, %v6952
        %7001 = vst.msk [vmem:[%s562 + $0x168] sm:$0xff] %vm769, %v6953
        %7002 = vst.msk [vmem:[%s562 + $0x170] sm:$0xff] %vm769, %v6954
        %7003 = vst.msk [vmem:[%s562 + $0x178] sm:$0xff] %vm769, %v6955
        %s7004 = sand.u32 %s284, 1
        %s7005 = scalar_lea.sflag [#allocation5], %s7004
        %s7006 = sand.u32 %s284, 1
        %s7007 = smul.addr %s7006, 384
        %s7008 = scalar_lea.vmem [#allocation21], %s7007
        // Predicated region
        $region109: #{tpu_custom_call.1} parent=63 // pred_check
          %p7009 = pneg %p294
        $region110: #{tpu_custom_call.1} parent=63 // pred_check_branch
          %7011 = sbr.rel (%p7009) target = $region112
        $region111: #{tpu_custom_call.1} parent=63 // pred_region
          %s7013 = ssub.s32 6144, 6144
          %7014 = vsyncadd %s7005, %s7013
          %s7015 = smul.addr %s35, 48
          %s7016 = smul.addr %s7015, 128
          %s7017 = scalar_lea.hbm %s11, %s7016
          %s7018 = sshll.u32 %s7008, 4
          %s7019 = int_to_ptr.vmem [resolvable:$true] %s7018
          %7024 = dma.vmem_to_hbm [thread:$0]  %s7019, 6144, %s7017, %s7005, 128, 128, 8
        $region112: #{tpu_custom_call.1} parent=63 // pred_fallthru
          _
      $region64: #{tpu_custom_call.1} parent=5 // pred_fallthru
        _
      %p7025 = scmp.le.s32.totalorder 2, %s30
      // Predicated region
      $region113: #{tpu_custom_call.1} parent=5 // pred_check
        %p7026 = pneg %p7025
      $region114: #{tpu_custom_call.1} parent=5 // pred_check_branch
        %7028 = sbr.rel (%p7026) target = $region116
      $region115: #{tpu_custom_call.1} parent=5 // pred_region
        %s7029 = ssub.s32 %s30, 2
        // Predicated region
        $region117: #{tpu_custom_call.1} parent=115 // pred_check
          %p7030 = pneg %p300
        $region118: #{tpu_custom_call.1} parent=115 // pred_check_branch
          %7032 = sbr.rel (%p7030) target = $region120
        $region119: #{tpu_custom_call.1} parent=115 // pred_region
          %s7033 = sand.u32 %s285, 1
          %s7034 = scalar_lea.sflag [#allocation5], %s7033
          %s7035 = sand.u32 %s285, 1
          %s7036 = smul.addr %s7035, 384
          %s7037 = scalar_lea.vmem [#allocation21], %s7036
          %7038 = dma.done %s7034, 6144
        $region120: #{tpu_custom_call.1} parent=115 // pred_fallthru
          _
      $region116: #{tpu_custom_call.1} parent=5 // pred_fallthru
        _
    $region6: #{tpu_custom_call.1} parent=1 // loop_footer
      %s34 = sadd.s32 1, %s30
    $region7: #{tpu_custom_call.1} parent=1 // loop_footer_branch
      %29 = sbr.rel target = $region3
    $region8: #{tpu_custom_call.1} parent=1 // loop_exit
      _
    %7039 = vsyncpa [#allocation4], 1
    %s7040 = scalar_lea.sflag [#allocation4], 1
    %7041 = vsyncpa %s7040, 1
    %7042 = vsyncpa [#allocation7], 1
    %s7043 = scalar_lea.sflag [#allocation7], 1
    %7044 = vsyncpa %s7043, 1
    %7045 = vsyncpa [#allocation10], 1
    %7046 = vsyncpa [#allocation13], 1
    %7047 = vsyncpa [#allocation16], 1
    %7048 = vsyncpa [#allocation19], 1
    %7049 = vsyncpa [#allocation5], 1
    %s7050 = scalar_lea.sflag [#allocation5], 1
    %7051 = vsyncpa %s7050, 1

</llo_original>
